<compile_context>
chip_gen: v5e
topology: v5e:2x2
jax: 0.10.0
libtpu: 0.0.40
codegen_flags: <defaults>
</compile_context>

<pallas_src>
import jax
import jax.numpy as jnp
from jax import lax
from jax.experimental import pallas as pl
from jax.experimental.pallas import tpu as pltpu


# ----------------------------------------------------------------------------
# Kernel
# ----------------------------------------------------------------------------
def _resblock_kernel(x_ref, w1_ref, sh1_ref, w2_ref, sh2_ref, o_ref,
                     pad_ref, col_ref):
    # x_ref  : (nb, H, W, C)   f32 input block (NHWC, C on the lane dim)
    # wK_ref : (9*C, C)        bf16 im2col weights, BN scale pre-folded into cout
    # shK_ref: (1, C)          f32 folded BN shift (conv bias absorbed)
    # o_ref  : (nb, H, W, C)   f32 output block
    # pad_ref: (nb, H+2, W, C) f32 scratch, H-padded activation
    # col_ref: (nb*H*W, 9*C)   bf16 scratch, im2col patch matrix
    nb, H, W, C = x_ref.shape
    M = nb * H * W

    # Zero only the H-halo rows; the interior is fully overwritten before each conv.
    zrow = jnp.zeros((nb, 1, W, C), jnp.float32)
    pad_ref[:, 0:1, :, :] = zrow
    pad_ref[:, H + 1:H + 2, :, :] = zrow

    # Hoisted wrap-column masks: computed once, reused by both convs / all taps
    # (JAX does not CSE broadcast/iota, so do NOT re-create these per tap).
    w_idx = lax.broadcasted_iota(jnp.int32, (1, 1, W, C), 2)
    keep = {0: w_idx != 0,          # dx=0: roll +1 wraps col W-1 into col 0
            2: w_idx != (W - 1)}    # dx=2: roll -1 wraps col 0 into col W-1

    def build_col(src_f32):
        """Write src into the pad interior, then fill the (M, 9C) im2col buffer."""
        pad_ref[:, 1:H + 1, :, :] = src_f32
        for dy in range(3):
            for dx in range(3):
                k = dy * 3 + dx
                tap = pad_ref[:, dy:dy + H, :, :]            # (nb, H, W, C) f32
                if dx != 1:
                    # W shift is a per-vreg sublane rotate (XLU slot) + wrap mask;
                    # done per-(dy,dx) slice so liveness stays a few vregs.
                    tap = pltpu.roll(tap, (1 - dx) % W, 2)
                    tap = jnp.where(keep[dx], tap, 0.0)
                # Lane-aligned store: offset k*C is a multiple of 128 lanes.
                col_ref[:, k * C:(k + 1) * C] = (
                    tap.reshape(M, C).astype(jnp.bfloat16))

    # ---- conv1 (BN scale folded into w1) + shift + ReLU -----------------------
    build_col(x_ref[...])
    y1 = jnp.dot(col_ref[...], w1_ref[...], preferred_element_type=jnp.float32)
    y1 = jnp.maximum(y1 + sh1_ref[...], 0.0)                 # (M, C) f32

    # ---- conv2 (BN scale folded into w2) + shift + residual + ReLU ------------
    build_col(y1.reshape(nb, H, W, C))                       # y1 dies here
    y2 = jnp.dot(col_ref[...], w2_ref[...], preferred_element_type=jnp.float32)
    out = jnp.maximum(y2 + sh2_ref[...] + x_ref[...].reshape(M, C), 0.0)
    o_ref[...] = out.reshape(nb, H, W, C)


# ----------------------------------------------------------------------------
# Parameter folding (shared by the Pallas wrapper and the bf16-matched reference)
# ----------------------------------------------------------------------------
def _fold_params(params, C, eps):
    """Fold conv bias + eval-mode BN running stats into (bf16 im2col W, f32 shift)."""
    def fold(g, be, m, v, b):
        scale = g / jnp.sqrt(v + eps)
        shift = be + scale * (b - m)
        return scale, shift

    def prep_w(w_oihw, scale):
        # torch OIHW (Cout, Cin, ky, kx) -> (ky, kx, Cin, Cout) -> (9*Cin, Cout),
        # BN scale folded into the output channels; bf16 for the MXU.
        wm = jnp.transpose(w_oihw, (2, 3, 1, 0)).reshape(9 * C, C)
        return (wm * scale[None, :]).astype(jnp.bfloat16)

    p = params
    s1, sh1 = fold(p["g1"], p["be1"], p["m1"], p["v1"], p["b1"])
    s2, sh2 = fold(p["g2"], p["be2"], p["m2"], p["v2"], p["b2"])
    return (prep_w(p["w1"], s1), sh1.astype(jnp.float32),
            prep_w(p["w2"], s2), sh2.astype(jnp.float32))


def _pick_nb(N, H, W, block_n=None):
    """Images per grid step.  Target M = nb*H*W >= 256 (fills the 256-wide MXU of
    v6e/v7x) while keeping >= 2 grid steps so both v7x TensorCores get work under
    dimension_semantics=("parallel",); production batches should give each core
    >= ~4 steps so the in/out DMAs pipeline behind compute."""
    if block_n is not None:
        return block_n if N % block_n == 0 else 1
    hw = H * W
    divs = [d for d in range(1, N + 1) if N % d == 0]
    for d in divs:                              # smallest divisor that fills the MXU
        if d * hw >= 256 and N // d >= 2:
            return d
    cands = [d for d in divs if N // d >= 2]    # else maximize M with >= 2 steps
    return cands[-1] if cands else 1


# ----------------------------------------------------------------------------
# Wrapper
# ----------------------------------------------------------------------------
def resblock_forward(x_nchw, params, *, eps=1e-5, block_n=None):
    """Pallas implementation of ResBlock.forward (inference-mode BatchNorm)."""
    N, C, H, W = x_nchw.shape
    w1, sh1, w2, sh2 = _fold_params(params, C, eps)

    # TODO(synk): in a full model keep activations NHWC end-to-end; these two
    # transposes are a full HBM round-trip comparable to the kernel's own DMA.
    x_nhwc = jnp.transpose(x_nchw, (0, 2, 3, 1)).astype(jnp.float32)

    nb = _pick_nb(N, H, W, block_n)

    out_nhwc = pl.pallas_call(
        _resblock_kernel,
        out_shape=jax.ShapeDtypeStruct((N, H, W, C), jnp.float32),
        grid_spec=pltpu.PrefetchScalarGridSpec(
            num_scalar_prefetch=0,
            grid=(N // nb,),
            in_specs=[
                pl.BlockSpec((nb, H, W, C), lambda n: (n, 0, 0, 0)),  # x (f32)
                pl.BlockSpec((9 * C, C), lambda n: (0, 0)),           # w1 (bf16)
                pl.BlockSpec((1, C), lambda n: (0, 0)),               # shift1
                pl.BlockSpec((9 * C, C), lambda n: (0, 0)),           # w2 (bf16)
                pl.BlockSpec((1, C), lambda n: (0, 0)),               # shift2
            ],
            out_specs=pl.BlockSpec((nb, H, W, C), lambda n: (n, 0, 0, 0)),
            scratch_shapes=[
                pltpu.VMEM((nb, H + 2, W, C), jnp.float32),      # H-padded act
                pltpu.VMEM((nb * H * W, 9 * C), jnp.bfloat16),   # im2col buffer
            ],
        ),
        compiler_params=pltpu.CompilerParams(
            dimension_semantics=("parallel",),
            vmem_limit_bytes=24 << 20,   # ~7 MiB live at nb=4; fits v7x's 64 MiB VMEM
        ),
    )(x_nhwc, w1, sh1[None, :], w2, sh2[None, :])

    return jnp.transpose(out_nhwc, (0, 3, 1, 2))  # back to NCHW


# ----------------------------------------------------------------------------
# References
# ----------------------------------------------------------------------------
def resblock_reference(x, p, *, eps=1e-5):
    """Pure-JAX f32 reference (PyTorch eval-mode semantics)."""
    def conv(x, w, b):
        y = lax.conv_general_dilated(
            x, w, window_strides=(1, 1), padding=((1, 1), (1, 1)),
            dimension_numbers=("NCHW", "OIHW", "NCHW"))
        return y + b[None, :, None, None]

    def bn(x, g, be, m, v):
        return (g[None, :, None, None] * (x - m[None, :, None, None])
                / jnp.sqrt(v[None, :, None, None] + eps)
                + be[None, :, None, None])

    y = jax.nn.relu(bn(conv(x, p["w1"], p["b1"]), p["g1"], p["be1"], p["m1"], p["v1"]))
    y = bn(conv(y, p["w2"], p["b2"]), p["g2"], p["be2"], p["m2"], p["v2"])
    return jax.nn.relu(y + x)


def resblock_reference_bf16(x_nchw, params, *, eps=1e-5):
    """XLA reference matching the kernel's numerics (same folded bf16 weights,
    bf16 conv inputs, f32 accumulation, f32 residual).  Only summation order
    differs from the Pallas kernel, so the comparison can be tight."""
    N, C, H, W = x_nchw.shape
    w1, sh1, w2, sh2 = _fold_params(params, C, eps)
    x = jnp.transpose(x_nchw, (0, 2, 3, 1)).astype(jnp.float32)   # NHWC

    def conv(a_f32, w_mat):
        w_hwio = w_mat.reshape(3, 3, C, C)            # (ky, kx, Cin, Cout)
        return lax.conv_general_dilated(
            a_f32.astype(jnp.bfloat16), w_hwio,
            window_strides=(1, 1), padding=((1, 1), (1, 1)),
            dimension_numbers=("NHWC", "HWIO", "NHWC"),
            preferred_element_type=jnp.float32)

    y1 = jax.nn.relu(conv(x, w1) + sh1[None, None, None, :])
    y2 = conv(y1, w2) + sh2[None, None, None, :]
    out = jax.nn.relu(y2 + x)
    return jnp.transpose(out, (0, 3, 1, 2))


# ----------------------------------------------------------------------------
# Demo / self-test
# ----------------------------------------------------------------------------
if __name__ == "__main__":
    # Channels fixed at 256 by the module; 8x8 board; batch 4 so the wrapper picks
    # nb=2 (M=128) and a 2-step "parallel" grid.
    N, C, H, W = 4, 256, 8, 8
    key = jax.random.PRNGKey(0)
    ks = jax.random.split(key, 13)

    x = jax.random.normal(ks[0], (N, C, H, W), jnp.float32)

    def make_branch(k_w, k_b, k_g, k_be, k_m, k_v):
        return dict(
            w=0.05 * jax.random.normal(k_w, (C, C, 3, 3), jnp.float32),
            b=0.05 * jax.random.normal(k_b, (C,), jnp.float32),
            g=1.0 + 0.1 * jax.random.normal(k_g, (C,), jnp.float32),
            be=0.1 * jax.random.normal(k_be, (C,), jnp.float32),
            m=0.1 * jax.random.normal(k_m, (C,), jnp.float32),
            v=0.5 + jnp.abs(jax.random.normal(k_v, (C,), jnp.float32)),
        )

    b1 = make_branch(*ks[1:7])
    b2 = make_branch(*ks[7:13])
    params = {
        "w1": b1["w"], "b1": b1["b"], "g1": b1["g"], "be1": b1["be"], "m1": b1["m"], "v1": b1["v"],
        "w2": b2["w"], "b2": b2["b"], "g2": b2["g"], "be2": b2["be"], "m2": b2["m"], "v2": b2["v"],
    }

    out = jax.block_until_ready(resblock_forward(x, params))
    assert out.shape == (N, C, H, W) and out.dtype == jnp.float32

    # (a) Tight structural check: identical quantization points as the kernel, so
    #     any roll/mask/tap-ordering/BlockSpec bug would blow way past this bound.
    ref_bf16 = jax.block_until_ready(resblock_reference_bf16(x, params))
    err_bf16 = float(jnp.max(jnp.abs(out - ref_bf16)))
    assert err_bf16 < 3e-2, f"bf16-matched reference mismatch: {err_bf16}"

    # (b) Semantic check vs the pure-f32 PyTorch eval-mode reference; tolerance is
    #     sized for bf16 MXU inputs through two chained K=2304 convolutions.
    ref_f32 = jax.block_until_ready(resblock_reference(x, params))
    err_f32 = float(jnp.max(jnp.abs(out - ref_f32)))
    assert jnp.allclose(out, ref_f32, rtol=2e-2, atol=1.5e-1), err_f32

    print("KERNEL_OK")
</pallas_src>

<mosaic_0001>
module attributes {stable_mosaic.version = 11 : i64} {
  func.func @_resblock_kernel(%arg0: i32, %arg1: memref<2x8x8x256xf32, #tpu.memory_space<vmem>>, %arg2: memref<2304x256xbf16, #tpu.memory_space<vmem>>, %arg3: memref<1x256xf32, #tpu.memory_space<vmem>>, %arg4: memref<2304x256xbf16, #tpu.memory_space<vmem>>, %arg5: memref<1x256xf32, #tpu.memory_space<vmem>>, %arg6: memref<2x8x8x256xf32, #tpu.memory_space<vmem>>, %arg7: memref<2x10x8x256xf32, #tpu.memory_space<vmem>>, %arg8: memref<128x2304xbf16, #tpu.memory_space<vmem>>) attributes {dimension_semantics = [#tpu.dimension_semantics<parallel>], iteration_bounds = array<i64: 2>, scalar_prefetch = 0 : i64, scratch_operands = 2 : i64, tpu.core_type = #tpu.core_type<tc>, window_params = [{transform_indices = @transform_0, window_bounds = array<i64: 2, 8, 8, 256>}, {pipeline_mode = #tpu.pipeline_mode<synchronous>, transform_indices = @transform_1, window_bounds = array<i64: 2304, 256>}, {pipeline_mode = #tpu.pipeline_mode<synchronous>, transform_indices = @transform_2, window_bounds = array<i64: 1, 256>}, {pipeline_mode = #tpu.pipeline_mode<synchronous>, transform_indices = @transform_3, window_bounds = array<i64: 2304, 256>}, {pipeline_mode = #tpu.pipeline_mode<synchronous>, transform_indices = @transform_4, window_bounds = array<i64: 1, 256>}, {transform_indices = @transform_5, window_bounds = array<i64: 2, 8, 8, 256>}]} {
    %cst = arith.constant 0.000000e+00 : f32
    %0 = vector.broadcast %cst : f32 to vector<2x1x8x256xf32>
    %c0 = arith.constant 0 : index
    %c0_0 = arith.constant 0 : index
    %c0_1 = arith.constant 0 : index
    %c0_2 = arith.constant 0 : index
    %1 = vector.load %arg7[%c0, %c0_0, %c0_1, %c0_2] : memref<2x10x8x256xf32, #tpu.memory_space<vmem>>, vector<2x1x8x256xf32>
    tpu.vector_store %arg7[%c0, %c0_0, %c0_1, %c0_2], %0 {strides = array<i32>} : memref<2x10x8x256xf32, #tpu.memory_space<vmem>>, vector<2x1x8x256xf32>,
    %c0_3 = arith.constant 0 : index
    %c9 = arith.constant 9 : index
    %c0_4 = arith.constant 0 : index
    %c0_5 = arith.constant 0 : index
    %2 = vector.load %arg7[%c0_3, %c9, %c0_4, %c0_5] : memref<2x10x8x256xf32, #tpu.memory_space<vmem>>, vector<2x1x8x256xf32>
    tpu.vector_store %arg7[%c0_3, %c9, %c0_4, %c0_5], %0 {strides = array<i32>} : memref<2x10x8x256xf32, #tpu.memory_space<vmem>>, vector<2x1x8x256xf32>,
    %3 = tpu.iota {dimensions = array<i32: 2>} : vector<1x1x8x256xi32>
    %c0_i32 = arith.constant 0 : i32
    %4 = vector.broadcast %c0_i32 : i32 to vector<1x1x8x256xi32>
    %5 = arith.cmpi ne, %3, %4 : vector<1x1x8x256xi32>
    %c7_i32 = arith.constant 7 : i32
    %6 = vector.broadcast %c7_i32 : i32 to vector<1x1x8x256xi32>
    %7 = arith.cmpi ne, %3, %6 : vector<1x1x8x256xi32>
    %c0_6 = arith.constant 0 : index
    %c0_7 = arith.constant 0 : index
    %c0_8 = arith.constant 0 : index
    %c0_9 = arith.constant 0 : index
    %8 = vector.load %arg1[%c0_6, %c0_7, %c0_8, %c0_9] : memref<2x8x8x256xf32, #tpu.memory_space<vmem>>, vector<2x8x8x256xf32>
    %c0_10 = arith.constant 0 : index
    %c1 = arith.constant 1 : index
    %c0_11 = arith.constant 0 : index
    %c0_12 = arith.constant 0 : index
    %9 = vector.load %arg7[%c0_10, %c1, %c0_11, %c0_12] : memref<2x10x8x256xf32, #tpu.memory_space<vmem>>, vector<2x8x8x256xf32>
    tpu.vector_store %arg7[%c0_10, %c1, %c0_11, %c0_12], %8 {strides = array<i32>} : memref<2x10x8x256xf32, #tpu.memory_space<vmem>>, vector<2x8x8x256xf32>,
    %c0_13 = arith.constant 0 : index
    %c0_14 = arith.constant 0 : index
    %c0_15 = arith.constant 0 : index
    %c0_16 = arith.constant 0 : index
    %10 = vector.load %arg7[%c0_13, %c0_14, %c0_15, %c0_16] : memref<2x10x8x256xf32, #tpu.memory_space<vmem>>, vector<2x8x8x256xf32>
    %c1_i32 = arith.constant 1 : i32
    %11 = tpu.dynamic_rotate %10 by %c1_i32 dim 2 : vector<2x8x8x256xf32>, i32 -> vector<2x8x8x256xf32>
    %cst_17 = arith.constant 0.000000e+00 : f32
    %12 = vector.shape_cast %5 : vector<1x1x8x256xi1> to vector<1x1x8x256xi1>
    %13 = vector.broadcast %12 : vector<1x1x8x256xi1> to vector<2x8x8x256xi1>
    %14 = vector.broadcast %cst_17 : f32 to vector<2x8x8x256xf32>
    %15 = arith.select %13, %11, %14 : vector<2x8x8x256xi1>, vector<2x8x8x256xf32>
    %16 = vector.shape_cast %15 : vector<2x8x8x256xf32> to vector<128x256xf32>
    %17 = arith.truncf %16 : vector<128x256xf32> to vector<128x256xbf16>
    %c0_18 = arith.constant 0 : index
    %c0_19 = arith.constant 0 : index
    %18 = vector.load %arg8[%c0_18, %c0_19] : memref<128x2304xbf16, #tpu.memory_space<vmem>>, vector<128x256xbf16>
    tpu.vector_store %arg8[%c0_18, %c0_19], %17 {strides = array<i32>} : memref<128x2304xbf16, #tpu.memory_space<vmem>>, vector<128x256xbf16>,
    %c0_20 = arith.constant 0 : index
    %c0_21 = arith.constant 0 : index
    %c0_22 = arith.constant 0 : index
    %c0_23 = arith.constant 0 : index
    %19 = vector.load %arg7[%c0_20, %c0_21, %c0_22, %c0_23] : memref<2x10x8x256xf32, #tpu.memory_space<vmem>>, vector<2x8x8x256xf32>
    %20 = vector.shape_cast %19 : vector<2x8x8x256xf32> to vector<128x256xf32>
    %21 = arith.truncf %20 : vector<128x256xf32> to vector<128x256xbf16>
    %c0_24 = arith.constant 0 : index
    %c256 = arith.constant 256 : index
    %22 = vector.load %arg8[%c0_24, %c256] : memref<128x2304xbf16, #tpu.memory_space<vmem>>, vector<128x256xbf16>
    tpu.vector_store %arg8[%c0_24, %c256], %21 {strides = array<i32>} : memref<128x2304xbf16, #tpu.memory_space<vmem>>, vector<128x256xbf16>,
    %c0_25 = arith.constant 0 : index
    %c0_26 = arith.constant 0 : index
    %c0_27 = arith.constant 0 : index
    %c0_28 = arith.constant 0 : index
    %23 = vector.load %arg7[%c0_25, %c0_26, %c0_27, %c0_28] : memref<2x10x8x256xf32, #tpu.memory_space<vmem>>, vector<2x8x8x256xf32>
    %c7_i32_29 = arith.constant 7 : i32
    %24 = tpu.dynamic_rotate %23 by %c7_i32_29 dim 2 : vector<2x8x8x256xf32>, i32 -> vector<2x8x8x256xf32>
    %cst_30 = arith.constant 0.000000e+00 : f32
    %25 = vector.shape_cast %7 : vector<1x1x8x256xi1> to vector<1x1x8x256xi1>
    %26 = vector.broadcast %25 : vector<1x1x8x256xi1> to vector<2x8x8x256xi1>
    %27 = vector.broadcast %cst_30 : f32 to vector<2x8x8x256xf32>
    %28 = arith.select %26, %24, %27 : vector<2x8x8x256xi1>, vector<2x8x8x256xf32>
    %29 = vector.shape_cast %28 : vector<2x8x8x256xf32> to vector<128x256xf32>
    %30 = arith.truncf %29 : vector<128x256xf32> to vector<128x256xbf16>
    %c0_31 = arith.constant 0 : index
    %c512 = arith.constant 512 : index
    %31 = vector.load %arg8[%c0_31, %c512] : memref<128x2304xbf16, #tpu.memory_space<vmem>>, vector<128x256xbf16>
    tpu.vector_store %arg8[%c0_31, %c512], %30 {strides = array<i32>} : memref<128x2304xbf16, #tpu.memory_space<vmem>>, vector<128x256xbf16>,
    %c0_32 = arith.constant 0 : index
    %c1_33 = arith.constant 1 : index
    %c0_34 = arith.constant 0 : index
    %c0_35 = arith.constant 0 : index
    %32 = vector.load %arg7[%c0_32, %c1_33, %c0_34, %c0_35] : memref<2x10x8x256xf32, #tpu.memory_space<vmem>>, vector<2x8x8x256xf32>
    %c1_i32_36 = arith.constant 1 : i32
    %33 = tpu.dynamic_rotate %32 by %c1_i32_36 dim 2 : vector<2x8x8x256xf32>, i32 -> vector<2x8x8x256xf32>
    %cst_37 = arith.constant 0.000000e+00 : f32
    %34 = vector.shape_cast %5 : vector<1x1x8x256xi1> to vector<1x1x8x256xi1>
    %35 = vector.broadcast %34 : vector<1x1x8x256xi1> to vector<2x8x8x256xi1>
    %36 = vector.broadcast %cst_37 : f32 to vector<2x8x8x256xf32>
    %37 = arith.select %35, %33, %36 : vector<2x8x8x256xi1>, vector<2x8x8x256xf32>
    %38 = vector.shape_cast %37 : vector<2x8x8x256xf32> to vector<128x256xf32>
    %39 = arith.truncf %38 : vector<128x256xf32> to vector<128x256xbf16>
    %c0_38 = arith.constant 0 : index
    %c768 = arith.constant 768 : index
    %40 = vector.load %arg8[%c0_38, %c768] : memref<128x2304xbf16, #tpu.memory_space<vmem>>, vector<128x256xbf16>
    tpu.vector_store %arg8[%c0_38, %c768], %39 {strides = array<i32>} : memref<128x2304xbf16, #tpu.memory_space<vmem>>, vector<128x256xbf16>,
    %c0_39 = arith.constant 0 : index
    %c1_40 = arith.constant 1 : index
    %c0_41 = arith.constant 0 : index
    %c0_42 = arith.constant 0 : index
    %41 = vector.load %arg7[%c0_39, %c1_40, %c0_41, %c0_42] : memref<2x10x8x256xf32, #tpu.memory_space<vmem>>, vector<2x8x8x256xf32>
    %42 = vector.shape_cast %41 : vector<2x8x8x256xf32> to vector<128x256xf32>
    %43 = arith.truncf %42 : vector<128x256xf32> to vector<128x256xbf16>
    %c0_43 = arith.constant 0 : index
    %c1024 = arith.constant 1024 : index
    %44 = vector.load %arg8[%c0_43, %c1024] : memref<128x2304xbf16, #tpu.memory_space<vmem>>, vector<128x256xbf16>
    tpu.vector_store %arg8[%c0_43, %c1024], %43 {strides = array<i32>} : memref<128x2304xbf16, #tpu.memory_space<vmem>>, vector<128x256xbf16>,
    %c0_44 = arith.constant 0 : index
    %c1_45 = arith.constant 1 : index
    %c0_46 = arith.constant 0 : index
    %c0_47 = arith.constant 0 : index
    %45 = vector.load %arg7[%c0_44, %c1_45, %c0_46, %c0_47] : memref<2x10x8x256xf32, #tpu.memory_space<vmem>>, vector<2x8x8x256xf32>
    %c7_i32_48 = arith.constant 7 : i32
    %46 = tpu.dynamic_rotate %45 by %c7_i32_48 dim 2 : vector<2x8x8x256xf32>, i32 -> vector<2x8x8x256xf32>
    %cst_49 = arith.constant 0.000000e+00 : f32
    %47 = vector.shape_cast %7 : vector<1x1x8x256xi1> to vector<1x1x8x256xi1>
    %48 = vector.broadcast %47 : vector<1x1x8x256xi1> to vector<2x8x8x256xi1>
    %49 = vector.broadcast %cst_49 : f32 to vector<2x8x8x256xf32>
    %50 = arith.select %48, %46, %49 : vector<2x8x8x256xi1>, vector<2x8x8x256xf32>
    %51 = vector.shape_cast %50 : vector<2x8x8x256xf32> to vector<128x256xf32>
    %52 = arith.truncf %51 : vector<128x256xf32> to vector<128x256xbf16>
    %c0_50 = arith.constant 0 : index
    %c1280 = arith.constant 1280 : index
    %53 = vector.load %arg8[%c0_50, %c1280] : memref<128x2304xbf16, #tpu.memory_space<vmem>>, vector<128x256xbf16>
    tpu.vector_store %arg8[%c0_50, %c1280], %52 {strides = array<i32>} : memref<128x2304xbf16, #tpu.memory_space<vmem>>, vector<128x256xbf16>,
    %c0_51 = arith.constant 0 : index
    %c2 = arith.constant 2 : index
    %c0_52 = arith.constant 0 : index
    %c0_53 = arith.constant 0 : index
    %54 = vector.load %arg7[%c0_51, %c2, %c0_52, %c0_53] : memref<2x10x8x256xf32, #tpu.memory_space<vmem>>, vector<2x8x8x256xf32>
    %c1_i32_54 = arith.constant 1 : i32
    %55 = tpu.dynamic_rotate %54 by %c1_i32_54 dim 2 : vector<2x8x8x256xf32>, i32 -> vector<2x8x8x256xf32>
    %cst_55 = arith.constant 0.000000e+00 : f32
    %56 = vector.shape_cast %5 : vector<1x1x8x256xi1> to vector<1x1x8x256xi1>
    %57 = vector.broadcast %56 : vector<1x1x8x256xi1> to vector<2x8x8x256xi1>
    %58 = vector.broadcast %cst_55 : f32 to vector<2x8x8x256xf32>
    %59 = arith.select %57, %55, %58 : vector<2x8x8x256xi1>, vector<2x8x8x256xf32>
    %60 = vector.shape_cast %59 : vector<2x8x8x256xf32> to vector<128x256xf32>
    %61 = arith.truncf %60 : vector<128x256xf32> to vector<128x256xbf16>
    %c0_56 = arith.constant 0 : index
    %c1536 = arith.constant 1536 : index
    %62 = vector.load %arg8[%c0_56, %c1536] : memref<128x2304xbf16, #tpu.memory_space<vmem>>, vector<128x256xbf16>
    tpu.vector_store %arg8[%c0_56, %c1536], %61 {strides = array<i32>} : memref<128x2304xbf16, #tpu.memory_space<vmem>>, vector<128x256xbf16>,
    %c0_57 = arith.constant 0 : index
    %c2_58 = arith.constant 2 : index
    %c0_59 = arith.constant 0 : index
    %c0_60 = arith.constant 0 : index
    %63 = vector.load %arg7[%c0_57, %c2_58, %c0_59, %c0_60] : memref<2x10x8x256xf32, #tpu.memory_space<vmem>>, vector<2x8x8x256xf32>
    %64 = vector.shape_cast %63 : vector<2x8x8x256xf32> to vector<128x256xf32>
    %65 = arith.truncf %64 : vector<128x256xf32> to vector<128x256xbf16>
    %c0_61 = arith.constant 0 : index
    %c1792 = arith.constant 1792 : index
    %66 = vector.load %arg8[%c0_61, %c1792] : memref<128x2304xbf16, #tpu.memory_space<vmem>>, vector<128x256xbf16>
    tpu.vector_store %arg8[%c0_61, %c1792], %65 {strides = array<i32>} : memref<128x2304xbf16, #tpu.memory_space<vmem>>, vector<128x256xbf16>,
    %c0_62 = arith.constant 0 : index
    %c2_63 = arith.constant 2 : index
    %c0_64 = arith.constant 0 : index
    %c0_65 = arith.constant 0 : index
    %67 = vector.load %arg7[%c0_62, %c2_63, %c0_64, %c0_65] : memref<2x10x8x256xf32, #tpu.memory_space<vmem>>, vector<2x8x8x256xf32>
    %c7_i32_66 = arith.constant 7 : i32
    %68 = tpu.dynamic_rotate %67 by %c7_i32_66 dim 2 : vector<2x8x8x256xf32>, i32 -> vector<2x8x8x256xf32>
    %cst_67 = arith.constant 0.000000e+00 : f32
    %69 = vector.shape_cast %7 : vector<1x1x8x256xi1> to vector<1x1x8x256xi1>
    %70 = vector.broadcast %69 : vector<1x1x8x256xi1> to vector<2x8x8x256xi1>
    %71 = vector.broadcast %cst_67 : f32 to vector<2x8x8x256xf32>
    %72 = arith.select %70, %68, %71 : vector<2x8x8x256xi1>, vector<2x8x8x256xf32>
    %73 = vector.shape_cast %72 : vector<2x8x8x256xf32> to vector<128x256xf32>
    %74 = arith.truncf %73 : vector<128x256xf32> to vector<128x256xbf16>
    %c0_68 = arith.constant 0 : index
    %c2048 = arith.constant 2048 : index
    %75 = vector.load %arg8[%c0_68, %c2048] : memref<128x2304xbf16, #tpu.memory_space<vmem>>, vector<128x256xbf16>
    tpu.vector_store %arg8[%c0_68, %c2048], %74 {strides = array<i32>} : memref<128x2304xbf16, #tpu.memory_space<vmem>>, vector<128x256xbf16>,
    %c0_69 = arith.constant 0 : index
    %c0_70 = arith.constant 0 : index
    %76 = vector.load %arg8[%c0_69, %c0_70] : memref<128x2304xbf16, #tpu.memory_space<vmem>>, vector<128x2304xbf16>
    %c0_71 = arith.constant 0 : index
    %c0_72 = arith.constant 0 : index
    %77 = vector.load %arg2[%c0_71, %c0_72] : memref<2304x256xbf16, #tpu.memory_space<vmem>>, vector<2304x256xbf16>
    %cst_73 = arith.constant dense<0.000000e+00> : vector<128x256xf32>
    %78 = tpu.matmul %76, %77, %cst_73 {dimension_numbers = #tpu.dot_dimension_numbers<[1], [0], [0], [1], [0, 0, 1, 1], [], []>} : vector<128x2304xbf16>, vector<2304x256xbf16>, vector<128x256xf32> -> vector<128x256xf32>
    %c0_74 = arith.constant 0 : index
    %c0_75 = arith.constant 0 : index
    %79 = vector.load %arg3[%c0_74, %c0_75] : memref<1x256xf32, #tpu.memory_space<vmem>>, vector<1x256xf32>
    %80 = vector.broadcast %79 : vector<1x256xf32> to vector<128x256xf32>
    %81 = arith.addf %78, %80 : vector<128x256xf32>
    %cst_76 = arith.constant 0.000000e+00 : f32
    %82 = vector.broadcast %cst_76 : f32 to vector<128x256xf32>
    %83 = arith.maximumf %81, %82 : vector<128x256xf32>
    %84 = vector.shape_cast %83 : vector<128x256xf32> to vector<2x8x8x256xf32>
    %c0_77 = arith.constant 0 : index
    %c1_78 = arith.constant 1 : index
    %c0_79 = arith.constant 0 : index
    %c0_80 = arith.constant 0 : index
    %85 = vector.load %arg7[%c0_77, %c1_78, %c0_79, %c0_80] : memref<2x10x8x256xf32, #tpu.memory_space<vmem>>, vector<2x8x8x256xf32>
    tpu.vector_store %arg7[%c0_77, %c1_78, %c0_79, %c0_80], %84 {strides = array<i32>} : memref<2x10x8x256xf32, #tpu.memory_space<vmem>>, vector<2x8x8x256xf32>,
    %c0_81 = arith.constant 0 : index
    %c0_82 = arith.constant 0 : index
    %c0_83 = arith.constant 0 : index
    %c0_84 = arith.constant 0 : index
    %86 = vector.load %arg7[%c0_81, %c0_82, %c0_83, %c0_84] : memref<2x10x8x256xf32, #tpu.memory_space<vmem>>, vector<2x8x8x256xf32>
    %c1_i32_85 = arith.constant 1 : i32
    %87 = tpu.dynamic_rotate %86 by %c1_i32_85 dim 2 : vector<2x8x8x256xf32>, i32 -> vector<2x8x8x256xf32>
    %cst_86 = arith.constant 0.000000e+00 : f32
    %88 = vector.shape_cast %5 : vector<1x1x8x256xi1> to vector<1x1x8x256xi1>
    %89 = vector.broadcast %88 : vector<1x1x8x256xi1> to vector<2x8x8x256xi1>
    %90 = vector.broadcast %cst_86 : f32 to vector<2x8x8x256xf32>
    %91 = arith.select %89, %87, %90 : vector<2x8x8x256xi1>, vector<2x8x8x256xf32>
    %92 = vector.shape_cast %91 : vector<2x8x8x256xf32> to vector<128x256xf32>
    %93 = arith.truncf %92 : vector<128x256xf32> to vector<128x256xbf16>
    %c0_87 = arith.constant 0 : index
    %c0_88 = arith.constant 0 : index
    %94 = vector.load %arg8[%c0_87, %c0_88] : memref<128x2304xbf16, #tpu.memory_space<vmem>>, vector<128x256xbf16>
    tpu.vector_store %arg8[%c0_87, %c0_88], %93 {strides = array<i32>} : memref<128x2304xbf16, #tpu.memory_space<vmem>>, vector<128x256xbf16>,
    %c0_89 = arith.constant 0 : index
    %c0_90 = arith.constant 0 : index
    %c0_91 = arith.constant 0 : index
    %c0_92 = arith.constant 0 : index
    %95 = vector.load %arg7[%c0_89, %c0_90, %c0_91, %c0_92] : memref<2x10x8x256xf32, #tpu.memory_space<vmem>>, vector<2x8x8x256xf32>
    %96 = vector.shape_cast %95 : vector<2x8x8x256xf32> to vector<128x256xf32>
    %97 = arith.truncf %96 : vector<128x256xf32> to vector<128x256xbf16>
    %c0_93 = arith.constant 0 : index
    %c256_94 = arith.constant 256 : index
    %98 = vector.load %arg8[%c0_93, %c256_94] : memref<128x2304xbf16, #tpu.memory_space<vmem>>, vector<128x256xbf16>
    tpu.vector_store %arg8[%c0_93, %c256_94], %97 {strides = array<i32>} : memref<128x2304xbf16, #tpu.memory_space<vmem>>, vector<128x256xbf16>,
    %c0_95 = arith.constant 0 : index
    %c0_96 = arith.constant 0 : index
    %c0_97 = arith.constant 0 : index
    %c0_98 = arith.constant 0 : index
    %99 = vector.load %arg7[%c0_95, %c0_96, %c0_97, %c0_98] : memref<2x10x8x256xf32, #tpu.memory_space<vmem>>, vector<2x8x8x256xf32>
    %c7_i32_99 = arith.constant 7 : i32
    %100 = tpu.dynamic_rotate %99 by %c7_i32_99 dim 2 : vector<2x8x8x256xf32>, i32 -> vector<2x8x8x256xf32>
    %cst_100 = arith.constant 0.000000e+00 : f32
    %101 = vector.shape_cast %7 : vector<1x1x8x256xi1> to vector<1x1x8x256xi1>
    %102 = vector.broadcast %101 : vector<1x1x8x256xi1> to vector<2x8x8x256xi1>
    %103 = vector.broadcast %cst_100 : f32 to vector<2x8x8x256xf32>
    %104 = arith.select %102, %100, %103 : vector<2x8x8x256xi1>, vector<2x8x8x256xf32>
    %105 = vector.shape_cast %104 : vector<2x8x8x256xf32> to vector<128x256xf32>
    %106 = arith.truncf %105 : vector<128x256xf32> to vector<128x256xbf16>
    %c0_101 = arith.constant 0 : index
    %c512_102 = arith.constant 512 : index
    %107 = vector.load %arg8[%c0_101, %c512_102] : memref<128x2304xbf16, #tpu.memory_space<vmem>>, vector<128x256xbf16>
    tpu.vector_store %arg8[%c0_101, %c512_102], %106 {strides = array<i32>} : memref<128x2304xbf16, #tpu.memory_space<vmem>>, vector<128x256xbf16>,
    %c0_103 = arith.constant 0 : index
    %c1_104 = arith.constant 1 : index
    %c0_105 = arith.constant 0 : index
    %c0_106 = arith.constant 0 : index
    %108 = vector.load %arg7[%c0_103, %c1_104, %c0_105, %c0_106] : memref<2x10x8x256xf32, #tpu.memory_space<vmem>>, vector<2x8x8x256xf32>
    %c1_i32_107 = arith.constant 1 : i32
    %109 = tpu.dynamic_rotate %108 by %c1_i32_107 dim 2 : vector<2x8x8x256xf32>, i32 -> vector<2x8x8x256xf32>
    %cst_108 = arith.constant 0.000000e+00 : f32
    %110 = vector.shape_cast %5 : vector<1x1x8x256xi1> to vector<1x1x8x256xi1>
    %111 = vector.broadcast %110 : vector<1x1x8x256xi1> to vector<2x8x8x256xi1>
    %112 = vector.broadcast %cst_108 : f32 to vector<2x8x8x256xf32>
    %113 = arith.select %111, %109, %112 : vector<2x8x8x256xi1>, vector<2x8x8x256xf32>
    %114 = vector.shape_cast %113 : vector<2x8x8x256xf32> to vector<128x256xf32>
    %115 = arith.truncf %114 : vector<128x256xf32> to vector<128x256xbf16>
    %c0_109 = arith.constant 0 : index
    %c768_110 = arith.constant 768 : index
    %116 = vector.load %arg8[%c0_109, %c768_110] : memref<128x2304xbf16, #tpu.memory_space<vmem>>, vector<128x256xbf16>
    tpu.vector_store %arg8[%c0_109, %c768_110], %115 {strides = array<i32>} : memref<128x2304xbf16, #tpu.memory_space<vmem>>, vector<128x256xbf16>,
    %c0_111 = arith.constant 0 : index
    %c1_112 = arith.constant 1 : index
    %c0_113 = arith.constant 0 : index
    %c0_114 = arith.constant 0 : index
    %117 = vector.load %arg7[%c0_111, %c1_112, %c0_113, %c0_114] : memref<2x10x8x256xf32, #tpu.memory_space<vmem>>, vector<2x8x8x256xf32>
    %118 = vector.shape_cast %117 : vector<2x8x8x256xf32> to vector<128x256xf32>
    %119 = arith.truncf %118 : vector<128x256xf32> to vector<128x256xbf16>
    %c0_115 = arith.constant 0 : index
    %c1024_116 = arith.constant 1024 : index
    %120 = vector.load %arg8[%c0_115, %c1024_116] : memref<128x2304xbf16, #tpu.memory_space<vmem>>, vector<128x256xbf16>
    tpu.vector_store %arg8[%c0_115, %c1024_116], %119 {strides = array<i32>} : memref<128x2304xbf16, #tpu.memory_space<vmem>>, vector<128x256xbf16>,
    %c0_117 = arith.constant 0 : index
    %c1_118 = arith.constant 1 : index
    %c0_119 = arith.constant 0 : index
    %c0_120 = arith.constant 0 : index
    %121 = vector.load %arg7[%c0_117, %c1_118, %c0_119, %c0_120] : memref<2x10x8x256xf32, #tpu.memory_space<vmem>>, vector<2x8x8x256xf32>
    %c7_i32_121 = arith.constant 7 : i32
    %122 = tpu.dynamic_rotate %121 by %c7_i32_121 dim 2 : vector<2x8x8x256xf32>, i32 -> vector<2x8x8x256xf32>
    %cst_122 = arith.constant 0.000000e+00 : f32
    %123 = vector.shape_cast %7 : vector<1x1x8x256xi1> to vector<1x1x8x256xi1>
    %124 = vector.broadcast %123 : vector<1x1x8x256xi1> to vector<2x8x8x256xi1>
    %125 = vector.broadcast %cst_122 : f32 to vector<2x8x8x256xf32>
    %126 = arith.select %124, %122, %125 : vector<2x8x8x256xi1>, vector<2x8x8x256xf32>
    %127 = vector.shape_cast %126 : vector<2x8x8x256xf32> to vector<128x256xf32>
    %128 = arith.truncf %127 : vector<128x256xf32> to vector<128x256xbf16>
    %c0_123 = arith.constant 0 : index
    %c1280_124 = arith.constant 1280 : index
    %129 = vector.load %arg8[%c0_123, %c1280_124] : memref<128x2304xbf16, #tpu.memory_space<vmem>>, vector<128x256xbf16>
    tpu.vector_store %arg8[%c0_123, %c1280_124], %128 {strides = array<i32>} : memref<128x2304xbf16, #tpu.memory_space<vmem>>, vector<128x256xbf16>,
    %c0_125 = arith.constant 0 : index
    %c2_126 = arith.constant 2 : index
    %c0_127 = arith.constant 0 : index
    %c0_128 = arith.constant 0 : index
    %130 = vector.load %arg7[%c0_125, %c2_126, %c0_127, %c0_128] : memref<2x10x8x256xf32, #tpu.memory_space<vmem>>, vector<2x8x8x256xf32>
    %c1_i32_129 = arith.constant 1 : i32
    %131 = tpu.dynamic_rotate %130 by %c1_i32_129 dim 2 : vector<2x8x8x256xf32>, i32 -> vector<2x8x8x256xf32>
    %cst_130 = arith.constant 0.000000e+00 : f32
    %132 = vector.shape_cast %5 : vector<1x1x8x256xi1> to vector<1x1x8x256xi1>
    %133 = vector.broadcast %132 : vector<1x1x8x256xi1> to vector<2x8x8x256xi1>
    %134 = vector.broadcast %cst_130 : f32 to vector<2x8x8x256xf32>
    %135 = arith.select %133, %131, %134 : vector<2x8x8x256xi1>, vector<2x8x8x256xf32>
    %136 = vector.shape_cast %135 : vector<2x8x8x256xf32> to vector<128x256xf32>
    %137 = arith.truncf %136 : vector<128x256xf32> to vector<128x256xbf16>
    %c0_131 = arith.constant 0 : index
    %c1536_132 = arith.constant 1536 : index
    %138 = vector.load %arg8[%c0_131, %c1536_132] : memref<128x2304xbf16, #tpu.memory_space<vmem>>, vector<128x256xbf16>
    tpu.vector_store %arg8[%c0_131, %c1536_132], %137 {strides = array<i32>} : memref<128x2304xbf16, #tpu.memory_space<vmem>>, vector<128x256xbf16>,
    %c0_133 = arith.constant 0 : index
    %c2_134 = arith.constant 2 : index
    %c0_135 = arith.constant 0 : index
    %c0_136 = arith.constant 0 : index
    %139 = vector.load %arg7[%c0_133, %c2_134, %c0_135, %c0_136] : memref<2x10x8x256xf32, #tpu.memory_space<vmem>>, vector<2x8x8x256xf32>
    %140 = vector.shape_cast %139 : vector<2x8x8x256xf32> to vector<128x256xf32>
    %141 = arith.truncf %140 : vector<128x256xf32> to vector<128x256xbf16>
    %c0_137 = arith.constant 0 : index
    %c1792_138 = arith.constant 1792 : index
    %142 = vector.load %arg8[%c0_137, %c1792_138] : memref<128x2304xbf16, #tpu.memory_space<vmem>>, vector<128x256xbf16>
    tpu.vector_store %arg8[%c0_137, %c1792_138], %141 {strides = array<i32>} : memref<128x2304xbf16, #tpu.memory_space<vmem>>, vector<128x256xbf16>,
    %c0_139 = arith.constant 0 : index
    %c2_140 = arith.constant 2 : index
    %c0_141 = arith.constant 0 : index
    %c0_142 = arith.constant 0 : index
    %143 = vector.load %arg7[%c0_139, %c2_140, %c0_141, %c0_142] : memref<2x10x8x256xf32, #tpu.memory_space<vmem>>, vector<2x8x8x256xf32>
    %c7_i32_143 = arith.constant 7 : i32
    %144 = tpu.dynamic_rotate %143 by %c7_i32_143 dim 2 : vector<2x8x8x256xf32>, i32 -> vector<2x8x8x256xf32>
    %cst_144 = arith.constant 0.000000e+00 : f32
    %145 = vector.shape_cast %7 : vector<1x1x8x256xi1> to vector<1x1x8x256xi1>
    %146 = vector.broadcast %145 : vector<1x1x8x256xi1> to vector<2x8x8x256xi1>
    %147 = vector.broadcast %cst_144 : f32 to vector<2x8x8x256xf32>
    %148 = arith.select %146, %144, %147 : vector<2x8x8x256xi1>, vector<2x8x8x256xf32>
    %149 = vector.shape_cast %148 : vector<2x8x8x256xf32> to vector<128x256xf32>
    %150 = arith.truncf %149 : vector<128x256xf32> to vector<128x256xbf16>
    %c0_145 = arith.constant 0 : index
    %c2048_146 = arith.constant 2048 : index
    %151 = vector.load %arg8[%c0_145, %c2048_146] : memref<128x2304xbf16, #tpu.memory_space<vmem>>, vector<128x256xbf16>
    tpu.vector_store %arg8[%c0_145, %c2048_146], %150 {strides = array<i32>} : memref<128x2304xbf16, #tpu.memory_space<vmem>>, vector<128x256xbf16>,
    %c0_147 = arith.constant 0 : index
    %c0_148 = arith.constant 0 : index
    %152 = vector.load %arg8[%c0_147, %c0_148] : memref<128x2304xbf16, #tpu.memory_space<vmem>>, vector<128x2304xbf16>
    %c0_149 = arith.constant 0 : index
    %c0_150 = arith.constant 0 : index
    %153 = vector.load %arg4[%c0_149, %c0_150] : memref<2304x256xbf16, #tpu.memory_space<vmem>>, vector<2304x256xbf16>
    %cst_151 = arith.constant dense<0.000000e+00> : vector<128x256xf32>
    %154 = tpu.matmul %152, %153, %cst_151 {dimension_numbers = #tpu.dot_dimension_numbers<[1], [0], [0], [1], [0, 0, 1, 1], [], []>} : vector<128x2304xbf16>, vector<2304x256xbf16>, vector<128x256xf32> -> vector<128x256xf32>
    %c0_152 = arith.constant 0 : index
    %c0_153 = arith.constant 0 : index
    %155 = vector.load %arg5[%c0_152, %c0_153] : memref<1x256xf32, #tpu.memory_space<vmem>>, vector<1x256xf32>
    %156 = vector.broadcast %155 : vector<1x256xf32> to vector<128x256xf32>
    %157 = arith.addf %154, %156 : vector<128x256xf32>
    %c0_154 = arith.constant 0 : index
    %c0_155 = arith.constant 0 : index
    %c0_156 = arith.constant 0 : index
    %c0_157 = arith.constant 0 : index
    %158 = vector.load %arg1[%c0_154, %c0_155, %c0_156, %c0_157] : memref<2x8x8x256xf32, #tpu.memory_space<vmem>>, vector<2x8x8x256xf32>
    %159 = vector.shape_cast %158 : vector<2x8x8x256xf32> to vector<128x256xf32>
    %160 = arith.addf %157, %159 : vector<128x256xf32>
    %cst_158 = arith.constant 0.000000e+00 : f32
    %161 = vector.broadcast %cst_158 : f32 to vector<128x256xf32>
    %162 = arith.maximumf %160, %161 : vector<128x256xf32>
    %163 = vector.shape_cast %162 : vector<128x256xf32> to vector<2x8x8x256xf32>
    %c0_159 = arith.constant 0 : index
    %c0_160 = arith.constant 0 : index
    %c0_161 = arith.constant 0 : index
    %c0_162 = arith.constant 0 : index
    %164 = vector.load %arg6[%c0_159, %c0_160, %c0_161, %c0_162] : memref<2x8x8x256xf32, #tpu.memory_space<vmem>>, vector<2x8x8x256xf32>
    tpu.vector_store %arg6[%c0_159, %c0_160, %c0_161, %c0_162], %163 {strides = array<i32>} : memref<2x8x8x256xf32, #tpu.memory_space<vmem>>, vector<2x8x8x256xf32>,
    return
  }
  func.func @transform_0(%arg0: i32) -> (i32, i32, i32, i32) {
    %c0_i32 = arith.constant 0 : i32
    %c0_i32_0 = arith.constant 0 : i32
    %c0_i32_1 = arith.constant 0 : i32
    %c0_i32_2 = arith.constant 0 : i32
    return %arg0, %c0_i32, %c0_i32_0, %c0_i32_1 : i32, i32, i32, i32
  }
  func.func @transform_1(%arg0: i32) -> (i32, i32) {
    %c0_i32 = arith.constant 0 : i32
    %c0_i32_0 = arith.constant 0 : i32
    %c0_i32_1 = arith.constant 0 : i32
    return %c0_i32, %c0_i32_0 : i32, i32
  }
  func.func @transform_2(%arg0: i32) -> (i32, i32) {
    %c0_i32 = arith.constant 0 : i32
    %c0_i32_0 = arith.constant 0 : i32
    %c0_i32_1 = arith.constant 0 : i32
    return %c0_i32, %c0_i32_0 : i32, i32
  }
  func.func @transform_3(%arg0: i32) -> (i32, i32) {
    %c0_i32 = arith.constant 0 : i32
    %c0_i32_0 = arith.constant 0 : i32
    %c0_i32_1 = arith.constant 0 : i32
    return %c0_i32, %c0_i32_0 : i32, i32
  }
  func.func @transform_4(%arg0: i32) -> (i32, i32) {
    %c0_i32 = arith.constant 0 : i32
    %c0_i32_0 = arith.constant 0 : i32
    %c0_i32_1 = arith.constant 0 : i32
    return %c0_i32, %c0_i32_0 : i32, i32
  }
  func.func @transform_5(%arg0: i32) -> (i32, i32, i32, i32) {
    %c0_i32 = arith.constant 0 : i32
    %c0_i32_0 = arith.constant 0 : i32
    %c0_i32_1 = arith.constant 0 : i32
    %c0_i32_2 = arith.constant 0 : i32
    return %arg0, %c0_i32, %c0_i32_0, %c0_i32_1 : i32, i32, i32, i32
  }
}

</mosaic_0001>

<llo_original>
// kernel: tpu_custom_call.1
$region0: #{tpu_custom_call.1}
  #allocation0 [shape = 'u32[]', space=smem, size = 0x4, offset = 0x4, fixed_abs, tag = 'smem constant byte address 0x4 - core index']
  #allocation1 [shape = 'u32[72,128]{1,0:T(1,128)}', space=vmem, size = 0x9000, scoped, tag = 'internal scratch']
  #allocation2 [shape = 'f32[2,10,8,256]{3,2,1,0:T(8,128)}', space=vmem, size = 0x28000, scoped, tag = 'scratch operand']
  #allocation3 [shape = 'bf16[128,2304]{1,0:T(8,128)(2,1)}', space=vmem, size = 0x90000, scoped, tag = 'scratch operand']
  %s0 = inlined_call_operand.hbm [shape: f32[4,8,8,256], index: 0, kind: input, shape index: {}]
  %s1 = inlined_call_operand.hbm [shape: bf16[2304,256], index: 1, kind: input, shape index: {}]
  %s2 = inlined_call_operand.hbm [shape: f32[1,256], index: 2, kind: input, shape index: {}]
  %s3 = inlined_call_operand.hbm [shape: bf16[2304,256], index: 3, kind: input, shape index: {}]
  %s4 = inlined_call_operand.hbm [shape: f32[1,256], index: 4, kind: input, shape index: {}]
  %s5 = inlined_call_operand.hbm [shape: f32[4,8,8,256], index: 5, kind: output, shape index: {}]
  %s6 = sld [smem:[#allocation0]]
  $region73: #{tpu_custom_call.1} parent=0
    _
  %s8 = ssub.s32 1, %s6
  %s9 = scalar_select 0, %s8, %s6
  $region1: #{tpu_custom_call.1} parent=0
    #allocation4 [shape = 'u8[262144]{0}', space=vmem, size = 0x40000, scoped, tag = 'input window, operand 0']
    #allocation5 [shape = 's32[2]{0}', space=sflag, size = 0x8, scoped, tag = 'scoped memory for tpu_custom_call.1']
    #allocation6 [shape = 's32[2]{0}', space=sflag, size = 0x8, scoped, tag = 'scoped memory for tpu_custom_call.1']
    #allocation7 [shape = 'u8[1179648]{0}', space=vmem, size = 0x120000, scoped, tag = 'input window, operand 1, single buffered']
    #allocation8 [shape = 's32[1]{0}', space=sflag, size = 0x4, scoped, tag = 'scoped memory for tpu_custom_call.1']
    #allocation9 [shape = 'u8[1024]{0}', space=vmem, size = 0x400, scoped, tag = 'input window, operand 2, single buffered']
    #allocation10 [shape = 'u8[1179648]{0}', space=vmem, size = 0x120000, scoped, tag = 'input window, operand 3, single buffered']
    #allocation11 [shape = 's32[1]{0}', space=sflag, size = 0x4, scoped, tag = 'scoped memory for tpu_custom_call.1']
    #allocation12 [shape = 'u8[1024]{0}', space=vmem, size = 0x400, scoped, tag = 'input window, operand 4, single buffered']
    #allocation13 [shape = 'u8[262144]{0}', space=vmem, size = 0x40000, scoped, tag = 'output window, operand 0']
    %10 = vsyncpa [#allocation5], 0
    %s11 = scalar_lea.sflag [#allocation5], 1
    %12 = vsyncpa %s11, 0
    %13 = vsyncpa [#allocation8], 0
    %14 = vsyncpa [#allocation11], 0
    %15 = vsyncpa [#allocation6], 0
    %s16 = scalar_lea.sflag [#allocation6], 1
    %17 = vsyncpa %s16, 0
    loop: start=0, step=1, limit=4
    $region2: #{tpu_custom_call.1} parent=1 // loop_pre_header
      _
    $region3: #{tpu_custom_call.1} parent=1 // loop_header
      %s19 = sphi 0, %s23
      %p20 = scmp.ge.s32.totalorder %s19, 4
      %s29 = sphi 0, %s31
      %s32 = sphi 0, %s29
      %s33 = sphi 0, %s32
      %s49 = sphi 0, %s33
      %s53 = sphi 0, %s53
      %s55 = sphi 0, %s53
      %s56 = sphi 0, %s55
      %s70 = sphi 0, %s56
      %s74 = sphi 0, %s74
      %s76 = sphi 0, %s74
      %s77 = sphi 0, %s76
      %s91 = sphi 0, %s77
      %s95 = sphi 0, %s95
      %s97 = sphi 0, %s95
      %s98 = sphi 0, %s97
      %s112 = sphi 0, %s98
      %s116 = sphi 0, %s116
      %s118 = sphi 0, %s116
      %s119 = sphi 0, %s118
      %s133 = sphi 0, %s119
      %s139 = sphi 0, %s141
      %s142 = sphi 0, %s139
      %s143 = sphi 0, %s142
      %s159 = sphi 0, %s143
    $region4: #{tpu_custom_call.1} parent=1 // loop_header_branch
      %22 = sbr.rel (%p20) target = $region8
    $region5: #{tpu_custom_call.1} parent=1 // loop_body
      %s24 = ssub.s32 %s19, 1
      %s25 = ssub.s32 %s19, 2
      %s26 = sadd.s32 %s19, 1
      %s27 = ssub.s32 %s19, %s26
      %p28 = scmp.eq.s32.totalorder %s27, 0
      %s30 = sadd.s32 %s29, 1
      %s31 = scalar_select %p28, %s29, %s30
      %p34 = pneg %p28
      %p35 = scmp.eq.s32.totalorder %s19, 1
      %p36 = por %p34, %p35
      %p37 = scmp.ne.s32.totalorder %s29, %s32
      %p38 = scmp.eq.s32.totalorder %s19, 0
      %p39 = por %p37, %p38
      %p40 = scmp.ne.s32.totalorder %s29, %s32
      %p41 = scmp.eq.s32.totalorder %s24, 1
      %p42 = por %p40, %p41
      %p43 = scmp.ne.s32.totalorder %s32, %s33
      %p44 = scmp.eq.s32.totalorder %s24, 0
      %p45 = por %p43, %p44
      %p46 = scmp.ne.s32.totalorder %s32, %s33
      %p47 = scmp.eq.s32.totalorder %s25, 1
      %p48 = por %p46, %p47
      %p50 = scmp.ne.s32.totalorder %s33, %s49
      %p51 = scmp.eq.s32.totalorder %s25, 0
      %p52 = por %p50, %p51
      %s54 = sadd.s32 %s53, 1
      %p57 = scmp.eq.s32.totalorder %s19, 1
      %p58 = scmp.ne.s32.totalorder %s53, %s55
      %p59 = scmp.eq.s32.totalorder %s19, 0
      %p60 = por %p58, %p59
      %p61 = scmp.ne.s32.totalorder %s53, %s55
      %p62 = scmp.eq.s32.totalorder %s24, 1
      %p63 = por %p61, %p62
      %p64 = scmp.ne.s32.totalorder %s55, %s56
      %p65 = scmp.eq.s32.totalorder %s24, 0
      %p66 = por %p64, %p65
      %p67 = scmp.ne.s32.totalorder %s55, %s56
      %p68 = scmp.eq.s32.totalorder %s25, 1
      %p69 = por %p67, %p68
      %p71 = scmp.ne.s32.totalorder %s56, %s70
      %p72 = scmp.eq.s32.totalorder %s25, 0
      %p73 = por %p71, %p72
      %s75 = sadd.s32 %s74, 1
      %p78 = scmp.eq.s32.totalorder %s19, 1
      %p79 = scmp.ne.s32.totalorder %s74, %s76
      %p80 = scmp.eq.s32.totalorder %s19, 0
      %p81 = por %p79, %p80
      %p82 = scmp.ne.s32.totalorder %s74, %s76
      %p83 = scmp.eq.s32.totalorder %s24, 1
      %p84 = por %p82, %p83
      %p85 = scmp.ne.s32.totalorder %s76, %s77
      %p86 = scmp.eq.s32.totalorder %s24, 0
      %p87 = por %p85, %p86
      %p88 = scmp.ne.s32.totalorder %s76, %s77
      %p89 = scmp.eq.s32.totalorder %s25, 1
      %p90 = por %p88, %p89
      %p92 = scmp.ne.s32.totalorder %s77, %s91
      %p93 = scmp.eq.s32.totalorder %s25, 0
      %p94 = por %p92, %p93
      %s96 = sadd.s32 %s95, 1
      %p99 = scmp.eq.s32.totalorder %s19, 1
      %p100 = scmp.ne.s32.totalorder %s95, %s97
      %p101 = scmp.eq.s32.totalorder %s19, 0
      %p102 = por %p100, %p101
      %p103 = scmp.ne.s32.totalorder %s95, %s97
      %p104 = scmp.eq.s32.totalorder %s24, 1
      %p105 = por %p103, %p104
      %p106 = scmp.ne.s32.totalorder %s97, %s98
      %p107 = scmp.eq.s32.totalorder %s24, 0
      %p108 = por %p106, %p107
      %p109 = scmp.ne.s32.totalorder %s97, %s98
      %p110 = scmp.eq.s32.totalorder %s25, 1
      %p111 = por %p109, %p110
      %p113 = scmp.ne.s32.totalorder %s98, %s112
      %p114 = scmp.eq.s32.totalorder %s25, 0
      %p115 = por %p113, %p114
      %s117 = sadd.s32 %s116, 1
      %p120 = scmp.eq.s32.totalorder %s19, 1
      %p121 = scmp.ne.s32.totalorder %s116, %s118
      %p122 = scmp.eq.s32.totalorder %s19, 0
      %p123 = por %p121, %p122
      %p124 = scmp.ne.s32.totalorder %s116, %s118
      %p125 = scmp.eq.s32.totalorder %s24, 1
      %p126 = por %p124, %p125
      %p127 = scmp.ne.s32.totalorder %s118, %s119
      %p128 = scmp.eq.s32.totalorder %s24, 0
      %p129 = por %p127, %p128
      %p130 = scmp.ne.s32.totalorder %s118, %s119
      %p131 = scmp.eq.s32.totalorder %s25, 1
      %p132 = por %p130, %p131
      %p134 = scmp.ne.s32.totalorder %s119, %s133
      %p135 = scmp.eq.s32.totalorder %s25, 0
      %p136 = por %p134, %p135
      %s137 = ssub.s32 %s19, %s26
      %p138 = scmp.eq.s32.totalorder %s137, 0
      %s140 = sadd.s32 %s139, 1
      %s141 = scalar_select %p138, %s139, %s140
      %p144 = pneg %p138
      %p145 = scmp.eq.s32.totalorder %s19, 1
      %p146 = por %p144, %p145
      %p147 = scmp.ne.s32.totalorder %s139, %s142
      %p148 = scmp.eq.s32.totalorder %s19, 0
      %p149 = por %p147, %p148
      %p150 = scmp.ne.s32.totalorder %s139, %s142
      %p151 = scmp.eq.s32.totalorder %s24, 1
      %p152 = por %p150, %p151
      %p153 = scmp.ne.s32.totalorder %s142, %s143
      %p154 = scmp.eq.s32.totalorder %s24, 0
      %p155 = por %p153, %p154
      %p156 = scmp.ne.s32.totalorder %s142, %s143
      %p157 = scmp.eq.s32.totalorder %s25, 1
      %p158 = por %p156, %p157
      %p160 = scmp.ne.s32.totalorder %s143, %s159
      %p161 = scmp.eq.s32.totalorder %s25, 0
      %p162 = por %p160, %p161
      %p163 = scmp.le.s32.totalorder 1, %s19
      %p164 = scmp.lt.s32.totalorder %s19, 3
      %p165 = pnand %p163, %p164
      %p166 = pneg %p165
      // Predicated region
      $region9: #{tpu_custom_call.1} parent=5 // pred_check
        _
      $region10: #{tpu_custom_call.1} parent=5 // pred_check_branch
        %168 = sbr.rel (%p165) target = $region12
      $region11: #{tpu_custom_call.1} parent=5 // pred_region
        %s169 = ssub.s32 %s19, 1
        // Predicated region
        $region13: #{tpu_custom_call.1} parent=11 // pred_check
          %p170 = pneg %p66
        $region14: #{tpu_custom_call.1} parent=11 // pred_check_branch
          %172 = sbr.rel (%p170) target = $region16
        $region15: #{tpu_custom_call.1} parent=11 // pred_region
          %174 = vsyncadd [#allocation8], 0
          %s175 = sshll.u32 %s1, 4
          %s176 = int_to_ptr.hbm [resolvable:$true] %s175
          %s177 = sshll.u32 [#allocation7], 4
          %s178 = int_to_ptr.vmem [resolvable:$true] %s177
          %183 = dma.hbm_to_vmem [thread:$0]  %s176, 36864, %s178, [#allocation8], 128, 128, 8
        $region16: #{tpu_custom_call.1} parent=11 // pred_fallthru
          _
        // Predicated region
        $region17: #{tpu_custom_call.1} parent=11 // pred_check
          %p184 = pneg %p87
        $region18: #{tpu_custom_call.1} parent=11 // pred_check_branch
          %186 = sbr.rel (%p184) target = $region20
        $region19: #{tpu_custom_call.1} parent=11 // pred_region
          %188 = vsyncadd [#allocation8], 0
          %s190 = sshll.u32 %s2, 4
          %s191 = int_to_ptr.hbm [resolvable:$true] %s190
          %s192 = sshll.u32 [#allocation9], 4
          %s193 = int_to_ptr.vmem [resolvable:$true] %s192
          %195 = dma.hbm_to_vmem [thread:$0]  %s191, 32, %s193, [#allocation8]
        $region20: #{tpu_custom_call.1} parent=11 // pred_fallthru
          _
        // Predicated region
        $region21: #{tpu_custom_call.1} parent=11 // pred_check
          %p196 = pneg %p108
        $region22: #{tpu_custom_call.1} parent=11 // pred_check_branch
          %198 = sbr.rel (%p196) target = $region24
        $region23: #{tpu_custom_call.1} parent=11 // pred_region
          %200 = vsyncadd [#allocation11], 0
          %s201 = sshll.u32 %s3, 4
          %s202 = int_to_ptr.hbm [resolvable:$true] %s201
          %s203 = sshll.u32 [#allocation10], 4
          %s204 = int_to_ptr.vmem [resolvable:$true] %s203
          %209 = dma.hbm_to_vmem [thread:$0]  %s202, 36864, %s204, [#allocation11], 128, 128, 8
        $region24: #{tpu_custom_call.1} parent=11 // pred_fallthru
          _
        // Predicated region
        $region25: #{tpu_custom_call.1} parent=11 // pred_check
          %p210 = pneg %p129
        $region26: #{tpu_custom_call.1} parent=11 // pred_check_branch
          %212 = sbr.rel (%p210) target = $region28
        $region27: #{tpu_custom_call.1} parent=11 // pred_region
          %214 = vsyncadd [#allocation11], 0
          %s216 = sshll.u32 %s4, 4
          %s217 = int_to_ptr.hbm [resolvable:$true] %s216
          %s218 = sshll.u32 [#allocation12], 4
          %s219 = int_to_ptr.vmem [resolvable:$true] %s218
          %221 = dma.hbm_to_vmem [thread:$0]  %s217, 32, %s219, [#allocation11]
        $region28: #{tpu_custom_call.1} parent=11 // pred_fallthru
          _
      $region12: #{tpu_custom_call.1} parent=5 // pred_fallthru
        _
      %p222 = scmp.lt.s32.totalorder %s19, 2
      // Predicated region
      $region29: #{tpu_custom_call.1} parent=5 // pred_check
        %p223 = pneg %p222
      $region30: #{tpu_custom_call.1} parent=5 // pred_check_branch
        %225 = sbr.rel (%p223) target = $region32
      $region31: #{tpu_custom_call.1} parent=5 // pred_region
        // Predicated region
        $region33: #{tpu_custom_call.1} parent=31 // pred_check
          %p226 = pneg %p39
        $region34: #{tpu_custom_call.1} parent=31 // pred_check_branch
          %228 = sbr.rel (%p226) target = $region36
        $region35: #{tpu_custom_call.1} parent=31 // pred_region
          %s229 = sand.u32 %s29, 1
          %s230 = scalar_lea.sflag [#allocation5], %s229
          %s231 = sand.u32 %s29, 1
          %s232 = smul.addr %s231, 256
          %s233 = scalar_lea.vmem [#allocation4], %s232
          %s234 = smul.u32 2, %s19
          %236 = vsyncadd %s230, 0
          %s237 = smul.addr %s234, 16
          %s238 = smul.addr %s237, 8
          %s239 = scalar_lea.hbm %s0, %s238
          %s240 = sshll.u32 %s239, 4
          %s241 = int_to_ptr.hbm [resolvable:$true] %s240
          %s242 = sshll.u32 %s233, 4
          %s243 = int_to_ptr.vmem [resolvable:$true] %s242
          %248 = dma.hbm_to_vmem [thread:$0]  %s241, 4096, %s243, %s230, 256, 256, 16
        $region36: #{tpu_custom_call.1} parent=31 // pred_fallthru
          _
      $region32: #{tpu_custom_call.1} parent=5 // pred_fallthru
        _
      %p249 = scmp.le.s32.totalorder 1, %s19
      %p250 = scmp.lt.s32.totalorder %s19, 3
      %p251 = pnand %p249, %p250
      %p252 = pneg %p251
      // Predicated region
      $region37: #{tpu_custom_call.1} parent=5 // pred_check
        _
      $region38: #{tpu_custom_call.1} parent=5 // pred_check_branch
        %254 = sbr.rel (%p251) target = $region40
      $region39: #{tpu_custom_call.1} parent=5 // pred_region
        %s255 = ssub.s32 %s19, 1
        %s256 = sand.u32 %s32, 1
        %s257 = scalar_lea.sflag [#allocation5], %s256
        %s258 = sand.u32 %s32, 1
        %s259 = smul.addr %s258, 256
        %s260 = scalar_lea.vmem [#allocation4], %s259
        // Predicated region
        $region41: #{tpu_custom_call.1} parent=39 // pred_check
          %p261 = pneg %p45
        $region42: #{tpu_custom_call.1} parent=39 // pred_check_branch
          %263 = sbr.rel (%p261) target = $region44
        $region43: #{tpu_custom_call.1} parent=39 // pred_region
          %265 = dma.done %s257, 4096
        $region44: #{tpu_custom_call.1} parent=39 // pred_fallthru
          _
        // Predicated region
        $region45: #{tpu_custom_call.1} parent=39 // pred_check
          %p266 = pneg %p66
        $region46: #{tpu_custom_call.1} parent=39 // pred_check_branch
          %268 = sbr.rel (%p266) target = $region48
        $region47: #{tpu_custom_call.1} parent=39 // pred_region
          %270 = dma.done [#allocation8], 36864
        $region48: #{tpu_custom_call.1} parent=39 // pred_fallthru
          _
        // Predicated region
        $region49: #{tpu_custom_call.1} parent=39 // pred_check
          %p271 = pneg %p87
        $region50: #{tpu_custom_call.1} parent=39 // pred_check_branch
          %273 = sbr.rel (%p271) target = $region52
        $region51: #{tpu_custom_call.1} parent=39 // pred_region
          %275 = dma.done [#allocation8], 32
        $region52: #{tpu_custom_call.1} parent=39 // pred_fallthru
          _
        // Predicated region
        $region53: #{tpu_custom_call.1} parent=39 // pred_check
          %p276 = pneg %p108
        $region54: #{tpu_custom_call.1} parent=39 // pred_check_branch
          %278 = sbr.rel (%p276) target = $region56
        $region55: #{tpu_custom_call.1} parent=39 // pred_region
          %280 = dma.done [#allocation11], 36864
        $region56: #{tpu_custom_call.1} parent=39 // pred_fallthru
          _
        // Predicated region
        $region57: #{tpu_custom_call.1} parent=39 // pred_check
          %p281 = pneg %p129
        $region58: #{tpu_custom_call.1} parent=39 // pred_check_branch
          %283 = sbr.rel (%p281) target = $region60
        $region59: #{tpu_custom_call.1} parent=39 // pred_region
          %285 = dma.done [#allocation11], 32
        $region60: #{tpu_custom_call.1} parent=39 // pred_fallthru
          _
        %s286 = sand.u32 %s32, 1
        %s287 = scalar_lea.sflag [#allocation5], %s286
        %s288 = sand.u32 %s32, 1
        %s289 = smul.addr %s288, 256
        %s290 = scalar_lea.vmem [#allocation4], %s289
        %p291 = pneg %p45
        %p292 = pneg %p42
        %p293 = pneg %p66
        %p294 = pneg %p63
        %p295 = pneg %p87
        %p296 = pneg %p84
        %p297 = pneg %p108
        %p298 = pneg %p105
        %p299 = pneg %p129
        %p300 = pneg %p126
        %p301 = pneg %p155
        %p302 = pneg %p152
        %s303 = sand.u32 %s142, 1
        %s304 = scalar_lea.sflag [#allocation6], %s303
        %s305 = sand.u32 %s142, 1
        %s306 = smul.addr %s305, 256
        %s307 = scalar_lea.vmem [#allocation13], %s306
        %s308 = smul.u32 2, %s24
        %s309 = smul.u32 2, %s24
        %310 = vst [vmem:[#allocation2] sm:$0xff] 0.0
        %311 = vst [vmem:[#allocation2 + $0x8] sm:$0xff] 0.0
        %312 = vst [vmem:[#allocation2 + $0xa0] sm:$0xff] 0.0
        %313 = vst [vmem:[#allocation2 + $0xa8] sm:$0xff] 0.0
        %s314 = scalar_lea.vmem [#allocation2], 144
        %315 = vst [vmem:[%s314] sm:$0xff] 0.0
        %316 = vst [vmem:[%s314 + $0x8] sm:$0xff] 0.0
        %317 = vst [vmem:[%s314 + $0xa0] sm:$0xff] 0.0
        %318 = vst [vmem:[%s314 + $0xa8] sm:$0xff] 0.0
        %v319 = vlaneseq
        %v320 = vshrl.u32 %v319, 7
        %vm321 = vcmp.ne.s32.totalorder %v320, 0
        %vm322 = vcmp.ne.s32.totalorder %v320, 7
        %v323 = vld [vmem:[%s260] sm:$0xff]
        %v324 = vld [vmem:[%s260 + $0x8] sm:$0xff]
        %v325 = vld [vmem:[%s260 + $0x10] sm:$0xff]
        %v326 = vld [vmem:[%s260 + $0x18] sm:$0xff]
        %v327 = vld [vmem:[%s260 + $0x20] sm:$0xff]
        %v328 = vld [vmem:[%s260 + $0x28] sm:$0xff]
        %v329 = vld [vmem:[%s260 + $0x30] sm:$0xff]
        %v330 = vld [vmem:[%s260 + $0x38] sm:$0xff]
        %v331 = vld [vmem:[%s260 + $0x40] sm:$0xff]
        %v332 = vld [vmem:[%s260 + $0x48] sm:$0xff]
        %v333 = vld [vmem:[%s260 + $0x50] sm:$0xff]
        %v334 = vld [vmem:[%s260 + $0x58] sm:$0xff]
        %v335 = vld [vmem:[%s260 + $0x60] sm:$0xff]
        %v336 = vld [vmem:[%s260 + $0x68] sm:$0xff]
        %v337 = vld [vmem:[%s260 + $0x70] sm:$0xff]
        %v338 = vld [vmem:[%s260 + $0x78] sm:$0xff]
        %v339 = vld [vmem:[%s260 + $0x80] sm:$0xff]
        %v340 = vld [vmem:[%s260 + $0x88] sm:$0xff]
        %v341 = vld [vmem:[%s260 + $0x90] sm:$0xff]
        %v342 = vld [vmem:[%s260 + $0x98] sm:$0xff]
        %v343 = vld [vmem:[%s260 + $0xa0] sm:$0xff]
        %v344 = vld [vmem:[%s260 + $0xa8] sm:$0xff]
        %v345 = vld [vmem:[%s260 + $0xb0] sm:$0xff]
        %v346 = vld [vmem:[%s260 + $0xb8] sm:$0xff]
        %v347 = vld [vmem:[%s260 + $0xc0] sm:$0xff]
        %v348 = vld [vmem:[%s260 + $0xc8] sm:$0xff]
        %v349 = vld [vmem:[%s260 + $0xd0] sm:$0xff]
        %v350 = vld [vmem:[%s260 + $0xd8] sm:$0xff]
        %v351 = vld [vmem:[%s260 + $0xe0] sm:$0xff]
        %v352 = vld [vmem:[%s260 + $0xe8] sm:$0xff]
        %v353 = vld [vmem:[%s260 + $0xf0] sm:$0xff]
        %v354 = vld [vmem:[%s260 + $0xf8] sm:$0xff]
        %s355 = scalar_lea.vmem [#allocation2], 16
        %356 = vst [vmem:[%s355] sm:$0xff] %v323
        %357 = vst [vmem:[%s355 + $0x8] sm:$0xff] %v324
        %358 = vst [vmem:[%s355 + $0x10] sm:$0xff] %v325
        %359 = vst [vmem:[%s355 + $0x18] sm:$0xff] %v326
        %360 = vst [vmem:[%s355 + $0x20] sm:$0xff] %v327
        %361 = vst [vmem:[%s355 + $0x28] sm:$0xff] %v328
        %362 = vst [vmem:[%s355 + $0x30] sm:$0xff] %v329
        %363 = vst [vmem:[%s355 + $0x38] sm:$0xff] %v330
        %364 = vst [vmem:[%s355 + $0x40] sm:$0xff] %v331
        %365 = vst [vmem:[%s355 + $0x48] sm:$0xff] %v332
        %366 = vst [vmem:[%s355 + $0x50] sm:$0xff] %v333
        %367 = vst [vmem:[%s355 + $0x58] sm:$0xff] %v334
        %368 = vst [vmem:[%s355 + $0x60] sm:$0xff] %v335
        %369 = vst [vmem:[%s355 + $0x68] sm:$0xff] %v336
        %370 = vst [vmem:[%s355 + $0x70] sm:$0xff] %v337
        %371 = vst [vmem:[%s355 + $0x78] sm:$0xff] %v338
        %372 = vst [vmem:[%s355 + $0xa0] sm:$0xff] %v339
        %373 = vst [vmem:[%s355 + $0xa8] sm:$0xff] %v340
        %374 = vst [vmem:[%s355 + $0xb0] sm:$0xff] %v341
        %375 = vst [vmem:[%s355 + $0xb8] sm:$0xff] %v342
        %376 = vst [vmem:[%s355 + $0xc0] sm:$0xff] %v343
        %377 = vst [vmem:[%s355 + $0xc8] sm:$0xff] %v344
        %378 = vst [vmem:[%s355 + $0xd0] sm:$0xff] %v345
        %379 = vst [vmem:[%s355 + $0xd8] sm:$0xff] %v346
        %380 = vst [vmem:[%s355 + $0xe0] sm:$0xff] %v347
        %381 = vst [vmem:[%s355 + $0xe8] sm:$0xff] %v348
        %382 = vst [vmem:[%s355 + $0xf0] sm:$0xff] %v349
        %383 = vst [vmem:[%s355 + $0xf8] sm:$0xff] %v350
        %384 = vst [vmem:[%s355 + $0x100] sm:$0xff] %v351
        %385 = vst [vmem:[%s355 + $0x108] sm:$0xff] %v352
        %386 = vst [vmem:[%s355 + $0x110] sm:$0xff] %v353
        %387 = vst [vmem:[%s355 + $0x118] sm:$0xff] %v354
        %v388 = vld [vmem:[#allocation2] sm:$0xff]
        %v389 = vld [vmem:[#allocation2 + $0x8] sm:$0xff]
        %v390 = vld [vmem:[#allocation2 + $0x10] sm:$0xff]
        %v391 = vld [vmem:[#allocation2 + $0x18] sm:$0xff]
        %v392 = vld [vmem:[#allocation2 + $0x20] sm:$0xff]
        %v393 = vld [vmem:[#allocation2 + $0x28] sm:$0xff]
        %v394 = vld [vmem:[#allocation2 + $0x30] sm:$0xff]
        %v395 = vld [vmem:[#allocation2 + $0x38] sm:$0xff]
        %v396 = vld [vmem:[#allocation2 + $0x40] sm:$0xff]
        %v397 = vld [vmem:[#allocation2 + $0x48] sm:$0xff]
        %v398 = vld [vmem:[#allocation2 + $0x50] sm:$0xff]
        %v399 = vld [vmem:[#allocation2 + $0x58] sm:$0xff]
        %v400 = vld [vmem:[#allocation2 + $0x60] sm:$0xff]
        %v401 = vld [vmem:[#allocation2 + $0x68] sm:$0xff]
        %v402 = vld [vmem:[#allocation2 + $0x70] sm:$0xff]
        %v403 = vld [vmem:[#allocation2 + $0x78] sm:$0xff]
        %v404 = vld [vmem:[#allocation2 + $0xa0] sm:$0xff]
        %v405 = vld [vmem:[#allocation2 + $0xa8] sm:$0xff]
        %v406 = vld [vmem:[#allocation2 + $0xb0] sm:$0xff]
        %v407 = vld [vmem:[#allocation2 + $0xb8] sm:$0xff]
        %v408 = vld [vmem:[#allocation2 + $0xc0] sm:$0xff]
        %v409 = vld [vmem:[#allocation2 + $0xc8] sm:$0xff]
        %v410 = vld [vmem:[#allocation2 + $0xd0] sm:$0xff]
        %v411 = vld [vmem:[#allocation2 + $0xd8] sm:$0xff]
        %v412 = vld [vmem:[#allocation2 + $0xe0] sm:$0xff]
        %v413 = vld [vmem:[#allocation2 + $0xe8] sm:$0xff]
        %v414 = vld [vmem:[#allocation2 + $0xf0] sm:$0xff]
        %v415 = vld [vmem:[#allocation2 + $0xf8] sm:$0xff]
        %v416 = vld [vmem:[#allocation2 + $0x100] sm:$0xff]
        %v417 = vld [vmem:[#allocation2 + $0x108] sm:$0xff]
        %v418 = vld [vmem:[#allocation2 + $0x110] sm:$0xff]
        %v419 = vld [vmem:[#allocation2 + $0x118] sm:$0xff]
        %v420 = vrot.slane %v388, 7
        %v421 = vrot.slane %v389, 7
        %v422 = vrot.slane %v390, 7
        %v423 = vrot.slane %v391, 7
        %v424 = vrot.slane %v392, 7
        %v425 = vrot.slane %v393, 7
        %v426 = vrot.slane %v394, 7
        %v427 = vrot.slane %v395, 7
        %v428 = vrot.slane %v396, 7
        %v429 = vrot.slane %v397, 7
        %v430 = vrot.slane %v398, 7
        %v431 = vrot.slane %v399, 7
        %v432 = vrot.slane %v400, 7
        %v433 = vrot.slane %v401, 7
        %v434 = vrot.slane %v402, 7
        %v435 = vrot.slane %v403, 7
        %v436 = vrot.slane %v404, 7
        %v437 = vrot.slane %v405, 7
        %v438 = vrot.slane %v406, 7
        %v439 = vrot.slane %v407, 7
        %v440 = vrot.slane %v408, 7
        %v441 = vrot.slane %v409, 7
        %v442 = vrot.slane %v410, 7
        %v443 = vrot.slane %v411, 7
        %v444 = vrot.slane %v412, 7
        %v445 = vrot.slane %v413, 7
        %v446 = vrot.slane %v414, 7
        %v447 = vrot.slane %v415, 7
        %v448 = vrot.slane %v416, 7
        %v449 = vrot.slane %v417, 7
        %v450 = vrot.slane %v418, 7
        %v451 = vrot.slane %v419, 7
        %v452 = vsel %vm321, 1, 0
        %vm453 = vcmp.eq.s32.totalorder %v452, 1
        %v454 = vsel %vm453, %v420, 0.0
        %v455 = vsel %vm453, %v421, 0.0
        %v456 = vsel %vm453, %v422, 0.0
        %v457 = vsel %vm453, %v423, 0.0
        %v458 = vsel %vm453, %v424, 0.0
        %v459 = vsel %vm453, %v425, 0.0
        %v460 = vsel %vm453, %v426, 0.0
        %v461 = vsel %vm453, %v427, 0.0
        %v462 = vsel %vm453, %v428, 0.0
        %v463 = vsel %vm453, %v429, 0.0
        %v464 = vsel %vm453, %v430, 0.0
        %v465 = vsel %vm453, %v431, 0.0
        %v466 = vsel %vm453, %v432, 0.0
        %v467 = vsel %vm453, %v433, 0.0
        %v468 = vsel %vm453, %v434, 0.0
        %v469 = vsel %vm453, %v435, 0.0
        %v470 = vsel %vm453, %v436, 0.0
        %v471 = vsel %vm453, %v437, 0.0
        %v472 = vsel %vm453, %v438, 0.0
        %v473 = vsel %vm453, %v439, 0.0
        %v474 = vsel %vm453, %v440, 0.0
        %v475 = vsel %vm453, %v441, 0.0
        %v476 = vsel %vm453, %v442, 0.0
        %v477 = vsel %vm453, %v443, 0.0
        %v478 = vsel %vm453, %v444, 0.0
        %v479 = vsel %vm453, %v445, 0.0
        %v480 = vsel %vm453, %v446, 0.0
        %v481 = vsel %vm453, %v447, 0.0
        %v482 = vsel %vm453, %v448, 0.0
        %v483 = vsel %vm453, %v449, 0.0
        %v484 = vsel %vm453, %v450, 0.0
        %v485 = vsel %vm453, %v451, 0.0
        %v486 = vpack.c.bf16 %v455, %v454
        %v487 = vpack.c.bf16 %v457, %v456
        %v488 = vpack.c.bf16 %v459, %v458
        %v489 = vpack.c.bf16 %v461, %v460
        %v490 = vpack.c.bf16 %v463, %v462
        %v491 = vpack.c.bf16 %v465, %v464
        %v492 = vpack.c.bf16 %v467, %v466
        %v493 = vpack.c.bf16 %v469, %v468
        %v494 = vpack.c.bf16 %v471, %v470
        %v495 = vpack.c.bf16 %v473, %v472
        %v496 = vpack.c.bf16 %v475, %v474
        %v497 = vpack.c.bf16 %v477, %v476
        %v498 = vpack.c.bf16 %v479, %v478
        %v499 = vpack.c.bf16 %v481, %v480
        %v500 = vpack.c.bf16 %v483, %v482
        %v501 = vpack.c.bf16 %v485, %v484
        %502 = vst [vmem:[#allocation3] sm:$0xff] %v486
        %503 = vst [vmem:[#allocation3 + $0x48] sm:$0xff] %v487
        %504 = vst [vmem:[#allocation3 + $0x90] sm:$0xff] %v488
        %505 = vst [vmem:[#allocation3 + $0xd8] sm:$0xff] %v489
        %506 = vst [vmem:[#allocation3 + $0x120] sm:$0xff] %v490
        %507 = vst [vmem:[#allocation3 + $0x168] sm:$0xff] %v491
        %508 = vst [vmem:[#allocation3 + $0x1b0] sm:$0xff] %v492
        %509 = vst [vmem:[#allocation3 + $0x1f8] sm:$0xff] %v493
        %510 = vst [vmem:[#allocation3 + $0x240] sm:$0xff] %v494
        %511 = vst [vmem:[#allocation3 + $0x288] sm:$0xff] %v495
        %512 = vst [vmem:[#allocation3 + $0x2d0] sm:$0xff] %v496
        %513 = vst [vmem:[#allocation3 + $0x318] sm:$0xff] %v497
        %514 = vst [vmem:[#allocation3 + $0x360] sm:$0xff] %v498
        %515 = vst [vmem:[#allocation3 + $0x3a8] sm:$0xff] %v499
        %516 = vst [vmem:[#allocation3 + $0x3f0] sm:$0xff] %v500
        %517 = vst [vmem:[#allocation3 + $0x438] sm:$0xff] %v501
        %v518 = vld [vmem:[#allocation2] sm:$0xff]
        %v519 = vld [vmem:[#allocation2 + $0x8] sm:$0xff]
        %v520 = vld [vmem:[#allocation2 + $0x10] sm:$0xff]
        %v521 = vld [vmem:[#allocation2 + $0x18] sm:$0xff]
        %v522 = vld [vmem:[#allocation2 + $0x20] sm:$0xff]
        %v523 = vld [vmem:[#allocation2 + $0x28] sm:$0xff]
        %v524 = vld [vmem:[#allocation2 + $0x30] sm:$0xff]
        %v525 = vld [vmem:[#allocation2 + $0x38] sm:$0xff]
        %v526 = vld [vmem:[#allocation2 + $0x40] sm:$0xff]
        %v527 = vld [vmem:[#allocation2 + $0x48] sm:$0xff]
        %v528 = vld [vmem:[#allocation2 + $0x50] sm:$0xff]
        %v529 = vld [vmem:[#allocation2 + $0x58] sm:$0xff]
        %v530 = vld [vmem:[#allocation2 + $0x60] sm:$0xff]
        %v531 = vld [vmem:[#allocation2 + $0x68] sm:$0xff]
        %v532 = vld [vmem:[#allocation2 + $0x70] sm:$0xff]
        %v533 = vld [vmem:[#allocation2 + $0x78] sm:$0xff]
        %v534 = vld [vmem:[#allocation2 + $0xa0] sm:$0xff]
        %v535 = vld [vmem:[#allocation2 + $0xa8] sm:$0xff]
        %v536 = vld [vmem:[#allocation2 + $0xb0] sm:$0xff]
        %v537 = vld [vmem:[#allocation2 + $0xb8] sm:$0xff]
        %v538 = vld [vmem:[#allocation2 + $0xc0] sm:$0xff]
        %v539 = vld [vmem:[#allocation2 + $0xc8] sm:$0xff]
        %v540 = vld [vmem:[#allocation2 + $0xd0] sm:$0xff]
        %v541 = vld [vmem:[#allocation2 + $0xd8] sm:$0xff]
        %v542 = vld [vmem:[#allocation2 + $0xe0] sm:$0xff]
        %v543 = vld [vmem:[#allocation2 + $0xe8] sm:$0xff]
        %v544 = vld [vmem:[#allocation2 + $0xf0] sm:$0xff]
        %v545 = vld [vmem:[#allocation2 + $0xf8] sm:$0xff]
        %v546 = vld [vmem:[#allocation2 + $0x100] sm:$0xff]
        %v547 = vld [vmem:[#allocation2 + $0x108] sm:$0xff]
        %v548 = vld [vmem:[#allocation2 + $0x110] sm:$0xff]
        %v549 = vld [vmem:[#allocation2 + $0x118] sm:$0xff]
        %v550 = vpack.c.bf16 %v519, %v518
        %v551 = vpack.c.bf16 %v521, %v520
        %v552 = vpack.c.bf16 %v523, %v522
        %v553 = vpack.c.bf16 %v525, %v524
        %v554 = vpack.c.bf16 %v527, %v526
        %v555 = vpack.c.bf16 %v529, %v528
        %v556 = vpack.c.bf16 %v531, %v530
        %v557 = vpack.c.bf16 %v533, %v532
        %v558 = vpack.c.bf16 %v535, %v534
        %v559 = vpack.c.bf16 %v537, %v536
        %v560 = vpack.c.bf16 %v539, %v538
        %v561 = vpack.c.bf16 %v541, %v540
        %v562 = vpack.c.bf16 %v543, %v542
        %v563 = vpack.c.bf16 %v545, %v544
        %v564 = vpack.c.bf16 %v547, %v546
        %v565 = vpack.c.bf16 %v549, %v548
        %566 = vst [vmem:[#allocation3 + $0x8] sm:$0xff] %v550
        %567 = vst [vmem:[#allocation3 + $0x50] sm:$0xff] %v551
        %568 = vst [vmem:[#allocation3 + $0x98] sm:$0xff] %v552
        %569 = vst [vmem:[#allocation3 + $0xe0] sm:$0xff] %v553
        %570 = vst [vmem:[#allocation3 + $0x128] sm:$0xff] %v554
        %571 = vst [vmem:[#allocation3 + $0x170] sm:$0xff] %v555
        %572 = vst [vmem:[#allocation3 + $0x1b8] sm:$0xff] %v556
        %573 = vst [vmem:[#allocation3 + $0x200] sm:$0xff] %v557
        %574 = vst [vmem:[#allocation3 + $0x248] sm:$0xff] %v558
        %575 = vst [vmem:[#allocation3 + $0x290] sm:$0xff] %v559
        %576 = vst [vmem:[#allocation3 + $0x2d8] sm:$0xff] %v560
        %577 = vst [vmem:[#allocation3 + $0x320] sm:$0xff] %v561
        %578 = vst [vmem:[#allocation3 + $0x368] sm:$0xff] %v562
        %579 = vst [vmem:[#allocation3 + $0x3b0] sm:$0xff] %v563
        %580 = vst [vmem:[#allocation3 + $0x3f8] sm:$0xff] %v564
        %581 = vst [vmem:[#allocation3 + $0x440] sm:$0xff] %v565
        %v582 = vld [vmem:[#allocation2] sm:$0xff]
        %v583 = vld [vmem:[#allocation2 + $0x8] sm:$0xff]
        %v584 = vld [vmem:[#allocation2 + $0x10] sm:$0xff]
        %v585 = vld [vmem:[#allocation2 + $0x18] sm:$0xff]
        %v586 = vld [vmem:[#allocation2 + $0x20] sm:$0xff]
        %v587 = vld [vmem:[#allocation2 + $0x28] sm:$0xff]
        %v588 = vld [vmem:[#allocation2 + $0x30] sm:$0xff]
        %v589 = vld [vmem:[#allocation2 + $0x38] sm:$0xff]
        %v590 = vld [vmem:[#allocation2 + $0x40] sm:$0xff]
        %v591 = vld [vmem:[#allocation2 + $0x48] sm:$0xff]
        %v592 = vld [vmem:[#allocation2 + $0x50] sm:$0xff]
        %v593 = vld [vmem:[#allocation2 + $0x58] sm:$0xff]
        %v594 = vld [vmem:[#allocation2 + $0x60] sm:$0xff]
        %v595 = vld [vmem:[#allocation2 + $0x68] sm:$0xff]
        %v596 = vld [vmem:[#allocation2 + $0x70] sm:$0xff]
        %v597 = vld [vmem:[#allocation2 + $0x78] sm:$0xff]
        %v598 = vld [vmem:[#allocation2 + $0xa0] sm:$0xff]
        %v599 = vld [vmem:[#allocation2 + $0xa8] sm:$0xff]
        %v600 = vld [vmem:[#allocation2 + $0xb0] sm:$0xff]
        %v601 = vld [vmem:[#allocation2 + $0xb8] sm:$0xff]
        %v602 = vld [vmem:[#allocation2 + $0xc0] sm:$0xff]
        %v603 = vld [vmem:[#allocation2 + $0xc8] sm:$0xff]
        %v604 = vld [vmem:[#allocation2 + $0xd0] sm:$0xff]
        %v605 = vld [vmem:[#allocation2 + $0xd8] sm:$0xff]
        %v606 = vld [vmem:[#allocation2 + $0xe0] sm:$0xff]
        %v607 = vld [vmem:[#allocation2 + $0xe8] sm:$0xff]
        %v608 = vld [vmem:[#allocation2 + $0xf0] sm:$0xff]
        %v609 = vld [vmem:[#allocation2 + $0xf8] sm:$0xff]
        %v610 = vld [vmem:[#allocation2 + $0x100] sm:$0xff]
        %v611 = vld [vmem:[#allocation2 + $0x108] sm:$0xff]
        %v612 = vld [vmem:[#allocation2 + $0x110] sm:$0xff]
        %v613 = vld [vmem:[#allocation2 + $0x118] sm:$0xff]
        %v614 = vrot.slane %v582, 1
        %v615 = vrot.slane %v583, 1
        %v616 = vrot.slane %v584, 1
        %v617 = vrot.slane %v585, 1
        %v618 = vrot.slane %v586, 1
        %v619 = vrot.slane %v587, 1
        %v620 = vrot.slane %v588, 1
        %v621 = vrot.slane %v589, 1
        %v622 = vrot.slane %v590, 1
        %v623 = vrot.slane %v591, 1
        %v624 = vrot.slane %v592, 1
        %v625 = vrot.slane %v593, 1
        %v626 = vrot.slane %v594, 1
        %v627 = vrot.slane %v595, 1
        %v628 = vrot.slane %v596, 1
        %v629 = vrot.slane %v597, 1
        %v630 = vrot.slane %v598, 1
        %v631 = vrot.slane %v599, 1
        %v632 = vrot.slane %v600, 1
        %v633 = vrot.slane %v601, 1
        %v634 = vrot.slane %v602, 1
        %v635 = vrot.slane %v603, 1
        %v636 = vrot.slane %v604, 1
        %v637 = vrot.slane %v605, 1
        %v638 = vrot.slane %v606, 1
        %v639 = vrot.slane %v607, 1
        %v640 = vrot.slane %v608, 1
        %v641 = vrot.slane %v609, 1
        %v642 = vrot.slane %v610, 1
        %v643 = vrot.slane %v611, 1
        %v644 = vrot.slane %v612, 1
        %v645 = vrot.slane %v613, 1
        %v646 = vsel %vm322, 1, 0
        %vm647 = vcmp.eq.s32.totalorder %v646, 1
        %v648 = vsel %vm647, %v614, 0.0
        %v649 = vsel %vm647, %v615, 0.0
        %v650 = vsel %vm647, %v616, 0.0
        %v651 = vsel %vm647, %v617, 0.0
        %v652 = vsel %vm647, %v618, 0.0
        %v653 = vsel %vm647, %v619, 0.0
        %v654 = vsel %vm647, %v620, 0.0
        %v655 = vsel %vm647, %v621, 0.0
        %v656 = vsel %vm647, %v622, 0.0
        %v657 = vsel %vm647, %v623, 0.0
        %v658 = vsel %vm647, %v624, 0.0
        %v659 = vsel %vm647, %v625, 0.0
        %v660 = vsel %vm647, %v626, 0.0
        %v661 = vsel %vm647, %v627, 0.0
        %v662 = vsel %vm647, %v628, 0.0
        %v663 = vsel %vm647, %v629, 0.0
        %v664 = vsel %vm647, %v630, 0.0
        %v665 = vsel %vm647, %v631, 0.0
        %v666 = vsel %vm647, %v632, 0.0
        %v667 = vsel %vm647, %v633, 0.0
        %v668 = vsel %vm647, %v634, 0.0
        %v669 = vsel %vm647, %v635, 0.0
        %v670 = vsel %vm647, %v636, 0.0
        %v671 = vsel %vm647, %v637, 0.0
        %v672 = vsel %vm647, %v638, 0.0
        %v673 = vsel %vm647, %v639, 0.0
        %v674 = vsel %vm647, %v640, 0.0
        %v675 = vsel %vm647, %v641, 0.0
        %v676 = vsel %vm647, %v642, 0.0
        %v677 = vsel %vm647, %v643, 0.0
        %v678 = vsel %vm647, %v644, 0.0
        %v679 = vsel %vm647, %v645, 0.0
        %v680 = vpack.c.bf16 %v649, %v648
        %v681 = vpack.c.bf16 %v651, %v650
        %v682 = vpack.c.bf16 %v653, %v652
        %v683 = vpack.c.bf16 %v655, %v654
        %v684 = vpack.c.bf16 %v657, %v656
        %v685 = vpack.c.bf16 %v659, %v658
        %v686 = vpack.c.bf16 %v661, %v660
        %v687 = vpack.c.bf16 %v663, %v662
        %v688 = vpack.c.bf16 %v665, %v664
        %v689 = vpack.c.bf16 %v667, %v666
        %v690 = vpack.c.bf16 %v669, %v668
        %v691 = vpack.c.bf16 %v671, %v670
        %v692 = vpack.c.bf16 %v673, %v672
        %v693 = vpack.c.bf16 %v675, %v674
        %v694 = vpack.c.bf16 %v677, %v676
        %v695 = vpack.c.bf16 %v679, %v678
        %696 = vst [vmem:[#allocation3 + $0x10] sm:$0xff] %v680
        %697 = vst [vmem:[#allocation3 + $0x58] sm:$0xff] %v681
        %698 = vst [vmem:[#allocation3 + $0xa0] sm:$0xff] %v682
        %699 = vst [vmem:[#allocation3 + $0xe8] sm:$0xff] %v683
        %700 = vst [vmem:[#allocation3 + $0x130] sm:$0xff] %v684
        %701 = vst [vmem:[#allocation3 + $0x178] sm:$0xff] %v685
        %702 = vst [vmem:[#allocation3 + $0x1c0] sm:$0xff] %v686
        %703 = vst [vmem:[#allocation3 + $0x208] sm:$0xff] %v687
        %704 = vst [vmem:[#allocation3 + $0x250] sm:$0xff] %v688
        %705 = vst [vmem:[#allocation3 + $0x298] sm:$0xff] %v689
        %706 = vst [vmem:[#allocation3 + $0x2e0] sm:$0xff] %v690
        %707 = vst [vmem:[#allocation3 + $0x328] sm:$0xff] %v691
        %708 = vst [vmem:[#allocation3 + $0x370] sm:$0xff] %v692
        %709 = vst [vmem:[#allocation3 + $0x3b8] sm:$0xff] %v693
        %710 = vst [vmem:[#allocation3 + $0x400] sm:$0xff] %v694
        %711 = vst [vmem:[#allocation3 + $0x448] sm:$0xff] %v695
        %v712 = vld [vmem:[%s355] sm:$0xff]
        %v713 = vld [vmem:[%s355 + $0x8] sm:$0xff]
        %v714 = vld [vmem:[%s355 + $0x10] sm:$0xff]
        %v715 = vld [vmem:[%s355 + $0x18] sm:$0xff]
        %v716 = vld [vmem:[%s355 + $0x20] sm:$0xff]
        %v717 = vld [vmem:[%s355 + $0x28] sm:$0xff]
        %v718 = vld [vmem:[%s355 + $0x30] sm:$0xff]
        %v719 = vld [vmem:[%s355 + $0x38] sm:$0xff]
        %v720 = vld [vmem:[%s355 + $0x40] sm:$0xff]
        %v721 = vld [vmem:[%s355 + $0x48] sm:$0xff]
        %v722 = vld [vmem:[%s355 + $0x50] sm:$0xff]
        %v723 = vld [vmem:[%s355 + $0x58] sm:$0xff]
        %v724 = vld [vmem:[%s355 + $0x60] sm:$0xff]
        %v725 = vld [vmem:[%s355 + $0x68] sm:$0xff]
        %v726 = vld [vmem:[%s355 + $0x70] sm:$0xff]
        %v727 = vld [vmem:[%s355 + $0x78] sm:$0xff]
        %v728 = vld [vmem:[%s355 + $0xa0] sm:$0xff]
        %v729 = vld [vmem:[%s355 + $0xa8] sm:$0xff]
        %v730 = vld [vmem:[%s355 + $0xb0] sm:$0xff]
        %v731 = vld [vmem:[%s355 + $0xb8] sm:$0xff]
        %v732 = vld [vmem:[%s355 + $0xc0] sm:$0xff]
        %v733 = vld [vmem:[%s355 + $0xc8] sm:$0xff]
        %v734 = vld [vmem:[%s355 + $0xd0] sm:$0xff]
        %v735 = vld [vmem:[%s355 + $0xd8] sm:$0xff]
        %v736 = vld [vmem:[%s355 + $0xe0] sm:$0xff]
        %v737 = vld [vmem:[%s355 + $0xe8] sm:$0xff]
        %v738 = vld [vmem:[%s355 + $0xf0] sm:$0xff]
        %v739 = vld [vmem:[%s355 + $0xf8] sm:$0xff]
        %v740 = vld [vmem:[%s355 + $0x100] sm:$0xff]
        %v741 = vld [vmem:[%s355 + $0x108] sm:$0xff]
        %v742 = vld [vmem:[%s355 + $0x110] sm:$0xff]
        %v743 = vld [vmem:[%s355 + $0x118] sm:$0xff]
        %v744 = vrot.slane %v712, 7
        %v745 = vrot.slane %v713, 7
        %v746 = vrot.slane %v714, 7
        %v747 = vrot.slane %v715, 7
        %v748 = vrot.slane %v716, 7
        %v749 = vrot.slane %v717, 7
        %v750 = vrot.slane %v718, 7
        %v751 = vrot.slane %v719, 7
        %v752 = vrot.slane %v720, 7
        %v753 = vrot.slane %v721, 7
        %v754 = vrot.slane %v722, 7
        %v755 = vrot.slane %v723, 7
        %v756 = vrot.slane %v724, 7
        %v757 = vrot.slane %v725, 7
        %v758 = vrot.slane %v726, 7
        %v759 = vrot.slane %v727, 7
        %v760 = vrot.slane %v728, 7
        %v761 = vrot.slane %v729, 7
        %v762 = vrot.slane %v730, 7
        %v763 = vrot.slane %v731, 7
        %v764 = vrot.slane %v732, 7
        %v765 = vrot.slane %v733, 7
        %v766 = vrot.slane %v734, 7
        %v767 = vrot.slane %v735, 7
        %v768 = vrot.slane %v736, 7
        %v769 = vrot.slane %v737, 7
        %v770 = vrot.slane %v738, 7
        %v771 = vrot.slane %v739, 7
        %v772 = vrot.slane %v740, 7
        %v773 = vrot.slane %v741, 7
        %v774 = vrot.slane %v742, 7
        %v775 = vrot.slane %v743, 7
        %v776 = vsel %vm453, %v744, 0.0
        %v777 = vsel %vm453, %v745, 0.0
        %v778 = vsel %vm453, %v746, 0.0
        %v779 = vsel %vm453, %v747, 0.0
        %v780 = vsel %vm453, %v748, 0.0
        %v781 = vsel %vm453, %v749, 0.0
        %v782 = vsel %vm453, %v750, 0.0
        %v783 = vsel %vm453, %v751, 0.0
        %v784 = vsel %vm453, %v752, 0.0
        %v785 = vsel %vm453, %v753, 0.0
        %v786 = vsel %vm453, %v754, 0.0
        %v787 = vsel %vm453, %v755, 0.0
        %v788 = vsel %vm453, %v756, 0.0
        %v789 = vsel %vm453, %v757, 0.0
        %v790 = vsel %vm453, %v758, 0.0
        %v791 = vsel %vm453, %v759, 0.0
        %v792 = vsel %vm453, %v760, 0.0
        %v793 = vsel %vm453, %v761, 0.0
        %v794 = vsel %vm453, %v762, 0.0
        %v795 = vsel %vm453, %v763, 0.0
        %v796 = vsel %vm453, %v764, 0.0
        %v797 = vsel %vm453, %v765, 0.0
        %v798 = vsel %vm453, %v766, 0.0
        %v799 = vsel %vm453, %v767, 0.0
        %v800 = vsel %vm453, %v768, 0.0
        %v801 = vsel %vm453, %v769, 0.0
        %v802 = vsel %vm453, %v770, 0.0
        %v803 = vsel %vm453, %v771, 0.0
        %v804 = vsel %vm453, %v772, 0.0
        %v805 = vsel %vm453, %v773, 0.0
        %v806 = vsel %vm453, %v774, 0.0
        %v807 = vsel %vm453, %v775, 0.0
        %v808 = vpack.c.bf16 %v777, %v776
        %v809 = vpack.c.bf16 %v779, %v778
        %v810 = vpack.c.bf16 %v781, %v780
        %v811 = vpack.c.bf16 %v783, %v782
        %v812 = vpack.c.bf16 %v785, %v784
        %v813 = vpack.c.bf16 %v787, %v786
        %v814 = vpack.c.bf16 %v789, %v788
        %v815 = vpack.c.bf16 %v791, %v790
        %v816 = vpack.c.bf16 %v793, %v792
        %v817 = vpack.c.bf16 %v795, %v794
        %v818 = vpack.c.bf16 %v797, %v796
        %v819 = vpack.c.bf16 %v799, %v798
        %v820 = vpack.c.bf16 %v801, %v800
        %v821 = vpack.c.bf16 %v803, %v802
        %v822 = vpack.c.bf16 %v805, %v804
        %v823 = vpack.c.bf16 %v807, %v806
        %824 = vst [vmem:[#allocation3 + $0x18] sm:$0xff] %v808
        %825 = vst [vmem:[#allocation3 + $0x60] sm:$0xff] %v809
        %826 = vst [vmem:[#allocation3 + $0xa8] sm:$0xff] %v810
        %827 = vst [vmem:[#allocation3 + $0xf0] sm:$0xff] %v811
        %828 = vst [vmem:[#allocation3 + $0x138] sm:$0xff] %v812
        %829 = vst [vmem:[#allocation3 + $0x180] sm:$0xff] %v813
        %830 = vst [vmem:[#allocation3 + $0x1c8] sm:$0xff] %v814
        %831 = vst [vmem:[#allocation3 + $0x210] sm:$0xff] %v815
        %832 = vst [vmem:[#allocation3 + $0x258] sm:$0xff] %v816
        %833 = vst [vmem:[#allocation3 + $0x2a0] sm:$0xff] %v817
        %834 = vst [vmem:[#allocation3 + $0x2e8] sm:$0xff] %v818
        %835 = vst [vmem:[#allocation3 + $0x330] sm:$0xff] %v819
        %836 = vst [vmem:[#allocation3 + $0x378] sm:$0xff] %v820
        %837 = vst [vmem:[#allocation3 + $0x3c0] sm:$0xff] %v821
        %838 = vst [vmem:[#allocation3 + $0x408] sm:$0xff] %v822
        %839 = vst [vmem:[#allocation3 + $0x450] sm:$0xff] %v823
        %v840 = vld [vmem:[%s355] sm:$0xff]
        %v841 = vld [vmem:[%s355 + $0x8] sm:$0xff]
        %v842 = vld [vmem:[%s355 + $0x10] sm:$0xff]
        %v843 = vld [vmem:[%s355 + $0x18] sm:$0xff]
        %v844 = vld [vmem:[%s355 + $0x20] sm:$0xff]
        %v845 = vld [vmem:[%s355 + $0x28] sm:$0xff]
        %v846 = vld [vmem:[%s355 + $0x30] sm:$0xff]
        %v847 = vld [vmem:[%s355 + $0x38] sm:$0xff]
        %v848 = vld [vmem:[%s355 + $0x40] sm:$0xff]
        %v849 = vld [vmem:[%s355 + $0x48] sm:$0xff]
        %v850 = vld [vmem:[%s355 + $0x50] sm:$0xff]
        %v851 = vld [vmem:[%s355 + $0x58] sm:$0xff]
        %v852 = vld [vmem:[%s355 + $0x60] sm:$0xff]
        %v853 = vld [vmem:[%s355 + $0x68] sm:$0xff]
        %v854 = vld [vmem:[%s355 + $0x70] sm:$0xff]
        %v855 = vld [vmem:[%s355 + $0x78] sm:$0xff]
        %v856 = vld [vmem:[%s355 + $0xa0] sm:$0xff]
        %v857 = vld [vmem:[%s355 + $0xa8] sm:$0xff]
        %v858 = vld [vmem:[%s355 + $0xb0] sm:$0xff]
        %v859 = vld [vmem:[%s355 + $0xb8] sm:$0xff]
        %v860 = vld [vmem:[%s355 + $0xc0] sm:$0xff]
        %v861 = vld [vmem:[%s355 + $0xc8] sm:$0xff]
        %v862 = vld [vmem:[%s355 + $0xd0] sm:$0xff]
        %v863 = vld [vmem:[%s355 + $0xd8] sm:$0xff]
        %v864 = vld [vmem:[%s355 + $0xe0] sm:$0xff]
        %v865 = vld [vmem:[%s355 + $0xe8] sm:$0xff]
        %v866 = vld [vmem:[%s355 + $0xf0] sm:$0xff]
        %v867 = vld [vmem:[%s355 + $0xf8] sm:$0xff]
        %v868 = vld [vmem:[%s355 + $0x100] sm:$0xff]
        %v869 = vld [vmem:[%s355 + $0x108] sm:$0xff]
        %v870 = vld [vmem:[%s355 + $0x110] sm:$0xff]
        %v871 = vld [vmem:[%s355 + $0x118] sm:$0xff]
        %v872 = vpack.c.bf16 %v841, %v840
        %v873 = vpack.c.bf16 %v843, %v842
        %v874 = vpack.c.bf16 %v845, %v844
        %v875 = vpack.c.bf16 %v847, %v846
        %v876 = vpack.c.bf16 %v849, %v848
        %v877 = vpack.c.bf16 %v851, %v850
        %v878 = vpack.c.bf16 %v853, %v852
        %v879 = vpack.c.bf16 %v855, %v854
        %v880 = vpack.c.bf16 %v857, %v856
        %v881 = vpack.c.bf16 %v859, %v858
        %v882 = vpack.c.bf16 %v861, %v860
        %v883 = vpack.c.bf16 %v863, %v862
        %v884 = vpack.c.bf16 %v865, %v864
        %v885 = vpack.c.bf16 %v867, %v866
        %v886 = vpack.c.bf16 %v869, %v868
        %v887 = vpack.c.bf16 %v871, %v870
        %888 = vst [vmem:[#allocation3 + $0x20] sm:$0xff] %v872
        %889 = vst [vmem:[#allocation3 + $0x68] sm:$0xff] %v873
        %890 = vst [vmem:[#allocation3 + $0xb0] sm:$0xff] %v874
        %891 = vst [vmem:[#allocation3 + $0xf8] sm:$0xff] %v875
        %892 = vst [vmem:[#allocation3 + $0x140] sm:$0xff] %v876
        %893 = vst [vmem:[#allocation3 + $0x188] sm:$0xff] %v877
        %894 = vst [vmem:[#allocation3 + $0x1d0] sm:$0xff] %v878
        %895 = vst [vmem:[#allocation3 + $0x218] sm:$0xff] %v879
        %896 = vst [vmem:[#allocation3 + $0x260] sm:$0xff] %v880
        %897 = vst [vmem:[#allocation3 + $0x2a8] sm:$0xff] %v881
        %898 = vst [vmem:[#allocation3 + $0x2f0] sm:$0xff] %v882
        %899 = vst [vmem:[#allocation3 + $0x338] sm:$0xff] %v883
        %900 = vst [vmem:[#allocation3 + $0x380] sm:$0xff] %v884
        %901 = vst [vmem:[#allocation3 + $0x3c8] sm:$0xff] %v885
        %902 = vst [vmem:[#allocation3 + $0x410] sm:$0xff] %v886
        %903 = vst [vmem:[#allocation3 + $0x458] sm:$0xff] %v887
        %v904 = vld [vmem:[%s355] sm:$0xff]
        %v905 = vld [vmem:[%s355 + $0x8] sm:$0xff]
        %v906 = vld [vmem:[%s355 + $0x10] sm:$0xff]
        %v907 = vld [vmem:[%s355 + $0x18] sm:$0xff]
        %v908 = vld [vmem:[%s355 + $0x20] sm:$0xff]
        %v909 = vld [vmem:[%s355 + $0x28] sm:$0xff]
        %v910 = vld [vmem:[%s355 + $0x30] sm:$0xff]
        %v911 = vld [vmem:[%s355 + $0x38] sm:$0xff]
        %v912 = vld [vmem:[%s355 + $0x40] sm:$0xff]
        %v913 = vld [vmem:[%s355 + $0x48] sm:$0xff]
        %v914 = vld [vmem:[%s355 + $0x50] sm:$0xff]
        %v915 = vld [vmem:[%s355 + $0x58] sm:$0xff]
        %v916 = vld [vmem:[%s355 + $0x60] sm:$0xff]
        %v917 = vld [vmem:[%s355 + $0x68] sm:$0xff]
        %v918 = vld [vmem:[%s355 + $0x70] sm:$0xff]
        %v919 = vld [vmem:[%s355 + $0x78] sm:$0xff]
        %v920 = vld [vmem:[%s355 + $0xa0] sm:$0xff]
        %v921 = vld [vmem:[%s355 + $0xa8] sm:$0xff]
        %v922 = vld [vmem:[%s355 + $0xb0] sm:$0xff]
        %v923 = vld [vmem:[%s355 + $0xb8] sm:$0xff]
        %v924 = vld [vmem:[%s355 + $0xc0] sm:$0xff]
        %v925 = vld [vmem:[%s355 + $0xc8] sm:$0xff]
        %v926 = vld [vmem:[%s355 + $0xd0] sm:$0xff]
        %v927 = vld [vmem:[%s355 + $0xd8] sm:$0xff]
        %v928 = vld [vmem:[%s355 + $0xe0] sm:$0xff]
        %v929 = vld [vmem:[%s355 + $0xe8] sm:$0xff]
        %v930 = vld [vmem:[%s355 + $0xf0] sm:$0xff]
        %v931 = vld [vmem:[%s355 + $0xf8] sm:$0xff]
        %v932 = vld [vmem:[%s355 + $0x100] sm:$0xff]
        %v933 = vld [vmem:[%s355 + $0x108] sm:$0xff]
        %v934 = vld [vmem:[%s355 + $0x110] sm:$0xff]
        %v935 = vld [vmem:[%s355 + $0x118] sm:$0xff]
        %v936 = vrot.slane %v904, 1
        %v937 = vrot.slane %v905, 1
        %v938 = vrot.slane %v906, 1
        %v939 = vrot.slane %v907, 1
        %v940 = vrot.slane %v908, 1
        %v941 = vrot.slane %v909, 1
        %v942 = vrot.slane %v910, 1
        %v943 = vrot.slane %v911, 1
        %v944 = vrot.slane %v912, 1
        %v945 = vrot.slane %v913, 1
        %v946 = vrot.slane %v914, 1
        %v947 = vrot.slane %v915, 1
        %v948 = vrot.slane %v916, 1
        %v949 = vrot.slane %v917, 1
        %v950 = vrot.slane %v918, 1
        %v951 = vrot.slane %v919, 1
        %v952 = vrot.slane %v920, 1
        %v953 = vrot.slane %v921, 1
        %v954 = vrot.slane %v922, 1
        %v955 = vrot.slane %v923, 1
        %v956 = vrot.slane %v924, 1
        %v957 = vrot.slane %v925, 1
        %v958 = vrot.slane %v926, 1
        %v959 = vrot.slane %v927, 1
        %v960 = vrot.slane %v928, 1
        %v961 = vrot.slane %v929, 1
        %v962 = vrot.slane %v930, 1
        %v963 = vrot.slane %v931, 1
        %v964 = vrot.slane %v932, 1
        %v965 = vrot.slane %v933, 1
        %v966 = vrot.slane %v934, 1
        %v967 = vrot.slane %v935, 1
        %v968 = vsel %vm647, %v936, 0.0
        %v969 = vsel %vm647, %v937, 0.0
        %v970 = vsel %vm647, %v938, 0.0
        %v971 = vsel %vm647, %v939, 0.0
        %v972 = vsel %vm647, %v940, 0.0
        %v973 = vsel %vm647, %v941, 0.0
        %v974 = vsel %vm647, %v942, 0.0
        %v975 = vsel %vm647, %v943, 0.0
        %v976 = vsel %vm647, %v944, 0.0
        %v977 = vsel %vm647, %v945, 0.0
        %v978 = vsel %vm647, %v946, 0.0
        %v979 = vsel %vm647, %v947, 0.0
        %v980 = vsel %vm647, %v948, 0.0
        %v981 = vsel %vm647, %v949, 0.0
        %v982 = vsel %vm647, %v950, 0.0
        %v983 = vsel %vm647, %v951, 0.0
        %v984 = vsel %vm647, %v952, 0.0
        %v985 = vsel %vm647, %v953, 0.0
        %v986 = vsel %vm647, %v954, 0.0
        %v987 = vsel %vm647, %v955, 0.0
        %v988 = vsel %vm647, %v956, 0.0
        %v989 = vsel %vm647, %v957, 0.0
        %v990 = vsel %vm647, %v958, 0.0
        %v991 = vsel %vm647, %v959, 0.0
        %v992 = vsel %vm647, %v960, 0.0
        %v993 = vsel %vm647, %v961, 0.0
        %v994 = vsel %vm647, %v962, 0.0
        %v995 = vsel %vm647, %v963, 0.0
        %v996 = vsel %vm647, %v964, 0.0
        %v997 = vsel %vm647, %v965, 0.0
        %v998 = vsel %vm647, %v966, 0.0
        %v999 = vsel %vm647, %v967, 0.0
        %v1000 = vpack.c.bf16 %v969, %v968
        %v1001 = vpack.c.bf16 %v971, %v970
        %v1002 = vpack.c.bf16 %v973, %v972
        %v1003 = vpack.c.bf16 %v975, %v974
        %v1004 = vpack.c.bf16 %v977, %v976
        %v1005 = vpack.c.bf16 %v979, %v978
        %v1006 = vpack.c.bf16 %v981, %v980
        %v1007 = vpack.c.bf16 %v983, %v982
        %v1008 = vpack.c.bf16 %v985, %v984
        %v1009 = vpack.c.bf16 %v987, %v986
        %v1010 = vpack.c.bf16 %v989, %v988
        %v1011 = vpack.c.bf16 %v991, %v990
        %v1012 = vpack.c.bf16 %v993, %v992
        %v1013 = vpack.c.bf16 %v995, %v994
        %v1014 = vpack.c.bf16 %v997, %v996
        %v1015 = vpack.c.bf16 %v999, %v998
        %1016 = vst [vmem:[#allocation3 + $0x28] sm:$0xff] %v1000
        %1017 = vst [vmem:[#allocation3 + $0x70] sm:$0xff] %v1001
        %1018 = vst [vmem:[#allocation3 + $0xb8] sm:$0xff] %v1002
        %1019 = vst [vmem:[#allocation3 + $0x100] sm:$0xff] %v1003
        %1020 = vst [vmem:[#allocation3 + $0x148] sm:$0xff] %v1004
        %1021 = vst [vmem:[#allocation3 + $0x190] sm:$0xff] %v1005
        %1022 = vst [vmem:[#allocation3 + $0x1d8] sm:$0xff] %v1006
        %1023 = vst [vmem:[#allocation3 + $0x220] sm:$0xff] %v1007
        %1024 = vst [vmem:[#allocation3 + $0x268] sm:$0xff] %v1008
        %1025 = vst [vmem:[#allocation3 + $0x2b0] sm:$0xff] %v1009
        %1026 = vst [vmem:[#allocation3 + $0x2f8] sm:$0xff] %v1010
        %1027 = vst [vmem:[#allocation3 + $0x340] sm:$0xff] %v1011
        %1028 = vst [vmem:[#allocation3 + $0x388] sm:$0xff] %v1012
        %1029 = vst [vmem:[#allocation3 + $0x3d0] sm:$0xff] %v1013
        %1030 = vst [vmem:[#allocation3 + $0x418] sm:$0xff] %v1014
        %1031 = vst [vmem:[#allocation3 + $0x460] sm:$0xff] %v1015
        %s1032 = scalar_lea.vmem [#allocation2], 32
        %v1033 = vld [vmem:[%s1032] sm:$0xff]
        %v1034 = vld [vmem:[%s1032 + $0x8] sm:$0xff]
        %v1035 = vld [vmem:[%s1032 + $0x10] sm:$0xff]
        %v1036 = vld [vmem:[%s1032 + $0x18] sm:$0xff]
        %v1037 = vld [vmem:[%s1032 + $0x20] sm:$0xff]
        %v1038 = vld [vmem:[%s1032 + $0x28] sm:$0xff]
        %v1039 = vld [vmem:[%s1032 + $0x30] sm:$0xff]
        %v1040 = vld [vmem:[%s1032 + $0x38] sm:$0xff]
        %v1041 = vld [vmem:[%s1032 + $0x40] sm:$0xff]
        %v1042 = vld [vmem:[%s1032 + $0x48] sm:$0xff]
        %v1043 = vld [vmem:[%s1032 + $0x50] sm:$0xff]
        %v1044 = vld [vmem:[%s1032 + $0x58] sm:$0xff]
        %v1045 = vld [vmem:[%s1032 + $0x60] sm:$0xff]
        %v1046 = vld [vmem:[%s1032 + $0x68] sm:$0xff]
        %v1047 = vld [vmem:[%s1032 + $0x70] sm:$0xff]
        %v1048 = vld [vmem:[%s1032 + $0x78] sm:$0xff]
        %v1049 = vld [vmem:[%s1032 + $0xa0] sm:$0xff]
        %v1050 = vld [vmem:[%s1032 + $0xa8] sm:$0xff]
        %v1051 = vld [vmem:[%s1032 + $0xb0] sm:$0xff]
        %v1052 = vld [vmem:[%s1032 + $0xb8] sm:$0xff]
        %v1053 = vld [vmem:[%s1032 + $0xc0] sm:$0xff]
        %v1054 = vld [vmem:[%s1032 + $0xc8] sm:$0xff]
        %v1055 = vld [vmem:[%s1032 + $0xd0] sm:$0xff]
        %v1056 = vld [vmem:[%s1032 + $0xd8] sm:$0xff]
        %v1057 = vld [vmem:[%s1032 + $0xe0] sm:$0xff]
        %v1058 = vld [vmem:[%s1032 + $0xe8] sm:$0xff]
        %v1059 = vld [vmem:[%s1032 + $0xf0] sm:$0xff]
        %v1060 = vld [vmem:[%s1032 + $0xf8] sm:$0xff]
        %v1061 = vld [vmem:[%s1032 + $0x100] sm:$0xff]
        %v1062 = vld [vmem:[%s1032 + $0x108] sm:$0xff]
        %v1063 = vld [vmem:[%s1032 + $0x110] sm:$0xff]
        %v1064 = vld [vmem:[%s1032 + $0x118] sm:$0xff]
        %v1065 = vrot.slane %v1033, 7
        %v1066 = vrot.slane %v1034, 7
        %v1067 = vrot.slane %v1035, 7
        %v1068 = vrot.slane %v1036, 7
        %v1069 = vrot.slane %v1037, 7
        %v1070 = vrot.slane %v1038, 7
        %v1071 = vrot.slane %v1039, 7
        %v1072 = vrot.slane %v1040, 7
        %v1073 = vrot.slane %v1041, 7
        %v1074 = vrot.slane %v1042, 7
        %v1075 = vrot.slane %v1043, 7
        %v1076 = vrot.slane %v1044, 7
        %v1077 = vrot.slane %v1045, 7
        %v1078 = vrot.slane %v1046, 7
        %v1079 = vrot.slane %v1047, 7
        %v1080 = vrot.slane %v1048, 7
        %v1081 = vrot.slane %v1049, 7
        %v1082 = vrot.slane %v1050, 7
        %v1083 = vrot.slane %v1051, 7
        %v1084 = vrot.slane %v1052, 7
        %v1085 = vrot.slane %v1053, 7
        %v1086 = vrot.slane %v1054, 7
        %v1087 = vrot.slane %v1055, 7
        %v1088 = vrot.slane %v1056, 7
        %v1089 = vrot.slane %v1057, 7
        %v1090 = vrot.slane %v1058, 7
        %v1091 = vrot.slane %v1059, 7
        %v1092 = vrot.slane %v1060, 7
        %v1093 = vrot.slane %v1061, 7
        %v1094 = vrot.slane %v1062, 7
        %v1095 = vrot.slane %v1063, 7
        %v1096 = vrot.slane %v1064, 7
        %v1097 = vsel %vm453, %v1065, 0.0
        %v1098 = vsel %vm453, %v1066, 0.0
        %v1099 = vsel %vm453, %v1067, 0.0
        %v1100 = vsel %vm453, %v1068, 0.0
        %v1101 = vsel %vm453, %v1069, 0.0
        %v1102 = vsel %vm453, %v1070, 0.0
        %v1103 = vsel %vm453, %v1071, 0.0
        %v1104 = vsel %vm453, %v1072, 0.0
        %v1105 = vsel %vm453, %v1073, 0.0
        %v1106 = vsel %vm453, %v1074, 0.0
        %v1107 = vsel %vm453, %v1075, 0.0
        %v1108 = vsel %vm453, %v1076, 0.0
        %v1109 = vsel %vm453, %v1077, 0.0
        %v1110 = vsel %vm453, %v1078, 0.0
        %v1111 = vsel %vm453, %v1079, 0.0
        %v1112 = vsel %vm453, %v1080, 0.0
        %v1113 = vsel %vm453, %v1081, 0.0
        %v1114 = vsel %vm453, %v1082, 0.0
        %v1115 = vsel %vm453, %v1083, 0.0
        %v1116 = vsel %vm453, %v1084, 0.0
        %v1117 = vsel %vm453, %v1085, 0.0
        %v1118 = vsel %vm453, %v1086, 0.0
        %v1119 = vsel %vm453, %v1087, 0.0
        %v1120 = vsel %vm453, %v1088, 0.0
        %v1121 = vsel %vm453, %v1089, 0.0
        %v1122 = vsel %vm453, %v1090, 0.0
        %v1123 = vsel %vm453, %v1091, 0.0
        %v1124 = vsel %vm453, %v1092, 0.0
        %v1125 = vsel %vm453, %v1093, 0.0
        %v1126 = vsel %vm453, %v1094, 0.0
        %v1127 = vsel %vm453, %v1095, 0.0
        %v1128 = vsel %vm453, %v1096, 0.0
        %v1129 = vpack.c.bf16 %v1098, %v1097
        %v1130 = vpack.c.bf16 %v1100, %v1099
        %v1131 = vpack.c.bf16 %v1102, %v1101
        %v1132 = vpack.c.bf16 %v1104, %v1103
        %v1133 = vpack.c.bf16 %v1106, %v1105
        %v1134 = vpack.c.bf16 %v1108, %v1107
        %v1135 = vpack.c.bf16 %v1110, %v1109
        %v1136 = vpack.c.bf16 %v1112, %v1111
        %v1137 = vpack.c.bf16 %v1114, %v1113
        %v1138 = vpack.c.bf16 %v1116, %v1115
        %v1139 = vpack.c.bf16 %v1118, %v1117
        %v1140 = vpack.c.bf16 %v1120, %v1119
        %v1141 = vpack.c.bf16 %v1122, %v1121
        %v1142 = vpack.c.bf16 %v1124, %v1123
        %v1143 = vpack.c.bf16 %v1126, %v1125
        %v1144 = vpack.c.bf16 %v1128, %v1127
        %1145 = vst [vmem:[#allocation3 + $0x30] sm:$0xff] %v1129
        %1146 = vst [vmem:[#allocation3 + $0x78] sm:$0xff] %v1130
        %1147 = vst [vmem:[#allocation3 + $0xc0] sm:$0xff] %v1131
        %1148 = vst [vmem:[#allocation3 + $0x108] sm:$0xff] %v1132
        %1149 = vst [vmem:[#allocation3 + $0x150] sm:$0xff] %v1133
        %1150 = vst [vmem:[#allocation3 + $0x198] sm:$0xff] %v1134
        %1151 = vst [vmem:[#allocation3 + $0x1e0] sm:$0xff] %v1135
        %1152 = vst [vmem:[#allocation3 + $0x228] sm:$0xff] %v1136
        %1153 = vst [vmem:[#allocation3 + $0x270] sm:$0xff] %v1137
        %1154 = vst [vmem:[#allocation3 + $0x2b8] sm:$0xff] %v1138
        %1155 = vst [vmem:[#allocation3 + $0x300] sm:$0xff] %v1139
        %1156 = vst [vmem:[#allocation3 + $0x348] sm:$0xff] %v1140
        %1157 = vst [vmem:[#allocation3 + $0x390] sm:$0xff] %v1141
        %1158 = vst [vmem:[#allocation3 + $0x3d8] sm:$0xff] %v1142
        %1159 = vst [vmem:[#allocation3 + $0x420] sm:$0xff] %v1143
        %1160 = vst [vmem:[#allocation3 + $0x468] sm:$0xff] %v1144
        %v1161 = vld [vmem:[%s1032] sm:$0xff]
        %v1162 = vld [vmem:[%s1032 + $0x8] sm:$0xff]
        %v1163 = vld [vmem:[%s1032 + $0x10] sm:$0xff]
        %v1164 = vld [vmem:[%s1032 + $0x18] sm:$0xff]
        %v1165 = vld [vmem:[%s1032 + $0x20] sm:$0xff]
        %v1166 = vld [vmem:[%s1032 + $0x28] sm:$0xff]
        %v1167 = vld [vmem:[%s1032 + $0x30] sm:$0xff]
        %v1168 = vld [vmem:[%s1032 + $0x38] sm:$0xff]
        %v1169 = vld [vmem:[%s1032 + $0x40] sm:$0xff]
        %v1170 = vld [vmem:[%s1032 + $0x48] sm:$0xff]
        %v1171 = vld [vmem:[%s1032 + $0x50] sm:$0xff]
        %v1172 = vld [vmem:[%s1032 + $0x58] sm:$0xff]
        %v1173 = vld [vmem:[%s1032 + $0x60] sm:$0xff]
        %v1174 = vld [vmem:[%s1032 + $0x68] sm:$0xff]
        %v1175 = vld [vmem:[%s1032 + $0x70] sm:$0xff]
        %v1176 = vld [vmem:[%s1032 + $0x78] sm:$0xff]
        %v1177 = vld [vmem:[%s1032 + $0xa0] sm:$0xff]
        %v1178 = vld [vmem:[%s1032 + $0xa8] sm:$0xff]
        %v1179 = vld [vmem:[%s1032 + $0xb0] sm:$0xff]
        %v1180 = vld [vmem:[%s1032 + $0xb8] sm:$0xff]
        %v1181 = vld [vmem:[%s1032 + $0xc0] sm:$0xff]
        %v1182 = vld [vmem:[%s1032 + $0xc8] sm:$0xff]
        %v1183 = vld [vmem:[%s1032 + $0xd0] sm:$0xff]
        %v1184 = vld [vmem:[%s1032 + $0xd8] sm:$0xff]
        %v1185 = vld [vmem:[%s1032 + $0xe0] sm:$0xff]
        %v1186 = vld [vmem:[%s1032 + $0xe8] sm:$0xff]
        %v1187 = vld [vmem:[%s1032 + $0xf0] sm:$0xff]
        %v1188 = vld [vmem:[%s1032 + $0xf8] sm:$0xff]
        %v1189 = vld [vmem:[%s1032 + $0x100] sm:$0xff]
        %v1190 = vld [vmem:[%s1032 + $0x108] sm:$0xff]
        %v1191 = vld [vmem:[%s1032 + $0x110] sm:$0xff]
        %v1192 = vld [vmem:[%s1032 + $0x118] sm:$0xff]
        %v1193 = vpack.c.bf16 %v1162, %v1161
        %v1194 = vpack.c.bf16 %v1164, %v1163
        %v1195 = vpack.c.bf16 %v1166, %v1165
        %v1196 = vpack.c.bf16 %v1168, %v1167
        %v1197 = vpack.c.bf16 %v1170, %v1169
        %v1198 = vpack.c.bf16 %v1172, %v1171
        %v1199 = vpack.c.bf16 %v1174, %v1173
        %v1200 = vpack.c.bf16 %v1176, %v1175
        %v1201 = vpack.c.bf16 %v1178, %v1177
        %v1202 = vpack.c.bf16 %v1180, %v1179
        %v1203 = vpack.c.bf16 %v1182, %v1181
        %v1204 = vpack.c.bf16 %v1184, %v1183
        %v1205 = vpack.c.bf16 %v1186, %v1185
        %v1206 = vpack.c.bf16 %v1188, %v1187
        %v1207 = vpack.c.bf16 %v1190, %v1189
        %v1208 = vpack.c.bf16 %v1192, %v1191
        %1209 = vst [vmem:[#allocation3 + $0x38] sm:$0xff] %v1193
        %1210 = vst [vmem:[#allocation3 + $0x80] sm:$0xff] %v1194
        %1211 = vst [vmem:[#allocation3 + $0xc8] sm:$0xff] %v1195
        %1212 = vst [vmem:[#allocation3 + $0x110] sm:$0xff] %v1196
        %1213 = vst [vmem:[#allocation3 + $0x158] sm:$0xff] %v1197
        %1214 = vst [vmem:[#allocation3 + $0x1a0] sm:$0xff] %v1198
        %1215 = vst [vmem:[#allocation3 + $0x1e8] sm:$0xff] %v1199
        %1216 = vst [vmem:[#allocation3 + $0x230] sm:$0xff] %v1200
        %1217 = vst [vmem:[#allocation3 + $0x278] sm:$0xff] %v1201
        %1218 = vst [vmem:[#allocation3 + $0x2c0] sm:$0xff] %v1202
        %1219 = vst [vmem:[#allocation3 + $0x308] sm:$0xff] %v1203
        %1220 = vst [vmem:[#allocation3 + $0x350] sm:$0xff] %v1204
        %1221 = vst [vmem:[#allocation3 + $0x398] sm:$0xff] %v1205
        %1222 = vst [vmem:[#allocation3 + $0x3e0] sm:$0xff] %v1206
        %1223 = vst [vmem:[#allocation3 + $0x428] sm:$0xff] %v1207
        %1224 = vst [vmem:[#allocation3 + $0x470] sm:$0xff] %v1208
        %v1225 = vld [vmem:[%s1032] sm:$0xff]
        %v1226 = vld [vmem:[%s1032 + $0x8] sm:$0xff]
        %v1227 = vld [vmem:[%s1032 + $0x10] sm:$0xff]
        %v1228 = vld [vmem:[%s1032 + $0x18] sm:$0xff]
        %v1229 = vld [vmem:[%s1032 + $0x20] sm:$0xff]
        %v1230 = vld [vmem:[%s1032 + $0x28] sm:$0xff]
        %v1231 = vld [vmem:[%s1032 + $0x30] sm:$0xff]
        %v1232 = vld [vmem:[%s1032 + $0x38] sm:$0xff]
        %v1233 = vld [vmem:[%s1032 + $0x40] sm:$0xff]
        %v1234 = vld [vmem:[%s1032 + $0x48] sm:$0xff]
        %v1235 = vld [vmem:[%s1032 + $0x50] sm:$0xff]
        %v1236 = vld [vmem:[%s1032 + $0x58] sm:$0xff]
        %v1237 = vld [vmem:[%s1032 + $0x60] sm:$0xff]
        %v1238 = vld [vmem:[%s1032 + $0x68] sm:$0xff]
        %v1239 = vld [vmem:[%s1032 + $0x70] sm:$0xff]
        %v1240 = vld [vmem:[%s1032 + $0x78] sm:$0xff]
        %v1241 = vld [vmem:[%s1032 + $0xa0] sm:$0xff]
        %v1242 = vld [vmem:[%s1032 + $0xa8] sm:$0xff]
        %v1243 = vld [vmem:[%s1032 + $0xb0] sm:$0xff]
        %v1244 = vld [vmem:[%s1032 + $0xb8] sm:$0xff]
        %v1245 = vld [vmem:[%s1032 + $0xc0] sm:$0xff]
        %v1246 = vld [vmem:[%s1032 + $0xc8] sm:$0xff]
        %v1247 = vld [vmem:[%s1032 + $0xd0] sm:$0xff]
        %v1248 = vld [vmem:[%s1032 + $0xd8] sm:$0xff]
        %v1249 = vld [vmem:[%s1032 + $0xe0] sm:$0xff]
        %v1250 = vld [vmem:[%s1032 + $0xe8] sm:$0xff]
        %v1251 = vld [vmem:[%s1032 + $0xf0] sm:$0xff]
        %v1252 = vld [vmem:[%s1032 + $0xf8] sm:$0xff]
        %v1253 = vld [vmem:[%s1032 + $0x100] sm:$0xff]
        %v1254 = vld [vmem:[%s1032 + $0x108] sm:$0xff]
        %v1255 = vld [vmem:[%s1032 + $0x110] sm:$0xff]
        %v1256 = vld [vmem:[%s1032 + $0x118] sm:$0xff]
        %v1257 = vrot.slane %v1225, 1
        %v1258 = vrot.slane %v1226, 1
        %v1259 = vrot.slane %v1227, 1
        %v1260 = vrot.slane %v1228, 1
        %v1261 = vrot.slane %v1229, 1
        %v1262 = vrot.slane %v1230, 1
        %v1263 = vrot.slane %v1231, 1
        %v1264 = vrot.slane %v1232, 1
        %v1265 = vrot.slane %v1233, 1
        %v1266 = vrot.slane %v1234, 1
        %v1267 = vrot.slane %v1235, 1
        %v1268 = vrot.slane %v1236, 1
        %v1269 = vrot.slane %v1237, 1
        %v1270 = vrot.slane %v1238, 1
        %v1271 = vrot.slane %v1239, 1
        %v1272 = vrot.slane %v1240, 1
        %v1273 = vrot.slane %v1241, 1
        %v1274 = vrot.slane %v1242, 1
        %v1275 = vrot.slane %v1243, 1
        %v1276 = vrot.slane %v1244, 1
        %v1277 = vrot.slane %v1245, 1
        %v1278 = vrot.slane %v1246, 1
        %v1279 = vrot.slane %v1247, 1
        %v1280 = vrot.slane %v1248, 1
        %v1281 = vrot.slane %v1249, 1
        %v1282 = vrot.slane %v1250, 1
        %v1283 = vrot.slane %v1251, 1
        %v1284 = vrot.slane %v1252, 1
        %v1285 = vrot.slane %v1253, 1
        %v1286 = vrot.slane %v1254, 1
        %v1287 = vrot.slane %v1255, 1
        %v1288 = vrot.slane %v1256, 1
        %v1289 = vsel %vm647, %v1257, 0.0
        %v1290 = vsel %vm647, %v1258, 0.0
        %v1291 = vsel %vm647, %v1259, 0.0
        %v1292 = vsel %vm647, %v1260, 0.0
        %v1293 = vsel %vm647, %v1261, 0.0
        %v1294 = vsel %vm647, %v1262, 0.0
        %v1295 = vsel %vm647, %v1263, 0.0
        %v1296 = vsel %vm647, %v1264, 0.0
        %v1297 = vsel %vm647, %v1265, 0.0
        %v1298 = vsel %vm647, %v1266, 0.0
        %v1299 = vsel %vm647, %v1267, 0.0
        %v1300 = vsel %vm647, %v1268, 0.0
        %v1301 = vsel %vm647, %v1269, 0.0
        %v1302 = vsel %vm647, %v1270, 0.0
        %v1303 = vsel %vm647, %v1271, 0.0
        %v1304 = vsel %vm647, %v1272, 0.0
        %v1305 = vsel %vm647, %v1273, 0.0
        %v1306 = vsel %vm647, %v1274, 0.0
        %v1307 = vsel %vm647, %v1275, 0.0
        %v1308 = vsel %vm647, %v1276, 0.0
        %v1309 = vsel %vm647, %v1277, 0.0
        %v1310 = vsel %vm647, %v1278, 0.0
        %v1311 = vsel %vm647, %v1279, 0.0
        %v1312 = vsel %vm647, %v1280, 0.0
        %v1313 = vsel %vm647, %v1281, 0.0
        %v1314 = vsel %vm647, %v1282, 0.0
        %v1315 = vsel %vm647, %v1283, 0.0
        %v1316 = vsel %vm647, %v1284, 0.0
        %v1317 = vsel %vm647, %v1285, 0.0
        %v1318 = vsel %vm647, %v1286, 0.0
        %v1319 = vsel %vm647, %v1287, 0.0
        %v1320 = vsel %vm647, %v1288, 0.0
        %v1321 = vpack.c.bf16 %v1290, %v1289
        %v1322 = vpack.c.bf16 %v1292, %v1291
        %v1323 = vpack.c.bf16 %v1294, %v1293
        %v1324 = vpack.c.bf16 %v1296, %v1295
        %v1325 = vpack.c.bf16 %v1298, %v1297
        %v1326 = vpack.c.bf16 %v1300, %v1299
        %v1327 = vpack.c.bf16 %v1302, %v1301
        %v1328 = vpack.c.bf16 %v1304, %v1303
        %v1329 = vpack.c.bf16 %v1306, %v1305
        %v1330 = vpack.c.bf16 %v1308, %v1307
        %v1331 = vpack.c.bf16 %v1310, %v1309
        %v1332 = vpack.c.bf16 %v1312, %v1311
        %v1333 = vpack.c.bf16 %v1314, %v1313
        %v1334 = vpack.c.bf16 %v1316, %v1315
        %v1335 = vpack.c.bf16 %v1318, %v1317
        %v1336 = vpack.c.bf16 %v1320, %v1319
        %1337 = vst [vmem:[#allocation3 + $0x40] sm:$0xff] %v1321
        %1338 = vst [vmem:[#allocation3 + $0x88] sm:$0xff] %v1322
        %1339 = vst [vmem:[#allocation3 + $0xd0] sm:$0xff] %v1323
        %1340 = vst [vmem:[#allocation3 + $0x118] sm:$0xff] %v1324
        %1341 = vst [vmem:[#allocation3 + $0x160] sm:$0xff] %v1325
        %1342 = vst [vmem:[#allocation3 + $0x1a8] sm:$0xff] %v1326
        %1343 = vst [vmem:[#allocation3 + $0x1f0] sm:$0xff] %v1327
        %1344 = vst [vmem:[#allocation3 + $0x238] sm:$0xff] %v1328
        %1345 = vst [vmem:[#allocation3 + $0x280] sm:$0xff] %v1329
        %1346 = vst [vmem:[#allocation3 + $0x2c8] sm:$0xff] %v1330
        %1347 = vst [vmem:[#allocation3 + $0x310] sm:$0xff] %v1331
        %1348 = vst [vmem:[#allocation3 + $0x358] sm:$0xff] %v1332
        %1349 = vst [vmem:[#allocation3 + $0x3a0] sm:$0xff] %v1333
        %1350 = vst [vmem:[#allocation3 + $0x3e8] sm:$0xff] %v1334
        %1351 = vst [vmem:[#allocation3 + $0x430] sm:$0xff] %v1335
        %1352 = vst [vmem:[#allocation3 + $0x478] sm:$0xff] %v1336
        %v1353 = vld [vmem:[#allocation3] sm:$0xff]
        %v1354 = vld [vmem:[#allocation3 + $0x8] sm:$0xff]
        %v1355 = vld [vmem:[#allocation3 + $0x10] sm:$0xff]
        %v1356 = vld [vmem:[#allocation3 + $0x18] sm:$0xff]
        %v1357 = vld [vmem:[#allocation3 + $0x20] sm:$0xff]
        %v1358 = vld [vmem:[#allocation3 + $0x28] sm:$0xff]
        %v1359 = vld [vmem:[#allocation3 + $0x30] sm:$0xff]
        %v1360 = vld [vmem:[#allocation3 + $0x38] sm:$0xff]
        %v1361 = vld [vmem:[#allocation3 + $0x40] sm:$0xff]
        %v1362 = vld [vmem:[#allocation3 + $0x48] sm:$0xff]
        %v1363 = vld [vmem:[#allocation3 + $0x50] sm:$0xff]
        %v1364 = vld [vmem:[#allocation3 + $0x58] sm:$0xff]
        %v1365 = vld [vmem:[#allocation3 + $0x60] sm:$0xff]
        %v1366 = vld [vmem:[#allocation3 + $0x68] sm:$0xff]
        %v1367 = vld [vmem:[#allocation3 + $0x70] sm:$0xff]
        %v1368 = vld [vmem:[#allocation3 + $0x78] sm:$0xff]
        %v1369 = vld [vmem:[#allocation3 + $0x80] sm:$0xff]
        %v1370 = vld [vmem:[#allocation3 + $0x88] sm:$0xff]
        %v1371 = vld [vmem:[#allocation3 + $0x90] sm:$0xff]
        %v1372 = vld [vmem:[#allocation3 + $0x98] sm:$0xff]
        %v1373 = vld [vmem:[#allocation3 + $0xa0] sm:$0xff]
        %v1374 = vld [vmem:[#allocation3 + $0xa8] sm:$0xff]
        %v1375 = vld [vmem:[#allocation3 + $0xb0] sm:$0xff]
        %v1376 = vld [vmem:[#allocation3 + $0xb8] sm:$0xff]
        %v1377 = vld [vmem:[#allocation3 + $0xc0] sm:$0xff]
        %v1378 = vld [vmem:[#allocation3 + $0xc8] sm:$0xff]
        %v1379 = vld [vmem:[#allocation3 + $0xd0] sm:$0xff]
        %v1380 = vld [vmem:[#allocation3 + $0xd8] sm:$0xff]
        %v1381 = vld [vmem:[#allocation3 + $0xe0] sm:$0xff]
        %v1382 = vld [vmem:[#allocation3 + $0xe8] sm:$0xff]
        %v1383 = vld [vmem:[#allocation3 + $0xf0] sm:$0xff]
        %v1384 = vld [vmem:[#allocation3 + $0xf8] sm:$0xff]
        %v1385 = vld [vmem:[#allocation3 + $0x100] sm:$0xff]
        %v1386 = vld [vmem:[#allocation3 + $0x108] sm:$0xff]
        %v1387 = vld [vmem:[#allocation3 + $0x110] sm:$0xff]
        %v1388 = vld [vmem:[#allocation3 + $0x118] sm:$0xff]
        %v1389 = vld [vmem:[#allocation3 + $0x120] sm:$0xff]
        %v1390 = vld [vmem:[#allocation3 + $0x128] sm:$0xff]
        %v1391 = vld [vmem:[#allocation3 + $0x130] sm:$0xff]
        %v1392 = vld [vmem:[#allocation3 + $0x138] sm:$0xff]
        %v1393 = vld [vmem:[#allocation3 + $0x140] sm:$0xff]
        %v1394 = vld [vmem:[#allocation3 + $0x148] sm:$0xff]
        %v1395 = vld [vmem:[#allocation3 + $0x150] sm:$0xff]
        %v1396 = vld [vmem:[#allocation3 + $0x158] sm:$0xff]
        %v1397 = vld [vmem:[#allocation3 + $0x160] sm:$0xff]
        %v1398 = vld [vmem:[#allocation3 + $0x168] sm:$0xff]
        %v1399 = vld [vmem:[#allocation3 + $0x170] sm:$0xff]
        %v1400 = vld [vmem:[#allocation3 + $0x178] sm:$0xff]
        %v1401 = vld [vmem:[#allocation3 + $0x180] sm:$0xff]
        %v1402 = vld [vmem:[#allocation3 + $0x188] sm:$0xff]
        %v1403 = vld [vmem:[#allocation3 + $0x190] sm:$0xff]
        %v1404 = vld [vmem:[#allocation3 + $0x198] sm:$0xff]
        %v1405 = vld [vmem:[#allocation3 + $0x1a0] sm:$0xff]
        %v1406 = vld [vmem:[#allocation3 + $0x1a8] sm:$0xff]
        %v1407 = vld [vmem:[#allocation3 + $0x1b0] sm:$0xff]
        %v1408 = vld [vmem:[#allocation3 + $0x1b8] sm:$0xff]
        %v1409 = vld [vmem:[#allocation3 + $0x1c0] sm:$0xff]
        %v1410 = vld [vmem:[#allocation3 + $0x1c8] sm:$0xff]
        %v1411 = vld [vmem:[#allocation3 + $0x1d0] sm:$0xff]
        %v1412 = vld [vmem:[#allocation3 + $0x1d8] sm:$0xff]
        %v1413 = vld [vmem:[#allocation3 + $0x1e0] sm:$0xff]
        %v1414 = vld [vmem:[#allocation3 + $0x1e8] sm:$0xff]
        %v1415 = vld [vmem:[#allocation3 + $0x1f0] sm:$0xff]
        %v1416 = vld [vmem:[#allocation3 + $0x1f8] sm:$0xff]
        %v1417 = vld [vmem:[#allocation3 + $0x200] sm:$0xff]
        %v1418 = vld [vmem:[#allocation3 + $0x208] sm:$0xff]
        %v1419 = vld [vmem:[#allocation3 + $0x210] sm:$0xff]
        %v1420 = vld [vmem:[#allocation3 + $0x218] sm:$0xff]
        %v1421 = vld [vmem:[#allocation3 + $0x220] sm:$0xff]
        %v1422 = vld [vmem:[#allocation3 + $0x228] sm:$0xff]
        %v1423 = vld [vmem:[#allocation3 + $0x230] sm:$0xff]
        %v1424 = vld [vmem:[#allocation3 + $0x238] sm:$0xff]
        %v1425 = vld [vmem:[#allocation3 + $0x240] sm:$0xff]
        %v1426 = vld [vmem:[#allocation3 + $0x248] sm:$0xff]
        %v1427 = vld [vmem:[#allocation3 + $0x250] sm:$0xff]
        %v1428 = vld [vmem:[#allocation3 + $0x258] sm:$0xff]
        %v1429 = vld [vmem:[#allocation3 + $0x260] sm:$0xff]
        %v1430 = vld [vmem:[#allocation3 + $0x268] sm:$0xff]
        %v1431 = vld [vmem:[#allocation3 + $0x270] sm:$0xff]
        %v1432 = vld [vmem:[#allocation3 + $0x278] sm:$0xff]
        %v1433 = vld [vmem:[#allocation3 + $0x280] sm:$0xff]
        %v1434 = vld [vmem:[#allocation3 + $0x288] sm:$0xff]
        %v1435 = vld [vmem:[#allocation3 + $0x290] sm:$0xff]
        %v1436 = vld [vmem:[#allocation3 + $0x298] sm:$0xff]
        %v1437 = vld [vmem:[#allocation3 + $0x2a0] sm:$0xff]
        %v1438 = vld [vmem:[#allocation3 + $0x2a8] sm:$0xff]
        %v1439 = vld [vmem:[#allocation3 + $0x2b0] sm:$0xff]
        %v1440 = vld [vmem:[#allocation3 + $0x2b8] sm:$0xff]
        %v1441 = vld [vmem:[#allocation3 + $0x2c0] sm:$0xff]
        %v1442 = vld [vmem:[#allocation3 + $0x2c8] sm:$0xff]
        %v1443 = vld [vmem:[#allocation3 + $0x2d0] sm:$0xff]
        %v1444 = vld [vmem:[#allocation3 + $0x2d8] sm:$0xff]
        %v1445 = vld [vmem:[#allocation3 + $0x2e0] sm:$0xff]
        %v1446 = vld [vmem:[#allocation3 + $0x2e8] sm:$0xff]
        %v1447 = vld [vmem:[#allocation3 + $0x2f0] sm:$0xff]
        %v1448 = vld [vmem:[#allocation3 + $0x2f8] sm:$0xff]
        %v1449 = vld [vmem:[#allocation3 + $0x300] sm:$0xff]
        %v1450 = vld [vmem:[#allocation3 + $0x308] sm:$0xff]
        %v1451 = vld [vmem:[#allocation3 + $0x310] sm:$0xff]
        %v1452 = vld [vmem:[#allocation3 + $0x318] sm:$0xff]
        %v1453 = vld [vmem:[#allocation3 + $0x320] sm:$0xff]
        %v1454 = vld [vmem:[#allocation3 + $0x328] sm:$0xff]
        %v1455 = vld [vmem:[#allocation3 + $0x330] sm:$0xff]
        %v1456 = vld [vmem:[#allocation3 + $0x338] sm:$0xff]
        %v1457 = vld [vmem:[#allocation3 + $0x340] sm:$0xff]
        %v1458 = vld [vmem:[#allocation3 + $0x348] sm:$0xff]
        %v1459 = vld [vmem:[#allocation3 + $0x350] sm:$0xff]
        %v1460 = vld [vmem:[#allocation3 + $0x358] sm:$0xff]
        %v1461 = vld [vmem:[#allocation3 + $0x360] sm:$0xff]
        %v1462 = vld [vmem:[#allocation3 + $0x368] sm:$0xff]
        %v1463 = vld [vmem:[#allocation3 + $0x370] sm:$0xff]
        %v1464 = vld [vmem:[#allocation3 + $0x378] sm:$0xff]
        %v1465 = vld [vmem:[#allocation3 + $0x380] sm:$0xff]
        %v1466 = vld [vmem:[#allocation3 + $0x388] sm:$0xff]
        %v1467 = vld [vmem:[#allocation3 + $0x390] sm:$0xff]
        %v1468 = vld [vmem:[#allocation3 + $0x398] sm:$0xff]
        %v1469 = vld [vmem:[#allocation3 + $0x3a0] sm:$0xff]
        %v1470 = vld [vmem:[#allocation3 + $0x3a8] sm:$0xff]
        %v1471 = vld [vmem:[#allocation3 + $0x3b0] sm:$0xff]
        %v1472 = vld [vmem:[#allocation3 + $0x3b8] sm:$0xff]
        %v1473 = vld [vmem:[#allocation3 + $0x3c0] sm:$0xff]
        %v1474 = vld [vmem:[#allocation3 + $0x3c8] sm:$0xff]
        %v1475 = vld [vmem:[#allocation3 + $0x3d0] sm:$0xff]
        %v1476 = vld [vmem:[#allocation3 + $0x3d8] sm:$0xff]
        %v1477 = vld [vmem:[#allocation3 + $0x3e0] sm:$0xff]
        %v1478 = vld [vmem:[#allocation3 + $0x3e8] sm:$0xff]
        %v1479 = vld [vmem:[#allocation3 + $0x3f0] sm:$0xff]
        %v1480 = vld [vmem:[#allocation3 + $0x3f8] sm:$0xff]
        %v1481 = vld [vmem:[#allocation3 + $0x400] sm:$0xff]
        %v1482 = vld [vmem:[#allocation3 + $0x408] sm:$0xff]
        %v1483 = vld [vmem:[#allocation3 + $0x410] sm:$0xff]
        %v1484 = vld [vmem:[#allocation3 + $0x418] sm:$0xff]
        %v1485 = vld [vmem:[#allocation3 + $0x420] sm:$0xff]
        %v1486 = vld [vmem:[#allocation3 + $0x428] sm:$0xff]
        %v1487 = vld [vmem:[#allocation3 + $0x430] sm:$0xff]
        %v1488 = vld [vmem:[#allocation3 + $0x438] sm:$0xff]
        %v1489 = vld [vmem:[#allocation3 + $0x440] sm:$0xff]
        %v1490 = vld [vmem:[#allocation3 + $0x448] sm:$0xff]
        %v1491 = vld [vmem:[#allocation3 + $0x450] sm:$0xff]
        %v1492 = vld [vmem:[#allocation3 + $0x458] sm:$0xff]
        %v1493 = vld [vmem:[#allocation3 + $0x460] sm:$0xff]
        %v1494 = vld [vmem:[#allocation3 + $0x468] sm:$0xff]
        %v1495 = vld [vmem:[#allocation3 + $0x470] sm:$0xff]
        %v1496 = vld [vmem:[#allocation3 + $0x478] sm:$0xff]
        %v1497 = vld [vmem:[#allocation7] sm:$0xff]
        %v1498 = vld [vmem:[#allocation7 + $0x8] sm:$0xff]
        %v1499 = vld [vmem:[#allocation7 + $0x10] sm:$0xff]
        %v1500 = vld [vmem:[#allocation7 + $0x18] sm:$0xff]
        %v1501 = vld [vmem:[#allocation7 + $0x20] sm:$0xff]
        %v1502 = vld [vmem:[#allocation7 + $0x28] sm:$0xff]
        %v1503 = vld [vmem:[#allocation7 + $0x30] sm:$0xff]
        %v1504 = vld [vmem:[#allocation7 + $0x38] sm:$0xff]
        %v1505 = vld [vmem:[#allocation7 + $0x40] sm:$0xff]
        %v1506 = vld [vmem:[#allocation7 + $0x48] sm:$0xff]
        %v1507 = vld [vmem:[#allocation7 + $0x50] sm:$0xff]
        %v1508 = vld [vmem:[#allocation7 + $0x58] sm:$0xff]
        %v1509 = vld [vmem:[#allocation7 + $0x60] sm:$0xff]
        %v1510 = vld [vmem:[#allocation7 + $0x68] sm:$0xff]
        %v1511 = vld [vmem:[#allocation7 + $0x70] sm:$0xff]
        %v1512 = vld [vmem:[#allocation7 + $0x78] sm:$0xff]
        %v1513 = vld [vmem:[#allocation7 + $0x80] sm:$0xff]
        %v1514 = vld [vmem:[#allocation7 + $0x88] sm:$0xff]
        %v1515 = vld [vmem:[#allocation7 + $0x90] sm:$0xff]
        %v1516 = vld [vmem:[#allocation7 + $0x98] sm:$0xff]
        %v1517 = vld [vmem:[#allocation7 + $0xa0] sm:$0xff]
        %v1518 = vld [vmem:[#allocation7 + $0xa8] sm:$0xff]
        %v1519 = vld [vmem:[#allocation7 + $0xb0] sm:$0xff]
        %v1520 = vld [vmem:[#allocation7 + $0xb8] sm:$0xff]
        %v1521 = vld [vmem:[#allocation7 + $0xc0] sm:$0xff]
        %v1522 = vld [vmem:[#allocation7 + $0xc8] sm:$0xff]
        %v1523 = vld [vmem:[#allocation7 + $0xd0] sm:$0xff]
        %v1524 = vld [vmem:[#allocation7 + $0xd8] sm:$0xff]
        %v1525 = vld [vmem:[#allocation7 + $0xe0] sm:$0xff]
        %v1526 = vld [vmem:[#allocation7 + $0xe8] sm:$0xff]
        %v1527 = vld [vmem:[#allocation7 + $0xf0] sm:$0xff]
        %v1528 = vld [vmem:[#allocation7 + $0xf8] sm:$0xff]
        %v1529 = vld [vmem:[#allocation7 + $0x100] sm:$0xff]
        %v1530 = vld [vmem:[#allocation7 + $0x108] sm:$0xff]
        %v1531 = vld [vmem:[#allocation7 + $0x110] sm:$0xff]
        %v1532 = vld [vmem:[#allocation7 + $0x118] sm:$0xff]
        %v1533 = vld [vmem:[#allocation7 + $0x120] sm:$0xff]
        %v1534 = vld [vmem:[#allocation7 + $0x128] sm:$0xff]
        %v1535 = vld [vmem:[#allocation7 + $0x130] sm:$0xff]
        %v1536 = vld [vmem:[#allocation7 + $0x138] sm:$0xff]
        %v1537 = vld [vmem:[#allocation7 + $0x140] sm:$0xff]
        %v1538 = vld [vmem:[#allocation7 + $0x148] sm:$0xff]
        %v1539 = vld [vmem:[#allocation7 + $0x150] sm:$0xff]
        %v1540 = vld [vmem:[#allocation7 + $0x158] sm:$0xff]
        %v1541 = vld [vmem:[#allocation7 + $0x160] sm:$0xff]
        %v1542 = vld [vmem:[#allocation7 + $0x168] sm:$0xff]
        %v1543 = vld [vmem:[#allocation7 + $0x170] sm:$0xff]
        %v1544 = vld [vmem:[#allocation7 + $0x178] sm:$0xff]
        %v1545 = vld [vmem:[#allocation7 + $0x180] sm:$0xff]
        %v1546 = vld [vmem:[#allocation7 + $0x188] sm:$0xff]
        %v1547 = vld [vmem:[#allocation7 + $0x190] sm:$0xff]
        %v1548 = vld [vmem:[#allocation7 + $0x198] sm:$0xff]
        %v1549 = vld [vmem:[#allocation7 + $0x1a0] sm:$0xff]
        %v1550 = vld [vmem:[#allocation7 + $0x1a8] sm:$0xff]
        %v1551 = vld [vmem:[#allocation7 + $0x1b0] sm:$0xff]
        %v1552 = vld [vmem:[#allocation7 + $0x1b8] sm:$0xff]
        %v1553 = vld [vmem:[#allocation7 + $0x1c0] sm:$0xff]
        %v1554 = vld [vmem:[#allocation7 + $0x1c8] sm:$0xff]
        %v1555 = vld [vmem:[#allocation7 + $0x1d0] sm:$0xff]
        %v1556 = vld [vmem:[#allocation7 + $0x1d8] sm:$0xff]
        %v1557 = vld [vmem:[#allocation7 + $0x1e0] sm:$0xff]
        %v1558 = vld [vmem:[#allocation7 + $0x1e8] sm:$0xff]
        %v1559 = vld [vmem:[#allocation7 + $0x1f0] sm:$0xff]
        %v1560 = vld [vmem:[#allocation7 + $0x1f8] sm:$0xff]
        %v1561 = vld [vmem:[#allocation7 + $0x200] sm:$0xff]
        %v1562 = vld [vmem:[#allocation7 + $0x208] sm:$0xff]
        %v1563 = vld [vmem:[#allocation7 + $0x210] sm:$0xff]
        %v1564 = vld [vmem:[#allocation7 + $0x218] sm:$0xff]
        %v1565 = vld [vmem:[#allocation7 + $0x220] sm:$0xff]
        %v1566 = vld [vmem:[#allocation7 + $0x228] sm:$0xff]
        %v1567 = vld [vmem:[#allocation7 + $0x230] sm:$0xff]
        %v1568 = vld [vmem:[#allocation7 + $0x238] sm:$0xff]
        %v1569 = vld [vmem:[#allocation7 + $0x240] sm:$0xff]
        %v1570 = vld [vmem:[#allocation7 + $0x248] sm:$0xff]
        %v1571 = vld [vmem:[#allocation7 + $0x250] sm:$0xff]
        %v1572 = vld [vmem:[#allocation7 + $0x258] sm:$0xff]
        %v1573 = vld [vmem:[#allocation7 + $0x260] sm:$0xff]
        %v1574 = vld [vmem:[#allocation7 + $0x268] sm:$0xff]
        %v1575 = vld [vmem:[#allocation7 + $0x270] sm:$0xff]
        %v1576 = vld [vmem:[#allocation7 + $0x278] sm:$0xff]
        %v1577 = vld [vmem:[#allocation7 + $0x280] sm:$0xff]
        %v1578 = vld [vmem:[#allocation7 + $0x288] sm:$0xff]
        %v1579 = vld [vmem:[#allocation7 + $0x290] sm:$0xff]
        %v1580 = vld [vmem:[#allocation7 + $0x298] sm:$0xff]
        %v1581 = vld [vmem:[#allocation7 + $0x2a0] sm:$0xff]
        %v1582 = vld [vmem:[#allocation7 + $0x2a8] sm:$0xff]
        %v1583 = vld [vmem:[#allocation7 + $0x2b0] sm:$0xff]
        %v1584 = vld [vmem:[#allocation7 + $0x2b8] sm:$0xff]
        %v1585 = vld [vmem:[#allocation7 + $0x2c0] sm:$0xff]
        %v1586 = vld [vmem:[#allocation7 + $0x2c8] sm:$0xff]
        %v1587 = vld [vmem:[#allocation7 + $0x2d0] sm:$0xff]
        %v1588 = vld [vmem:[#allocation7 + $0x2d8] sm:$0xff]
        %v1589 = vld [vmem:[#allocation7 + $0x2e0] sm:$0xff]
        %v1590 = vld [vmem:[#allocation7 + $0x2e8] sm:$0xff]
        %v1591 = vld [vmem:[#allocation7 + $0x2f0] sm:$0xff]
        %v1592 = vld [vmem:[#allocation7 + $0x2f8] sm:$0xff]
        %v1593 = vld [vmem:[#allocation7 + $0x300] sm:$0xff]
        %v1594 = vld [vmem:[#allocation7 + $0x308] sm:$0xff]
        %v1595 = vld [vmem:[#allocation7 + $0x310] sm:$0xff]
        %v1596 = vld [vmem:[#allocation7 + $0x318] sm:$0xff]
        %v1597 = vld [vmem:[#allocation7 + $0x320] sm:$0xff]
        %v1598 = vld [vmem:[#allocation7 + $0x328] sm:$0xff]
        %v1599 = vld [vmem:[#allocation7 + $0x330] sm:$0xff]
        %v1600 = vld [vmem:[#allocation7 + $0x338] sm:$0xff]
        %v1601 = vld [vmem:[#allocation7 + $0x340] sm:$0xff]
        %v1602 = vld [vmem:[#allocation7 + $0x348] sm:$0xff]
        %v1603 = vld [vmem:[#allocation7 + $0x350] sm:$0xff]
        %v1604 = vld [vmem:[#allocation7 + $0x358] sm:$0xff]
        %v1605 = vld [vmem:[#allocation7 + $0x360] sm:$0xff]
        %v1606 = vld [vmem:[#allocation7 + $0x368] sm:$0xff]
        %v1607 = vld [vmem:[#allocation7 + $0x370] sm:$0xff]
        %v1608 = vld [vmem:[#allocation7 + $0x378] sm:$0xff]
        %v1609 = vld [vmem:[#allocation7 + $0x380] sm:$0xff]
        %v1610 = vld [vmem:[#allocation7 + $0x388] sm:$0xff]
        %v1611 = vld [vmem:[#allocation7 + $0x390] sm:$0xff]
        %v1612 = vld [vmem:[#allocation7 + $0x398] sm:$0xff]
        %v1613 = vld [vmem:[#allocation7 + $0x3a0] sm:$0xff]
        %v1614 = vld [vmem:[#allocation7 + $0x3a8] sm:$0xff]
        %v1615 = vld [vmem:[#allocation7 + $0x3b0] sm:$0xff]
        %v1616 = vld [vmem:[#allocation7 + $0x3b8] sm:$0xff]
        %v1617 = vld [vmem:[#allocation7 + $0x3c0] sm:$0xff]
        %v1618 = vld [vmem:[#allocation7 + $0x3c8] sm:$0xff]
        %v1619 = vld [vmem:[#allocation7 + $0x3d0] sm:$0xff]
        %v1620 = vld [vmem:[#allocation7 + $0x3d8] sm:$0xff]
        %v1621 = vld [vmem:[#allocation7 + $0x3e0] sm:$0xff]
        %v1622 = vld [vmem:[#allocation7 + $0x3e8] sm:$0xff]
        %v1623 = vld [vmem:[#allocation7 + $0x3f0] sm:$0xff]
        %v1624 = vld [vmem:[#allocation7 + $0x3f8] sm:$0xff]
        %v1625 = vld [vmem:[#allocation7 + $0x400] sm:$0xff]
        %v1626 = vld [vmem:[#allocation7 + $0x408] sm:$0xff]
        %v1627 = vld [vmem:[#allocation7 + $0x410] sm:$0xff]
        %v1628 = vld [vmem:[#allocation7 + $0x418] sm:$0xff]
        %v1629 = vld [vmem:[#allocation7 + $0x420] sm:$0xff]
        %v1630 = vld [vmem:[#allocation7 + $0x428] sm:$0xff]
        %v1631 = vld [vmem:[#allocation7 + $0x430] sm:$0xff]
        %v1632 = vld [vmem:[#allocation7 + $0x438] sm:$0xff]
        %v1633 = vld [vmem:[#allocation7 + $0x440] sm:$0xff]
        %v1634 = vld [vmem:[#allocation7 + $0x448] sm:$0xff]
        %v1635 = vld [vmem:[#allocation7 + $0x450] sm:$0xff]
        %v1636 = vld [vmem:[#allocation7 + $0x458] sm:$0xff]
        %v1637 = vld [vmem:[#allocation7 + $0x460] sm:$0xff]
        %v1638 = vld [vmem:[#allocation7 + $0x468] sm:$0xff]
        %v1639 = vld [vmem:[#allocation7 + $0x470] sm:$0xff]
        %v1640 = vld [vmem:[#allocation7 + $0x478] sm:$0xff]
        %v1641 = vld [vmem:[#allocation7 + $0x480] sm:$0xff]
        %v1642 = vld [vmem:[#allocation7 + $0x488] sm:$0xff]
        %v1643 = vld [vmem:[#allocation7 + $0x490] sm:$0xff]
        %v1644 = vld [vmem:[#allocation7 + $0x498] sm:$0xff]
        %v1645 = vld [vmem:[#allocation7 + $0x4a0] sm:$0xff]
        %v1646 = vld [vmem:[#allocation7 + $0x4a8] sm:$0xff]
        %v1647 = vld [vmem:[#allocation7 + $0x4b0] sm:$0xff]
        %v1648 = vld [vmem:[#allocation7 + $0x4b8] sm:$0xff]
        %v1649 = vld [vmem:[#allocation7 + $0x4c0] sm:$0xff]
        %v1650 = vld [vmem:[#allocation7 + $0x4c8] sm:$0xff]
        %v1651 = vld [vmem:[#allocation7 + $0x4d0] sm:$0xff]
        %v1652 = vld [vmem:[#allocation7 + $0x4d8] sm:$0xff]
        %v1653 = vld [vmem:[#allocation7 + $0x4e0] sm:$0xff]
        %v1654 = vld [vmem:[#allocation7 + $0x4e8] sm:$0xff]
        %v1655 = vld [vmem:[#allocation7 + $0x4f0] sm:$0xff]
        %v1656 = vld [vmem:[#allocation7 + $0x4f8] sm:$0xff]
        %v1657 = vld [vmem:[#allocation7 + $0x500] sm:$0xff]
        %v1658 = vld [vmem:[#allocation7 + $0x508] sm:$0xff]
        %v1659 = vld [vmem:[#allocation7 + $0x510] sm:$0xff]
        %v1660 = vld [vmem:[#allocation7 + $0x518] sm:$0xff]
        %v1661 = vld [vmem:[#allocation7 + $0x520] sm:$0xff]
        %v1662 = vld [vmem:[#allocation7 + $0x528] sm:$0xff]
        %v1663 = vld [vmem:[#allocation7 + $0x530] sm:$0xff]
        %v1664 = vld [vmem:[#allocation7 + $0x538] sm:$0xff]
        %v1665 = vld [vmem:[#allocation7 + $0x540] sm:$0xff]
        %v1666 = vld [vmem:[#allocation7 + $0x548] sm:$0xff]
        %v1667 = vld [vmem:[#allocation7 + $0x550] sm:$0xff]
        %v1668 = vld [vmem:[#allocation7 + $0x558] sm:$0xff]
        %v1669 = vld [vmem:[#allocation7 + $0x560] sm:$0xff]
        %v1670 = vld [vmem:[#allocation7 + $0x568] sm:$0xff]
        %v1671 = vld [vmem:[#allocation7 + $0x570] sm:$0xff]
        %v1672 = vld [vmem:[#allocation7 + $0x578] sm:$0xff]
        %v1673 = vld [vmem:[#allocation7 + $0x580] sm:$0xff]
        %v1674 = vld [vmem:[#allocation7 + $0x588] sm:$0xff]
        %v1675 = vld [vmem:[#allocation7 + $0x590] sm:$0xff]
        %v1676 = vld [vmem:[#allocation7 + $0x598] sm:$0xff]
        %v1677 = vld [vmem:[#allocation7 + $0x5a0] sm:$0xff]
        %v1678 = vld [vmem:[#allocation7 + $0x5a8] sm:$0xff]
        %v1679 = vld [vmem:[#allocation7 + $0x5b0] sm:$0xff]
        %v1680 = vld [vmem:[#allocation7 + $0x5b8] sm:$0xff]
        %v1681 = vld [vmem:[#allocation7 + $0x5c0] sm:$0xff]
        %v1682 = vld [vmem:[#allocation7 + $0x5c8] sm:$0xff]
        %v1683 = vld [vmem:[#allocation7 + $0x5d0] sm:$0xff]
        %v1684 = vld [vmem:[#allocation7 + $0x5d8] sm:$0xff]
        %v1685 = vld [vmem:[#allocation7 + $0x5e0] sm:$0xff]
        %v1686 = vld [vmem:[#allocation7 + $0x5e8] sm:$0xff]
        %v1687 = vld [vmem:[#allocation7 + $0x5f0] sm:$0xff]
        %v1688 = vld [vmem:[#allocation7 + $0x5f8] sm:$0xff]
        %v1689 = vld [vmem:[#allocation7 + $0x600] sm:$0xff]
        %v1690 = vld [vmem:[#allocation7 + $0x608] sm:$0xff]
        %v1691 = vld [vmem:[#allocation7 + $0x610] sm:$0xff]
        %v1692 = vld [vmem:[#allocation7 + $0x618] sm:$0xff]
        %v1693 = vld [vmem:[#allocation7 + $0x620] sm:$0xff]
        %v1694 = vld [vmem:[#allocation7 + $0x628] sm:$0xff]
        %v1695 = vld [vmem:[#allocation7 + $0x630] sm:$0xff]
        %v1696 = vld [vmem:[#allocation7 + $0x638] sm:$0xff]
        %v1697 = vld [vmem:[#allocation7 + $0x640] sm:$0xff]
        %v1698 = vld [vmem:[#allocation7 + $0x648] sm:$0xff]
        %v1699 = vld [vmem:[#allocation7 + $0x650] sm:$0xff]
        %v1700 = vld [vmem:[#allocation7 + $0x658] sm:$0xff]
        %v1701 = vld [vmem:[#allocation7 + $0x660] sm:$0xff]
        %v1702 = vld [vmem:[#allocation7 + $0x668] sm:$0xff]
        %v1703 = vld [vmem:[#allocation7 + $0x670] sm:$0xff]
        %v1704 = vld [vmem:[#allocation7 + $0x678] sm:$0xff]
        %v1705 = vld [vmem:[#allocation7 + $0x680] sm:$0xff]
        %v1706 = vld [vmem:[#allocation7 + $0x688] sm:$0xff]
        %v1707 = vld [vmem:[#allocation7 + $0x690] sm:$0xff]
        %v1708 = vld [vmem:[#allocation7 + $0x698] sm:$0xff]
        %v1709 = vld [vmem:[#allocation7 + $0x6a0] sm:$0xff]
        %v1710 = vld [vmem:[#allocation7 + $0x6a8] sm:$0xff]
        %v1711 = vld [vmem:[#allocation7 + $0x6b0] sm:$0xff]
        %v1712 = vld [vmem:[#allocation7 + $0x6b8] sm:$0xff]
        %v1713 = vld [vmem:[#allocation7 + $0x6c0] sm:$0xff]
        %v1714 = vld [vmem:[#allocation7 + $0x6c8] sm:$0xff]
        %v1715 = vld [vmem:[#allocation7 + $0x6d0] sm:$0xff]
        %v1716 = vld [vmem:[#allocation7 + $0x6d8] sm:$0xff]
        %v1717 = vld [vmem:[#allocation7 + $0x6e0] sm:$0xff]
        %v1718 = vld [vmem:[#allocation7 + $0x6e8] sm:$0xff]
        %v1719 = vld [vmem:[#allocation7 + $0x6f0] sm:$0xff]
        %v1720 = vld [vmem:[#allocation7 + $0x6f8] sm:$0xff]
        %v1721 = vld [vmem:[#allocation7 + $0x700] sm:$0xff]
        %v1722 = vld [vmem:[#allocation7 + $0x708] sm:$0xff]
        %v1723 = vld [vmem:[#allocation7 + $0x710] sm:$0xff]
        %v1724 = vld [vmem:[#allocation7 + $0x718] sm:$0xff]
        %v1725 = vld [vmem:[#allocation7 + $0x720] sm:$0xff]
        %v1726 = vld [vmem:[#allocation7 + $0x728] sm:$0xff]
        %v1727 = vld [vmem:[#allocation7 + $0x730] sm:$0xff]
        %v1728 = vld [vmem:[#allocation7 + $0x738] sm:$0xff]
        %v1729 = vld [vmem:[#allocation7 + $0x740] sm:$0xff]
        %v1730 = vld [vmem:[#allocation7 + $0x748] sm:$0xff]
        %v1731 = vld [vmem:[#allocation7 + $0x750] sm:$0xff]
        %v1732 = vld [vmem:[#allocation7 + $0x758] sm:$0xff]
        %v1733 = vld [vmem:[#allocation7 + $0x760] sm:$0xff]
        %v1734 = vld [vmem:[#allocation7 + $0x768] sm:$0xff]
        %v1735 = vld [vmem:[#allocation7 + $0x770] sm:$0xff]
        %v1736 = vld [vmem:[#allocation7 + $0x778] sm:$0xff]
        %v1737 = vld [vmem:[#allocation7 + $0x780] sm:$0xff]
        %v1738 = vld [vmem:[#allocation7 + $0x788] sm:$0xff]
        %v1739 = vld [vmem:[#allocation7 + $0x790] sm:$0xff]
        %v1740 = vld [vmem:[#allocation7 + $0x798] sm:$0xff]
        %v1741 = vld [vmem:[#allocation7 + $0x7a0] sm:$0xff]
        %v1742 = vld [vmem:[#allocation7 + $0x7a8] sm:$0xff]
        %v1743 = vld [vmem:[#allocation7 + $0x7b0] sm:$0xff]
        %v1744 = vld [vmem:[#allocation7 + $0x7b8] sm:$0xff]
        %v1745 = vld [vmem:[#allocation7 + $0x7c0] sm:$0xff]
        %v1746 = vld [vmem:[#allocation7 + $0x7c8] sm:$0xff]
        %v1747 = vld [vmem:[#allocation7 + $0x7d0] sm:$0xff]
        %v1748 = vld [vmem:[#allocation7 + $0x7d8] sm:$0xff]
        %v1749 = vld [vmem:[#allocation7 + $0x7e0] sm:$0xff]
        %v1750 = vld [vmem:[#allocation7 + $0x7e8] sm:$0xff]
        %v1751 = vld [vmem:[#allocation7 + $0x7f0] sm:$0xff]
        %v1752 = vld [vmem:[#allocation7 + $0x7f8] sm:$0xff]
        %v1753 = vld [vmem:[#allocation7 + $0x800] sm:$0xff]
        %v1754 = vld [vmem:[#allocation7 + $0x808] sm:$0xff]
        %v1755 = vld [vmem:[#allocation7 + $0x810] sm:$0xff]
        %v1756 = vld [vmem:[#allocation7 + $0x818] sm:$0xff]
        %v1757 = vld [vmem:[#allocation7 + $0x820] sm:$0xff]
        %v1758 = vld [vmem:[#allocation7 + $0x828] sm:$0xff]
        %v1759 = vld [vmem:[#allocation7 + $0x830] sm:$0xff]
        %v1760 = vld [vmem:[#allocation7 + $0x838] sm:$0xff]
        %v1761 = vld [vmem:[#allocation7 + $0x840] sm:$0xff]
        %v1762 = vld [vmem:[#allocation7 + $0x848] sm:$0xff]
        %v1763 = vld [vmem:[#allocation7 + $0x850] sm:$0xff]
        %v1764 = vld [vmem:[#allocation7 + $0x858] sm:$0xff]
        %v1765 = vld [vmem:[#allocation7 + $0x860] sm:$0xff]
        %v1766 = vld [vmem:[#allocation7 + $0x868] sm:$0xff]
        %v1767 = vld [vmem:[#allocation7 + $0x870] sm:$0xff]
        %v1768 = vld [vmem:[#allocation7 + $0x878] sm:$0xff]
        %v1769 = vld [vmem:[#allocation7 + $0x880] sm:$0xff]
        %v1770 = vld [vmem:[#allocation7 + $0x888] sm:$0xff]
        %v1771 = vld [vmem:[#allocation7 + $0x890] sm:$0xff]
        %v1772 = vld [vmem:[#allocation7 + $0x898] sm:$0xff]
        %v1773 = vld [vmem:[#allocation7 + $0x8a0] sm:$0xff]
        %v1774 = vld [vmem:[#allocation7 + $0x8a8] sm:$0xff]
        %v1775 = vld [vmem:[#allocation7 + $0x8b0] sm:$0xff]
        %v1776 = vld [vmem:[#allocation7 + $0x8b8] sm:$0xff]
        %v1777 = vld [vmem:[#allocation7 + $0x8c0] sm:$0xff]
        %v1778 = vld [vmem:[#allocation7 + $0x8c8] sm:$0xff]
        %v1779 = vld [vmem:[#allocation7 + $0x8d0] sm:$0xff]
        %v1780 = vld [vmem:[#allocation7 + $0x8d8] sm:$0xff]
        %v1781 = vld [vmem:[#allocation7 + $0x8e0] sm:$0xff]
        %v1782 = vld [vmem:[#allocation7 + $0x8e8] sm:$0xff]
        %v1783 = vld [vmem:[#allocation7 + $0x8f0] sm:$0xff]
        %v1784 = vld [vmem:[#allocation7 + $0x8f8] sm:$0xff]
        %v1785 = vld [vmem:[#allocation9] sm:$0x3]
        %v1787 = vperm.slane %v1785, 0
        %v1788 = vperm.slane %v1785, 1
        %v1935 = vunpack.c.l.b16 %v1353
        %v1936 = vunpack.c.h.b16 %v1353
        %v1937 = vunpack.c.l.b16 %v1354
        %v1938 = vunpack.c.h.b16 %v1354
        %v1939 = vunpack.c.l.b16 %v1355
        %v1940 = vunpack.c.h.b16 %v1355
        %v1941 = vunpack.c.l.b16 %v1356
        %v1942 = vunpack.c.h.b16 %v1356
        %v1943 = vunpack.c.l.b16 %v1357
        %v1944 = vunpack.c.h.b16 %v1357
        %v1945 = vunpack.c.l.b16 %v1358
        %v1946 = vunpack.c.h.b16 %v1358
        %v1947 = vunpack.c.l.b16 %v1359
        %v1948 = vunpack.c.h.b16 %v1359
        %v1949 = vunpack.c.l.b16 %v1360
        %v1950 = vunpack.c.h.b16 %v1360
        %v1951 = vunpack.c.l.b16 %v1361
        %v1952 = vunpack.c.h.b16 %v1361
        %v1953 = vunpack.c.l.b16 %v1362
        %v1954 = vunpack.c.h.b16 %v1362
        %v1955 = vunpack.c.l.b16 %v1363
        %v1956 = vunpack.c.h.b16 %v1363
        %v1957 = vunpack.c.l.b16 %v1364
        %v1958 = vunpack.c.h.b16 %v1364
        %v1959 = vunpack.c.l.b16 %v1365
        %v1960 = vunpack.c.h.b16 %v1365
        %v1961 = vunpack.c.l.b16 %v1366
        %v1962 = vunpack.c.h.b16 %v1366
        %v1963 = vunpack.c.l.b16 %v1367
        %v1964 = vunpack.c.h.b16 %v1367
        %v1965 = vunpack.c.l.b16 %v1368
        %v1966 = vunpack.c.h.b16 %v1368
        %v1967 = vunpack.c.l.b16 %v1369
        %v1968 = vunpack.c.h.b16 %v1369
        %v1969 = vunpack.c.l.b16 %v1370
        %v1970 = vunpack.c.h.b16 %v1370
        %v1971 = vunpack.c.l.b16 %v1371
        %v1972 = vunpack.c.h.b16 %v1371
        %v1973 = vunpack.c.l.b16 %v1372
        %v1974 = vunpack.c.h.b16 %v1372
        %v1975 = vunpack.c.l.b16 %v1373
        %v1976 = vunpack.c.h.b16 %v1373
        %v1977 = vunpack.c.l.b16 %v1374
        %v1978 = vunpack.c.h.b16 %v1374
        %v1979 = vunpack.c.l.b16 %v1375
        %v1980 = vunpack.c.h.b16 %v1375
        %v1981 = vunpack.c.l.b16 %v1376
        %v1982 = vunpack.c.h.b16 %v1376
        %v1983 = vunpack.c.l.b16 %v1377
        %v1984 = vunpack.c.h.b16 %v1377
        %v1985 = vunpack.c.l.b16 %v1378
        %v1986 = vunpack.c.h.b16 %v1378
        %v1987 = vunpack.c.l.b16 %v1379
        %v1988 = vunpack.c.h.b16 %v1379
        %v1989 = vunpack.c.l.b16 %v1380
        %v1990 = vunpack.c.h.b16 %v1380
        %v1991 = vunpack.c.l.b16 %v1381
        %v1992 = vunpack.c.h.b16 %v1381
        %v1993 = vunpack.c.l.b16 %v1382
        %v1994 = vunpack.c.h.b16 %v1382
        %v1995 = vunpack.c.l.b16 %v1383
        %v1996 = vunpack.c.h.b16 %v1383
        %v1997 = vunpack.c.l.b16 %v1384
        %v1998 = vunpack.c.h.b16 %v1384
        %v1999 = vunpack.c.l.b16 %v1385
        %v2000 = vunpack.c.h.b16 %v1385
        %v2001 = vunpack.c.l.b16 %v1386
        %v2002 = vunpack.c.h.b16 %v1386
        %v2003 = vunpack.c.l.b16 %v1387
        %v2004 = vunpack.c.h.b16 %v1387
        %v2005 = vunpack.c.l.b16 %v1388
        %v2006 = vunpack.c.h.b16 %v1388
        %v2007 = vunpack.c.l.b16 %v1389
        %v2008 = vunpack.c.h.b16 %v1389
        %v2009 = vunpack.c.l.b16 %v1390
        %v2010 = vunpack.c.h.b16 %v1390
        %v2011 = vunpack.c.l.b16 %v1391
        %v2012 = vunpack.c.h.b16 %v1391
        %v2013 = vunpack.c.l.b16 %v1392
        %v2014 = vunpack.c.h.b16 %v1392
        %v2015 = vunpack.c.l.b16 %v1393
        %v2016 = vunpack.c.h.b16 %v1393
        %v2017 = vunpack.c.l.b16 %v1394
        %v2018 = vunpack.c.h.b16 %v1394
        %v2019 = vunpack.c.l.b16 %v1395
        %v2020 = vunpack.c.h.b16 %v1395
        %v2021 = vunpack.c.l.b16 %v1396
        %v2022 = vunpack.c.h.b16 %v1396
        %v2023 = vunpack.c.l.b16 %v1397
        %v2024 = vunpack.c.h.b16 %v1397
        %v2025 = vunpack.c.l.b16 %v1398
        %v2026 = vunpack.c.h.b16 %v1398
        %v2027 = vunpack.c.l.b16 %v1399
        %v2028 = vunpack.c.h.b16 %v1399
        %v2029 = vunpack.c.l.b16 %v1400
        %v2030 = vunpack.c.h.b16 %v1400
        %v2031 = vunpack.c.l.b16 %v1401
        %v2032 = vunpack.c.h.b16 %v1401
        %v2033 = vunpack.c.l.b16 %v1402
        %v2034 = vunpack.c.h.b16 %v1402
        %v2035 = vunpack.c.l.b16 %v1403
        %v2036 = vunpack.c.h.b16 %v1403
        %v2037 = vunpack.c.l.b16 %v1404
        %v2038 = vunpack.c.h.b16 %v1404
        %v2039 = vunpack.c.l.b16 %v1405
        %v2040 = vunpack.c.h.b16 %v1405
        %v2041 = vunpack.c.l.b16 %v1406
        %v2042 = vunpack.c.h.b16 %v1406
        %v2043 = vunpack.c.l.b16 %v1407
        %v2044 = vunpack.c.h.b16 %v1407
        %v2045 = vunpack.c.l.b16 %v1408
        %v2046 = vunpack.c.h.b16 %v1408
        %v2047 = vunpack.c.l.b16 %v1409
        %v2048 = vunpack.c.h.b16 %v1409
        %v2049 = vunpack.c.l.b16 %v1410
        %v2050 = vunpack.c.h.b16 %v1410
        %v2051 = vunpack.c.l.b16 %v1411
        %v2052 = vunpack.c.h.b16 %v1411
        %v2053 = vunpack.c.l.b16 %v1412
        %v2054 = vunpack.c.h.b16 %v1412
        %v2055 = vunpack.c.l.b16 %v1413
        %v2056 = vunpack.c.h.b16 %v1413
        %v2057 = vunpack.c.l.b16 %v1414
        %v2058 = vunpack.c.h.b16 %v1414
        %v2059 = vunpack.c.l.b16 %v1415
        %v2060 = vunpack.c.h.b16 %v1415
        %v2061 = vunpack.c.l.b16 %v1416
        %v2062 = vunpack.c.h.b16 %v1416
        %v2063 = vunpack.c.l.b16 %v1417
        %v2064 = vunpack.c.h.b16 %v1417
        %v2065 = vunpack.c.l.b16 %v1418
        %v2066 = vunpack.c.h.b16 %v1418
        %v2067 = vunpack.c.l.b16 %v1419
        %v2068 = vunpack.c.h.b16 %v1419
        %v2069 = vunpack.c.l.b16 %v1420
        %v2070 = vunpack.c.h.b16 %v1420
        %v2071 = vunpack.c.l.b16 %v1421
        %v2072 = vunpack.c.h.b16 %v1421
        %v2073 = vunpack.c.l.b16 %v1422
        %v2074 = vunpack.c.h.b16 %v1422
        %v2075 = vunpack.c.l.b16 %v1423
        %v2076 = vunpack.c.h.b16 %v1423
        %v2077 = vunpack.c.l.b16 %v1424
        %v2078 = vunpack.c.h.b16 %v1424
        %v2079 = vunpack.c.l.b16 %v1425
        %v2080 = vunpack.c.h.b16 %v1425
        %v2081 = vunpack.c.l.b16 %v1426
        %v2082 = vunpack.c.h.b16 %v1426
        %v2083 = vunpack.c.l.b16 %v1427
        %v2084 = vunpack.c.h.b16 %v1427
        %v2085 = vunpack.c.l.b16 %v1428
        %v2086 = vunpack.c.h.b16 %v1428
        %v2087 = vunpack.c.l.b16 %v1429
        %v2088 = vunpack.c.h.b16 %v1429
        %v2089 = vunpack.c.l.b16 %v1430
        %v2090 = vunpack.c.h.b16 %v1430
        %v2091 = vunpack.c.l.b16 %v1431
        %v2092 = vunpack.c.h.b16 %v1431
        %v2093 = vunpack.c.l.b16 %v1432
        %v2094 = vunpack.c.h.b16 %v1432
        %v2095 = vunpack.c.l.b16 %v1433
        %v2096 = vunpack.c.h.b16 %v1433
        %v2097 = vunpack.c.l.b16 %v1434
        %v2098 = vunpack.c.h.b16 %v1434
        %v2099 = vunpack.c.l.b16 %v1435
        %v2100 = vunpack.c.h.b16 %v1435
        %v2101 = vunpack.c.l.b16 %v1436
        %v2102 = vunpack.c.h.b16 %v1436
        %v2103 = vunpack.c.l.b16 %v1437
        %v2104 = vunpack.c.h.b16 %v1437
        %v2105 = vunpack.c.l.b16 %v1438
        %v2106 = vunpack.c.h.b16 %v1438
        %v2107 = vunpack.c.l.b16 %v1439
        %v2108 = vunpack.c.h.b16 %v1439
        %v2109 = vunpack.c.l.b16 %v1440
        %v2110 = vunpack.c.h.b16 %v1440
        %v2111 = vunpack.c.l.b16 %v1441
        %v2112 = vunpack.c.h.b16 %v1441
        %v2113 = vunpack.c.l.b16 %v1442
        %v2114 = vunpack.c.h.b16 %v1442
        %v2115 = vunpack.c.l.b16 %v1443
        %v2116 = vunpack.c.h.b16 %v1443
        %v2117 = vunpack.c.l.b16 %v1444
        %v2118 = vunpack.c.h.b16 %v1444
        %v2119 = vunpack.c.l.b16 %v1445
        %v2120 = vunpack.c.h.b16 %v1445
        %v2121 = vunpack.c.l.b16 %v1446
        %v2122 = vunpack.c.h.b16 %v1446
        %v2123 = vunpack.c.l.b16 %v1447
        %v2124 = vunpack.c.h.b16 %v1447
        %v2125 = vunpack.c.l.b16 %v1448
        %v2126 = vunpack.c.h.b16 %v1448
        %v2127 = vunpack.c.l.b16 %v1449
        %v2128 = vunpack.c.h.b16 %v1449
        %v2129 = vunpack.c.l.b16 %v1450
        %v2130 = vunpack.c.h.b16 %v1450
        %v2131 = vunpack.c.l.b16 %v1451
        %v2132 = vunpack.c.h.b16 %v1451
        %v2133 = vunpack.c.l.b16 %v1452
        %v2134 = vunpack.c.h.b16 %v1452
        %v2135 = vunpack.c.l.b16 %v1453
        %v2136 = vunpack.c.h.b16 %v1453
        %v2137 = vunpack.c.l.b16 %v1454
        %v2138 = vunpack.c.h.b16 %v1454
        %v2139 = vunpack.c.l.b16 %v1455
        %v2140 = vunpack.c.h.b16 %v1455
        %v2141 = vunpack.c.l.b16 %v1456
        %v2142 = vunpack.c.h.b16 %v1456
        %v2143 = vunpack.c.l.b16 %v1457
        %v2144 = vunpack.c.h.b16 %v1457
        %v2145 = vunpack.c.l.b16 %v1458
        %v2146 = vunpack.c.h.b16 %v1458
        %v2147 = vunpack.c.l.b16 %v1459
        %v2148 = vunpack.c.h.b16 %v1459
        %v2149 = vunpack.c.l.b16 %v1460
        %v2150 = vunpack.c.h.b16 %v1460
        %v2151 = vunpack.c.l.b16 %v1461
        %v2152 = vunpack.c.h.b16 %v1461
        %v2153 = vunpack.c.l.b16 %v1462
        %v2154 = vunpack.c.h.b16 %v1462
        %v2155 = vunpack.c.l.b16 %v1463
        %v2156 = vunpack.c.h.b16 %v1463
        %v2157 = vunpack.c.l.b16 %v1464
        %v2158 = vunpack.c.h.b16 %v1464
        %v2159 = vunpack.c.l.b16 %v1465
        %v2160 = vunpack.c.h.b16 %v1465
        %v2161 = vunpack.c.l.b16 %v1466
        %v2162 = vunpack.c.h.b16 %v1466
        %v2163 = vunpack.c.l.b16 %v1467
        %v2164 = vunpack.c.h.b16 %v1467
        %v2165 = vunpack.c.l.b16 %v1468
        %v2166 = vunpack.c.h.b16 %v1468
        %v2167 = vunpack.c.l.b16 %v1469
        %v2168 = vunpack.c.h.b16 %v1469
        %v2169 = vunpack.c.l.b16 %v1470
        %v2170 = vunpack.c.h.b16 %v1470
        %v2171 = vunpack.c.l.b16 %v1471
        %v2172 = vunpack.c.h.b16 %v1471
        %v2173 = vunpack.c.l.b16 %v1472
        %v2174 = vunpack.c.h.b16 %v1472
        %v2175 = vunpack.c.l.b16 %v1473
        %v2176 = vunpack.c.h.b16 %v1473
        %v2177 = vunpack.c.l.b16 %v1474
        %v2178 = vunpack.c.h.b16 %v1474
        %v2179 = vunpack.c.l.b16 %v1475
        %v2180 = vunpack.c.h.b16 %v1475
        %v2181 = vunpack.c.l.b16 %v1476
        %v2182 = vunpack.c.h.b16 %v1476
        %v2183 = vunpack.c.l.b16 %v1477
        %v2184 = vunpack.c.h.b16 %v1477
        %v2185 = vunpack.c.l.b16 %v1478
        %v2186 = vunpack.c.h.b16 %v1478
        %v2187 = vunpack.c.l.b16 %v1479
        %v2188 = vunpack.c.h.b16 %v1479
        %v2189 = vunpack.c.l.b16 %v1480
        %v2190 = vunpack.c.h.b16 %v1480
        %v2191 = vunpack.c.l.b16 %v1481
        %v2192 = vunpack.c.h.b16 %v1481
        %v2193 = vunpack.c.l.b16 %v1482
        %v2194 = vunpack.c.h.b16 %v1482
        %v2195 = vunpack.c.l.b16 %v1483
        %v2196 = vunpack.c.h.b16 %v1483
        %v2197 = vunpack.c.l.b16 %v1484
        %v2198 = vunpack.c.h.b16 %v1484
        %v2199 = vunpack.c.l.b16 %v1485
        %v2200 = vunpack.c.h.b16 %v1485
        %v2201 = vunpack.c.l.b16 %v1486
        %v2202 = vunpack.c.h.b16 %v1486
        %v2203 = vunpack.c.l.b16 %v1487
        %v2204 = vunpack.c.h.b16 %v1487
        %v2205 = vunpack.c.l.b16 %v1488
        %v2206 = vunpack.c.h.b16 %v1488
        %v2207 = vunpack.c.l.b16 %v1489
        %v2208 = vunpack.c.h.b16 %v1489
        %v2209 = vunpack.c.l.b16 %v1490
        %v2210 = vunpack.c.h.b16 %v1490
        %v2211 = vunpack.c.l.b16 %v1491
        %v2212 = vunpack.c.h.b16 %v1491
        %v2213 = vunpack.c.l.b16 %v1492
        %v2214 = vunpack.c.h.b16 %v1492
        %v2215 = vunpack.c.l.b16 %v1493
        %v2216 = vunpack.c.h.b16 %v1493
        %v2217 = vunpack.c.l.b16 %v1494
        %v2218 = vunpack.c.h.b16 %v1494
        %v2219 = vunpack.c.l.b16 %v1495
        %v2220 = vunpack.c.h.b16 %v1495
        %v2221 = vunpack.c.l.b16 %v1496
        %v2222 = vunpack.c.h.b16 %v1496
        %v2223 = vpack.c.b16 %v1953, %v1935
        %v2224 = vpack.c.b16 %v1954, %v1936
        %v2225 = vpack.c.b16 %v1955, %v1937
        %v2226 = vpack.c.b16 %v1956, %v1938
        %v2227 = vpack.c.b16 %v1957, %v1939
        %v2228 = vpack.c.b16 %v1958, %v1940
        %v2229 = vpack.c.b16 %v1959, %v1941
        %v2230 = vpack.c.b16 %v1960, %v1942
        %v2231 = vpack.c.b16 %v1961, %v1943
        %v2232 = vpack.c.b16 %v1962, %v1944
        %v2233 = vpack.c.b16 %v1963, %v1945
        %v2234 = vpack.c.b16 %v1964, %v1946
        %v2235 = vpack.c.b16 %v1965, %v1947
        %v2236 = vpack.c.b16 %v1966, %v1948
        %v2237 = vpack.c.b16 %v1967, %v1949
        %v2238 = vpack.c.b16 %v1968, %v1950
        %v2239 = vpack.c.b16 %v1969, %v1951
        %v2240 = vpack.c.b16 %v1970, %v1952
        %v2241 = vpack.c.b16 %v1989, %v1971
        %v2242 = vpack.c.b16 %v1990, %v1972
        %v2243 = vpack.c.b16 %v1991, %v1973
        %v2244 = vpack.c.b16 %v1992, %v1974
        %v2245 = vpack.c.b16 %v1993, %v1975
        %v2246 = vpack.c.b16 %v1994, %v1976
        %v2247 = vpack.c.b16 %v1995, %v1977
        %v2248 = vpack.c.b16 %v1996, %v1978
        %v2249 = vpack.c.b16 %v1997, %v1979
        %v2250 = vpack.c.b16 %v1998, %v1980
        %v2251 = vpack.c.b16 %v1999, %v1981
        %v2252 = vpack.c.b16 %v2000, %v1982
        %v2253 = vpack.c.b16 %v2001, %v1983
        %v2254 = vpack.c.b16 %v2002, %v1984
        %v2255 = vpack.c.b16 %v2003, %v1985
        %v2256 = vpack.c.b16 %v2004, %v1986
        %v2257 = vpack.c.b16 %v2005, %v1987
        %v2258 = vpack.c.b16 %v2006, %v1988
        %v2259 = vpack.c.b16 %v2025, %v2007
        %v2260 = vpack.c.b16 %v2026, %v2008
        %v2261 = vpack.c.b16 %v2027, %v2009
        %v2262 = vpack.c.b16 %v2028, %v2010
        %v2263 = vpack.c.b16 %v2029, %v2011
        %v2264 = vpack.c.b16 %v2030, %v2012
        %v2265 = vpack.c.b16 %v2031, %v2013
        %v2266 = vpack.c.b16 %v2032, %v2014
        %v2267 = vpack.c.b16 %v2033, %v2015
        %v2268 = vpack.c.b16 %v2034, %v2016
        %v2269 = vpack.c.b16 %v2035, %v2017
        %v2270 = vpack.c.b16 %v2036, %v2018
        %v2271 = vpack.c.b16 %v2037, %v2019
        %v2272 = vpack.c.b16 %v2038, %v2020
        %v2273 = vpack.c.b16 %v2039, %v2021
        %v2274 = vpack.c.b16 %v2040, %v2022
        %v2275 = vpack.c.b16 %v2041, %v2023
        %v2276 = vpack.c.b16 %v2042, %v2024
        %v2277 = vpack.c.b16 %v2061, %v2043
        %v2278 = vpack.c.b16 %v2062, %v2044
        %v2279 = vpack.c.b16 %v2063, %v2045
        %v2280 = vpack.c.b16 %v2064, %v2046
        %v2281 = vpack.c.b16 %v2065, %v2047
        %v2282 = vpack.c.b16 %v2066, %v2048
        %v2283 = vpack.c.b16 %v2067, %v2049
        %v2284 = vpack.c.b16 %v2068, %v2050
        %v2285 = vpack.c.b16 %v2069, %v2051
        %v2286 = vpack.c.b16 %v2070, %v2052
        %v2287 = vpack.c.b16 %v2071, %v2053
        %v2288 = vpack.c.b16 %v2072, %v2054
        %v2289 = vpack.c.b16 %v2073, %v2055
        %v2290 = vpack.c.b16 %v2074, %v2056
        %v2291 = vpack.c.b16 %v2075, %v2057
        %v2292 = vpack.c.b16 %v2076, %v2058
        %v2293 = vpack.c.b16 %v2077, %v2059
        %v2294 = vpack.c.b16 %v2078, %v2060
        %v2295 = vpack.c.b16 %v2097, %v2079
        %v2296 = vpack.c.b16 %v2098, %v2080
        %v2297 = vpack.c.b16 %v2099, %v2081
        %v2298 = vpack.c.b16 %v2100, %v2082
        %v2299 = vpack.c.b16 %v2101, %v2083
        %v2300 = vpack.c.b16 %v2102, %v2084
        %v2301 = vpack.c.b16 %v2103, %v2085
        %v2302 = vpack.c.b16 %v2104, %v2086
        %v2303 = vpack.c.b16 %v2105, %v2087
        %v2304 = vpack.c.b16 %v2106, %v2088
        %v2305 = vpack.c.b16 %v2107, %v2089
        %v2306 = vpack.c.b16 %v2108, %v2090
        %v2307 = vpack.c.b16 %v2109, %v2091
        %v2308 = vpack.c.b16 %v2110, %v2092
        %v2309 = vpack.c.b16 %v2111, %v2093
        %v2310 = vpack.c.b16 %v2112, %v2094
        %v2311 = vpack.c.b16 %v2113, %v2095
        %v2312 = vpack.c.b16 %v2114, %v2096
        %v2313 = vpack.c.b16 %v2133, %v2115
        %v2314 = vpack.c.b16 %v2134, %v2116
        %v2315 = vpack.c.b16 %v2135, %v2117
        %v2316 = vpack.c.b16 %v2136, %v2118
        %v2317 = vpack.c.b16 %v2137, %v2119
        %v2318 = vpack.c.b16 %v2138, %v2120
        %v2319 = vpack.c.b16 %v2139, %v2121
        %v2320 = vpack.c.b16 %v2140, %v2122
        %v2321 = vpack.c.b16 %v2141, %v2123
        %v2322 = vpack.c.b16 %v2142, %v2124
        %v2323 = vpack.c.b16 %v2143, %v2125
        %v2324 = vpack.c.b16 %v2144, %v2126
        %v2325 = vpack.c.b16 %v2145, %v2127
        %v2326 = vpack.c.b16 %v2146, %v2128
        %v2327 = vpack.c.b16 %v2147, %v2129
        %v2328 = vpack.c.b16 %v2148, %v2130
        %v2329 = vpack.c.b16 %v2149, %v2131
        %v2330 = vpack.c.b16 %v2150, %v2132
        %v2331 = vpack.c.b16 %v2169, %v2151
        %v2332 = vpack.c.b16 %v2170, %v2152
        %v2333 = vpack.c.b16 %v2171, %v2153
        %v2334 = vpack.c.b16 %v2172, %v2154
        %v2335 = vpack.c.b16 %v2173, %v2155
        %v2336 = vpack.c.b16 %v2174, %v2156
        %v2337 = vpack.c.b16 %v2175, %v2157
        %v2338 = vpack.c.b16 %v2176, %v2158
        %v2339 = vpack.c.b16 %v2177, %v2159
        %v2340 = vpack.c.b16 %v2178, %v2160
        %v2341 = vpack.c.b16 %v2179, %v2161
        %v2342 = vpack.c.b16 %v2180, %v2162
        %v2343 = vpack.c.b16 %v2181, %v2163
        %v2344 = vpack.c.b16 %v2182, %v2164
        %v2345 = vpack.c.b16 %v2183, %v2165
        %v2346 = vpack.c.b16 %v2184, %v2166
        %v2347 = vpack.c.b16 %v2185, %v2167
        %v2348 = vpack.c.b16 %v2186, %v2168
        %v2349 = vpack.c.b16 %v2205, %v2187
        %v2350 = vpack.c.b16 %v2206, %v2188
        %v2351 = vpack.c.b16 %v2207, %v2189
        %v2352 = vpack.c.b16 %v2208, %v2190
        %v2353 = vpack.c.b16 %v2209, %v2191
        %v2354 = vpack.c.b16 %v2210, %v2192
        %v2355 = vpack.c.b16 %v2211, %v2193
        %v2356 = vpack.c.b16 %v2212, %v2194
        %v2357 = vpack.c.b16 %v2213, %v2195
        %v2358 = vpack.c.b16 %v2214, %v2196
        %v2359 = vpack.c.b16 %v2215, %v2197
        %v2360 = vpack.c.b16 %v2216, %v2198
        %v2361 = vpack.c.b16 %v2217, %v2199
        %v2362 = vpack.c.b16 %v2218, %v2200
        %v2363 = vpack.c.b16 %v2219, %v2201
        %v2364 = vpack.c.b16 %v2220, %v2202
        %v2365 = vpack.c.b16 %v2221, %v2203
        %v2366 = vpack.c.b16 %v2222, %v2204
        %v2799 = vunpack.c.l.b16 %v1497
        %v2800 = vunpack.c.h.b16 %v1497
        %v2801 = vunpack.c.l.b16 %v1498
        %v2802 = vunpack.c.h.b16 %v1498
        %v2803 = vunpack.c.l.b16 %v1499
        %v2804 = vunpack.c.h.b16 %v1499
        %v2805 = vunpack.c.l.b16 %v1500
        %v2806 = vunpack.c.h.b16 %v1500
        %v2807 = vunpack.c.l.b16 %v1501
        %v2808 = vunpack.c.h.b16 %v1501
        %v2809 = vunpack.c.l.b16 %v1502
        %v2810 = vunpack.c.h.b16 %v1502
        %v2811 = vunpack.c.l.b16 %v1503
        %v2812 = vunpack.c.h.b16 %v1503
        %v2813 = vunpack.c.l.b16 %v1504
        %v2814 = vunpack.c.h.b16 %v1504
        %v2815 = vunpack.c.l.b16 %v1505
        %v2816 = vunpack.c.h.b16 %v1505
        %v2817 = vunpack.c.l.b16 %v1506
        %v2818 = vunpack.c.h.b16 %v1506
        %v2819 = vunpack.c.l.b16 %v1507
        %v2820 = vunpack.c.h.b16 %v1507
        %v2821 = vunpack.c.l.b16 %v1508
        %v2822 = vunpack.c.h.b16 %v1508
        %v2823 = vunpack.c.l.b16 %v1509
        %v2824 = vunpack.c.h.b16 %v1509
        %v2825 = vunpack.c.l.b16 %v1510
        %v2826 = vunpack.c.h.b16 %v1510
        %v2827 = vunpack.c.l.b16 %v1511
        %v2828 = vunpack.c.h.b16 %v1511
        %v2829 = vunpack.c.l.b16 %v1512
        %v2830 = vunpack.c.h.b16 %v1512
        %v2831 = vunpack.c.l.b16 %v1513
        %v2832 = vunpack.c.h.b16 %v1513
        %v2833 = vunpack.c.l.b16 %v1514
        %v2834 = vunpack.c.h.b16 %v1514
        %v2835 = vunpack.c.l.b16 %v1515
        %v2836 = vunpack.c.h.b16 %v1515
        %v2837 = vunpack.c.l.b16 %v1516
        %v2838 = vunpack.c.h.b16 %v1516
        %v2839 = vunpack.c.l.b16 %v1517
        %v2840 = vunpack.c.h.b16 %v1517
        %v2841 = vunpack.c.l.b16 %v1518
        %v2842 = vunpack.c.h.b16 %v1518
        %v2843 = vunpack.c.l.b16 %v1519
        %v2844 = vunpack.c.h.b16 %v1519
        %v2845 = vunpack.c.l.b16 %v1520
        %v2846 = vunpack.c.h.b16 %v1520
        %v2847 = vunpack.c.l.b16 %v1521
        %v2848 = vunpack.c.h.b16 %v1521
        %v2849 = vunpack.c.l.b16 %v1522
        %v2850 = vunpack.c.h.b16 %v1522
        %v2851 = vunpack.c.l.b16 %v1523
        %v2852 = vunpack.c.h.b16 %v1523
        %v2853 = vunpack.c.l.b16 %v1524
        %v2854 = vunpack.c.h.b16 %v1524
        %v2855 = vunpack.c.l.b16 %v1525
        %v2856 = vunpack.c.h.b16 %v1525
        %v2857 = vunpack.c.l.b16 %v1526
        %v2858 = vunpack.c.h.b16 %v1526
        %v2859 = vunpack.c.l.b16 %v1527
        %v2860 = vunpack.c.h.b16 %v1527
        %v2861 = vunpack.c.l.b16 %v1528
        %v2862 = vunpack.c.h.b16 %v1528
        %v2863 = vunpack.c.l.b16 %v1529
        %v2864 = vunpack.c.h.b16 %v1529
        %v2865 = vunpack.c.l.b16 %v1530
        %v2866 = vunpack.c.h.b16 %v1530
        %v2867 = vunpack.c.l.b16 %v1531
        %v2868 = vunpack.c.h.b16 %v1531
        %v2869 = vunpack.c.l.b16 %v1532
        %v2870 = vunpack.c.h.b16 %v1532
        %v2871 = vunpack.c.l.b16 %v1533
        %v2872 = vunpack.c.h.b16 %v1533
        %v2873 = vunpack.c.l.b16 %v1534
        %v2874 = vunpack.c.h.b16 %v1534
        %v2875 = vunpack.c.l.b16 %v1535
        %v2876 = vunpack.c.h.b16 %v1535
        %v2877 = vunpack.c.l.b16 %v1536
        %v2878 = vunpack.c.h.b16 %v1536
        %v2879 = vunpack.c.l.b16 %v1537
        %v2880 = vunpack.c.h.b16 %v1537
        %v2881 = vunpack.c.l.b16 %v1538
        %v2882 = vunpack.c.h.b16 %v1538
        %v2883 = vunpack.c.l.b16 %v1539
        %v2884 = vunpack.c.h.b16 %v1539
        %v2885 = vunpack.c.l.b16 %v1540
        %v2886 = vunpack.c.h.b16 %v1540
        %v2887 = vunpack.c.l.b16 %v1541
        %v2888 = vunpack.c.h.b16 %v1541
        %v2889 = vunpack.c.l.b16 %v1542
        %v2890 = vunpack.c.h.b16 %v1542
        %v2891 = vunpack.c.l.b16 %v1543
        %v2892 = vunpack.c.h.b16 %v1543
        %v2893 = vunpack.c.l.b16 %v1544
        %v2894 = vunpack.c.h.b16 %v1544
        %v2895 = vunpack.c.l.b16 %v1545
        %v2896 = vunpack.c.h.b16 %v1545
        %v2897 = vunpack.c.l.b16 %v1546
        %v2898 = vunpack.c.h.b16 %v1546
        %v2899 = vunpack.c.l.b16 %v1547
        %v2900 = vunpack.c.h.b16 %v1547
        %v2901 = vunpack.c.l.b16 %v1548
        %v2902 = vunpack.c.h.b16 %v1548
        %v2903 = vunpack.c.l.b16 %v1549
        %v2904 = vunpack.c.h.b16 %v1549
        %v2905 = vunpack.c.l.b16 %v1550
        %v2906 = vunpack.c.h.b16 %v1550
        %v2907 = vunpack.c.l.b16 %v1551
        %v2908 = vunpack.c.h.b16 %v1551
        %v2909 = vunpack.c.l.b16 %v1552
        %v2910 = vunpack.c.h.b16 %v1552
        %v2911 = vunpack.c.l.b16 %v1553
        %v2912 = vunpack.c.h.b16 %v1553
        %v2913 = vunpack.c.l.b16 %v1554
        %v2914 = vunpack.c.h.b16 %v1554
        %v2915 = vunpack.c.l.b16 %v1555
        %v2916 = vunpack.c.h.b16 %v1555
        %v2917 = vunpack.c.l.b16 %v1556
        %v2918 = vunpack.c.h.b16 %v1556
        %v2919 = vunpack.c.l.b16 %v1557
        %v2920 = vunpack.c.h.b16 %v1557
        %v2921 = vunpack.c.l.b16 %v1558
        %v2922 = vunpack.c.h.b16 %v1558
        %v2923 = vunpack.c.l.b16 %v1559
        %v2924 = vunpack.c.h.b16 %v1559
        %v2925 = vunpack.c.l.b16 %v1560
        %v2926 = vunpack.c.h.b16 %v1560
        %v2927 = vunpack.c.l.b16 %v1561
        %v2928 = vunpack.c.h.b16 %v1561
        %v2929 = vunpack.c.l.b16 %v1562
        %v2930 = vunpack.c.h.b16 %v1562
        %v2931 = vunpack.c.l.b16 %v1563
        %v2932 = vunpack.c.h.b16 %v1563
        %v2933 = vunpack.c.l.b16 %v1564
        %v2934 = vunpack.c.h.b16 %v1564
        %v2935 = vunpack.c.l.b16 %v1565
        %v2936 = vunpack.c.h.b16 %v1565
        %v2937 = vunpack.c.l.b16 %v1566
        %v2938 = vunpack.c.h.b16 %v1566
        %v2939 = vunpack.c.l.b16 %v1567
        %v2940 = vunpack.c.h.b16 %v1567
        %v2941 = vunpack.c.l.b16 %v1568
        %v2942 = vunpack.c.h.b16 %v1568
        %v2943 = vunpack.c.l.b16 %v1569
        %v2944 = vunpack.c.h.b16 %v1569
        %v2945 = vunpack.c.l.b16 %v1570
        %v2946 = vunpack.c.h.b16 %v1570
        %v2947 = vunpack.c.l.b16 %v1571
        %v2948 = vunpack.c.h.b16 %v1571
        %v2949 = vunpack.c.l.b16 %v1572
        %v2950 = vunpack.c.h.b16 %v1572
        %v2951 = vunpack.c.l.b16 %v1573
        %v2952 = vunpack.c.h.b16 %v1573
        %v2953 = vunpack.c.l.b16 %v1574
        %v2954 = vunpack.c.h.b16 %v1574
        %v2955 = vunpack.c.l.b16 %v1575
        %v2956 = vunpack.c.h.b16 %v1575
        %v2957 = vunpack.c.l.b16 %v1576
        %v2958 = vunpack.c.h.b16 %v1576
        %v2959 = vunpack.c.l.b16 %v1577
        %v2960 = vunpack.c.h.b16 %v1577
        %v2961 = vunpack.c.l.b16 %v1578
        %v2962 = vunpack.c.h.b16 %v1578
        %v2963 = vunpack.c.l.b16 %v1579
        %v2964 = vunpack.c.h.b16 %v1579
        %v2965 = vunpack.c.l.b16 %v1580
        %v2966 = vunpack.c.h.b16 %v1580
        %v2967 = vunpack.c.l.b16 %v1581
        %v2968 = vunpack.c.h.b16 %v1581
        %v2969 = vunpack.c.l.b16 %v1582
        %v2970 = vunpack.c.h.b16 %v1582
        %v2971 = vunpack.c.l.b16 %v1583
        %v2972 = vunpack.c.h.b16 %v1583
        %v2973 = vunpack.c.l.b16 %v1584
        %v2974 = vunpack.c.h.b16 %v1584
        %v2975 = vunpack.c.l.b16 %v1585
        %v2976 = vunpack.c.h.b16 %v1585
        %v2977 = vunpack.c.l.b16 %v1586
        %v2978 = vunpack.c.h.b16 %v1586
        %v2979 = vunpack.c.l.b16 %v1587
        %v2980 = vunpack.c.h.b16 %v1587
        %v2981 = vunpack.c.l.b16 %v1588
        %v2982 = vunpack.c.h.b16 %v1588
        %v2983 = vunpack.c.l.b16 %v1589
        %v2984 = vunpack.c.h.b16 %v1589
        %v2985 = vunpack.c.l.b16 %v1590
        %v2986 = vunpack.c.h.b16 %v1590
        %v2987 = vunpack.c.l.b16 %v1591
        %v2988 = vunpack.c.h.b16 %v1591
        %v2989 = vunpack.c.l.b16 %v1592
        %v2990 = vunpack.c.h.b16 %v1592
        %v2991 = vunpack.c.l.b16 %v1593
        %v2992 = vunpack.c.h.b16 %v1593
        %v2993 = vunpack.c.l.b16 %v1594
        %v2994 = vunpack.c.h.b16 %v1594
        %v2995 = vunpack.c.l.b16 %v1595
        %v2996 = vunpack.c.h.b16 %v1595
        %v2997 = vunpack.c.l.b16 %v1596
        %v2998 = vunpack.c.h.b16 %v1596
        %v2999 = vunpack.c.l.b16 %v1597
        %v3000 = vunpack.c.h.b16 %v1597
        %v3001 = vunpack.c.l.b16 %v1598
        %v3002 = vunpack.c.h.b16 %v1598
        %v3003 = vunpack.c.l.b16 %v1599
        %v3004 = vunpack.c.h.b16 %v1599
        %v3005 = vunpack.c.l.b16 %v1600
        %v3006 = vunpack.c.h.b16 %v1600
        %v3007 = vunpack.c.l.b16 %v1601
        %v3008 = vunpack.c.h.b16 %v1601
        %v3009 = vunpack.c.l.b16 %v1602
        %v3010 = vunpack.c.h.b16 %v1602
        %v3011 = vunpack.c.l.b16 %v1603
        %v3012 = vunpack.c.h.b16 %v1603
        %v3013 = vunpack.c.l.b16 %v1604
        %v3014 = vunpack.c.h.b16 %v1604
        %v3015 = vunpack.c.l.b16 %v1605
        %v3016 = vunpack.c.h.b16 %v1605
        %v3017 = vunpack.c.l.b16 %v1606
        %v3018 = vunpack.c.h.b16 %v1606
        %v3019 = vunpack.c.l.b16 %v1607
        %v3020 = vunpack.c.h.b16 %v1607
        %v3021 = vunpack.c.l.b16 %v1608
        %v3022 = vunpack.c.h.b16 %v1608
        %v3023 = vunpack.c.l.b16 %v1609
        %v3024 = vunpack.c.h.b16 %v1609
        %v3025 = vunpack.c.l.b16 %v1610
        %v3026 = vunpack.c.h.b16 %v1610
        %v3027 = vunpack.c.l.b16 %v1611
        %v3028 = vunpack.c.h.b16 %v1611
        %v3029 = vunpack.c.l.b16 %v1612
        %v3030 = vunpack.c.h.b16 %v1612
        %v3031 = vunpack.c.l.b16 %v1613
        %v3032 = vunpack.c.h.b16 %v1613
        %v3033 = vunpack.c.l.b16 %v1614
        %v3034 = vunpack.c.h.b16 %v1614
        %v3035 = vunpack.c.l.b16 %v1615
        %v3036 = vunpack.c.h.b16 %v1615
        %v3037 = vunpack.c.l.b16 %v1616
        %v3038 = vunpack.c.h.b16 %v1616
        %v3039 = vunpack.c.l.b16 %v1617
        %v3040 = vunpack.c.h.b16 %v1617
        %v3041 = vunpack.c.l.b16 %v1618
        %v3042 = vunpack.c.h.b16 %v1618
        %v3043 = vunpack.c.l.b16 %v1619
        %v3044 = vunpack.c.h.b16 %v1619
        %v3045 = vunpack.c.l.b16 %v1620
        %v3046 = vunpack.c.h.b16 %v1620
        %v3047 = vunpack.c.l.b16 %v1621
        %v3048 = vunpack.c.h.b16 %v1621
        %v3049 = vunpack.c.l.b16 %v1622
        %v3050 = vunpack.c.h.b16 %v1622
        %v3051 = vunpack.c.l.b16 %v1623
        %v3052 = vunpack.c.h.b16 %v1623
        %v3053 = vunpack.c.l.b16 %v1624
        %v3054 = vunpack.c.h.b16 %v1624
        %v3055 = vunpack.c.l.b16 %v1625
        %v3056 = vunpack.c.h.b16 %v1625
        %v3057 = vunpack.c.l.b16 %v1626
        %v3058 = vunpack.c.h.b16 %v1626
        %v3059 = vunpack.c.l.b16 %v1627
        %v3060 = vunpack.c.h.b16 %v1627
        %v3061 = vunpack.c.l.b16 %v1628
        %v3062 = vunpack.c.h.b16 %v1628
        %v3063 = vunpack.c.l.b16 %v1629
        %v3064 = vunpack.c.h.b16 %v1629
        %v3065 = vunpack.c.l.b16 %v1630
        %v3066 = vunpack.c.h.b16 %v1630
        %v3067 = vunpack.c.l.b16 %v1631
        %v3068 = vunpack.c.h.b16 %v1631
        %v3069 = vunpack.c.l.b16 %v1632
        %v3070 = vunpack.c.h.b16 %v1632
        %v3071 = vunpack.c.l.b16 %v1633
        %v3072 = vunpack.c.h.b16 %v1633
        %v3073 = vunpack.c.l.b16 %v1634
        %v3074 = vunpack.c.h.b16 %v1634
        %v3075 = vunpack.c.l.b16 %v1635
        %v3076 = vunpack.c.h.b16 %v1635
        %v3077 = vunpack.c.l.b16 %v1636
        %v3078 = vunpack.c.h.b16 %v1636
        %v3079 = vunpack.c.l.b16 %v1637
        %v3080 = vunpack.c.h.b16 %v1637
        %v3081 = vunpack.c.l.b16 %v1638
        %v3082 = vunpack.c.h.b16 %v1638
        %v3083 = vunpack.c.l.b16 %v1639
        %v3084 = vunpack.c.h.b16 %v1639
        %v3085 = vunpack.c.l.b16 %v1640
        %v3086 = vunpack.c.h.b16 %v1640
        %v3087 = vunpack.c.l.b16 %v1641
        %v3088 = vunpack.c.h.b16 %v1641
        %v3089 = vunpack.c.l.b16 %v1642
        %v3090 = vunpack.c.h.b16 %v1642
        %v3091 = vunpack.c.l.b16 %v1643
        %v3092 = vunpack.c.h.b16 %v1643
        %v3093 = vunpack.c.l.b16 %v1644
        %v3094 = vunpack.c.h.b16 %v1644
        %v3095 = vunpack.c.l.b16 %v1645
        %v3096 = vunpack.c.h.b16 %v1645
        %v3097 = vunpack.c.l.b16 %v1646
        %v3098 = vunpack.c.h.b16 %v1646
        %v3099 = vunpack.c.l.b16 %v1647
        %v3100 = vunpack.c.h.b16 %v1647
        %v3101 = vunpack.c.l.b16 %v1648
        %v3102 = vunpack.c.h.b16 %v1648
        %v3103 = vunpack.c.l.b16 %v1649
        %v3104 = vunpack.c.h.b16 %v1649
        %v3105 = vunpack.c.l.b16 %v1650
        %v3106 = vunpack.c.h.b16 %v1650
        %v3107 = vunpack.c.l.b16 %v1651
        %v3108 = vunpack.c.h.b16 %v1651
        %v3109 = vunpack.c.l.b16 %v1652
        %v3110 = vunpack.c.h.b16 %v1652
        %v3111 = vunpack.c.l.b16 %v1653
        %v3112 = vunpack.c.h.b16 %v1653
        %v3113 = vunpack.c.l.b16 %v1654
        %v3114 = vunpack.c.h.b16 %v1654
        %v3115 = vunpack.c.l.b16 %v1655
        %v3116 = vunpack.c.h.b16 %v1655
        %v3117 = vunpack.c.l.b16 %v1656
        %v3118 = vunpack.c.h.b16 %v1656
        %v3119 = vunpack.c.l.b16 %v1657
        %v3120 = vunpack.c.h.b16 %v1657
        %v3121 = vunpack.c.l.b16 %v1658
        %v3122 = vunpack.c.h.b16 %v1658
        %v3123 = vunpack.c.l.b16 %v1659
        %v3124 = vunpack.c.h.b16 %v1659
        %v3125 = vunpack.c.l.b16 %v1660
        %v3126 = vunpack.c.h.b16 %v1660
        %v3127 = vunpack.c.l.b16 %v1661
        %v3128 = vunpack.c.h.b16 %v1661
        %v3129 = vunpack.c.l.b16 %v1662
        %v3130 = vunpack.c.h.b16 %v1662
        %v3131 = vunpack.c.l.b16 %v1663
        %v3132 = vunpack.c.h.b16 %v1663
        %v3133 = vunpack.c.l.b16 %v1664
        %v3134 = vunpack.c.h.b16 %v1664
        %v3135 = vunpack.c.l.b16 %v1665
        %v3136 = vunpack.c.h.b16 %v1665
        %v3137 = vunpack.c.l.b16 %v1666
        %v3138 = vunpack.c.h.b16 %v1666
        %v3139 = vunpack.c.l.b16 %v1667
        %v3140 = vunpack.c.h.b16 %v1667
        %v3141 = vunpack.c.l.b16 %v1668
        %v3142 = vunpack.c.h.b16 %v1668
        %v3143 = vunpack.c.l.b16 %v1669
        %v3144 = vunpack.c.h.b16 %v1669
        %v3145 = vunpack.c.l.b16 %v1670
        %v3146 = vunpack.c.h.b16 %v1670
        %v3147 = vunpack.c.l.b16 %v1671
        %v3148 = vunpack.c.h.b16 %v1671
        %v3149 = vunpack.c.l.b16 %v1672
        %v3150 = vunpack.c.h.b16 %v1672
        %v3151 = vunpack.c.l.b16 %v1673
        %v3152 = vunpack.c.h.b16 %v1673
        %v3153 = vunpack.c.l.b16 %v1674
        %v3154 = vunpack.c.h.b16 %v1674
        %v3155 = vunpack.c.l.b16 %v1675
        %v3156 = vunpack.c.h.b16 %v1675
        %v3157 = vunpack.c.l.b16 %v1676
        %v3158 = vunpack.c.h.b16 %v1676
        %v3159 = vunpack.c.l.b16 %v1677
        %v3160 = vunpack.c.h.b16 %v1677
        %v3161 = vunpack.c.l.b16 %v1678
        %v3162 = vunpack.c.h.b16 %v1678
        %v3163 = vunpack.c.l.b16 %v1679
        %v3164 = vunpack.c.h.b16 %v1679
        %v3165 = vunpack.c.l.b16 %v1680
        %v3166 = vunpack.c.h.b16 %v1680
        %v3167 = vunpack.c.l.b16 %v1681
        %v3168 = vunpack.c.h.b16 %v1681
        %v3169 = vunpack.c.l.b16 %v1682
        %v3170 = vunpack.c.h.b16 %v1682
        %v3171 = vunpack.c.l.b16 %v1683
        %v3172 = vunpack.c.h.b16 %v1683
        %v3173 = vunpack.c.l.b16 %v1684
        %v3174 = vunpack.c.h.b16 %v1684
        %v3175 = vunpack.c.l.b16 %v1685
        %v3176 = vunpack.c.h.b16 %v1685
        %v3177 = vunpack.c.l.b16 %v1686
        %v3178 = vunpack.c.h.b16 %v1686
        %v3179 = vunpack.c.l.b16 %v1687
        %v3180 = vunpack.c.h.b16 %v1687
        %v3181 = vunpack.c.l.b16 %v1688
        %v3182 = vunpack.c.h.b16 %v1688
        %v3183 = vunpack.c.l.b16 %v1689
        %v3184 = vunpack.c.h.b16 %v1689
        %v3185 = vunpack.c.l.b16 %v1690
        %v3186 = vunpack.c.h.b16 %v1690
        %v3187 = vunpack.c.l.b16 %v1691
        %v3188 = vunpack.c.h.b16 %v1691
        %v3189 = vunpack.c.l.b16 %v1692
        %v3190 = vunpack.c.h.b16 %v1692
        %v3191 = vunpack.c.l.b16 %v1693
        %v3192 = vunpack.c.h.b16 %v1693
        %v3193 = vunpack.c.l.b16 %v1694
        %v3194 = vunpack.c.h.b16 %v1694
        %v3195 = vunpack.c.l.b16 %v1695
        %v3196 = vunpack.c.h.b16 %v1695
        %v3197 = vunpack.c.l.b16 %v1696
        %v3198 = vunpack.c.h.b16 %v1696
        %v3199 = vunpack.c.l.b16 %v1697
        %v3200 = vunpack.c.h.b16 %v1697
        %v3201 = vunpack.c.l.b16 %v1698
        %v3202 = vunpack.c.h.b16 %v1698
        %v3203 = vunpack.c.l.b16 %v1699
        %v3204 = vunpack.c.h.b16 %v1699
        %v3205 = vunpack.c.l.b16 %v1700
        %v3206 = vunpack.c.h.b16 %v1700
        %v3207 = vunpack.c.l.b16 %v1701
        %v3208 = vunpack.c.h.b16 %v1701
        %v3209 = vunpack.c.l.b16 %v1702
        %v3210 = vunpack.c.h.b16 %v1702
        %v3211 = vunpack.c.l.b16 %v1703
        %v3212 = vunpack.c.h.b16 %v1703
        %v3213 = vunpack.c.l.b16 %v1704
        %v3214 = vunpack.c.h.b16 %v1704
        %v3215 = vunpack.c.l.b16 %v1705
        %v3216 = vunpack.c.h.b16 %v1705
        %v3217 = vunpack.c.l.b16 %v1706
        %v3218 = vunpack.c.h.b16 %v1706
        %v3219 = vunpack.c.l.b16 %v1707
        %v3220 = vunpack.c.h.b16 %v1707
        %v3221 = vunpack.c.l.b16 %v1708
        %v3222 = vunpack.c.h.b16 %v1708
        %v3223 = vunpack.c.l.b16 %v1709
        %v3224 = vunpack.c.h.b16 %v1709
        %v3225 = vunpack.c.l.b16 %v1710
        %v3226 = vunpack.c.h.b16 %v1710
        %v3227 = vunpack.c.l.b16 %v1711
        %v3228 = vunpack.c.h.b16 %v1711
        %v3229 = vunpack.c.l.b16 %v1712
        %v3230 = vunpack.c.h.b16 %v1712
        %v3231 = vunpack.c.l.b16 %v1713
        %v3232 = vunpack.c.h.b16 %v1713
        %v3233 = vunpack.c.l.b16 %v1714
        %v3234 = vunpack.c.h.b16 %v1714
        %v3235 = vunpack.c.l.b16 %v1715
        %v3236 = vunpack.c.h.b16 %v1715
        %v3237 = vunpack.c.l.b16 %v1716
        %v3238 = vunpack.c.h.b16 %v1716
        %v3239 = vunpack.c.l.b16 %v1717
        %v3240 = vunpack.c.h.b16 %v1717
        %v3241 = vunpack.c.l.b16 %v1718
        %v3242 = vunpack.c.h.b16 %v1718
        %v3243 = vunpack.c.l.b16 %v1719
        %v3244 = vunpack.c.h.b16 %v1719
        %v3245 = vunpack.c.l.b16 %v1720
        %v3246 = vunpack.c.h.b16 %v1720
        %v3247 = vunpack.c.l.b16 %v1721
        %v3248 = vunpack.c.h.b16 %v1721
        %v3249 = vunpack.c.l.b16 %v1722
        %v3250 = vunpack.c.h.b16 %v1722
        %v3251 = vunpack.c.l.b16 %v1723
        %v3252 = vunpack.c.h.b16 %v1723
        %v3253 = vunpack.c.l.b16 %v1724
        %v3254 = vunpack.c.h.b16 %v1724
        %v3255 = vunpack.c.l.b16 %v1725
        %v3256 = vunpack.c.h.b16 %v1725
        %v3257 = vunpack.c.l.b16 %v1726
        %v3258 = vunpack.c.h.b16 %v1726
        %v3259 = vunpack.c.l.b16 %v1727
        %v3260 = vunpack.c.h.b16 %v1727
        %v3261 = vunpack.c.l.b16 %v1728
        %v3262 = vunpack.c.h.b16 %v1728
        %v3263 = vunpack.c.l.b16 %v1729
        %v3264 = vunpack.c.h.b16 %v1729
        %v3265 = vunpack.c.l.b16 %v1730
        %v3266 = vunpack.c.h.b16 %v1730
        %v3267 = vunpack.c.l.b16 %v1731
        %v3268 = vunpack.c.h.b16 %v1731
        %v3269 = vunpack.c.l.b16 %v1732
        %v3270 = vunpack.c.h.b16 %v1732
        %v3271 = vunpack.c.l.b16 %v1733
        %v3272 = vunpack.c.h.b16 %v1733
        %v3273 = vunpack.c.l.b16 %v1734
        %v3274 = vunpack.c.h.b16 %v1734
        %v3275 = vunpack.c.l.b16 %v1735
        %v3276 = vunpack.c.h.b16 %v1735
        %v3277 = vunpack.c.l.b16 %v1736
        %v3278 = vunpack.c.h.b16 %v1736
        %v3279 = vunpack.c.l.b16 %v1737
        %v3280 = vunpack.c.h.b16 %v1737
        %v3281 = vunpack.c.l.b16 %v1738
        %v3282 = vunpack.c.h.b16 %v1738
        %v3283 = vunpack.c.l.b16 %v1739
        %v3284 = vunpack.c.h.b16 %v1739
        %v3285 = vunpack.c.l.b16 %v1740
        %v3286 = vunpack.c.h.b16 %v1740
        %v3287 = vunpack.c.l.b16 %v1741
        %v3288 = vunpack.c.h.b16 %v1741
        %v3289 = vunpack.c.l.b16 %v1742
        %v3290 = vunpack.c.h.b16 %v1742
        %v3291 = vunpack.c.l.b16 %v1743
        %v3292 = vunpack.c.h.b16 %v1743
        %v3293 = vunpack.c.l.b16 %v1744
        %v3294 = vunpack.c.h.b16 %v1744
        %v3295 = vunpack.c.l.b16 %v1745
        %v3296 = vunpack.c.h.b16 %v1745
        %v3297 = vunpack.c.l.b16 %v1746
        %v3298 = vunpack.c.h.b16 %v1746
        %v3299 = vunpack.c.l.b16 %v1747
        %v3300 = vunpack.c.h.b16 %v1747
        %v3301 = vunpack.c.l.b16 %v1748
        %v3302 = vunpack.c.h.b16 %v1748
        %v3303 = vunpack.c.l.b16 %v1749
        %v3304 = vunpack.c.h.b16 %v1749
        %v3305 = vunpack.c.l.b16 %v1750
        %v3306 = vunpack.c.h.b16 %v1750
        %v3307 = vunpack.c.l.b16 %v1751
        %v3308 = vunpack.c.h.b16 %v1751
        %v3309 = vunpack.c.l.b16 %v1752
        %v3310 = vunpack.c.h.b16 %v1752
        %v3311 = vunpack.c.l.b16 %v1753
        %v3312 = vunpack.c.h.b16 %v1753
        %v3313 = vunpack.c.l.b16 %v1754
        %v3314 = vunpack.c.h.b16 %v1754
        %v3315 = vunpack.c.l.b16 %v1755
        %v3316 = vunpack.c.h.b16 %v1755
        %v3317 = vunpack.c.l.b16 %v1756
        %v3318 = vunpack.c.h.b16 %v1756
        %v3319 = vunpack.c.l.b16 %v1757
        %v3320 = vunpack.c.h.b16 %v1757
        %v3321 = vunpack.c.l.b16 %v1758
        %v3322 = vunpack.c.h.b16 %v1758
        %v3323 = vunpack.c.l.b16 %v1759
        %v3324 = vunpack.c.h.b16 %v1759
        %v3325 = vunpack.c.l.b16 %v1760
        %v3326 = vunpack.c.h.b16 %v1760
        %v3327 = vunpack.c.l.b16 %v1761
        %v3328 = vunpack.c.h.b16 %v1761
        %v3329 = vunpack.c.l.b16 %v1762
        %v3330 = vunpack.c.h.b16 %v1762
        %v3331 = vunpack.c.l.b16 %v1763
        %v3332 = vunpack.c.h.b16 %v1763
        %v3333 = vunpack.c.l.b16 %v1764
        %v3334 = vunpack.c.h.b16 %v1764
        %v3335 = vunpack.c.l.b16 %v1765
        %v3336 = vunpack.c.h.b16 %v1765
        %v3337 = vunpack.c.l.b16 %v1766
        %v3338 = vunpack.c.h.b16 %v1766
        %v3339 = vunpack.c.l.b16 %v1767
        %v3340 = vunpack.c.h.b16 %v1767
        %v3341 = vunpack.c.l.b16 %v1768
        %v3342 = vunpack.c.h.b16 %v1768
        %v3343 = vunpack.c.l.b16 %v1769
        %v3344 = vunpack.c.h.b16 %v1769
        %v3345 = vunpack.c.l.b16 %v1770
        %v3346 = vunpack.c.h.b16 %v1770
        %v3347 = vunpack.c.l.b16 %v1771
        %v3348 = vunpack.c.h.b16 %v1771
        %v3349 = vunpack.c.l.b16 %v1772
        %v3350 = vunpack.c.h.b16 %v1772
        %v3351 = vunpack.c.l.b16 %v1773
        %v3352 = vunpack.c.h.b16 %v1773
        %v3353 = vunpack.c.l.b16 %v1774
        %v3354 = vunpack.c.h.b16 %v1774
        %v3355 = vunpack.c.l.b16 %v1775
        %v3356 = vunpack.c.h.b16 %v1775
        %v3357 = vunpack.c.l.b16 %v1776
        %v3358 = vunpack.c.h.b16 %v1776
        %v3359 = vunpack.c.l.b16 %v1777
        %v3360 = vunpack.c.h.b16 %v1777
        %v3361 = vunpack.c.l.b16 %v1778
        %v3362 = vunpack.c.h.b16 %v1778
        %v3363 = vunpack.c.l.b16 %v1779
        %v3364 = vunpack.c.h.b16 %v1779
        %v3365 = vunpack.c.l.b16 %v1780
        %v3366 = vunpack.c.h.b16 %v1780
        %v3367 = vunpack.c.l.b16 %v1781
        %v3368 = vunpack.c.h.b16 %v1781
        %v3369 = vunpack.c.l.b16 %v1782
        %v3370 = vunpack.c.h.b16 %v1782
        %v3371 = vunpack.c.l.b16 %v1783
        %v3372 = vunpack.c.h.b16 %v1783
        %v3373 = vunpack.c.l.b16 %v1784
        %v3374 = vunpack.c.h.b16 %v1784
        %v3375 = vpack.c.b16 %v2801, %v2799
        %v3376 = vpack.c.b16 %v2802, %v2800
        %v3377 = vpack.c.b16 %v2805, %v2803
        %v3378 = vpack.c.b16 %v2806, %v2804
        %v3379 = vpack.c.b16 %v2809, %v2807
        %v3380 = vpack.c.b16 %v2810, %v2808
        %v3381 = vpack.c.b16 %v2813, %v2811
        %v3382 = vpack.c.b16 %v2814, %v2812
        %v3383 = vpack.c.b16 %v2817, %v2815
        %v3384 = vpack.c.b16 %v2818, %v2816
        %v3385 = vpack.c.b16 %v2821, %v2819
        %v3386 = vpack.c.b16 %v2822, %v2820
        %v3387 = vpack.c.b16 %v2825, %v2823
        %v3388 = vpack.c.b16 %v2826, %v2824
        %v3389 = vpack.c.b16 %v2829, %v2827
        %v3390 = vpack.c.b16 %v2830, %v2828
        %v3391 = vpack.c.b16 %v2833, %v2831
        %v3392 = vpack.c.b16 %v2834, %v2832
        %v3393 = vpack.c.b16 %v2837, %v2835
        %v3394 = vpack.c.b16 %v2838, %v2836
        %v3395 = vpack.c.b16 %v2841, %v2839
        %v3396 = vpack.c.b16 %v2842, %v2840
        %v3397 = vpack.c.b16 %v2845, %v2843
        %v3398 = vpack.c.b16 %v2846, %v2844
        %v3399 = vpack.c.b16 %v2849, %v2847
        %v3400 = vpack.c.b16 %v2850, %v2848
        %v3401 = vpack.c.b16 %v2853, %v2851
        %v3402 = vpack.c.b16 %v2854, %v2852
        %v3403 = vpack.c.b16 %v2857, %v2855
        %v3404 = vpack.c.b16 %v2858, %v2856
        %v3405 = vpack.c.b16 %v2861, %v2859
        %v3406 = vpack.c.b16 %v2862, %v2860
        %v3407 = vpack.c.b16 %v2865, %v2863
        %v3408 = vpack.c.b16 %v2866, %v2864
        %v3409 = vpack.c.b16 %v2869, %v2867
        %v3410 = vpack.c.b16 %v2870, %v2868
        %v3411 = vpack.c.b16 %v2873, %v2871
        %v3412 = vpack.c.b16 %v2874, %v2872
        %v3413 = vpack.c.b16 %v2877, %v2875
        %v3414 = vpack.c.b16 %v2878, %v2876
        %v3415 = vpack.c.b16 %v2881, %v2879
        %v3416 = vpack.c.b16 %v2882, %v2880
        %v3417 = vpack.c.b16 %v2885, %v2883
        %v3418 = vpack.c.b16 %v2886, %v2884
        %v3419 = vpack.c.b16 %v2889, %v2887
        %v3420 = vpack.c.b16 %v2890, %v2888
        %v3421 = vpack.c.b16 %v2893, %v2891
        %v3422 = vpack.c.b16 %v2894, %v2892
        %v3423 = vpack.c.b16 %v2897, %v2895
        %v3424 = vpack.c.b16 %v2898, %v2896
        %v3425 = vpack.c.b16 %v2901, %v2899
        %v3426 = vpack.c.b16 %v2902, %v2900
        %v3427 = vpack.c.b16 %v2905, %v2903
        %v3428 = vpack.c.b16 %v2906, %v2904
        %v3429 = vpack.c.b16 %v2909, %v2907
        %v3430 = vpack.c.b16 %v2910, %v2908
        %v3431 = vpack.c.b16 %v2913, %v2911
        %v3432 = vpack.c.b16 %v2914, %v2912
        %v3433 = vpack.c.b16 %v2917, %v2915
        %v3434 = vpack.c.b16 %v2918, %v2916
        %v3435 = vpack.c.b16 %v2921, %v2919
        %v3436 = vpack.c.b16 %v2922, %v2920
        %v3437 = vpack.c.b16 %v2925, %v2923
        %v3438 = vpack.c.b16 %v2926, %v2924
        %v3439 = vpack.c.b16 %v2929, %v2927
        %v3440 = vpack.c.b16 %v2930, %v2928
        %v3441 = vpack.c.b16 %v2933, %v2931
        %v3442 = vpack.c.b16 %v2934, %v2932
        %v3443 = vpack.c.b16 %v2937, %v2935
        %v3444 = vpack.c.b16 %v2938, %v2936
        %v3445 = vpack.c.b16 %v2941, %v2939
        %v3446 = vpack.c.b16 %v2942, %v2940
        %v3447 = vpack.c.b16 %v2945, %v2943
        %v3448 = vpack.c.b16 %v2946, %v2944
        %v3449 = vpack.c.b16 %v2949, %v2947
        %v3450 = vpack.c.b16 %v2950, %v2948
        %v3451 = vpack.c.b16 %v2953, %v2951
        %v3452 = vpack.c.b16 %v2954, %v2952
        %v3453 = vpack.c.b16 %v2957, %v2955
        %v3454 = vpack.c.b16 %v2958, %v2956
        %v3455 = vpack.c.b16 %v2961, %v2959
        %v3456 = vpack.c.b16 %v2962, %v2960
        %v3457 = vpack.c.b16 %v2965, %v2963
        %v3458 = vpack.c.b16 %v2966, %v2964
        %v3459 = vpack.c.b16 %v2969, %v2967
        %v3460 = vpack.c.b16 %v2970, %v2968
        %v3461 = vpack.c.b16 %v2973, %v2971
        %v3462 = vpack.c.b16 %v2974, %v2972
        %v3463 = vpack.c.b16 %v2977, %v2975
        %v3464 = vpack.c.b16 %v2978, %v2976
        %v3465 = vpack.c.b16 %v2981, %v2979
        %v3466 = vpack.c.b16 %v2982, %v2980
        %v3467 = vpack.c.b16 %v2985, %v2983
        %v3468 = vpack.c.b16 %v2986, %v2984
        %v3469 = vpack.c.b16 %v2989, %v2987
        %v3470 = vpack.c.b16 %v2990, %v2988
        %v3471 = vpack.c.b16 %v2993, %v2991
        %v3472 = vpack.c.b16 %v2994, %v2992
        %v3473 = vpack.c.b16 %v2997, %v2995
        %v3474 = vpack.c.b16 %v2998, %v2996
        %v3475 = vpack.c.b16 %v3001, %v2999
        %v3476 = vpack.c.b16 %v3002, %v3000
        %v3477 = vpack.c.b16 %v3005, %v3003
        %v3478 = vpack.c.b16 %v3006, %v3004
        %v3479 = vpack.c.b16 %v3009, %v3007
        %v3480 = vpack.c.b16 %v3010, %v3008
        %v3481 = vpack.c.b16 %v3013, %v3011
        %v3482 = vpack.c.b16 %v3014, %v3012
        %v3483 = vpack.c.b16 %v3017, %v3015
        %v3484 = vpack.c.b16 %v3018, %v3016
        %v3485 = vpack.c.b16 %v3021, %v3019
        %v3486 = vpack.c.b16 %v3022, %v3020
        %v3487 = vpack.c.b16 %v3025, %v3023
        %v3488 = vpack.c.b16 %v3026, %v3024
        %v3489 = vpack.c.b16 %v3029, %v3027
        %v3490 = vpack.c.b16 %v3030, %v3028
        %v3491 = vpack.c.b16 %v3033, %v3031
        %v3492 = vpack.c.b16 %v3034, %v3032
        %v3493 = vpack.c.b16 %v3037, %v3035
        %v3494 = vpack.c.b16 %v3038, %v3036
        %v3495 = vpack.c.b16 %v3041, %v3039
        %v3496 = vpack.c.b16 %v3042, %v3040
        %v3497 = vpack.c.b16 %v3045, %v3043
        %v3498 = vpack.c.b16 %v3046, %v3044
        %v3499 = vpack.c.b16 %v3049, %v3047
        %v3500 = vpack.c.b16 %v3050, %v3048
        %v3501 = vpack.c.b16 %v3053, %v3051
        %v3502 = vpack.c.b16 %v3054, %v3052
        %v3503 = vpack.c.b16 %v3057, %v3055
        %v3504 = vpack.c.b16 %v3058, %v3056
        %v3505 = vpack.c.b16 %v3061, %v3059
        %v3506 = vpack.c.b16 %v3062, %v3060
        %v3507 = vpack.c.b16 %v3065, %v3063
        %v3508 = vpack.c.b16 %v3066, %v3064
        %v3509 = vpack.c.b16 %v3069, %v3067
        %v3510 = vpack.c.b16 %v3070, %v3068
        %v3511 = vpack.c.b16 %v3073, %v3071
        %v3512 = vpack.c.b16 %v3074, %v3072
        %v3513 = vpack.c.b16 %v3077, %v3075
        %v3514 = vpack.c.b16 %v3078, %v3076
        %v3515 = vpack.c.b16 %v3081, %v3079
        %v3516 = vpack.c.b16 %v3082, %v3080
        %v3517 = vpack.c.b16 %v3085, %v3083
        %v3518 = vpack.c.b16 %v3086, %v3084
        %v3519 = vpack.c.b16 %v3089, %v3087
        %v3520 = vpack.c.b16 %v3090, %v3088
        %v3521 = vpack.c.b16 %v3093, %v3091
        %v3522 = vpack.c.b16 %v3094, %v3092
        %v3523 = vpack.c.b16 %v3097, %v3095
        %v3524 = vpack.c.b16 %v3098, %v3096
        %v3525 = vpack.c.b16 %v3101, %v3099
        %v3526 = vpack.c.b16 %v3102, %v3100
        %v3527 = vpack.c.b16 %v3105, %v3103
        %v3528 = vpack.c.b16 %v3106, %v3104
        %v3529 = vpack.c.b16 %v3109, %v3107
        %v3530 = vpack.c.b16 %v3110, %v3108
        %v3531 = vpack.c.b16 %v3113, %v3111
        %v3532 = vpack.c.b16 %v3114, %v3112
        %v3533 = vpack.c.b16 %v3117, %v3115
        %v3534 = vpack.c.b16 %v3118, %v3116
        %v3535 = vpack.c.b16 %v3121, %v3119
        %v3536 = vpack.c.b16 %v3122, %v3120
        %v3537 = vpack.c.b16 %v3125, %v3123
        %v3538 = vpack.c.b16 %v3126, %v3124
        %v3539 = vpack.c.b16 %v3129, %v3127
        %v3540 = vpack.c.b16 %v3130, %v3128
        %v3541 = vpack.c.b16 %v3133, %v3131
        %v3542 = vpack.c.b16 %v3134, %v3132
        %v3543 = vpack.c.b16 %v3137, %v3135
        %v3544 = vpack.c.b16 %v3138, %v3136
        %v3545 = vpack.c.b16 %v3141, %v3139
        %v3546 = vpack.c.b16 %v3142, %v3140
        %v3547 = vpack.c.b16 %v3145, %v3143
        %v3548 = vpack.c.b16 %v3146, %v3144
        %v3549 = vpack.c.b16 %v3149, %v3147
        %v3550 = vpack.c.b16 %v3150, %v3148
        %v3551 = vpack.c.b16 %v3153, %v3151
        %v3552 = vpack.c.b16 %v3154, %v3152
        %v3553 = vpack.c.b16 %v3157, %v3155
        %v3554 = vpack.c.b16 %v3158, %v3156
        %v3555 = vpack.c.b16 %v3161, %v3159
        %v3556 = vpack.c.b16 %v3162, %v3160
        %v3557 = vpack.c.b16 %v3165, %v3163
        %v3558 = vpack.c.b16 %v3166, %v3164
        %v3559 = vpack.c.b16 %v3169, %v3167
        %v3560 = vpack.c.b16 %v3170, %v3168
        %v3561 = vpack.c.b16 %v3173, %v3171
        %v3562 = vpack.c.b16 %v3174, %v3172
        %v3563 = vpack.c.b16 %v3177, %v3175
        %v3564 = vpack.c.b16 %v3178, %v3176
        %v3565 = vpack.c.b16 %v3181, %v3179
        %v3566 = vpack.c.b16 %v3182, %v3180
        %v3567 = vpack.c.b16 %v3185, %v3183
        %v3568 = vpack.c.b16 %v3186, %v3184
        %v3569 = vpack.c.b16 %v3189, %v3187
        %v3570 = vpack.c.b16 %v3190, %v3188
        %v3571 = vpack.c.b16 %v3193, %v3191
        %v3572 = vpack.c.b16 %v3194, %v3192
        %v3573 = vpack.c.b16 %v3197, %v3195
        %v3574 = vpack.c.b16 %v3198, %v3196
        %v3575 = vpack.c.b16 %v3201, %v3199
        %v3576 = vpack.c.b16 %v3202, %v3200
        %v3577 = vpack.c.b16 %v3205, %v3203
        %v3578 = vpack.c.b16 %v3206, %v3204
        %v3579 = vpack.c.b16 %v3209, %v3207
        %v3580 = vpack.c.b16 %v3210, %v3208
        %v3581 = vpack.c.b16 %v3213, %v3211
        %v3582 = vpack.c.b16 %v3214, %v3212
        %v3583 = vpack.c.b16 %v3217, %v3215
        %v3584 = vpack.c.b16 %v3218, %v3216
        %v3585 = vpack.c.b16 %v3221, %v3219
        %v3586 = vpack.c.b16 %v3222, %v3220
        %v3587 = vpack.c.b16 %v3225, %v3223
        %v3588 = vpack.c.b16 %v3226, %v3224
        %v3589 = vpack.c.b16 %v3229, %v3227
        %v3590 = vpack.c.b16 %v3230, %v3228
        %v3591 = vpack.c.b16 %v3233, %v3231
        %v3592 = vpack.c.b16 %v3234, %v3232
        %v3593 = vpack.c.b16 %v3237, %v3235
        %v3594 = vpack.c.b16 %v3238, %v3236
        %v3595 = vpack.c.b16 %v3241, %v3239
        %v3596 = vpack.c.b16 %v3242, %v3240
        %v3597 = vpack.c.b16 %v3245, %v3243
        %v3598 = vpack.c.b16 %v3246, %v3244
        %v3599 = vpack.c.b16 %v3249, %v3247
        %v3600 = vpack.c.b16 %v3250, %v3248
        %v3601 = vpack.c.b16 %v3253, %v3251
        %v3602 = vpack.c.b16 %v3254, %v3252
        %v3603 = vpack.c.b16 %v3257, %v3255
        %v3604 = vpack.c.b16 %v3258, %v3256
        %v3605 = vpack.c.b16 %v3261, %v3259
        %v3606 = vpack.c.b16 %v3262, %v3260
        %v3607 = vpack.c.b16 %v3265, %v3263
        %v3608 = vpack.c.b16 %v3266, %v3264
        %v3609 = vpack.c.b16 %v3269, %v3267
        %v3610 = vpack.c.b16 %v3270, %v3268
        %v3611 = vpack.c.b16 %v3273, %v3271
        %v3612 = vpack.c.b16 %v3274, %v3272
        %v3613 = vpack.c.b16 %v3277, %v3275
        %v3614 = vpack.c.b16 %v3278, %v3276
        %v3615 = vpack.c.b16 %v3281, %v3279
        %v3616 = vpack.c.b16 %v3282, %v3280
        %v3617 = vpack.c.b16 %v3285, %v3283
        %v3618 = vpack.c.b16 %v3286, %v3284
        %v3619 = vpack.c.b16 %v3289, %v3287
        %v3620 = vpack.c.b16 %v3290, %v3288
        %v3621 = vpack.c.b16 %v3293, %v3291
        %v3622 = vpack.c.b16 %v3294, %v3292
        %v3623 = vpack.c.b16 %v3297, %v3295
        %v3624 = vpack.c.b16 %v3298, %v3296
        %v3625 = vpack.c.b16 %v3301, %v3299
        %v3626 = vpack.c.b16 %v3302, %v3300
        %v3627 = vpack.c.b16 %v3305, %v3303
        %v3628 = vpack.c.b16 %v3306, %v3304
        %v3629 = vpack.c.b16 %v3309, %v3307
        %v3630 = vpack.c.b16 %v3310, %v3308
        %v3631 = vpack.c.b16 %v3313, %v3311
        %v3632 = vpack.c.b16 %v3314, %v3312
        %v3633 = vpack.c.b16 %v3317, %v3315
        %v3634 = vpack.c.b16 %v3318, %v3316
        %v3635 = vpack.c.b16 %v3321, %v3319
        %v3636 = vpack.c.b16 %v3322, %v3320
        %v3637 = vpack.c.b16 %v3325, %v3323
        %v3638 = vpack.c.b16 %v3326, %v3324
        %v3639 = vpack.c.b16 %v3329, %v3327
        %v3640 = vpack.c.b16 %v3330, %v3328
        %v3641 = vpack.c.b16 %v3333, %v3331
        %v3642 = vpack.c.b16 %v3334, %v3332
        %v3643 = vpack.c.b16 %v3337, %v3335
        %v3644 = vpack.c.b16 %v3338, %v3336
        %v3645 = vpack.c.b16 %v3341, %v3339
        %v3646 = vpack.c.b16 %v3342, %v3340
        %v3647 = vpack.c.b16 %v3345, %v3343
        %v3648 = vpack.c.b16 %v3346, %v3344
        %v3649 = vpack.c.b16 %v3349, %v3347
        %v3650 = vpack.c.b16 %v3350, %v3348
        %v3651 = vpack.c.b16 %v3353, %v3351
        %v3652 = vpack.c.b16 %v3354, %v3352
        %v3653 = vpack.c.b16 %v3357, %v3355
        %v3654 = vpack.c.b16 %v3358, %v3356
        %v3655 = vpack.c.b16 %v3361, %v3359
        %v3656 = vpack.c.b16 %v3362, %v3360
        %v3657 = vpack.c.b16 %v3365, %v3363
        %v3658 = vpack.c.b16 %v3366, %v3364
        %v3659 = vpack.c.b16 %v3369, %v3367
        %v3660 = vpack.c.b16 %v3370, %v3368
        %v3661 = vpack.c.b16 %v3373, %v3371
        %v3662 = vpack.c.b16 %v3374, %v3372
        %3951 = vmatpush.bf16.msra.mxu0 %v3389
        %3952 = vmatpush.bf16.msra.mxu0 %v3387
        %3953 = vmatpush.bf16.msra.mxu0 %v3385
        %3954 = vmatpush.bf16.msra.mxu0 %v3383
        %3955 = vmatpush.bf16.msra.mxu0 %v3381
        %3956 = vmatpush.bf16.msra.mxu0 %v3379
        %3957 = vmatpush.bf16.msra.mxu0 %v3377
        %3958 = vmatpush.bf16.msra.mxu0 %v3375
        %3959 = vmatmul.bf16.gmra.mxu0 %v2223
        %v3960 = vpop.f32.mrf.mxu0
        %v3961 = vadd.f32 %v1787, %v3960
        %v3962 = vpop.f32.mrf.mxu0
        %v3963 = vadd.f32 %v1787, %v3962
        %3964 = vmatmul.bf16.gmra.mxu0 %v2241
        %v3965 = vpop.f32.mrf.mxu0
        %v3966 = vadd.f32 %v1787, %v3965
        %v3967 = vpop.f32.mrf.mxu0
        %v3968 = vadd.f32 %v1787, %v3967
        %3969 = vmatmul.bf16.gmra.mxu0 %v2259
        %v3970 = vpop.f32.mrf.mxu0
        %v3971 = vadd.f32 %v1787, %v3970
        %v3972 = vpop.f32.mrf.mxu0
        %v3973 = vadd.f32 %v1787, %v3972
        %3974 = vmatmul.bf16.gmra.mxu0 %v2277
        %v3975 = vpop.f32.mrf.mxu0
        %v3976 = vadd.f32 %v1787, %v3975
        %v3977 = vpop.f32.mrf.mxu0
        %v3978 = vadd.f32 %v1787, %v3977
        %3979 = vmatmul.bf16.gmra.mxu0 %v2295
        %v3980 = vpop.f32.mrf.mxu0
        %v3981 = vadd.f32 %v1787, %v3980
        %v3982 = vpop.f32.mrf.mxu0
        %v3983 = vadd.f32 %v1787, %v3982
        %3984 = vmatmul.bf16.gmra.mxu0 %v2313
        %v3985 = vpop.f32.mrf.mxu0
        %v3986 = vadd.f32 %v1787, %v3985
        %v3987 = vpop.f32.mrf.mxu0
        %v3988 = vadd.f32 %v1787, %v3987
        %3989 = vmatmul.bf16.gmra.mxu0 %v2331
        %v3990 = vpop.f32.mrf.mxu0
        %v3991 = vadd.f32 %v1787, %v3990
        %v3992 = vpop.f32.mrf.mxu0
        %v3993 = vadd.f32 %v1787, %v3992
        %3994 = vmatmul.bf16.gmra.mxu0 %v2349
        %v3995 = vpop.f32.mrf.mxu0
        %v3996 = vadd.f32 %v1787, %v3995
        %v3997 = vpop.f32.mrf.mxu0
        %v3998 = vadd.f32 %v1787, %v3997
        %3999 = vdwg.mxu0
        %4000 = vmatpush.bf16.msra.mxu0 %v3405
        %4001 = vmatpush.bf16.msra.mxu0 %v3403
        %4002 = vmatpush.bf16.msra.mxu0 %v3401
        %4003 = vmatpush.bf16.msra.mxu0 %v3399
        %4004 = vmatpush.bf16.msra.mxu0 %v3397
        %4005 = vmatpush.bf16.msra.mxu0 %v3395
        %4006 = vmatpush.bf16.msra.mxu0 %v3393
        %4007 = vmatpush.bf16.msra.mxu0 %v3391
        %4008 = vmatmul.bf16.gmra.mxu0 %v2224
        %v4009 = vpop.f32.mrf.mxu0
        %v4010 = vadd.f32 %v3961, %v4009
        %v4011 = vpop.f32.mrf.mxu0
        %v4012 = vadd.f32 %v3963, %v4011
        %4013 = vmatmul.bf16.gmra.mxu0 %v2242
        %v4014 = vpop.f32.mrf.mxu0
        %v4015 = vadd.f32 %v3966, %v4014
        %v4016 = vpop.f32.mrf.mxu0
        %v4017 = vadd.f32 %v3968, %v4016
        %4018 = vmatmul.bf16.gmra.mxu0 %v2260
        %v4019 = vpop.f32.mrf.mxu0
        %v4020 = vadd.f32 %v3971, %v4019
        %v4021 = vpop.f32.mrf.mxu0
        %v4022 = vadd.f32 %v3973, %v4021
        %4023 = vmatmul.bf16.gmra.mxu0 %v2278
        %v4024 = vpop.f32.mrf.mxu0
        %v4025 = vadd.f32 %v3976, %v4024
        %v4026 = vpop.f32.mrf.mxu0
        %v4027 = vadd.f32 %v3978, %v4026
        %4028 = vmatmul.bf16.gmra.mxu0 %v2296
        %v4029 = vpop.f32.mrf.mxu0
        %v4030 = vadd.f32 %v3981, %v4029
        %v4031 = vpop.f32.mrf.mxu0
        %v4032 = vadd.f32 %v3983, %v4031
        %4033 = vmatmul.bf16.gmra.mxu0 %v2314
        %v4034 = vpop.f32.mrf.mxu0
        %v4035 = vadd.f32 %v3986, %v4034
        %v4036 = vpop.f32.mrf.mxu0
        %v4037 = vadd.f32 %v3988, %v4036
        %4038 = vmatmul.bf16.gmra.mxu0 %v2332
        %v4039 = vpop.f32.mrf.mxu0
        %v4040 = vadd.f32 %v3991, %v4039
        %v4041 = vpop.f32.mrf.mxu0
        %v4042 = vadd.f32 %v3993, %v4041
        %4043 = vmatmul.bf16.gmra.mxu0 %v2350
        %v4044 = vpop.f32.mrf.mxu0
        %v4045 = vadd.f32 %v3996, %v4044
        %v4046 = vpop.f32.mrf.mxu0
        %v4047 = vadd.f32 %v3998, %v4046
        %4048 = vdwg.mxu0
        %4049 = vmatpush.bf16.msra.mxu0 %v3421
        %4050 = vmatpush.bf16.msra.mxu0 %v3419
        %4051 = vmatpush.bf16.msra.mxu0 %v3417
        %4052 = vmatpush.bf16.msra.mxu0 %v3415
        %4053 = vmatpush.bf16.msra.mxu0 %v3413
        %4054 = vmatpush.bf16.msra.mxu0 %v3411
        %4055 = vmatpush.bf16.msra.mxu0 %v3409
        %4056 = vmatpush.bf16.msra.mxu0 %v3407
        %4057 = vmatmul.bf16.gmra.mxu0 %v2225
        %v4058 = vpop.f32.mrf.mxu0
        %v4059 = vadd.f32 %v4010, %v4058
        %v4060 = vpop.f32.mrf.mxu0
        %v4061 = vadd.f32 %v4012, %v4060
        %4062 = vmatmul.bf16.gmra.mxu0 %v2243
        %v4063 = vpop.f32.mrf.mxu0
        %v4064 = vadd.f32 %v4015, %v4063
        %v4065 = vpop.f32.mrf.mxu0
        %v4066 = vadd.f32 %v4017, %v4065
        %4067 = vmatmul.bf16.gmra.mxu0 %v2261
        %v4068 = vpop.f32.mrf.mxu0
        %v4069 = vadd.f32 %v4020, %v4068
        %v4070 = vpop.f32.mrf.mxu0
        %v4071 = vadd.f32 %v4022, %v4070
        %4072 = vmatmul.bf16.gmra.mxu0 %v2279
        %v4073 = vpop.f32.mrf.mxu0
        %v4074 = vadd.f32 %v4025, %v4073
        %v4075 = vpop.f32.mrf.mxu0
        %v4076 = vadd.f32 %v4027, %v4075
        %4077 = vmatmul.bf16.gmra.mxu0 %v2297
        %v4078 = vpop.f32.mrf.mxu0
        %v4079 = vadd.f32 %v4030, %v4078
        %v4080 = vpop.f32.mrf.mxu0
        %v4081 = vadd.f32 %v4032, %v4080
        %4082 = vmatmul.bf16.gmra.mxu0 %v2315
        %v4083 = vpop.f32.mrf.mxu0
        %v4084 = vadd.f32 %v4035, %v4083
        %v4085 = vpop.f32.mrf.mxu0
        %v4086 = vadd.f32 %v4037, %v4085
        %4087 = vmatmul.bf16.gmra.mxu0 %v2333
        %v4088 = vpop.f32.mrf.mxu0
        %v4089 = vadd.f32 %v4040, %v4088
        %v4090 = vpop.f32.mrf.mxu0
        %v4091 = vadd.f32 %v4042, %v4090
        %4092 = vmatmul.bf16.gmra.mxu0 %v2351
        %v4093 = vpop.f32.mrf.mxu0
        %v4094 = vadd.f32 %v4045, %v4093
        %v4095 = vpop.f32.mrf.mxu0
        %v4096 = vadd.f32 %v4047, %v4095
        %4097 = vdwg.mxu0
        %4098 = vmatpush.bf16.msra.mxu0 %v3437
        %4099 = vmatpush.bf16.msra.mxu0 %v3435
        %4100 = vmatpush.bf16.msra.mxu0 %v3433
        %4101 = vmatpush.bf16.msra.mxu0 %v3431
        %4102 = vmatpush.bf16.msra.mxu0 %v3429
        %4103 = vmatpush.bf16.msra.mxu0 %v3427
        %4104 = vmatpush.bf16.msra.mxu0 %v3425
        %4105 = vmatpush.bf16.msra.mxu0 %v3423
        %4106 = vmatmul.bf16.gmra.mxu0 %v2226
        %v4107 = vpop.f32.mrf.mxu0
        %v4108 = vadd.f32 %v4059, %v4107
        %v4109 = vpop.f32.mrf.mxu0
        %v4110 = vadd.f32 %v4061, %v4109
        %4111 = vmatmul.bf16.gmra.mxu0 %v2244
        %v4112 = vpop.f32.mrf.mxu0
        %v4113 = vadd.f32 %v4064, %v4112
        %v4114 = vpop.f32.mrf.mxu0
        %v4115 = vadd.f32 %v4066, %v4114
        %4116 = vmatmul.bf16.gmra.mxu0 %v2262
        %v4117 = vpop.f32.mrf.mxu0
        %v4118 = vadd.f32 %v4069, %v4117
        %v4119 = vpop.f32.mrf.mxu0
        %v4120 = vadd.f32 %v4071, %v4119
        %4121 = vmatmul.bf16.gmra.mxu0 %v2280
        %v4122 = vpop.f32.mrf.mxu0
        %v4123 = vadd.f32 %v4074, %v4122
        %v4124 = vpop.f32.mrf.mxu0
        %v4125 = vadd.f32 %v4076, %v4124
        %4126 = vmatmul.bf16.gmra.mxu0 %v2298
        %v4127 = vpop.f32.mrf.mxu0
        %v4128 = vadd.f32 %v4079, %v4127
        %v4129 = vpop.f32.mrf.mxu0
        %v4130 = vadd.f32 %v4081, %v4129
        %4131 = vmatmul.bf16.gmra.mxu0 %v2316
        %v4132 = vpop.f32.mrf.mxu0
        %v4133 = vadd.f32 %v4084, %v4132
        %v4134 = vpop.f32.mrf.mxu0
        %v4135 = vadd.f32 %v4086, %v4134
        %4136 = vmatmul.bf16.gmra.mxu0 %v2334
        %v4137 = vpop.f32.mrf.mxu0
        %v4138 = vadd.f32 %v4089, %v4137
        %v4139 = vpop.f32.mrf.mxu0
        %v4140 = vadd.f32 %v4091, %v4139
        %4141 = vmatmul.bf16.gmra.mxu0 %v2352
        %v4142 = vpop.f32.mrf.mxu0
        %v4143 = vadd.f32 %v4094, %v4142
        %v4144 = vpop.f32.mrf.mxu0
        %v4145 = vadd.f32 %v4096, %v4144
        %4146 = vdwg.mxu0
        %4147 = vmatpush.bf16.msra.mxu0 %v3453
        %4148 = vmatpush.bf16.msra.mxu0 %v3451
        %4149 = vmatpush.bf16.msra.mxu0 %v3449
        %4150 = vmatpush.bf16.msra.mxu0 %v3447
        %4151 = vmatpush.bf16.msra.mxu0 %v3445
        %4152 = vmatpush.bf16.msra.mxu0 %v3443
        %4153 = vmatpush.bf16.msra.mxu0 %v3441
        %4154 = vmatpush.bf16.msra.mxu0 %v3439
        %4155 = vmatmul.bf16.gmra.mxu0 %v2227
        %v4156 = vpop.f32.mrf.mxu0
        %v4157 = vadd.f32 %v4108, %v4156
        %v4158 = vpop.f32.mrf.mxu0
        %v4159 = vadd.f32 %v4110, %v4158
        %4160 = vmatmul.bf16.gmra.mxu0 %v2245
        %v4161 = vpop.f32.mrf.mxu0
        %v4162 = vadd.f32 %v4113, %v4161
        %v4163 = vpop.f32.mrf.mxu0
        %v4164 = vadd.f32 %v4115, %v4163
        %4165 = vmatmul.bf16.gmra.mxu0 %v2263
        %v4166 = vpop.f32.mrf.mxu0
        %v4167 = vadd.f32 %v4118, %v4166
        %v4168 = vpop.f32.mrf.mxu0
        %v4169 = vadd.f32 %v4120, %v4168
        %4170 = vmatmul.bf16.gmra.mxu0 %v2281
        %v4171 = vpop.f32.mrf.mxu0
        %v4172 = vadd.f32 %v4123, %v4171
        %v4173 = vpop.f32.mrf.mxu0
        %v4174 = vadd.f32 %v4125, %v4173
        %4175 = vmatmul.bf16.gmra.mxu0 %v2299
        %v4176 = vpop.f32.mrf.mxu0
        %v4177 = vadd.f32 %v4128, %v4176
        %v4178 = vpop.f32.mrf.mxu0
        %v4179 = vadd.f32 %v4130, %v4178
        %4180 = vmatmul.bf16.gmra.mxu0 %v2317
        %v4181 = vpop.f32.mrf.mxu0
        %v4182 = vadd.f32 %v4133, %v4181
        %v4183 = vpop.f32.mrf.mxu0
        %v4184 = vadd.f32 %v4135, %v4183
        %4185 = vmatmul.bf16.gmra.mxu0 %v2335
        %v4186 = vpop.f32.mrf.mxu0
        %v4187 = vadd.f32 %v4138, %v4186
        %v4188 = vpop.f32.mrf.mxu0
        %v4189 = vadd.f32 %v4140, %v4188
        %4190 = vmatmul.bf16.gmra.mxu0 %v2353
        %v4191 = vpop.f32.mrf.mxu0
        %v4192 = vadd.f32 %v4143, %v4191
        %v4193 = vpop.f32.mrf.mxu0
        %v4194 = vadd.f32 %v4145, %v4193
        %4195 = vdwg.mxu0
        %4196 = vmatpush.bf16.msra.mxu0 %v3469
        %4197 = vmatpush.bf16.msra.mxu0 %v3467
        %4198 = vmatpush.bf16.msra.mxu0 %v3465
        %4199 = vmatpush.bf16.msra.mxu0 %v3463
        %4200 = vmatpush.bf16.msra.mxu0 %v3461
        %4201 = vmatpush.bf16.msra.mxu0 %v3459
        %4202 = vmatpush.bf16.msra.mxu0 %v3457
        %4203 = vmatpush.bf16.msra.mxu0 %v3455
        %4204 = vmatmul.bf16.gmra.mxu0 %v2228
        %v4205 = vpop.f32.mrf.mxu0
        %v4206 = vadd.f32 %v4157, %v4205
        %v4207 = vpop.f32.mrf.mxu0
        %v4208 = vadd.f32 %v4159, %v4207
        %4209 = vmatmul.bf16.gmra.mxu0 %v2246
        %v4210 = vpop.f32.mrf.mxu0
        %v4211 = vadd.f32 %v4162, %v4210
        %v4212 = vpop.f32.mrf.mxu0
        %v4213 = vadd.f32 %v4164, %v4212
        %4214 = vmatmul.bf16.gmra.mxu0 %v2264
        %v4215 = vpop.f32.mrf.mxu0
        %v4216 = vadd.f32 %v4167, %v4215
        %v4217 = vpop.f32.mrf.mxu0
        %v4218 = vadd.f32 %v4169, %v4217
        %4219 = vmatmul.bf16.gmra.mxu0 %v2282
        %v4220 = vpop.f32.mrf.mxu0
        %v4221 = vadd.f32 %v4172, %v4220
        %v4222 = vpop.f32.mrf.mxu0
        %v4223 = vadd.f32 %v4174, %v4222
        %4224 = vmatmul.bf16.gmra.mxu0 %v2300
        %v4225 = vpop.f32.mrf.mxu0
        %v4226 = vadd.f32 %v4177, %v4225
        %v4227 = vpop.f32.mrf.mxu0
        %v4228 = vadd.f32 %v4179, %v4227
        %4229 = vmatmul.bf16.gmra.mxu0 %v2318
        %v4230 = vpop.f32.mrf.mxu0
        %v4231 = vadd.f32 %v4182, %v4230
        %v4232 = vpop.f32.mrf.mxu0
        %v4233 = vadd.f32 %v4184, %v4232
        %4234 = vmatmul.bf16.gmra.mxu0 %v2336
        %v4235 = vpop.f32.mrf.mxu0
        %v4236 = vadd.f32 %v4187, %v4235
        %v4237 = vpop.f32.mrf.mxu0
        %v4238 = vadd.f32 %v4189, %v4237
        %4239 = vmatmul.bf16.gmra.mxu0 %v2354
        %v4240 = vpop.f32.mrf.mxu0
        %v4241 = vadd.f32 %v4192, %v4240
        %v4242 = vpop.f32.mrf.mxu0
        %v4243 = vadd.f32 %v4194, %v4242
        %4244 = vdwg.mxu0
        %4245 = vmatpush.bf16.msra.mxu0 %v3485
        %4246 = vmatpush.bf16.msra.mxu0 %v3483
        %4247 = vmatpush.bf16.msra.mxu0 %v3481
        %4248 = vmatpush.bf16.msra.mxu0 %v3479
        %4249 = vmatpush.bf16.msra.mxu0 %v3477
        %4250 = vmatpush.bf16.msra.mxu0 %v3475
        %4251 = vmatpush.bf16.msra.mxu0 %v3473
        %4252 = vmatpush.bf16.msra.mxu0 %v3471
        %4253 = vmatmul.bf16.gmra.mxu0 %v2229
        %v4254 = vpop.f32.mrf.mxu0
        %v4255 = vadd.f32 %v4206, %v4254
        %v4256 = vpop.f32.mrf.mxu0
        %v4257 = vadd.f32 %v4208, %v4256
        %4258 = vmatmul.bf16.gmra.mxu0 %v2247
        %v4259 = vpop.f32.mrf.mxu0
        %v4260 = vadd.f32 %v4211, %v4259
        %v4261 = vpop.f32.mrf.mxu0
        %v4262 = vadd.f32 %v4213, %v4261
        %4263 = vmatmul.bf16.gmra.mxu0 %v2265
        %v4264 = vpop.f32.mrf.mxu0
        %v4265 = vadd.f32 %v4216, %v4264
        %v4266 = vpop.f32.mrf.mxu0
        %v4267 = vadd.f32 %v4218, %v4266
        %4268 = vmatmul.bf16.gmra.mxu0 %v2283
        %v4269 = vpop.f32.mrf.mxu0
        %v4270 = vadd.f32 %v4221, %v4269
        %v4271 = vpop.f32.mrf.mxu0
        %v4272 = vadd.f32 %v4223, %v4271
        %4273 = vmatmul.bf16.gmra.mxu0 %v2301
        %v4274 = vpop.f32.mrf.mxu0
        %v4275 = vadd.f32 %v4226, %v4274
        %v4276 = vpop.f32.mrf.mxu0
        %v4277 = vadd.f32 %v4228, %v4276
        %4278 = vmatmul.bf16.gmra.mxu0 %v2319
        %v4279 = vpop.f32.mrf.mxu0
        %v4280 = vadd.f32 %v4231, %v4279
        %v4281 = vpop.f32.mrf.mxu0
        %v4282 = vadd.f32 %v4233, %v4281
        %4283 = vmatmul.bf16.gmra.mxu0 %v2337
        %v4284 = vpop.f32.mrf.mxu0
        %v4285 = vadd.f32 %v4236, %v4284
        %v4286 = vpop.f32.mrf.mxu0
        %v4287 = vadd.f32 %v4238, %v4286
        %4288 = vmatmul.bf16.gmra.mxu0 %v2355
        %v4289 = vpop.f32.mrf.mxu0
        %v4290 = vadd.f32 %v4241, %v4289
        %v4291 = vpop.f32.mrf.mxu0
        %v4292 = vadd.f32 %v4243, %v4291
        %4293 = vdwg.mxu0
        %4294 = vmatpush.bf16.msra.mxu0 %v3501
        %4295 = vmatpush.bf16.msra.mxu0 %v3499
        %4296 = vmatpush.bf16.msra.mxu0 %v3497
        %4297 = vmatpush.bf16.msra.mxu0 %v3495
        %4298 = vmatpush.bf16.msra.mxu0 %v3493
        %4299 = vmatpush.bf16.msra.mxu0 %v3491
        %4300 = vmatpush.bf16.msra.mxu0 %v3489
        %4301 = vmatpush.bf16.msra.mxu0 %v3487
        %4302 = vmatmul.bf16.gmra.mxu0 %v2230
        %v4303 = vpop.f32.mrf.mxu0
        %v4304 = vadd.f32 %v4255, %v4303
        %v4305 = vpop.f32.mrf.mxu0
        %v4306 = vadd.f32 %v4257, %v4305
        %4307 = vmatmul.bf16.gmra.mxu0 %v2248
        %v4308 = vpop.f32.mrf.mxu0
        %v4309 = vadd.f32 %v4260, %v4308
        %v4310 = vpop.f32.mrf.mxu0
        %v4311 = vadd.f32 %v4262, %v4310
        %4312 = vmatmul.bf16.gmra.mxu0 %v2266
        %v4313 = vpop.f32.mrf.mxu0
        %v4314 = vadd.f32 %v4265, %v4313
        %v4315 = vpop.f32.mrf.mxu0
        %v4316 = vadd.f32 %v4267, %v4315
        %4317 = vmatmul.bf16.gmra.mxu0 %v2284
        %v4318 = vpop.f32.mrf.mxu0
        %v4319 = vadd.f32 %v4270, %v4318
        %v4320 = vpop.f32.mrf.mxu0
        %v4321 = vadd.f32 %v4272, %v4320
        %4322 = vmatmul.bf16.gmra.mxu0 %v2302
        %v4323 = vpop.f32.mrf.mxu0
        %v4324 = vadd.f32 %v4275, %v4323
        %v4325 = vpop.f32.mrf.mxu0
        %v4326 = vadd.f32 %v4277, %v4325
        %4327 = vmatmul.bf16.gmra.mxu0 %v2320
        %v4328 = vpop.f32.mrf.mxu0
        %v4329 = vadd.f32 %v4280, %v4328
        %v4330 = vpop.f32.mrf.mxu0
        %v4331 = vadd.f32 %v4282, %v4330
        %4332 = vmatmul.bf16.gmra.mxu0 %v2338
        %v4333 = vpop.f32.mrf.mxu0
        %v4334 = vadd.f32 %v4285, %v4333
        %v4335 = vpop.f32.mrf.mxu0
        %v4336 = vadd.f32 %v4287, %v4335
        %4337 = vmatmul.bf16.gmra.mxu0 %v2356
        %v4338 = vpop.f32.mrf.mxu0
        %v4339 = vadd.f32 %v4290, %v4338
        %v4340 = vpop.f32.mrf.mxu0
        %v4341 = vadd.f32 %v4292, %v4340
        %4342 = vdwg.mxu0
        %4343 = vmatpush.bf16.msra.mxu0 %v3517
        %4344 = vmatpush.bf16.msra.mxu0 %v3515
        %4345 = vmatpush.bf16.msra.mxu0 %v3513
        %4346 = vmatpush.bf16.msra.mxu0 %v3511
        %4347 = vmatpush.bf16.msra.mxu0 %v3509
        %4348 = vmatpush.bf16.msra.mxu0 %v3507
        %4349 = vmatpush.bf16.msra.mxu0 %v3505
        %4350 = vmatpush.bf16.msra.mxu0 %v3503
        %4351 = vmatmul.bf16.gmra.mxu0 %v2231
        %v4352 = vpop.f32.mrf.mxu0
        %v4353 = vadd.f32 %v4304, %v4352
        %v4354 = vpop.f32.mrf.mxu0
        %v4355 = vadd.f32 %v4306, %v4354
        %4356 = vmatmul.bf16.gmra.mxu0 %v2249
        %v4357 = vpop.f32.mrf.mxu0
        %v4358 = vadd.f32 %v4309, %v4357
        %v4359 = vpop.f32.mrf.mxu0
        %v4360 = vadd.f32 %v4311, %v4359
        %4361 = vmatmul.bf16.gmra.mxu0 %v2267
        %v4362 = vpop.f32.mrf.mxu0
        %v4363 = vadd.f32 %v4314, %v4362
        %v4364 = vpop.f32.mrf.mxu0
        %v4365 = vadd.f32 %v4316, %v4364
        %4366 = vmatmul.bf16.gmra.mxu0 %v2285
        %v4367 = vpop.f32.mrf.mxu0
        %v4368 = vadd.f32 %v4319, %v4367
        %v4369 = vpop.f32.mrf.mxu0
        %v4370 = vadd.f32 %v4321, %v4369
        %4371 = vmatmul.bf16.gmra.mxu0 %v2303
        %v4372 = vpop.f32.mrf.mxu0
        %v4373 = vadd.f32 %v4324, %v4372
        %v4374 = vpop.f32.mrf.mxu0
        %v4375 = vadd.f32 %v4326, %v4374
        %4376 = vmatmul.bf16.gmra.mxu0 %v2321
        %v4377 = vpop.f32.mrf.mxu0
        %v4378 = vadd.f32 %v4329, %v4377
        %v4379 = vpop.f32.mrf.mxu0
        %v4380 = vadd.f32 %v4331, %v4379
        %4381 = vmatmul.bf16.gmra.mxu0 %v2339
        %v4382 = vpop.f32.mrf.mxu0
        %v4383 = vadd.f32 %v4334, %v4382
        %v4384 = vpop.f32.mrf.mxu0
        %v4385 = vadd.f32 %v4336, %v4384
        %4386 = vmatmul.bf16.gmra.mxu0 %v2357
        %v4387 = vpop.f32.mrf.mxu0
        %v4388 = vadd.f32 %v4339, %v4387
        %v4389 = vpop.f32.mrf.mxu0
        %v4390 = vadd.f32 %v4341, %v4389
        %4391 = vdwg.mxu0
        %4392 = vmatpush.bf16.msra.mxu0 %v3533
        %4393 = vmatpush.bf16.msra.mxu0 %v3531
        %4394 = vmatpush.bf16.msra.mxu0 %v3529
        %4395 = vmatpush.bf16.msra.mxu0 %v3527
        %4396 = vmatpush.bf16.msra.mxu0 %v3525
        %4397 = vmatpush.bf16.msra.mxu0 %v3523
        %4398 = vmatpush.bf16.msra.mxu0 %v3521
        %4399 = vmatpush.bf16.msra.mxu0 %v3519
        %4400 = vmatmul.bf16.gmra.mxu0 %v2232
        %v4401 = vpop.f32.mrf.mxu0
        %v4402 = vadd.f32 %v4353, %v4401
        %v4403 = vpop.f32.mrf.mxu0
        %v4404 = vadd.f32 %v4355, %v4403
        %4405 = vmatmul.bf16.gmra.mxu0 %v2250
        %v4406 = vpop.f32.mrf.mxu0
        %v4407 = vadd.f32 %v4358, %v4406
        %v4408 = vpop.f32.mrf.mxu0
        %v4409 = vadd.f32 %v4360, %v4408
        %4410 = vmatmul.bf16.gmra.mxu0 %v2268
        %v4411 = vpop.f32.mrf.mxu0
        %v4412 = vadd.f32 %v4363, %v4411
        %v4413 = vpop.f32.mrf.mxu0
        %v4414 = vadd.f32 %v4365, %v4413
        %4415 = vmatmul.bf16.gmra.mxu0 %v2286
        %v4416 = vpop.f32.mrf.mxu0
        %v4417 = vadd.f32 %v4368, %v4416
        %v4418 = vpop.f32.mrf.mxu0
        %v4419 = vadd.f32 %v4370, %v4418
        %4420 = vmatmul.bf16.gmra.mxu0 %v2304
        %v4421 = vpop.f32.mrf.mxu0
        %v4422 = vadd.f32 %v4373, %v4421
        %v4423 = vpop.f32.mrf.mxu0
        %v4424 = vadd.f32 %v4375, %v4423
        %4425 = vmatmul.bf16.gmra.mxu0 %v2322
        %v4426 = vpop.f32.mrf.mxu0
        %v4427 = vadd.f32 %v4378, %v4426
        %v4428 = vpop.f32.mrf.mxu0
        %v4429 = vadd.f32 %v4380, %v4428
        %4430 = vmatmul.bf16.gmra.mxu0 %v2340
        %v4431 = vpop.f32.mrf.mxu0
        %v4432 = vadd.f32 %v4383, %v4431
        %v4433 = vpop.f32.mrf.mxu0
        %v4434 = vadd.f32 %v4385, %v4433
        %4435 = vmatmul.bf16.gmra.mxu0 %v2358
        %v4436 = vpop.f32.mrf.mxu0
        %v4437 = vadd.f32 %v4388, %v4436
        %v4438 = vpop.f32.mrf.mxu0
        %v4439 = vadd.f32 %v4390, %v4438
        %4440 = vdwg.mxu0
        %4441 = vmatpush.bf16.msra.mxu0 %v3549
        %4442 = vmatpush.bf16.msra.mxu0 %v3547
        %4443 = vmatpush.bf16.msra.mxu0 %v3545
        %4444 = vmatpush.bf16.msra.mxu0 %v3543
        %4445 = vmatpush.bf16.msra.mxu0 %v3541
        %4446 = vmatpush.bf16.msra.mxu0 %v3539
        %4447 = vmatpush.bf16.msra.mxu0 %v3537
        %4448 = vmatpush.bf16.msra.mxu0 %v3535
        %4449 = vmatmul.bf16.gmra.mxu0 %v2233
        %v4450 = vpop.f32.mrf.mxu0
        %v4451 = vadd.f32 %v4402, %v4450
        %v4452 = vpop.f32.mrf.mxu0
        %v4453 = vadd.f32 %v4404, %v4452
        %4454 = vmatmul.bf16.gmra.mxu0 %v2251
        %v4455 = vpop.f32.mrf.mxu0
        %v4456 = vadd.f32 %v4407, %v4455
        %v4457 = vpop.f32.mrf.mxu0
        %v4458 = vadd.f32 %v4409, %v4457
        %4459 = vmatmul.bf16.gmra.mxu0 %v2269
        %v4460 = vpop.f32.mrf.mxu0
        %v4461 = vadd.f32 %v4412, %v4460
        %v4462 = vpop.f32.mrf.mxu0
        %v4463 = vadd.f32 %v4414, %v4462
        %4464 = vmatmul.bf16.gmra.mxu0 %v2287
        %v4465 = vpop.f32.mrf.mxu0
        %v4466 = vadd.f32 %v4417, %v4465
        %v4467 = vpop.f32.mrf.mxu0
        %v4468 = vadd.f32 %v4419, %v4467
        %4469 = vmatmul.bf16.gmra.mxu0 %v2305
        %v4470 = vpop.f32.mrf.mxu0
        %v4471 = vadd.f32 %v4422, %v4470
        %v4472 = vpop.f32.mrf.mxu0
        %v4473 = vadd.f32 %v4424, %v4472
        %4474 = vmatmul.bf16.gmra.mxu0 %v2323
        %v4475 = vpop.f32.mrf.mxu0
        %v4476 = vadd.f32 %v4427, %v4475
        %v4477 = vpop.f32.mrf.mxu0
        %v4478 = vadd.f32 %v4429, %v4477
        %4479 = vmatmul.bf16.gmra.mxu0 %v2341
        %v4480 = vpop.f32.mrf.mxu0
        %v4481 = vadd.f32 %v4432, %v4480
        %v4482 = vpop.f32.mrf.mxu0
        %v4483 = vadd.f32 %v4434, %v4482
        %4484 = vmatmul.bf16.gmra.mxu0 %v2359
        %v4485 = vpop.f32.mrf.mxu0
        %v4486 = vadd.f32 %v4437, %v4485
        %v4487 = vpop.f32.mrf.mxu0
        %v4488 = vadd.f32 %v4439, %v4487
        %4489 = vdwg.mxu0
        %4490 = vmatpush.bf16.msra.mxu0 %v3565
        %4491 = vmatpush.bf16.msra.mxu0 %v3563
        %4492 = vmatpush.bf16.msra.mxu0 %v3561
        %4493 = vmatpush.bf16.msra.mxu0 %v3559
        %4494 = vmatpush.bf16.msra.mxu0 %v3557
        %4495 = vmatpush.bf16.msra.mxu0 %v3555
        %4496 = vmatpush.bf16.msra.mxu0 %v3553
        %4497 = vmatpush.bf16.msra.mxu0 %v3551
        %4498 = vmatmul.bf16.gmra.mxu0 %v2234
        %v4499 = vpop.f32.mrf.mxu0
        %v4500 = vadd.f32 %v4451, %v4499
        %v4501 = vpop.f32.mrf.mxu0
        %v4502 = vadd.f32 %v4453, %v4501
        %4503 = vmatmul.bf16.gmra.mxu0 %v2252
        %v4504 = vpop.f32.mrf.mxu0
        %v4505 = vadd.f32 %v4456, %v4504
        %v4506 = vpop.f32.mrf.mxu0
        %v4507 = vadd.f32 %v4458, %v4506
        %4508 = vmatmul.bf16.gmra.mxu0 %v2270
        %v4509 = vpop.f32.mrf.mxu0
        %v4510 = vadd.f32 %v4461, %v4509
        %v4511 = vpop.f32.mrf.mxu0
        %v4512 = vadd.f32 %v4463, %v4511
        %4513 = vmatmul.bf16.gmra.mxu0 %v2288
        %v4514 = vpop.f32.mrf.mxu0
        %v4515 = vadd.f32 %v4466, %v4514
        %v4516 = vpop.f32.mrf.mxu0
        %v4517 = vadd.f32 %v4468, %v4516
        %4518 = vmatmul.bf16.gmra.mxu0 %v2306
        %v4519 = vpop.f32.mrf.mxu0
        %v4520 = vadd.f32 %v4471, %v4519
        %v4521 = vpop.f32.mrf.mxu0
        %v4522 = vadd.f32 %v4473, %v4521
        %4523 = vmatmul.bf16.gmra.mxu0 %v2324
        %v4524 = vpop.f32.mrf.mxu0
        %v4525 = vadd.f32 %v4476, %v4524
        %v4526 = vpop.f32.mrf.mxu0
        %v4527 = vadd.f32 %v4478, %v4526
        %4528 = vmatmul.bf16.gmra.mxu0 %v2342
        %v4529 = vpop.f32.mrf.mxu0
        %v4530 = vadd.f32 %v4481, %v4529
        %v4531 = vpop.f32.mrf.mxu0
        %v4532 = vadd.f32 %v4483, %v4531
        %4533 = vmatmul.bf16.gmra.mxu0 %v2360
        %v4534 = vpop.f32.mrf.mxu0
        %v4535 = vadd.f32 %v4486, %v4534
        %v4536 = vpop.f32.mrf.mxu0
        %v4537 = vadd.f32 %v4488, %v4536
        %4538 = vdwg.mxu0
        %4539 = vmatpush.bf16.msra.mxu0 %v3581
        %4540 = vmatpush.bf16.msra.mxu0 %v3579
        %4541 = vmatpush.bf16.msra.mxu0 %v3577
        %4542 = vmatpush.bf16.msra.mxu0 %v3575
        %4543 = vmatpush.bf16.msra.mxu0 %v3573
        %4544 = vmatpush.bf16.msra.mxu0 %v3571
        %4545 = vmatpush.bf16.msra.mxu0 %v3569
        %4546 = vmatpush.bf16.msra.mxu0 %v3567
        %4547 = vmatmul.bf16.gmra.mxu0 %v2235
        %v4548 = vpop.f32.mrf.mxu0
        %v4549 = vadd.f32 %v4500, %v4548
        %v4550 = vpop.f32.mrf.mxu0
        %v4551 = vadd.f32 %v4502, %v4550
        %4552 = vmatmul.bf16.gmra.mxu0 %v2253
        %v4553 = vpop.f32.mrf.mxu0
        %v4554 = vadd.f32 %v4505, %v4553
        %v4555 = vpop.f32.mrf.mxu0
        %v4556 = vadd.f32 %v4507, %v4555
        %4557 = vmatmul.bf16.gmra.mxu0 %v2271
        %v4558 = vpop.f32.mrf.mxu0
        %v4559 = vadd.f32 %v4510, %v4558
        %v4560 = vpop.f32.mrf.mxu0
        %v4561 = vadd.f32 %v4512, %v4560
        %4562 = vmatmul.bf16.gmra.mxu0 %v2289
        %v4563 = vpop.f32.mrf.mxu0
        %v4564 = vadd.f32 %v4515, %v4563
        %v4565 = vpop.f32.mrf.mxu0
        %v4566 = vadd.f32 %v4517, %v4565
        %4567 = vmatmul.bf16.gmra.mxu0 %v2307
        %v4568 = vpop.f32.mrf.mxu0
        %v4569 = vadd.f32 %v4520, %v4568
        %v4570 = vpop.f32.mrf.mxu0
        %v4571 = vadd.f32 %v4522, %v4570
        %4572 = vmatmul.bf16.gmra.mxu0 %v2325
        %v4573 = vpop.f32.mrf.mxu0
        %v4574 = vadd.f32 %v4525, %v4573
        %v4575 = vpop.f32.mrf.mxu0
        %v4576 = vadd.f32 %v4527, %v4575
        %4577 = vmatmul.bf16.gmra.mxu0 %v2343
        %v4578 = vpop.f32.mrf.mxu0
        %v4579 = vadd.f32 %v4530, %v4578
        %v4580 = vpop.f32.mrf.mxu0
        %v4581 = vadd.f32 %v4532, %v4580
        %4582 = vmatmul.bf16.gmra.mxu0 %v2361
        %v4583 = vpop.f32.mrf.mxu0
        %v4584 = vadd.f32 %v4535, %v4583
        %v4585 = vpop.f32.mrf.mxu0
        %v4586 = vadd.f32 %v4537, %v4585
        %4587 = vdwg.mxu0
        %4588 = vmatpush.bf16.msra.mxu0 %v3597
        %4589 = vmatpush.bf16.msra.mxu0 %v3595
        %4590 = vmatpush.bf16.msra.mxu0 %v3593
        %4591 = vmatpush.bf16.msra.mxu0 %v3591
        %4592 = vmatpush.bf16.msra.mxu0 %v3589
        %4593 = vmatpush.bf16.msra.mxu0 %v3587
        %4594 = vmatpush.bf16.msra.mxu0 %v3585
        %4595 = vmatpush.bf16.msra.mxu0 %v3583
        %4596 = vmatmul.bf16.gmra.mxu0 %v2236
        %v4597 = vpop.f32.mrf.mxu0
        %v4598 = vadd.f32 %v4549, %v4597
        %v4599 = vpop.f32.mrf.mxu0
        %v4600 = vadd.f32 %v4551, %v4599
        %4601 = vmatmul.bf16.gmra.mxu0 %v2254
        %v4602 = vpop.f32.mrf.mxu0
        %v4603 = vadd.f32 %v4554, %v4602
        %v4604 = vpop.f32.mrf.mxu0
        %v4605 = vadd.f32 %v4556, %v4604
        %4606 = vmatmul.bf16.gmra.mxu0 %v2272
        %v4607 = vpop.f32.mrf.mxu0
        %v4608 = vadd.f32 %v4559, %v4607
        %v4609 = vpop.f32.mrf.mxu0
        %v4610 = vadd.f32 %v4561, %v4609
        %4611 = vmatmul.bf16.gmra.mxu0 %v2290
        %v4612 = vpop.f32.mrf.mxu0
        %v4613 = vadd.f32 %v4564, %v4612
        %v4614 = vpop.f32.mrf.mxu0
        %v4615 = vadd.f32 %v4566, %v4614
        %4616 = vmatmul.bf16.gmra.mxu0 %v2308
        %v4617 = vpop.f32.mrf.mxu0
        %v4618 = vadd.f32 %v4569, %v4617
        %v4619 = vpop.f32.mrf.mxu0
        %v4620 = vadd.f32 %v4571, %v4619
        %4621 = vmatmul.bf16.gmra.mxu0 %v2326
        %v4622 = vpop.f32.mrf.mxu0
        %v4623 = vadd.f32 %v4574, %v4622
        %v4624 = vpop.f32.mrf.mxu0
        %v4625 = vadd.f32 %v4576, %v4624
        %4626 = vmatmul.bf16.gmra.mxu0 %v2344
        %v4627 = vpop.f32.mrf.mxu0
        %v4628 = vadd.f32 %v4579, %v4627
        %v4629 = vpop.f32.mrf.mxu0
        %v4630 = vadd.f32 %v4581, %v4629
        %4631 = vmatmul.bf16.gmra.mxu0 %v2362
        %v4632 = vpop.f32.mrf.mxu0
        %v4633 = vadd.f32 %v4584, %v4632
        %v4634 = vpop.f32.mrf.mxu0
        %v4635 = vadd.f32 %v4586, %v4634
        %4636 = vdwg.mxu0
        %4637 = vmatpush.bf16.msra.mxu0 %v3613
        %4638 = vmatpush.bf16.msra.mxu0 %v3611
        %4639 = vmatpush.bf16.msra.mxu0 %v3609
        %4640 = vmatpush.bf16.msra.mxu0 %v3607
        %4641 = vmatpush.bf16.msra.mxu0 %v3605
        %4642 = vmatpush.bf16.msra.mxu0 %v3603
        %4643 = vmatpush.bf16.msra.mxu0 %v3601
        %4644 = vmatpush.bf16.msra.mxu0 %v3599
        %4645 = vmatmul.bf16.gmra.mxu0 %v2237
        %v4646 = vpop.f32.mrf.mxu0
        %v4647 = vadd.f32 %v4598, %v4646
        %v4648 = vpop.f32.mrf.mxu0
        %v4649 = vadd.f32 %v4600, %v4648
        %4650 = vmatmul.bf16.gmra.mxu0 %v2255
        %v4651 = vpop.f32.mrf.mxu0
        %v4652 = vadd.f32 %v4603, %v4651
        %v4653 = vpop.f32.mrf.mxu0
        %v4654 = vadd.f32 %v4605, %v4653
        %4655 = vmatmul.bf16.gmra.mxu0 %v2273
        %v4656 = vpop.f32.mrf.mxu0
        %v4657 = vadd.f32 %v4608, %v4656
        %v4658 = vpop.f32.mrf.mxu0
        %v4659 = vadd.f32 %v4610, %v4658
        %4660 = vmatmul.bf16.gmra.mxu0 %v2291
        %v4661 = vpop.f32.mrf.mxu0
        %v4662 = vadd.f32 %v4613, %v4661
        %v4663 = vpop.f32.mrf.mxu0
        %v4664 = vadd.f32 %v4615, %v4663
        %4665 = vmatmul.bf16.gmra.mxu0 %v2309
        %v4666 = vpop.f32.mrf.mxu0
        %v4667 = vadd.f32 %v4618, %v4666
        %v4668 = vpop.f32.mrf.mxu0
        %v4669 = vadd.f32 %v4620, %v4668
        %4670 = vmatmul.bf16.gmra.mxu0 %v2327
        %v4671 = vpop.f32.mrf.mxu0
        %v4672 = vadd.f32 %v4623, %v4671
        %v4673 = vpop.f32.mrf.mxu0
        %v4674 = vadd.f32 %v4625, %v4673
        %4675 = vmatmul.bf16.gmra.mxu0 %v2345
        %v4676 = vpop.f32.mrf.mxu0
        %v4677 = vadd.f32 %v4628, %v4676
        %v4678 = vpop.f32.mrf.mxu0
        %v4679 = vadd.f32 %v4630, %v4678
        %4680 = vmatmul.bf16.gmra.mxu0 %v2363
        %v4681 = vpop.f32.mrf.mxu0
        %v4682 = vadd.f32 %v4633, %v4681
        %v4683 = vpop.f32.mrf.mxu0
        %v4684 = vadd.f32 %v4635, %v4683
        %4685 = vdwg.mxu0
        %4686 = vmatpush.bf16.msra.mxu0 %v3629
        %4687 = vmatpush.bf16.msra.mxu0 %v3627
        %4688 = vmatpush.bf16.msra.mxu0 %v3625
        %4689 = vmatpush.bf16.msra.mxu0 %v3623
        %4690 = vmatpush.bf16.msra.mxu0 %v3621
        %4691 = vmatpush.bf16.msra.mxu0 %v3619
        %4692 = vmatpush.bf16.msra.mxu0 %v3617
        %4693 = vmatpush.bf16.msra.mxu0 %v3615
        %4694 = vmatmul.bf16.gmra.mxu0 %v2238
        %v4695 = vpop.f32.mrf.mxu0
        %v4696 = vadd.f32 %v4647, %v4695
        %v4697 = vpop.f32.mrf.mxu0
        %v4698 = vadd.f32 %v4649, %v4697
        %4699 = vmatmul.bf16.gmra.mxu0 %v2256
        %v4700 = vpop.f32.mrf.mxu0
        %v4701 = vadd.f32 %v4652, %v4700
        %v4702 = vpop.f32.mrf.mxu0
        %v4703 = vadd.f32 %v4654, %v4702
        %4704 = vmatmul.bf16.gmra.mxu0 %v2274
        %v4705 = vpop.f32.mrf.mxu0
        %v4706 = vadd.f32 %v4657, %v4705
        %v4707 = vpop.f32.mrf.mxu0
        %v4708 = vadd.f32 %v4659, %v4707
        %4709 = vmatmul.bf16.gmra.mxu0 %v2292
        %v4710 = vpop.f32.mrf.mxu0
        %v4711 = vadd.f32 %v4662, %v4710
        %v4712 = vpop.f32.mrf.mxu0
        %v4713 = vadd.f32 %v4664, %v4712
        %4714 = vmatmul.bf16.gmra.mxu0 %v2310
        %v4715 = vpop.f32.mrf.mxu0
        %v4716 = vadd.f32 %v4667, %v4715
        %v4717 = vpop.f32.mrf.mxu0
        %v4718 = vadd.f32 %v4669, %v4717
        %4719 = vmatmul.bf16.gmra.mxu0 %v2328
        %v4720 = vpop.f32.mrf.mxu0
        %v4721 = vadd.f32 %v4672, %v4720
        %v4722 = vpop.f32.mrf.mxu0
        %v4723 = vadd.f32 %v4674, %v4722
        %4724 = vmatmul.bf16.gmra.mxu0 %v2346
        %v4725 = vpop.f32.mrf.mxu0
        %v4726 = vadd.f32 %v4677, %v4725
        %v4727 = vpop.f32.mrf.mxu0
        %v4728 = vadd.f32 %v4679, %v4727
        %4729 = vmatmul.bf16.gmra.mxu0 %v2364
        %v4730 = vpop.f32.mrf.mxu0
        %v4731 = vadd.f32 %v4682, %v4730
        %v4732 = vpop.f32.mrf.mxu0
        %v4733 = vadd.f32 %v4684, %v4732
        %4734 = vdwg.mxu0
        %4735 = vmatpush.bf16.msra.mxu0 %v3645
        %4736 = vmatpush.bf16.msra.mxu0 %v3643
        %4737 = vmatpush.bf16.msra.mxu0 %v3641
        %4738 = vmatpush.bf16.msra.mxu0 %v3639
        %4739 = vmatpush.bf16.msra.mxu0 %v3637
        %4740 = vmatpush.bf16.msra.mxu0 %v3635
        %4741 = vmatpush.bf16.msra.mxu0 %v3633
        %4742 = vmatpush.bf16.msra.mxu0 %v3631
        %4743 = vmatmul.bf16.gmra.mxu0 %v2239
        %v4744 = vpop.f32.mrf.mxu0
        %v4745 = vadd.f32 %v4696, %v4744
        %v4746 = vpop.f32.mrf.mxu0
        %v4747 = vadd.f32 %v4698, %v4746
        %4748 = vmatmul.bf16.gmra.mxu0 %v2257
        %v4749 = vpop.f32.mrf.mxu0
        %v4750 = vadd.f32 %v4701, %v4749
        %v4751 = vpop.f32.mrf.mxu0
        %v4752 = vadd.f32 %v4703, %v4751
        %4753 = vmatmul.bf16.gmra.mxu0 %v2275
        %v4754 = vpop.f32.mrf.mxu0
        %v4755 = vadd.f32 %v4706, %v4754
        %v4756 = vpop.f32.mrf.mxu0
        %v4757 = vadd.f32 %v4708, %v4756
        %4758 = vmatmul.bf16.gmra.mxu0 %v2293
        %v4759 = vpop.f32.mrf.mxu0
        %v4760 = vadd.f32 %v4711, %v4759
        %v4761 = vpop.f32.mrf.mxu0
        %v4762 = vadd.f32 %v4713, %v4761
        %4763 = vmatmul.bf16.gmra.mxu0 %v2311
        %v4764 = vpop.f32.mrf.mxu0
        %v4765 = vadd.f32 %v4716, %v4764
        %v4766 = vpop.f32.mrf.mxu0
        %v4767 = vadd.f32 %v4718, %v4766
        %4768 = vmatmul.bf16.gmra.mxu0 %v2329
        %v4769 = vpop.f32.mrf.mxu0
        %v4770 = vadd.f32 %v4721, %v4769
        %v4771 = vpop.f32.mrf.mxu0
        %v4772 = vadd.f32 %v4723, %v4771
        %4773 = vmatmul.bf16.gmra.mxu0 %v2347
        %v4774 = vpop.f32.mrf.mxu0
        %v4775 = vadd.f32 %v4726, %v4774
        %v4776 = vpop.f32.mrf.mxu0
        %v4777 = vadd.f32 %v4728, %v4776
        %4778 = vmatmul.bf16.gmra.mxu0 %v2365
        %v4779 = vpop.f32.mrf.mxu0
        %v4780 = vadd.f32 %v4731, %v4779
        %v4781 = vpop.f32.mrf.mxu0
        %v4782 = vadd.f32 %v4733, %v4781
        %4783 = vdwg.mxu0
        %4784 = vmatpush.bf16.msra.mxu0 %v3661
        %4785 = vmatpush.bf16.msra.mxu0 %v3659
        %4786 = vmatpush.bf16.msra.mxu0 %v3657
        %4787 = vmatpush.bf16.msra.mxu0 %v3655
        %4788 = vmatpush.bf16.msra.mxu0 %v3653
        %4789 = vmatpush.bf16.msra.mxu0 %v3651
        %4790 = vmatpush.bf16.msra.mxu0 %v3649
        %4791 = vmatpush.bf16.msra.mxu0 %v3647
        %4792 = vmatmul.bf16.gmra.mxu0 %v2240
        %v4793 = vpop.f32.mrf.mxu0
        %v4794 = vadd.f32 %v4745, %v4793
        %v4795 = vpop.f32.mrf.mxu0
        %v4796 = vadd.f32 %v4747, %v4795
        %4797 = vmatmul.bf16.gmra.mxu0 %v2258
        %v4798 = vpop.f32.mrf.mxu0
        %v4799 = vadd.f32 %v4750, %v4798
        %v4800 = vpop.f32.mrf.mxu0
        %v4801 = vadd.f32 %v4752, %v4800
        %4802 = vmatmul.bf16.gmra.mxu0 %v2276
        %v4803 = vpop.f32.mrf.mxu0
        %v4804 = vadd.f32 %v4755, %v4803
        %v4805 = vpop.f32.mrf.mxu0
        %v4806 = vadd.f32 %v4757, %v4805
        %4807 = vmatmul.bf16.gmra.mxu0 %v2294
        %v4808 = vpop.f32.mrf.mxu0
        %v4809 = vadd.f32 %v4760, %v4808
        %v4810 = vpop.f32.mrf.mxu0
        %v4811 = vadd.f32 %v4762, %v4810
        %4812 = vmatmul.bf16.gmra.mxu0 %v2312
        %v4813 = vpop.f32.mrf.mxu0
        %v4814 = vadd.f32 %v4765, %v4813
        %v4815 = vpop.f32.mrf.mxu0
        %v4816 = vadd.f32 %v4767, %v4815
        %4817 = vmatmul.bf16.gmra.mxu0 %v2330
        %v4818 = vpop.f32.mrf.mxu0
        %v4819 = vadd.f32 %v4770, %v4818
        %v4820 = vpop.f32.mrf.mxu0
        %v4821 = vadd.f32 %v4772, %v4820
        %4822 = vmatmul.bf16.gmra.mxu0 %v2348
        %v4823 = vpop.f32.mrf.mxu0
        %v4824 = vadd.f32 %v4775, %v4823
        %v4825 = vpop.f32.mrf.mxu0
        %v4826 = vadd.f32 %v4777, %v4825
        %4827 = vmatmul.bf16.gmra.mxu0 %v2366
        %v4828 = vpop.f32.mrf.mxu0
        %v4829 = vadd.f32 %v4780, %v4828
        %v4830 = vpop.f32.mrf.mxu0
        %v4831 = vadd.f32 %v4782, %v4830
        %4832 = vdwg.mxu0
        %4833 = vmatpush.bf16.msra.mxu0 %v3390
        %4834 = vmatpush.bf16.msra.mxu0 %v3388
        %4835 = vmatpush.bf16.msra.mxu0 %v3386
        %4836 = vmatpush.bf16.msra.mxu0 %v3384
        %4837 = vmatpush.bf16.msra.mxu0 %v3382
        %4838 = vmatpush.bf16.msra.mxu0 %v3380
        %4839 = vmatpush.bf16.msra.mxu0 %v3378
        %4840 = vmatpush.bf16.msra.mxu0 %v3376
        %4841 = vmatmul.bf16.gmra.mxu0 %v2223
        %v4842 = vpop.f32.mrf.mxu0
        %v4843 = vadd.f32 %v1788, %v4842
        %v4844 = vpop.f32.mrf.mxu0
        %v4845 = vadd.f32 %v1788, %v4844
        %4846 = vmatmul.bf16.gmra.mxu0 %v2241
        %v4847 = vpop.f32.mrf.mxu0
        %v4848 = vadd.f32 %v1788, %v4847
        %v4849 = vpop.f32.mrf.mxu0
        %v4850 = vadd.f32 %v1788, %v4849
        %4851 = vmatmul.bf16.gmra.mxu0 %v2259
        %v4852 = vpop.f32.mrf.mxu0
        %v4853 = vadd.f32 %v1788, %v4852
        %v4854 = vpop.f32.mrf.mxu0
        %v4855 = vadd.f32 %v1788, %v4854
        %4856 = vmatmul.bf16.gmra.mxu0 %v2277
        %v4857 = vpop.f32.mrf.mxu0
        %v4858 = vadd.f32 %v1788, %v4857
        %v4859 = vpop.f32.mrf.mxu0
        %v4860 = vadd.f32 %v1788, %v4859
        %4861 = vmatmul.bf16.gmra.mxu0 %v2295
        %v4862 = vpop.f32.mrf.mxu0
        %v4863 = vadd.f32 %v1788, %v4862
        %v4864 = vpop.f32.mrf.mxu0
        %v4865 = vadd.f32 %v1788, %v4864
        %4866 = vmatmul.bf16.gmra.mxu0 %v2313
        %v4867 = vpop.f32.mrf.mxu0
        %v4868 = vadd.f32 %v1788, %v4867
        %v4869 = vpop.f32.mrf.mxu0
        %v4870 = vadd.f32 %v1788, %v4869
        %4871 = vmatmul.bf16.gmra.mxu0 %v2331
        %v4872 = vpop.f32.mrf.mxu0
        %v4873 = vadd.f32 %v1788, %v4872
        %v4874 = vpop.f32.mrf.mxu0
        %v4875 = vadd.f32 %v1788, %v4874
        %4876 = vmatmul.bf16.gmra.mxu0 %v2349
        %v4877 = vpop.f32.mrf.mxu0
        %v4878 = vadd.f32 %v1788, %v4877
        %v4879 = vpop.f32.mrf.mxu0
        %v4880 = vadd.f32 %v1788, %v4879
        %4881 = vdwg.mxu0
        %4882 = vmatpush.bf16.msra.mxu0 %v3406
        %4883 = vmatpush.bf16.msra.mxu0 %v3404
        %4884 = vmatpush.bf16.msra.mxu0 %v3402
        %4885 = vmatpush.bf16.msra.mxu0 %v3400
        %4886 = vmatpush.bf16.msra.mxu0 %v3398
        %4887 = vmatpush.bf16.msra.mxu0 %v3396
        %4888 = vmatpush.bf16.msra.mxu0 %v3394
        %4889 = vmatpush.bf16.msra.mxu0 %v3392
        %4890 = vmatmul.bf16.gmra.mxu0 %v2224
        %v4891 = vpop.f32.mrf.mxu0
        %v4892 = vadd.f32 %v4843, %v4891
        %v4893 = vpop.f32.mrf.mxu0
        %v4894 = vadd.f32 %v4845, %v4893
        %4895 = vmatmul.bf16.gmra.mxu0 %v2242
        %v4896 = vpop.f32.mrf.mxu0
        %v4897 = vadd.f32 %v4848, %v4896
        %v4898 = vpop.f32.mrf.mxu0
        %v4899 = vadd.f32 %v4850, %v4898
        %4900 = vmatmul.bf16.gmra.mxu0 %v2260
        %v4901 = vpop.f32.mrf.mxu0
        %v4902 = vadd.f32 %v4853, %v4901
        %v4903 = vpop.f32.mrf.mxu0
        %v4904 = vadd.f32 %v4855, %v4903
        %4905 = vmatmul.bf16.gmra.mxu0 %v2278
        %v4906 = vpop.f32.mrf.mxu0
        %v4907 = vadd.f32 %v4858, %v4906
        %v4908 = vpop.f32.mrf.mxu0
        %v4909 = vadd.f32 %v4860, %v4908
        %4910 = vmatmul.bf16.gmra.mxu0 %v2296
        %v4911 = vpop.f32.mrf.mxu0
        %v4912 = vadd.f32 %v4863, %v4911
        %v4913 = vpop.f32.mrf.mxu0
        %v4914 = vadd.f32 %v4865, %v4913
        %4915 = vmatmul.bf16.gmra.mxu0 %v2314
        %v4916 = vpop.f32.mrf.mxu0
        %v4917 = vadd.f32 %v4868, %v4916
        %v4918 = vpop.f32.mrf.mxu0
        %v4919 = vadd.f32 %v4870, %v4918
        %4920 = vmatmul.bf16.gmra.mxu0 %v2332
        %v4921 = vpop.f32.mrf.mxu0
        %v4922 = vadd.f32 %v4873, %v4921
        %v4923 = vpop.f32.mrf.mxu0
        %v4924 = vadd.f32 %v4875, %v4923
        %4925 = vmatmul.bf16.gmra.mxu0 %v2350
        %v4926 = vpop.f32.mrf.mxu0
        %v4927 = vadd.f32 %v4878, %v4926
        %v4928 = vpop.f32.mrf.mxu0
        %v4929 = vadd.f32 %v4880, %v4928
        %4930 = vdwg.mxu0
        %4931 = vmatpush.bf16.msra.mxu0 %v3422
        %4932 = vmatpush.bf16.msra.mxu0 %v3420
        %4933 = vmatpush.bf16.msra.mxu0 %v3418
        %4934 = vmatpush.bf16.msra.mxu0 %v3416
        %4935 = vmatpush.bf16.msra.mxu0 %v3414
        %4936 = vmatpush.bf16.msra.mxu0 %v3412
        %4937 = vmatpush.bf16.msra.mxu0 %v3410
        %4938 = vmatpush.bf16.msra.mxu0 %v3408
        %4939 = vmatmul.bf16.gmra.mxu0 %v2225
        %v4940 = vpop.f32.mrf.mxu0
        %v4941 = vadd.f32 %v4892, %v4940
        %v4942 = vpop.f32.mrf.mxu0
        %v4943 = vadd.f32 %v4894, %v4942
        %4944 = vmatmul.bf16.gmra.mxu0 %v2243
        %v4945 = vpop.f32.mrf.mxu0
        %v4946 = vadd.f32 %v4897, %v4945
        %v4947 = vpop.f32.mrf.mxu0
        %v4948 = vadd.f32 %v4899, %v4947
        %4949 = vmatmul.bf16.gmra.mxu0 %v2261
        %v4950 = vpop.f32.mrf.mxu0
        %v4951 = vadd.f32 %v4902, %v4950
        %v4952 = vpop.f32.mrf.mxu0
        %v4953 = vadd.f32 %v4904, %v4952
        %4954 = vmatmul.bf16.gmra.mxu0 %v2279
        %v4955 = vpop.f32.mrf.mxu0
        %v4956 = vadd.f32 %v4907, %v4955
        %v4957 = vpop.f32.mrf.mxu0
        %v4958 = vadd.f32 %v4909, %v4957
        %4959 = vmatmul.bf16.gmra.mxu0 %v2297
        %v4960 = vpop.f32.mrf.mxu0
        %v4961 = vadd.f32 %v4912, %v4960
        %v4962 = vpop.f32.mrf.mxu0
        %v4963 = vadd.f32 %v4914, %v4962
        %4964 = vmatmul.bf16.gmra.mxu0 %v2315
        %v4965 = vpop.f32.mrf.mxu0
        %v4966 = vadd.f32 %v4917, %v4965
        %v4967 = vpop.f32.mrf.mxu0
        %v4968 = vadd.f32 %v4919, %v4967
        %4969 = vmatmul.bf16.gmra.mxu0 %v2333
        %v4970 = vpop.f32.mrf.mxu0
        %v4971 = vadd.f32 %v4922, %v4970
        %v4972 = vpop.f32.mrf.mxu0
        %v4973 = vadd.f32 %v4924, %v4972
        %4974 = vmatmul.bf16.gmra.mxu0 %v2351
        %v4975 = vpop.f32.mrf.mxu0
        %v4976 = vadd.f32 %v4927, %v4975
        %v4977 = vpop.f32.mrf.mxu0
        %v4978 = vadd.f32 %v4929, %v4977
        %4979 = vdwg.mxu0
        %4980 = vmatpush.bf16.msra.mxu0 %v3438
        %4981 = vmatpush.bf16.msra.mxu0 %v3436
        %4982 = vmatpush.bf16.msra.mxu0 %v3434
        %4983 = vmatpush.bf16.msra.mxu0 %v3432
        %4984 = vmatpush.bf16.msra.mxu0 %v3430
        %4985 = vmatpush.bf16.msra.mxu0 %v3428
        %4986 = vmatpush.bf16.msra.mxu0 %v3426
        %4987 = vmatpush.bf16.msra.mxu0 %v3424
        %4988 = vmatmul.bf16.gmra.mxu0 %v2226
        %v4989 = vpop.f32.mrf.mxu0
        %v4990 = vadd.f32 %v4941, %v4989
        %v4991 = vpop.f32.mrf.mxu0
        %v4992 = vadd.f32 %v4943, %v4991
        %4993 = vmatmul.bf16.gmra.mxu0 %v2244
        %v4994 = vpop.f32.mrf.mxu0
        %v4995 = vadd.f32 %v4946, %v4994
        %v4996 = vpop.f32.mrf.mxu0
        %v4997 = vadd.f32 %v4948, %v4996
        %4998 = vmatmul.bf16.gmra.mxu0 %v2262
        %v4999 = vpop.f32.mrf.mxu0
        %v5000 = vadd.f32 %v4951, %v4999
        %v5001 = vpop.f32.mrf.mxu0
        %v5002 = vadd.f32 %v4953, %v5001
        %5003 = vmatmul.bf16.gmra.mxu0 %v2280
        %v5004 = vpop.f32.mrf.mxu0
        %v5005 = vadd.f32 %v4956, %v5004
        %v5006 = vpop.f32.mrf.mxu0
        %v5007 = vadd.f32 %v4958, %v5006
        %5008 = vmatmul.bf16.gmra.mxu0 %v2298
        %v5009 = vpop.f32.mrf.mxu0
        %v5010 = vadd.f32 %v4961, %v5009
        %v5011 = vpop.f32.mrf.mxu0
        %v5012 = vadd.f32 %v4963, %v5011
        %5013 = vmatmul.bf16.gmra.mxu0 %v2316
        %v5014 = vpop.f32.mrf.mxu0
        %v5015 = vadd.f32 %v4966, %v5014
        %v5016 = vpop.f32.mrf.mxu0
        %v5017 = vadd.f32 %v4968, %v5016
        %5018 = vmatmul.bf16.gmra.mxu0 %v2334
        %v5019 = vpop.f32.mrf.mxu0
        %v5020 = vadd.f32 %v4971, %v5019
        %v5021 = vpop.f32.mrf.mxu0
        %v5022 = vadd.f32 %v4973, %v5021
        %5023 = vmatmul.bf16.gmra.mxu0 %v2352
        %v5024 = vpop.f32.mrf.mxu0
        %v5025 = vadd.f32 %v4976, %v5024
        %v5026 = vpop.f32.mrf.mxu0
        %v5027 = vadd.f32 %v4978, %v5026
        %5028 = vdwg.mxu0
        %5029 = vmatpush.bf16.msra.mxu0 %v3454
        %5030 = vmatpush.bf16.msra.mxu0 %v3452
        %5031 = vmatpush.bf16.msra.mxu0 %v3450
        %5032 = vmatpush.bf16.msra.mxu0 %v3448
        %5033 = vmatpush.bf16.msra.mxu0 %v3446
        %5034 = vmatpush.bf16.msra.mxu0 %v3444
        %5035 = vmatpush.bf16.msra.mxu0 %v3442
        %5036 = vmatpush.bf16.msra.mxu0 %v3440
        %5037 = vmatmul.bf16.gmra.mxu0 %v2227
        %v5038 = vpop.f32.mrf.mxu0
        %v5039 = vadd.f32 %v4990, %v5038
        %v5040 = vpop.f32.mrf.mxu0
        %v5041 = vadd.f32 %v4992, %v5040
        %5042 = vmatmul.bf16.gmra.mxu0 %v2245
        %v5043 = vpop.f32.mrf.mxu0
        %v5044 = vadd.f32 %v4995, %v5043
        %v5045 = vpop.f32.mrf.mxu0
        %v5046 = vadd.f32 %v4997, %v5045
        %5047 = vmatmul.bf16.gmra.mxu0 %v2263
        %v5048 = vpop.f32.mrf.mxu0
        %v5049 = vadd.f32 %v5000, %v5048
        %v5050 = vpop.f32.mrf.mxu0
        %v5051 = vadd.f32 %v5002, %v5050
        %5052 = vmatmul.bf16.gmra.mxu0 %v2281
        %v5053 = vpop.f32.mrf.mxu0
        %v5054 = vadd.f32 %v5005, %v5053
        %v5055 = vpop.f32.mrf.mxu0
        %v5056 = vadd.f32 %v5007, %v5055
        %5057 = vmatmul.bf16.gmra.mxu0 %v2299
        %v5058 = vpop.f32.mrf.mxu0
        %v5059 = vadd.f32 %v5010, %v5058
        %v5060 = vpop.f32.mrf.mxu0
        %v5061 = vadd.f32 %v5012, %v5060
        %5062 = vmatmul.bf16.gmra.mxu0 %v2317
        %v5063 = vpop.f32.mrf.mxu0
        %v5064 = vadd.f32 %v5015, %v5063
        %v5065 = vpop.f32.mrf.mxu0
        %v5066 = vadd.f32 %v5017, %v5065
        %5067 = vmatmul.bf16.gmra.mxu0 %v2335
        %v5068 = vpop.f32.mrf.mxu0
        %v5069 = vadd.f32 %v5020, %v5068
        %v5070 = vpop.f32.mrf.mxu0
        %v5071 = vadd.f32 %v5022, %v5070
        %5072 = vmatmul.bf16.gmra.mxu0 %v2353
        %v5073 = vpop.f32.mrf.mxu0
        %v5074 = vadd.f32 %v5025, %v5073
        %v5075 = vpop.f32.mrf.mxu0
        %v5076 = vadd.f32 %v5027, %v5075
        %5077 = vdwg.mxu0
        %5078 = vmatpush.bf16.msra.mxu0 %v3470
        %5079 = vmatpush.bf16.msra.mxu0 %v3468
        %5080 = vmatpush.bf16.msra.mxu0 %v3466
        %5081 = vmatpush.bf16.msra.mxu0 %v3464
        %5082 = vmatpush.bf16.msra.mxu0 %v3462
        %5083 = vmatpush.bf16.msra.mxu0 %v3460
        %5084 = vmatpush.bf16.msra.mxu0 %v3458
        %5085 = vmatpush.bf16.msra.mxu0 %v3456
        %5086 = vmatmul.bf16.gmra.mxu0 %v2228
        %v5087 = vpop.f32.mrf.mxu0
        %v5088 = vadd.f32 %v5039, %v5087
        %v5089 = vpop.f32.mrf.mxu0
        %v5090 = vadd.f32 %v5041, %v5089
        %5091 = vmatmul.bf16.gmra.mxu0 %v2246
        %v5092 = vpop.f32.mrf.mxu0
        %v5093 = vadd.f32 %v5044, %v5092
        %v5094 = vpop.f32.mrf.mxu0
        %v5095 = vadd.f32 %v5046, %v5094
        %5096 = vmatmul.bf16.gmra.mxu0 %v2264
        %v5097 = vpop.f32.mrf.mxu0
        %v5098 = vadd.f32 %v5049, %v5097
        %v5099 = vpop.f32.mrf.mxu0
        %v5100 = vadd.f32 %v5051, %v5099
        %5101 = vmatmul.bf16.gmra.mxu0 %v2282
        %v5102 = vpop.f32.mrf.mxu0
        %v5103 = vadd.f32 %v5054, %v5102
        %v5104 = vpop.f32.mrf.mxu0
        %v5105 = vadd.f32 %v5056, %v5104
        %5106 = vmatmul.bf16.gmra.mxu0 %v2300
        %v5107 = vpop.f32.mrf.mxu0
        %v5108 = vadd.f32 %v5059, %v5107
        %v5109 = vpop.f32.mrf.mxu0
        %v5110 = vadd.f32 %v5061, %v5109
        %5111 = vmatmul.bf16.gmra.mxu0 %v2318
        %v5112 = vpop.f32.mrf.mxu0
        %v5113 = vadd.f32 %v5064, %v5112
        %v5114 = vpop.f32.mrf.mxu0
        %v5115 = vadd.f32 %v5066, %v5114
        %5116 = vmatmul.bf16.gmra.mxu0 %v2336
        %v5117 = vpop.f32.mrf.mxu0
        %v5118 = vadd.f32 %v5069, %v5117
        %v5119 = vpop.f32.mrf.mxu0
        %v5120 = vadd.f32 %v5071, %v5119
        %5121 = vmatmul.bf16.gmra.mxu0 %v2354
        %v5122 = vpop.f32.mrf.mxu0
        %v5123 = vadd.f32 %v5074, %v5122
        %v5124 = vpop.f32.mrf.mxu0
        %v5125 = vadd.f32 %v5076, %v5124
        %5126 = vdwg.mxu0
        %5127 = vmatpush.bf16.msra.mxu0 %v3486
        %5128 = vmatpush.bf16.msra.mxu0 %v3484
        %5129 = vmatpush.bf16.msra.mxu0 %v3482
        %5130 = vmatpush.bf16.msra.mxu0 %v3480
        %5131 = vmatpush.bf16.msra.mxu0 %v3478
        %5132 = vmatpush.bf16.msra.mxu0 %v3476
        %5133 = vmatpush.bf16.msra.mxu0 %v3474
        %5134 = vmatpush.bf16.msra.mxu0 %v3472
        %5135 = vmatmul.bf16.gmra.mxu0 %v2229
        %v5136 = vpop.f32.mrf.mxu0
        %v5137 = vadd.f32 %v5088, %v5136
        %v5138 = vpop.f32.mrf.mxu0
        %v5139 = vadd.f32 %v5090, %v5138
        %5140 = vmatmul.bf16.gmra.mxu0 %v2247
        %v5141 = vpop.f32.mrf.mxu0
        %v5142 = vadd.f32 %v5093, %v5141
        %v5143 = vpop.f32.mrf.mxu0
        %v5144 = vadd.f32 %v5095, %v5143
        %5145 = vmatmul.bf16.gmra.mxu0 %v2265
        %v5146 = vpop.f32.mrf.mxu0
        %v5147 = vadd.f32 %v5098, %v5146
        %v5148 = vpop.f32.mrf.mxu0
        %v5149 = vadd.f32 %v5100, %v5148
        %5150 = vmatmul.bf16.gmra.mxu0 %v2283
        %v5151 = vpop.f32.mrf.mxu0
        %v5152 = vadd.f32 %v5103, %v5151
        %v5153 = vpop.f32.mrf.mxu0
        %v5154 = vadd.f32 %v5105, %v5153
        %5155 = vmatmul.bf16.gmra.mxu0 %v2301
        %v5156 = vpop.f32.mrf.mxu0
        %v5157 = vadd.f32 %v5108, %v5156
        %v5158 = vpop.f32.mrf.mxu0
        %v5159 = vadd.f32 %v5110, %v5158
        %5160 = vmatmul.bf16.gmra.mxu0 %v2319
        %v5161 = vpop.f32.mrf.mxu0
        %v5162 = vadd.f32 %v5113, %v5161
        %v5163 = vpop.f32.mrf.mxu0
        %v5164 = vadd.f32 %v5115, %v5163
        %5165 = vmatmul.bf16.gmra.mxu0 %v2337
        %v5166 = vpop.f32.mrf.mxu0
        %v5167 = vadd.f32 %v5118, %v5166
        %v5168 = vpop.f32.mrf.mxu0
        %v5169 = vadd.f32 %v5120, %v5168
        %5170 = vmatmul.bf16.gmra.mxu0 %v2355
        %v5171 = vpop.f32.mrf.mxu0
        %v5172 = vadd.f32 %v5123, %v5171
        %v5173 = vpop.f32.mrf.mxu0
        %v5174 = vadd.f32 %v5125, %v5173
        %5175 = vdwg.mxu0
        %5176 = vmatpush.bf16.msra.mxu0 %v3502
        %5177 = vmatpush.bf16.msra.mxu0 %v3500
        %5178 = vmatpush.bf16.msra.mxu0 %v3498
        %5179 = vmatpush.bf16.msra.mxu0 %v3496
        %5180 = vmatpush.bf16.msra.mxu0 %v3494
        %5181 = vmatpush.bf16.msra.mxu0 %v3492
        %5182 = vmatpush.bf16.msra.mxu0 %v3490
        %5183 = vmatpush.bf16.msra.mxu0 %v3488
        %5184 = vmatmul.bf16.gmra.mxu0 %v2230
        %v5185 = vpop.f32.mrf.mxu0
        %v5186 = vadd.f32 %v5137, %v5185
        %v5187 = vpop.f32.mrf.mxu0
        %v5188 = vadd.f32 %v5139, %v5187
        %5189 = vmatmul.bf16.gmra.mxu0 %v2248
        %v5190 = vpop.f32.mrf.mxu0
        %v5191 = vadd.f32 %v5142, %v5190
        %v5192 = vpop.f32.mrf.mxu0
        %v5193 = vadd.f32 %v5144, %v5192
        %5194 = vmatmul.bf16.gmra.mxu0 %v2266
        %v5195 = vpop.f32.mrf.mxu0
        %v5196 = vadd.f32 %v5147, %v5195
        %v5197 = vpop.f32.mrf.mxu0
        %v5198 = vadd.f32 %v5149, %v5197
        %5199 = vmatmul.bf16.gmra.mxu0 %v2284
        %v5200 = vpop.f32.mrf.mxu0
        %v5201 = vadd.f32 %v5152, %v5200
        %v5202 = vpop.f32.mrf.mxu0
        %v5203 = vadd.f32 %v5154, %v5202
        %5204 = vmatmul.bf16.gmra.mxu0 %v2302
        %v5205 = vpop.f32.mrf.mxu0
        %v5206 = vadd.f32 %v5157, %v5205
        %v5207 = vpop.f32.mrf.mxu0
        %v5208 = vadd.f32 %v5159, %v5207
        %5209 = vmatmul.bf16.gmra.mxu0 %v2320
        %v5210 = vpop.f32.mrf.mxu0
        %v5211 = vadd.f32 %v5162, %v5210
        %v5212 = vpop.f32.mrf.mxu0
        %v5213 = vadd.f32 %v5164, %v5212
        %5214 = vmatmul.bf16.gmra.mxu0 %v2338
        %v5215 = vpop.f32.mrf.mxu0
        %v5216 = vadd.f32 %v5167, %v5215
        %v5217 = vpop.f32.mrf.mxu0
        %v5218 = vadd.f32 %v5169, %v5217
        %5219 = vmatmul.bf16.gmra.mxu0 %v2356
        %v5220 = vpop.f32.mrf.mxu0
        %v5221 = vadd.f32 %v5172, %v5220
        %v5222 = vpop.f32.mrf.mxu0
        %v5223 = vadd.f32 %v5174, %v5222
        %5224 = vdwg.mxu0
        %5225 = vmatpush.bf16.msra.mxu0 %v3518
        %5226 = vmatpush.bf16.msra.mxu0 %v3516
        %5227 = vmatpush.bf16.msra.mxu0 %v3514
        %5228 = vmatpush.bf16.msra.mxu0 %v3512
        %5229 = vmatpush.bf16.msra.mxu0 %v3510
        %5230 = vmatpush.bf16.msra.mxu0 %v3508
        %5231 = vmatpush.bf16.msra.mxu0 %v3506
        %5232 = vmatpush.bf16.msra.mxu0 %v3504
        %5233 = vmatmul.bf16.gmra.mxu0 %v2231
        %v5234 = vpop.f32.mrf.mxu0
        %v5235 = vadd.f32 %v5186, %v5234
        %v5236 = vpop.f32.mrf.mxu0
        %v5237 = vadd.f32 %v5188, %v5236
        %5238 = vmatmul.bf16.gmra.mxu0 %v2249
        %v5239 = vpop.f32.mrf.mxu0
        %v5240 = vadd.f32 %v5191, %v5239
        %v5241 = vpop.f32.mrf.mxu0
        %v5242 = vadd.f32 %v5193, %v5241
        %5243 = vmatmul.bf16.gmra.mxu0 %v2267
        %v5244 = vpop.f32.mrf.mxu0
        %v5245 = vadd.f32 %v5196, %v5244
        %v5246 = vpop.f32.mrf.mxu0
        %v5247 = vadd.f32 %v5198, %v5246
        %5248 = vmatmul.bf16.gmra.mxu0 %v2285
        %v5249 = vpop.f32.mrf.mxu0
        %v5250 = vadd.f32 %v5201, %v5249
        %v5251 = vpop.f32.mrf.mxu0
        %v5252 = vadd.f32 %v5203, %v5251
        %5253 = vmatmul.bf16.gmra.mxu0 %v2303
        %v5254 = vpop.f32.mrf.mxu0
        %v5255 = vadd.f32 %v5206, %v5254
        %v5256 = vpop.f32.mrf.mxu0
        %v5257 = vadd.f32 %v5208, %v5256
        %5258 = vmatmul.bf16.gmra.mxu0 %v2321
        %v5259 = vpop.f32.mrf.mxu0
        %v5260 = vadd.f32 %v5211, %v5259
        %v5261 = vpop.f32.mrf.mxu0
        %v5262 = vadd.f32 %v5213, %v5261
        %5263 = vmatmul.bf16.gmra.mxu0 %v2339
        %v5264 = vpop.f32.mrf.mxu0
        %v5265 = vadd.f32 %v5216, %v5264
        %v5266 = vpop.f32.mrf.mxu0
        %v5267 = vadd.f32 %v5218, %v5266
        %5268 = vmatmul.bf16.gmra.mxu0 %v2357
        %v5269 = vpop.f32.mrf.mxu0
        %v5270 = vadd.f32 %v5221, %v5269
        %v5271 = vpop.f32.mrf.mxu0
        %v5272 = vadd.f32 %v5223, %v5271
        %5273 = vdwg.mxu0
        %5274 = vmatpush.bf16.msra.mxu0 %v3534
        %5275 = vmatpush.bf16.msra.mxu0 %v3532
        %5276 = vmatpush.bf16.msra.mxu0 %v3530
        %5277 = vmatpush.bf16.msra.mxu0 %v3528
        %5278 = vmatpush.bf16.msra.mxu0 %v3526
        %5279 = vmatpush.bf16.msra.mxu0 %v3524
        %5280 = vmatpush.bf16.msra.mxu0 %v3522
        %5281 = vmatpush.bf16.msra.mxu0 %v3520
        %5282 = vmatmul.bf16.gmra.mxu0 %v2232
        %v5283 = vpop.f32.mrf.mxu0
        %v5284 = vadd.f32 %v5235, %v5283
        %v5285 = vpop.f32.mrf.mxu0
        %v5286 = vadd.f32 %v5237, %v5285
        %5287 = vmatmul.bf16.gmra.mxu0 %v2250
        %v5288 = vpop.f32.mrf.mxu0
        %v5289 = vadd.f32 %v5240, %v5288
        %v5290 = vpop.f32.mrf.mxu0
        %v5291 = vadd.f32 %v5242, %v5290
        %5292 = vmatmul.bf16.gmra.mxu0 %v2268
        %v5293 = vpop.f32.mrf.mxu0
        %v5294 = vadd.f32 %v5245, %v5293
        %v5295 = vpop.f32.mrf.mxu0
        %v5296 = vadd.f32 %v5247, %v5295
        %5297 = vmatmul.bf16.gmra.mxu0 %v2286
        %v5298 = vpop.f32.mrf.mxu0
        %v5299 = vadd.f32 %v5250, %v5298
        %v5300 = vpop.f32.mrf.mxu0
        %v5301 = vadd.f32 %v5252, %v5300
        %5302 = vmatmul.bf16.gmra.mxu0 %v2304
        %v5303 = vpop.f32.mrf.mxu0
        %v5304 = vadd.f32 %v5255, %v5303
        %v5305 = vpop.f32.mrf.mxu0
        %v5306 = vadd.f32 %v5257, %v5305
        %5307 = vmatmul.bf16.gmra.mxu0 %v2322
        %v5308 = vpop.f32.mrf.mxu0
        %v5309 = vadd.f32 %v5260, %v5308
        %v5310 = vpop.f32.mrf.mxu0
        %v5311 = vadd.f32 %v5262, %v5310
        %5312 = vmatmul.bf16.gmra.mxu0 %v2340
        %v5313 = vpop.f32.mrf.mxu0
        %v5314 = vadd.f32 %v5265, %v5313
        %v5315 = vpop.f32.mrf.mxu0
        %v5316 = vadd.f32 %v5267, %v5315
        %5317 = vmatmul.bf16.gmra.mxu0 %v2358
        %v5318 = vpop.f32.mrf.mxu0
        %v5319 = vadd.f32 %v5270, %v5318
        %v5320 = vpop.f32.mrf.mxu0
        %v5321 = vadd.f32 %v5272, %v5320
        %5322 = vdwg.mxu0
        %5323 = vmatpush.bf16.msra.mxu0 %v3550
        %5324 = vmatpush.bf16.msra.mxu0 %v3548
        %5325 = vmatpush.bf16.msra.mxu0 %v3546
        %5326 = vmatpush.bf16.msra.mxu0 %v3544
        %5327 = vmatpush.bf16.msra.mxu0 %v3542
        %5328 = vmatpush.bf16.msra.mxu0 %v3540
        %5329 = vmatpush.bf16.msra.mxu0 %v3538
        %5330 = vmatpush.bf16.msra.mxu0 %v3536
        %5331 = vmatmul.bf16.gmra.mxu0 %v2233
        %v5332 = vpop.f32.mrf.mxu0
        %v5333 = vadd.f32 %v5284, %v5332
        %v5334 = vpop.f32.mrf.mxu0
        %v5335 = vadd.f32 %v5286, %v5334
        %5336 = vmatmul.bf16.gmra.mxu0 %v2251
        %v5337 = vpop.f32.mrf.mxu0
        %v5338 = vadd.f32 %v5289, %v5337
        %v5339 = vpop.f32.mrf.mxu0
        %v5340 = vadd.f32 %v5291, %v5339
        %5341 = vmatmul.bf16.gmra.mxu0 %v2269
        %v5342 = vpop.f32.mrf.mxu0
        %v5343 = vadd.f32 %v5294, %v5342
        %v5344 = vpop.f32.mrf.mxu0
        %v5345 = vadd.f32 %v5296, %v5344
        %5346 = vmatmul.bf16.gmra.mxu0 %v2287
        %v5347 = vpop.f32.mrf.mxu0
        %v5348 = vadd.f32 %v5299, %v5347
        %v5349 = vpop.f32.mrf.mxu0
        %v5350 = vadd.f32 %v5301, %v5349
        %5351 = vmatmul.bf16.gmra.mxu0 %v2305
        %v5352 = vpop.f32.mrf.mxu0
        %v5353 = vadd.f32 %v5304, %v5352
        %v5354 = vpop.f32.mrf.mxu0
        %v5355 = vadd.f32 %v5306, %v5354
        %5356 = vmatmul.bf16.gmra.mxu0 %v2323
        %v5357 = vpop.f32.mrf.mxu0
        %v5358 = vadd.f32 %v5309, %v5357
        %v5359 = vpop.f32.mrf.mxu0
        %v5360 = vadd.f32 %v5311, %v5359
        %5361 = vmatmul.bf16.gmra.mxu0 %v2341
        %v5362 = vpop.f32.mrf.mxu0
        %v5363 = vadd.f32 %v5314, %v5362
        %v5364 = vpop.f32.mrf.mxu0
        %v5365 = vadd.f32 %v5316, %v5364
        %5366 = vmatmul.bf16.gmra.mxu0 %v2359
        %v5367 = vpop.f32.mrf.mxu0
        %v5368 = vadd.f32 %v5319, %v5367
        %v5369 = vpop.f32.mrf.mxu0
        %v5370 = vadd.f32 %v5321, %v5369
        %5371 = vdwg.mxu0
        %5372 = vmatpush.bf16.msra.mxu0 %v3566
        %5373 = vmatpush.bf16.msra.mxu0 %v3564
        %5374 = vmatpush.bf16.msra.mxu0 %v3562
        %5375 = vmatpush.bf16.msra.mxu0 %v3560
        %5376 = vmatpush.bf16.msra.mxu0 %v3558
        %5377 = vmatpush.bf16.msra.mxu0 %v3556
        %5378 = vmatpush.bf16.msra.mxu0 %v3554
        %5379 = vmatpush.bf16.msra.mxu0 %v3552
        %5380 = vmatmul.bf16.gmra.mxu0 %v2234
        %v5381 = vpop.f32.mrf.mxu0
        %v5382 = vadd.f32 %v5333, %v5381
        %v5383 = vpop.f32.mrf.mxu0
        %v5384 = vadd.f32 %v5335, %v5383
        %5385 = vmatmul.bf16.gmra.mxu0 %v2252
        %v5386 = vpop.f32.mrf.mxu0
        %v5387 = vadd.f32 %v5338, %v5386
        %v5388 = vpop.f32.mrf.mxu0
        %v5389 = vadd.f32 %v5340, %v5388
        %5390 = vmatmul.bf16.gmra.mxu0 %v2270
        %v5391 = vpop.f32.mrf.mxu0
        %v5392 = vadd.f32 %v5343, %v5391
        %v5393 = vpop.f32.mrf.mxu0
        %v5394 = vadd.f32 %v5345, %v5393
        %5395 = vmatmul.bf16.gmra.mxu0 %v2288
        %v5396 = vpop.f32.mrf.mxu0
        %v5397 = vadd.f32 %v5348, %v5396
        %v5398 = vpop.f32.mrf.mxu0
        %v5399 = vadd.f32 %v5350, %v5398
        %5400 = vmatmul.bf16.gmra.mxu0 %v2306
        %v5401 = vpop.f32.mrf.mxu0
        %v5402 = vadd.f32 %v5353, %v5401
        %v5403 = vpop.f32.mrf.mxu0
        %v5404 = vadd.f32 %v5355, %v5403
        %5405 = vmatmul.bf16.gmra.mxu0 %v2324
        %v5406 = vpop.f32.mrf.mxu0
        %v5407 = vadd.f32 %v5358, %v5406
        %v5408 = vpop.f32.mrf.mxu0
        %v5409 = vadd.f32 %v5360, %v5408
        %5410 = vmatmul.bf16.gmra.mxu0 %v2342
        %v5411 = vpop.f32.mrf.mxu0
        %v5412 = vadd.f32 %v5363, %v5411
        %v5413 = vpop.f32.mrf.mxu0
        %v5414 = vadd.f32 %v5365, %v5413
        %5415 = vmatmul.bf16.gmra.mxu0 %v2360
        %v5416 = vpop.f32.mrf.mxu0
        %v5417 = vadd.f32 %v5368, %v5416
        %v5418 = vpop.f32.mrf.mxu0
        %v5419 = vadd.f32 %v5370, %v5418
        %5420 = vdwg.mxu0
        %5421 = vmatpush.bf16.msra.mxu0 %v3582
        %5422 = vmatpush.bf16.msra.mxu0 %v3580
        %5423 = vmatpush.bf16.msra.mxu0 %v3578
        %5424 = vmatpush.bf16.msra.mxu0 %v3576
        %5425 = vmatpush.bf16.msra.mxu0 %v3574
        %5426 = vmatpush.bf16.msra.mxu0 %v3572
        %5427 = vmatpush.bf16.msra.mxu0 %v3570
        %5428 = vmatpush.bf16.msra.mxu0 %v3568
        %5429 = vmatmul.bf16.gmra.mxu0 %v2235
        %v5430 = vpop.f32.mrf.mxu0
        %v5431 = vadd.f32 %v5382, %v5430
        %v5432 = vpop.f32.mrf.mxu0
        %v5433 = vadd.f32 %v5384, %v5432
        %5434 = vmatmul.bf16.gmra.mxu0 %v2253
        %v5435 = vpop.f32.mrf.mxu0
        %v5436 = vadd.f32 %v5387, %v5435
        %v5437 = vpop.f32.mrf.mxu0
        %v5438 = vadd.f32 %v5389, %v5437
        %5439 = vmatmul.bf16.gmra.mxu0 %v2271
        %v5440 = vpop.f32.mrf.mxu0
        %v5441 = vadd.f32 %v5392, %v5440
        %v5442 = vpop.f32.mrf.mxu0
        %v5443 = vadd.f32 %v5394, %v5442
        %5444 = vmatmul.bf16.gmra.mxu0 %v2289
        %v5445 = vpop.f32.mrf.mxu0
        %v5446 = vadd.f32 %v5397, %v5445
        %v5447 = vpop.f32.mrf.mxu0
        %v5448 = vadd.f32 %v5399, %v5447
        %5449 = vmatmul.bf16.gmra.mxu0 %v2307
        %v5450 = vpop.f32.mrf.mxu0
        %v5451 = vadd.f32 %v5402, %v5450
        %v5452 = vpop.f32.mrf.mxu0
        %v5453 = vadd.f32 %v5404, %v5452
        %5454 = vmatmul.bf16.gmra.mxu0 %v2325
        %v5455 = vpop.f32.mrf.mxu0
        %v5456 = vadd.f32 %v5407, %v5455
        %v5457 = vpop.f32.mrf.mxu0
        %v5458 = vadd.f32 %v5409, %v5457
        %5459 = vmatmul.bf16.gmra.mxu0 %v2343
        %v5460 = vpop.f32.mrf.mxu0
        %v5461 = vadd.f32 %v5412, %v5460
        %v5462 = vpop.f32.mrf.mxu0
        %v5463 = vadd.f32 %v5414, %v5462
        %5464 = vmatmul.bf16.gmra.mxu0 %v2361
        %v5465 = vpop.f32.mrf.mxu0
        %v5466 = vadd.f32 %v5417, %v5465
        %v5467 = vpop.f32.mrf.mxu0
        %v5468 = vadd.f32 %v5419, %v5467
        %5469 = vdwg.mxu0
        %5470 = vmatpush.bf16.msra.mxu0 %v3598
        %5471 = vmatpush.bf16.msra.mxu0 %v3596
        %5472 = vmatpush.bf16.msra.mxu0 %v3594
        %5473 = vmatpush.bf16.msra.mxu0 %v3592
        %5474 = vmatpush.bf16.msra.mxu0 %v3590
        %5475 = vmatpush.bf16.msra.mxu0 %v3588
        %5476 = vmatpush.bf16.msra.mxu0 %v3586
        %5477 = vmatpush.bf16.msra.mxu0 %v3584
        %5478 = vmatmul.bf16.gmra.mxu0 %v2236
        %v5479 = vpop.f32.mrf.mxu0
        %v5480 = vadd.f32 %v5431, %v5479
        %v5481 = vpop.f32.mrf.mxu0
        %v5482 = vadd.f32 %v5433, %v5481
        %5483 = vmatmul.bf16.gmra.mxu0 %v2254
        %v5484 = vpop.f32.mrf.mxu0
        %v5485 = vadd.f32 %v5436, %v5484
        %v5486 = vpop.f32.mrf.mxu0
        %v5487 = vadd.f32 %v5438, %v5486
        %5488 = vmatmul.bf16.gmra.mxu0 %v2272
        %v5489 = vpop.f32.mrf.mxu0
        %v5490 = vadd.f32 %v5441, %v5489
        %v5491 = vpop.f32.mrf.mxu0
        %v5492 = vadd.f32 %v5443, %v5491
        %5493 = vmatmul.bf16.gmra.mxu0 %v2290
        %v5494 = vpop.f32.mrf.mxu0
        %v5495 = vadd.f32 %v5446, %v5494
        %v5496 = vpop.f32.mrf.mxu0
        %v5497 = vadd.f32 %v5448, %v5496
        %5498 = vmatmul.bf16.gmra.mxu0 %v2308
        %v5499 = vpop.f32.mrf.mxu0
        %v5500 = vadd.f32 %v5451, %v5499
        %v5501 = vpop.f32.mrf.mxu0
        %v5502 = vadd.f32 %v5453, %v5501
        %5503 = vmatmul.bf16.gmra.mxu0 %v2326
        %v5504 = vpop.f32.mrf.mxu0
        %v5505 = vadd.f32 %v5456, %v5504
        %v5506 = vpop.f32.mrf.mxu0
        %v5507 = vadd.f32 %v5458, %v5506
        %5508 = vmatmul.bf16.gmra.mxu0 %v2344
        %v5509 = vpop.f32.mrf.mxu0
        %v5510 = vadd.f32 %v5461, %v5509
        %v5511 = vpop.f32.mrf.mxu0
        %v5512 = vadd.f32 %v5463, %v5511
        %5513 = vmatmul.bf16.gmra.mxu0 %v2362
        %v5514 = vpop.f32.mrf.mxu0
        %v5515 = vadd.f32 %v5466, %v5514
        %v5516 = vpop.f32.mrf.mxu0
        %v5517 = vadd.f32 %v5468, %v5516
        %5518 = vdwg.mxu0
        %5519 = vmatpush.bf16.msra.mxu0 %v3614
        %5520 = vmatpush.bf16.msra.mxu0 %v3612
        %5521 = vmatpush.bf16.msra.mxu0 %v3610
        %5522 = vmatpush.bf16.msra.mxu0 %v3608
        %5523 = vmatpush.bf16.msra.mxu0 %v3606
        %5524 = vmatpush.bf16.msra.mxu0 %v3604
        %5525 = vmatpush.bf16.msra.mxu0 %v3602
        %5526 = vmatpush.bf16.msra.mxu0 %v3600
        %5527 = vmatmul.bf16.gmra.mxu0 %v2237
        %v5528 = vpop.f32.mrf.mxu0
        %v5529 = vadd.f32 %v5480, %v5528
        %v5530 = vpop.f32.mrf.mxu0
        %v5531 = vadd.f32 %v5482, %v5530
        %5532 = vmatmul.bf16.gmra.mxu0 %v2255
        %v5533 = vpop.f32.mrf.mxu0
        %v5534 = vadd.f32 %v5485, %v5533
        %v5535 = vpop.f32.mrf.mxu0
        %v5536 = vadd.f32 %v5487, %v5535
        %5537 = vmatmul.bf16.gmra.mxu0 %v2273
        %v5538 = vpop.f32.mrf.mxu0
        %v5539 = vadd.f32 %v5490, %v5538
        %v5540 = vpop.f32.mrf.mxu0
        %v5541 = vadd.f32 %v5492, %v5540
        %5542 = vmatmul.bf16.gmra.mxu0 %v2291
        %v5543 = vpop.f32.mrf.mxu0
        %v5544 = vadd.f32 %v5495, %v5543
        %v5545 = vpop.f32.mrf.mxu0
        %v5546 = vadd.f32 %v5497, %v5545
        %5547 = vmatmul.bf16.gmra.mxu0 %v2309
        %v5548 = vpop.f32.mrf.mxu0
        %v5549 = vadd.f32 %v5500, %v5548
        %v5550 = vpop.f32.mrf.mxu0
        %v5551 = vadd.f32 %v5502, %v5550
        %5552 = vmatmul.bf16.gmra.mxu0 %v2327
        %v5553 = vpop.f32.mrf.mxu0
        %v5554 = vadd.f32 %v5505, %v5553
        %v5555 = vpop.f32.mrf.mxu0
        %v5556 = vadd.f32 %v5507, %v5555
        %5557 = vmatmul.bf16.gmra.mxu0 %v2345
        %v5558 = vpop.f32.mrf.mxu0
        %v5559 = vadd.f32 %v5510, %v5558
        %v5560 = vpop.f32.mrf.mxu0
        %v5561 = vadd.f32 %v5512, %v5560
        %5562 = vmatmul.bf16.gmra.mxu0 %v2363
        %v5563 = vpop.f32.mrf.mxu0
        %v5564 = vadd.f32 %v5515, %v5563
        %v5565 = vpop.f32.mrf.mxu0
        %v5566 = vadd.f32 %v5517, %v5565
        %5567 = vdwg.mxu0
        %5568 = vmatpush.bf16.msra.mxu0 %v3630
        %5569 = vmatpush.bf16.msra.mxu0 %v3628
        %5570 = vmatpush.bf16.msra.mxu0 %v3626
        %5571 = vmatpush.bf16.msra.mxu0 %v3624
        %5572 = vmatpush.bf16.msra.mxu0 %v3622
        %5573 = vmatpush.bf16.msra.mxu0 %v3620
        %5574 = vmatpush.bf16.msra.mxu0 %v3618
        %5575 = vmatpush.bf16.msra.mxu0 %v3616
        %5576 = vmatmul.bf16.gmra.mxu0 %v2238
        %v5577 = vpop.f32.mrf.mxu0
        %v5578 = vadd.f32 %v5529, %v5577
        %v5579 = vpop.f32.mrf.mxu0
        %v5580 = vadd.f32 %v5531, %v5579
        %5581 = vmatmul.bf16.gmra.mxu0 %v2256
        %v5582 = vpop.f32.mrf.mxu0
        %v5583 = vadd.f32 %v5534, %v5582
        %v5584 = vpop.f32.mrf.mxu0
        %v5585 = vadd.f32 %v5536, %v5584
        %5586 = vmatmul.bf16.gmra.mxu0 %v2274
        %v5587 = vpop.f32.mrf.mxu0
        %v5588 = vadd.f32 %v5539, %v5587
        %v5589 = vpop.f32.mrf.mxu0
        %v5590 = vadd.f32 %v5541, %v5589
        %5591 = vmatmul.bf16.gmra.mxu0 %v2292
        %v5592 = vpop.f32.mrf.mxu0
        %v5593 = vadd.f32 %v5544, %v5592
        %v5594 = vpop.f32.mrf.mxu0
        %v5595 = vadd.f32 %v5546, %v5594
        %5596 = vmatmul.bf16.gmra.mxu0 %v2310
        %v5597 = vpop.f32.mrf.mxu0
        %v5598 = vadd.f32 %v5549, %v5597
        %v5599 = vpop.f32.mrf.mxu0
        %v5600 = vadd.f32 %v5551, %v5599
        %5601 = vmatmul.bf16.gmra.mxu0 %v2328
        %v5602 = vpop.f32.mrf.mxu0
        %v5603 = vadd.f32 %v5554, %v5602
        %v5604 = vpop.f32.mrf.mxu0
        %v5605 = vadd.f32 %v5556, %v5604
        %5606 = vmatmul.bf16.gmra.mxu0 %v2346
        %v5607 = vpop.f32.mrf.mxu0
        %v5608 = vadd.f32 %v5559, %v5607
        %v5609 = vpop.f32.mrf.mxu0
        %v5610 = vadd.f32 %v5561, %v5609
        %5611 = vmatmul.bf16.gmra.mxu0 %v2364
        %v5612 = vpop.f32.mrf.mxu0
        %v5613 = vadd.f32 %v5564, %v5612
        %v5614 = vpop.f32.mrf.mxu0
        %v5615 = vadd.f32 %v5566, %v5614
        %5616 = vdwg.mxu0
        %5617 = vmatpush.bf16.msra.mxu0 %v3646
        %5618 = vmatpush.bf16.msra.mxu0 %v3644
        %5619 = vmatpush.bf16.msra.mxu0 %v3642
        %5620 = vmatpush.bf16.msra.mxu0 %v3640
        %5621 = vmatpush.bf16.msra.mxu0 %v3638
        %5622 = vmatpush.bf16.msra.mxu0 %v3636
        %5623 = vmatpush.bf16.msra.mxu0 %v3634
        %5624 = vmatpush.bf16.msra.mxu0 %v3632
        %5625 = vmatmul.bf16.gmra.mxu0 %v2239
        %v5626 = vpop.f32.mrf.mxu0
        %v5627 = vadd.f32 %v5578, %v5626
        %v5628 = vpop.f32.mrf.mxu0
        %v5629 = vadd.f32 %v5580, %v5628
        %5630 = vmatmul.bf16.gmra.mxu0 %v2257
        %v5631 = vpop.f32.mrf.mxu0
        %v5632 = vadd.f32 %v5583, %v5631
        %v5633 = vpop.f32.mrf.mxu0
        %v5634 = vadd.f32 %v5585, %v5633
        %5635 = vmatmul.bf16.gmra.mxu0 %v2275
        %v5636 = vpop.f32.mrf.mxu0
        %v5637 = vadd.f32 %v5588, %v5636
        %v5638 = vpop.f32.mrf.mxu0
        %v5639 = vadd.f32 %v5590, %v5638
        %5640 = vmatmul.bf16.gmra.mxu0 %v2293
        %v5641 = vpop.f32.mrf.mxu0
        %v5642 = vadd.f32 %v5593, %v5641
        %v5643 = vpop.f32.mrf.mxu0
        %v5644 = vadd.f32 %v5595, %v5643
        %5645 = vmatmul.bf16.gmra.mxu0 %v2311
        %v5646 = vpop.f32.mrf.mxu0
        %v5647 = vadd.f32 %v5598, %v5646
        %v5648 = vpop.f32.mrf.mxu0
        %v5649 = vadd.f32 %v5600, %v5648
        %5650 = vmatmul.bf16.gmra.mxu0 %v2329
        %v5651 = vpop.f32.mrf.mxu0
        %v5652 = vadd.f32 %v5603, %v5651
        %v5653 = vpop.f32.mrf.mxu0
        %v5654 = vadd.f32 %v5605, %v5653
        %5655 = vmatmul.bf16.gmra.mxu0 %v2347
        %v5656 = vpop.f32.mrf.mxu0
        %v5657 = vadd.f32 %v5608, %v5656
        %v5658 = vpop.f32.mrf.mxu0
        %v5659 = vadd.f32 %v5610, %v5658
        %5660 = vmatmul.bf16.gmra.mxu0 %v2365
        %v5661 = vpop.f32.mrf.mxu0
        %v5662 = vadd.f32 %v5613, %v5661
        %v5663 = vpop.f32.mrf.mxu0
        %v5664 = vadd.f32 %v5615, %v5663
        %5665 = vdwg.mxu0
        %5666 = vmatpush.bf16.msra.mxu0 %v3662
        %5667 = vmatpush.bf16.msra.mxu0 %v3660
        %5668 = vmatpush.bf16.msra.mxu0 %v3658
        %5669 = vmatpush.bf16.msra.mxu0 %v3656
        %5670 = vmatpush.bf16.msra.mxu0 %v3654
        %5671 = vmatpush.bf16.msra.mxu0 %v3652
        %5672 = vmatpush.bf16.msra.mxu0 %v3650
        %5673 = vmatpush.bf16.msra.mxu0 %v3648
        %5674 = vmatmul.bf16.gmra.mxu0 %v2240
        %v5675 = vpop.f32.mrf.mxu0
        %v5676 = vadd.f32 %v5627, %v5675
        %v5677 = vpop.f32.mrf.mxu0
        %v5678 = vadd.f32 %v5629, %v5677
        %5679 = vmatmul.bf16.gmra.mxu0 %v2258
        %v5680 = vpop.f32.mrf.mxu0
        %v5681 = vadd.f32 %v5632, %v5680
        %v5682 = vpop.f32.mrf.mxu0
        %v5683 = vadd.f32 %v5634, %v5682
        %5684 = vmatmul.bf16.gmra.mxu0 %v2276
        %v5685 = vpop.f32.mrf.mxu0
        %v5686 = vadd.f32 %v5637, %v5685
        %v5687 = vpop.f32.mrf.mxu0
        %v5688 = vadd.f32 %v5639, %v5687
        %5689 = vmatmul.bf16.gmra.mxu0 %v2294
        %v5690 = vpop.f32.mrf.mxu0
        %v5691 = vadd.f32 %v5642, %v5690
        %v5692 = vpop.f32.mrf.mxu0
        %v5693 = vadd.f32 %v5644, %v5692
        %5694 = vmatmul.bf16.gmra.mxu0 %v2312
        %v5695 = vpop.f32.mrf.mxu0
        %v5696 = vadd.f32 %v5647, %v5695
        %v5697 = vpop.f32.mrf.mxu0
        %v5698 = vadd.f32 %v5649, %v5697
        %5699 = vmatmul.bf16.gmra.mxu0 %v2330
        %v5700 = vpop.f32.mrf.mxu0
        %v5701 = vadd.f32 %v5652, %v5700
        %v5702 = vpop.f32.mrf.mxu0
        %v5703 = vadd.f32 %v5654, %v5702
        %5704 = vmatmul.bf16.gmra.mxu0 %v2348
        %v5705 = vpop.f32.mrf.mxu0
        %v5706 = vadd.f32 %v5657, %v5705
        %v5707 = vpop.f32.mrf.mxu0
        %v5708 = vadd.f32 %v5659, %v5707
        %5709 = vmatmul.bf16.gmra.mxu0 %v2366
        %v5710 = vpop.f32.mrf.mxu0
        %v5711 = vadd.f32 %v5662, %v5710
        %v5712 = vpop.f32.mrf.mxu0
        %v5713 = vadd.f32 %v5664, %v5712
        %5714 = vdwg.mxu0
        %v5715 = vmax.f32 %v4794, 0.0
        %v5716 = vmax.f32 %v5676, 0.0
        %v5717 = vmax.f32 %v4796, 0.0
        %v5718 = vmax.f32 %v5678, 0.0
        %v5719 = vmax.f32 %v4799, 0.0
        %v5720 = vmax.f32 %v5681, 0.0
        %v5721 = vmax.f32 %v4801, 0.0
        %v5722 = vmax.f32 %v5683, 0.0
        %v5723 = vmax.f32 %v4804, 0.0
        %v5724 = vmax.f32 %v5686, 0.0
        %v5725 = vmax.f32 %v4806, 0.0
        %v5726 = vmax.f32 %v5688, 0.0
        %v5727 = vmax.f32 %v4809, 0.0
        %v5728 = vmax.f32 %v5691, 0.0
        %v5729 = vmax.f32 %v4811, 0.0
        %v5730 = vmax.f32 %v5693, 0.0
        %v5731 = vmax.f32 %v4814, 0.0
        %v5732 = vmax.f32 %v5696, 0.0
        %v5733 = vmax.f32 %v4816, 0.0
        %v5734 = vmax.f32 %v5698, 0.0
        %v5735 = vmax.f32 %v4819, 0.0
        %v5736 = vmax.f32 %v5701, 0.0
        %v5737 = vmax.f32 %v4821, 0.0
        %v5738 = vmax.f32 %v5703, 0.0
        %v5739 = vmax.f32 %v4824, 0.0
        %v5740 = vmax.f32 %v5706, 0.0
        %v5741 = vmax.f32 %v4826, 0.0
        %v5742 = vmax.f32 %v5708, 0.0
        %v5743 = vmax.f32 %v4829, 0.0
        %v5744 = vmax.f32 %v5711, 0.0
        %v5745 = vmax.f32 %v4831, 0.0
        %v5746 = vmax.f32 %v5713, 0.0
        %5747 = vst [vmem:[%s355] sm:$0xff] %v5715
        %5748 = vst [vmem:[%s355 + $0x8] sm:$0xff] %v5716
        %5749 = vst [vmem:[%s355 + $0x10] sm:$0xff] %v5717
        %5750 = vst [vmem:[%s355 + $0x18] sm:$0xff] %v5718
        %5751 = vst [vmem:[%s355 + $0x20] sm:$0xff] %v5719
        %5752 = vst [vmem:[%s355 + $0x28] sm:$0xff] %v5720
        %5753 = vst [vmem:[%s355 + $0x30] sm:$0xff] %v5721
        %5754 = vst [vmem:[%s355 + $0x38] sm:$0xff] %v5722
        %5755 = vst [vmem:[%s355 + $0x40] sm:$0xff] %v5723
        %5756 = vst [vmem:[%s355 + $0x48] sm:$0xff] %v5724
        %5757 = vst [vmem:[%s355 + $0x50] sm:$0xff] %v5725
        %5758 = vst [vmem:[%s355 + $0x58] sm:$0xff] %v5726
        %5759 = vst [vmem:[%s355 + $0x60] sm:$0xff] %v5727
        %5760 = vst [vmem:[%s355 + $0x68] sm:$0xff] %v5728
        %5761 = vst [vmem:[%s355 + $0x70] sm:$0xff] %v5729
        %5762 = vst [vmem:[%s355 + $0x78] sm:$0xff] %v5730
        %5763 = vst [vmem:[%s355 + $0xa0] sm:$0xff] %v5731
        %5764 = vst [vmem:[%s355 + $0xa8] sm:$0xff] %v5732
        %5765 = vst [vmem:[%s355 + $0xb0] sm:$0xff] %v5733
        %5766 = vst [vmem:[%s355 + $0xb8] sm:$0xff] %v5734
        %5767 = vst [vmem:[%s355 + $0xc0] sm:$0xff] %v5735
        %5768 = vst [vmem:[%s355 + $0xc8] sm:$0xff] %v5736
        %5769 = vst [vmem:[%s355 + $0xd0] sm:$0xff] %v5737
        %5770 = vst [vmem:[%s355 + $0xd8] sm:$0xff] %v5738
        %5771 = vst [vmem:[%s355 + $0xe0] sm:$0xff] %v5739
        %5772 = vst [vmem:[%s355 + $0xe8] sm:$0xff] %v5740
        %5773 = vst [vmem:[%s355 + $0xf0] sm:$0xff] %v5741
        %5774 = vst [vmem:[%s355 + $0xf8] sm:$0xff] %v5742
        %5775 = vst [vmem:[%s355 + $0x100] sm:$0xff] %v5743
        %5776 = vst [vmem:[%s355 + $0x108] sm:$0xff] %v5744
        %5777 = vst [vmem:[%s355 + $0x110] sm:$0xff] %v5745
        %5778 = vst [vmem:[%s355 + $0x118] sm:$0xff] %v5746
        %v5779 = vld [vmem:[#allocation2] sm:$0xff]
        %v5780 = vld [vmem:[#allocation2 + $0x8] sm:$0xff]
        %v5781 = vld [vmem:[#allocation2 + $0x10] sm:$0xff]
        %v5782 = vld [vmem:[#allocation2 + $0x18] sm:$0xff]
        %v5783 = vld [vmem:[#allocation2 + $0x20] sm:$0xff]
        %v5784 = vld [vmem:[#allocation2 + $0x28] sm:$0xff]
        %v5785 = vld [vmem:[#allocation2 + $0x30] sm:$0xff]
        %v5786 = vld [vmem:[#allocation2 + $0x38] sm:$0xff]
        %v5787 = vld [vmem:[#allocation2 + $0x40] sm:$0xff]
        %v5788 = vld [vmem:[#allocation2 + $0x48] sm:$0xff]
        %v5789 = vld [vmem:[#allocation2 + $0x50] sm:$0xff]
        %v5790 = vld [vmem:[#allocation2 + $0x58] sm:$0xff]
        %v5791 = vld [vmem:[#allocation2 + $0x60] sm:$0xff]
        %v5792 = vld [vmem:[#allocation2 + $0x68] sm:$0xff]
        %v5793 = vld [vmem:[#allocation2 + $0x70] sm:$0xff]
        %v5794 = vld [vmem:[#allocation2 + $0x78] sm:$0xff]
        %v5795 = vld [vmem:[#allocation2 + $0xa0] sm:$0xff]
        %v5796 = vld [vmem:[#allocation2 + $0xa8] sm:$0xff]
        %v5797 = vld [vmem:[#allocation2 + $0xb0] sm:$0xff]
        %v5798 = vld [vmem:[#allocation2 + $0xb8] sm:$0xff]
        %v5799 = vld [vmem:[#allocation2 + $0xc0] sm:$0xff]
        %v5800 = vld [vmem:[#allocation2 + $0xc8] sm:$0xff]
        %v5801 = vld [vmem:[#allocation2 + $0xd0] sm:$0xff]
        %v5802 = vld [vmem:[#allocation2 + $0xd8] sm:$0xff]
        %v5803 = vld [vmem:[#allocation2 + $0xe0] sm:$0xff]
        %v5804 = vld [vmem:[#allocation2 + $0xe8] sm:$0xff]
        %v5805 = vld [vmem:[#allocation2 + $0xf0] sm:$0xff]
        %v5806 = vld [vmem:[#allocation2 + $0xf8] sm:$0xff]
        %v5807 = vld [vmem:[#allocation2 + $0x100] sm:$0xff]
        %v5808 = vld [vmem:[#allocation2 + $0x108] sm:$0xff]
        %v5809 = vld [vmem:[#allocation2 + $0x110] sm:$0xff]
        %v5810 = vld [vmem:[#allocation2 + $0x118] sm:$0xff]
        %v5811 = vrot.slane %v5779, 7
        %v5812 = vrot.slane %v5780, 7
        %v5813 = vrot.slane %v5781, 7
        %v5814 = vrot.slane %v5782, 7
        %v5815 = vrot.slane %v5783, 7
        %v5816 = vrot.slane %v5784, 7
        %v5817 = vrot.slane %v5785, 7
        %v5818 = vrot.slane %v5786, 7
        %v5819 = vrot.slane %v5787, 7
        %v5820 = vrot.slane %v5788, 7
        %v5821 = vrot.slane %v5789, 7
        %v5822 = vrot.slane %v5790, 7
        %v5823 = vrot.slane %v5791, 7
        %v5824 = vrot.slane %v5792, 7
        %v5825 = vrot.slane %v5793, 7
        %v5826 = vrot.slane %v5794, 7
        %v5827 = vrot.slane %v5795, 7
        %v5828 = vrot.slane %v5796, 7
        %v5829 = vrot.slane %v5797, 7
        %v5830 = vrot.slane %v5798, 7
        %v5831 = vrot.slane %v5799, 7
        %v5832 = vrot.slane %v5800, 7
        %v5833 = vrot.slane %v5801, 7
        %v5834 = vrot.slane %v5802, 7
        %v5835 = vrot.slane %v5803, 7
        %v5836 = vrot.slane %v5804, 7
        %v5837 = vrot.slane %v5805, 7
        %v5838 = vrot.slane %v5806, 7
        %v5839 = vrot.slane %v5807, 7
        %v5840 = vrot.slane %v5808, 7
        %v5841 = vrot.slane %v5809, 7
        %v5842 = vrot.slane %v5810, 7
        %v5843 = vsel %vm453, %v5811, 0.0
        %v5844 = vsel %vm453, %v5812, 0.0
        %v5845 = vsel %vm453, %v5813, 0.0
        %v5846 = vsel %vm453, %v5814, 0.0
        %v5847 = vsel %vm453, %v5815, 0.0
        %v5848 = vsel %vm453, %v5816, 0.0
        %v5849 = vsel %vm453, %v5817, 0.0
        %v5850 = vsel %vm453, %v5818, 0.0
        %v5851 = vsel %vm453, %v5819, 0.0
        %v5852 = vsel %vm453, %v5820, 0.0
        %v5853 = vsel %vm453, %v5821, 0.0
        %v5854 = vsel %vm453, %v5822, 0.0
        %v5855 = vsel %vm453, %v5823, 0.0
        %v5856 = vsel %vm453, %v5824, 0.0
        %v5857 = vsel %vm453, %v5825, 0.0
        %v5858 = vsel %vm453, %v5826, 0.0
        %v5859 = vsel %vm453, %v5827, 0.0
        %v5860 = vsel %vm453, %v5828, 0.0
        %v5861 = vsel %vm453, %v5829, 0.0
        %v5862 = vsel %vm453, %v5830, 0.0
        %v5863 = vsel %vm453, %v5831, 0.0
        %v5864 = vsel %vm453, %v5832, 0.0
        %v5865 = vsel %vm453, %v5833, 0.0
        %v5866 = vsel %vm453, %v5834, 0.0
        %v5867 = vsel %vm453, %v5835, 0.0
        %v5868 = vsel %vm453, %v5836, 0.0
        %v5869 = vsel %vm453, %v5837, 0.0
        %v5870 = vsel %vm453, %v5838, 0.0
        %v5871 = vsel %vm453, %v5839, 0.0
        %v5872 = vsel %vm453, %v5840, 0.0
        %v5873 = vsel %vm453, %v5841, 0.0
        %v5874 = vsel %vm453, %v5842, 0.0
        %v5875 = vpack.c.bf16 %v5844, %v5843
        %v5876 = vpack.c.bf16 %v5846, %v5845
        %v5877 = vpack.c.bf16 %v5848, %v5847
        %v5878 = vpack.c.bf16 %v5850, %v5849
        %v5879 = vpack.c.bf16 %v5852, %v5851
        %v5880 = vpack.c.bf16 %v5854, %v5853
        %v5881 = vpack.c.bf16 %v5856, %v5855
        %v5882 = vpack.c.bf16 %v5858, %v5857
        %v5883 = vpack.c.bf16 %v5860, %v5859
        %v5884 = vpack.c.bf16 %v5862, %v5861
        %v5885 = vpack.c.bf16 %v5864, %v5863
        %v5886 = vpack.c.bf16 %v5866, %v5865
        %v5887 = vpack.c.bf16 %v5868, %v5867
        %v5888 = vpack.c.bf16 %v5870, %v5869
        %v5889 = vpack.c.bf16 %v5872, %v5871
        %v5890 = vpack.c.bf16 %v5874, %v5873
        %5891 = vst [vmem:[#allocation3] sm:$0xff] %v5875
        %5892 = vst [vmem:[#allocation3 + $0x48] sm:$0xff] %v5876
        %5893 = vst [vmem:[#allocation3 + $0x90] sm:$0xff] %v5877
        %5894 = vst [vmem:[#allocation3 + $0xd8] sm:$0xff] %v5878
        %5895 = vst [vmem:[#allocation3 + $0x120] sm:$0xff] %v5879
        %5896 = vst [vmem:[#allocation3 + $0x168] sm:$0xff] %v5880
        %5897 = vst [vmem:[#allocation3 + $0x1b0] sm:$0xff] %v5881
        %5898 = vst [vmem:[#allocation3 + $0x1f8] sm:$0xff] %v5882
        %5899 = vst [vmem:[#allocation3 + $0x240] sm:$0xff] %v5883
        %5900 = vst [vmem:[#allocation3 + $0x288] sm:$0xff] %v5884
        %5901 = vst [vmem:[#allocation3 + $0x2d0] sm:$0xff] %v5885
        %5902 = vst [vmem:[#allocation3 + $0x318] sm:$0xff] %v5886
        %5903 = vst [vmem:[#allocation3 + $0x360] sm:$0xff] %v5887
        %5904 = vst [vmem:[#allocation3 + $0x3a8] sm:$0xff] %v5888
        %5905 = vst [vmem:[#allocation3 + $0x3f0] sm:$0xff] %v5889
        %5906 = vst [vmem:[#allocation3 + $0x438] sm:$0xff] %v5890
        %v5907 = vld [vmem:[#allocation2] sm:$0xff]
        %v5908 = vld [vmem:[#allocation2 + $0x8] sm:$0xff]
        %v5909 = vld [vmem:[#allocation2 + $0x10] sm:$0xff]
        %v5910 = vld [vmem:[#allocation2 + $0x18] sm:$0xff]
        %v5911 = vld [vmem:[#allocation2 + $0x20] sm:$0xff]
        %v5912 = vld [vmem:[#allocation2 + $0x28] sm:$0xff]
        %v5913 = vld [vmem:[#allocation2 + $0x30] sm:$0xff]
        %v5914 = vld [vmem:[#allocation2 + $0x38] sm:$0xff]
        %v5915 = vld [vmem:[#allocation2 + $0x40] sm:$0xff]
        %v5916 = vld [vmem:[#allocation2 + $0x48] sm:$0xff]
        %v5917 = vld [vmem:[#allocation2 + $0x50] sm:$0xff]
        %v5918 = vld [vmem:[#allocation2 + $0x58] sm:$0xff]
        %v5919 = vld [vmem:[#allocation2 + $0x60] sm:$0xff]
        %v5920 = vld [vmem:[#allocation2 + $0x68] sm:$0xff]
        %v5921 = vld [vmem:[#allocation2 + $0x70] sm:$0xff]
        %v5922 = vld [vmem:[#allocation2 + $0x78] sm:$0xff]
        %v5923 = vld [vmem:[#allocation2 + $0xa0] sm:$0xff]
        %v5924 = vld [vmem:[#allocation2 + $0xa8] sm:$0xff]
        %v5925 = vld [vmem:[#allocation2 + $0xb0] sm:$0xff]
        %v5926 = vld [vmem:[#allocation2 + $0xb8] sm:$0xff]
        %v5927 = vld [vmem:[#allocation2 + $0xc0] sm:$0xff]
        %v5928 = vld [vmem:[#allocation2 + $0xc8] sm:$0xff]
        %v5929 = vld [vmem:[#allocation2 + $0xd0] sm:$0xff]
        %v5930 = vld [vmem:[#allocation2 + $0xd8] sm:$0xff]
        %v5931 = vld [vmem:[#allocation2 + $0xe0] sm:$0xff]
        %v5932 = vld [vmem:[#allocation2 + $0xe8] sm:$0xff]
        %v5933 = vld [vmem:[#allocation2 + $0xf0] sm:$0xff]
        %v5934 = vld [vmem:[#allocation2 + $0xf8] sm:$0xff]
        %v5935 = vld [vmem:[#allocation2 + $0x100] sm:$0xff]
        %v5936 = vld [vmem:[#allocation2 + $0x108] sm:$0xff]
        %v5937 = vld [vmem:[#allocation2 + $0x110] sm:$0xff]
        %v5938 = vld [vmem:[#allocation2 + $0x118] sm:$0xff]
        %v5939 = vpack.c.bf16 %v5908, %v5907
        %v5940 = vpack.c.bf16 %v5910, %v5909
        %v5941 = vpack.c.bf16 %v5912, %v5911
        %v5942 = vpack.c.bf16 %v5914, %v5913
        %v5943 = vpack.c.bf16 %v5916, %v5915
        %v5944 = vpack.c.bf16 %v5918, %v5917
        %v5945 = vpack.c.bf16 %v5920, %v5919
        %v5946 = vpack.c.bf16 %v5922, %v5921
        %v5947 = vpack.c.bf16 %v5924, %v5923
        %v5948 = vpack.c.bf16 %v5926, %v5925
        %v5949 = vpack.c.bf16 %v5928, %v5927
        %v5950 = vpack.c.bf16 %v5930, %v5929
        %v5951 = vpack.c.bf16 %v5932, %v5931
        %v5952 = vpack.c.bf16 %v5934, %v5933
        %v5953 = vpack.c.bf16 %v5936, %v5935
        %v5954 = vpack.c.bf16 %v5938, %v5937
        %5955 = vst [vmem:[#allocation3 + $0x8] sm:$0xff] %v5939
        %5956 = vst [vmem:[#allocation3 + $0x50] sm:$0xff] %v5940
        %5957 = vst [vmem:[#allocation3 + $0x98] sm:$0xff] %v5941
        %5958 = vst [vmem:[#allocation3 + $0xe0] sm:$0xff] %v5942
        %5959 = vst [vmem:[#allocation3 + $0x128] sm:$0xff] %v5943
        %5960 = vst [vmem:[#allocation3 + $0x170] sm:$0xff] %v5944
        %5961 = vst [vmem:[#allocation3 + $0x1b8] sm:$0xff] %v5945
        %5962 = vst [vmem:[#allocation3 + $0x200] sm:$0xff] %v5946
        %5963 = vst [vmem:[#allocation3 + $0x248] sm:$0xff] %v5947
        %5964 = vst [vmem:[#allocation3 + $0x290] sm:$0xff] %v5948
        %5965 = vst [vmem:[#allocation3 + $0x2d8] sm:$0xff] %v5949
        %5966 = vst [vmem:[#allocation3 + $0x320] sm:$0xff] %v5950
        %5967 = vst [vmem:[#allocation3 + $0x368] sm:$0xff] %v5951
        %5968 = vst [vmem:[#allocation3 + $0x3b0] sm:$0xff] %v5952
        %5969 = vst [vmem:[#allocation3 + $0x3f8] sm:$0xff] %v5953
        %5970 = vst [vmem:[#allocation3 + $0x440] sm:$0xff] %v5954
        %v5971 = vld [vmem:[#allocation2] sm:$0xff]
        %v5972 = vld [vmem:[#allocation2 + $0x8] sm:$0xff]
        %v5973 = vld [vmem:[#allocation2 + $0x10] sm:$0xff]
        %v5974 = vld [vmem:[#allocation2 + $0x18] sm:$0xff]
        %v5975 = vld [vmem:[#allocation2 + $0x20] sm:$0xff]
        %v5976 = vld [vmem:[#allocation2 + $0x28] sm:$0xff]
        %v5977 = vld [vmem:[#allocation2 + $0x30] sm:$0xff]
        %v5978 = vld [vmem:[#allocation2 + $0x38] sm:$0xff]
        %v5979 = vld [vmem:[#allocation2 + $0x40] sm:$0xff]
        %v5980 = vld [vmem:[#allocation2 + $0x48] sm:$0xff]
        %v5981 = vld [vmem:[#allocation2 + $0x50] sm:$0xff]
        %v5982 = vld [vmem:[#allocation2 + $0x58] sm:$0xff]
        %v5983 = vld [vmem:[#allocation2 + $0x60] sm:$0xff]
        %v5984 = vld [vmem:[#allocation2 + $0x68] sm:$0xff]
        %v5985 = vld [vmem:[#allocation2 + $0x70] sm:$0xff]
        %v5986 = vld [vmem:[#allocation2 + $0x78] sm:$0xff]
        %v5987 = vld [vmem:[#allocation2 + $0xa0] sm:$0xff]
        %v5988 = vld [vmem:[#allocation2 + $0xa8] sm:$0xff]
        %v5989 = vld [vmem:[#allocation2 + $0xb0] sm:$0xff]
        %v5990 = vld [vmem:[#allocation2 + $0xb8] sm:$0xff]
        %v5991 = vld [vmem:[#allocation2 + $0xc0] sm:$0xff]
        %v5992 = vld [vmem:[#allocation2 + $0xc8] sm:$0xff]
        %v5993 = vld [vmem:[#allocation2 + $0xd0] sm:$0xff]
        %v5994 = vld [vmem:[#allocation2 + $0xd8] sm:$0xff]
        %v5995 = vld [vmem:[#allocation2 + $0xe0] sm:$0xff]
        %v5996 = vld [vmem:[#allocation2 + $0xe8] sm:$0xff]
        %v5997 = vld [vmem:[#allocation2 + $0xf0] sm:$0xff]
        %v5998 = vld [vmem:[#allocation2 + $0xf8] sm:$0xff]
        %v5999 = vld [vmem:[#allocation2 + $0x100] sm:$0xff]
        %v6000 = vld [vmem:[#allocation2 + $0x108] sm:$0xff]
        %v6001 = vld [vmem:[#allocation2 + $0x110] sm:$0xff]
        %v6002 = vld [vmem:[#allocation2 + $0x118] sm:$0xff]
        %v6003 = vrot.slane %v5971, 1
        %v6004 = vrot.slane %v5972, 1
        %v6005 = vrot.slane %v5973, 1
        %v6006 = vrot.slane %v5974, 1
        %v6007 = vrot.slane %v5975, 1
        %v6008 = vrot.slane %v5976, 1
        %v6009 = vrot.slane %v5977, 1
        %v6010 = vrot.slane %v5978, 1
        %v6011 = vrot.slane %v5979, 1
        %v6012 = vrot.slane %v5980, 1
        %v6013 = vrot.slane %v5981, 1
        %v6014 = vrot.slane %v5982, 1
        %v6015 = vrot.slane %v5983, 1
        %v6016 = vrot.slane %v5984, 1
        %v6017 = vrot.slane %v5985, 1
        %v6018 = vrot.slane %v5986, 1
        %v6019 = vrot.slane %v5987, 1
        %v6020 = vrot.slane %v5988, 1
        %v6021 = vrot.slane %v5989, 1
        %v6022 = vrot.slane %v5990, 1
        %v6023 = vrot.slane %v5991, 1
        %v6024 = vrot.slane %v5992, 1
        %v6025 = vrot.slane %v5993, 1
        %v6026 = vrot.slane %v5994, 1
        %v6027 = vrot.slane %v5995, 1
        %v6028 = vrot.slane %v5996, 1
        %v6029 = vrot.slane %v5997, 1
        %v6030 = vrot.slane %v5998, 1
        %v6031 = vrot.slane %v5999, 1
        %v6032 = vrot.slane %v6000, 1
        %v6033 = vrot.slane %v6001, 1
        %v6034 = vrot.slane %v6002, 1
        %v6035 = vsel %vm647, %v6003, 0.0
        %v6036 = vsel %vm647, %v6004, 0.0
        %v6037 = vsel %vm647, %v6005, 0.0
        %v6038 = vsel %vm647, %v6006, 0.0
        %v6039 = vsel %vm647, %v6007, 0.0
        %v6040 = vsel %vm647, %v6008, 0.0
        %v6041 = vsel %vm647, %v6009, 0.0
        %v6042 = vsel %vm647, %v6010, 0.0
        %v6043 = vsel %vm647, %v6011, 0.0
        %v6044 = vsel %vm647, %v6012, 0.0
        %v6045 = vsel %vm647, %v6013, 0.0
        %v6046 = vsel %vm647, %v6014, 0.0
        %v6047 = vsel %vm647, %v6015, 0.0
        %v6048 = vsel %vm647, %v6016, 0.0
        %v6049 = vsel %vm647, %v6017, 0.0
        %v6050 = vsel %vm647, %v6018, 0.0
        %v6051 = vsel %vm647, %v6019, 0.0
        %v6052 = vsel %vm647, %v6020, 0.0
        %v6053 = vsel %vm647, %v6021, 0.0
        %v6054 = vsel %vm647, %v6022, 0.0
        %v6055 = vsel %vm647, %v6023, 0.0
        %v6056 = vsel %vm647, %v6024, 0.0
        %v6057 = vsel %vm647, %v6025, 0.0
        %v6058 = vsel %vm647, %v6026, 0.0
        %v6059 = vsel %vm647, %v6027, 0.0
        %v6060 = vsel %vm647, %v6028, 0.0
        %v6061 = vsel %vm647, %v6029, 0.0
        %v6062 = vsel %vm647, %v6030, 0.0
        %v6063 = vsel %vm647, %v6031, 0.0
        %v6064 = vsel %vm647, %v6032, 0.0
        %v6065 = vsel %vm647, %v6033, 0.0
        %v6066 = vsel %vm647, %v6034, 0.0
        %v6067 = vpack.c.bf16 %v6036, %v6035
        %v6068 = vpack.c.bf16 %v6038, %v6037
        %v6069 = vpack.c.bf16 %v6040, %v6039
        %v6070 = vpack.c.bf16 %v6042, %v6041
        %v6071 = vpack.c.bf16 %v6044, %v6043
        %v6072 = vpack.c.bf16 %v6046, %v6045
        %v6073 = vpack.c.bf16 %v6048, %v6047
        %v6074 = vpack.c.bf16 %v6050, %v6049
        %v6075 = vpack.c.bf16 %v6052, %v6051
        %v6076 = vpack.c.bf16 %v6054, %v6053
        %v6077 = vpack.c.bf16 %v6056, %v6055
        %v6078 = vpack.c.bf16 %v6058, %v6057
        %v6079 = vpack.c.bf16 %v6060, %v6059
        %v6080 = vpack.c.bf16 %v6062, %v6061
        %v6081 = vpack.c.bf16 %v6064, %v6063
        %v6082 = vpack.c.bf16 %v6066, %v6065
        %6083 = vst [vmem:[#allocation3 + $0x10] sm:$0xff] %v6067
        %6084 = vst [vmem:[#allocation3 + $0x58] sm:$0xff] %v6068
        %6085 = vst [vmem:[#allocation3 + $0xa0] sm:$0xff] %v6069
        %6086 = vst [vmem:[#allocation3 + $0xe8] sm:$0xff] %v6070
        %6087 = vst [vmem:[#allocation3 + $0x130] sm:$0xff] %v6071
        %6088 = vst [vmem:[#allocation3 + $0x178] sm:$0xff] %v6072
        %6089 = vst [vmem:[#allocation3 + $0x1c0] sm:$0xff] %v6073
        %6090 = vst [vmem:[#allocation3 + $0x208] sm:$0xff] %v6074
        %6091 = vst [vmem:[#allocation3 + $0x250] sm:$0xff] %v6075
        %6092 = vst [vmem:[#allocation3 + $0x298] sm:$0xff] %v6076
        %6093 = vst [vmem:[#allocation3 + $0x2e0] sm:$0xff] %v6077
        %6094 = vst [vmem:[#allocation3 + $0x328] sm:$0xff] %v6078
        %6095 = vst [vmem:[#allocation3 + $0x370] sm:$0xff] %v6079
        %6096 = vst [vmem:[#allocation3 + $0x3b8] sm:$0xff] %v6080
        %6097 = vst [vmem:[#allocation3 + $0x400] sm:$0xff] %v6081
        %6098 = vst [vmem:[#allocation3 + $0x448] sm:$0xff] %v6082
        %v6099 = vld [vmem:[%s355] sm:$0xff]
        %v6100 = vld [vmem:[%s355 + $0x8] sm:$0xff]
        %v6101 = vld [vmem:[%s355 + $0x10] sm:$0xff]
        %v6102 = vld [vmem:[%s355 + $0x18] sm:$0xff]
        %v6103 = vld [vmem:[%s355 + $0x20] sm:$0xff]
        %v6104 = vld [vmem:[%s355 + $0x28] sm:$0xff]
        %v6105 = vld [vmem:[%s355 + $0x30] sm:$0xff]
        %v6106 = vld [vmem:[%s355 + $0x38] sm:$0xff]
        %v6107 = vld [vmem:[%s355 + $0x40] sm:$0xff]
        %v6108 = vld [vmem:[%s355 + $0x48] sm:$0xff]
        %v6109 = vld [vmem:[%s355 + $0x50] sm:$0xff]
        %v6110 = vld [vmem:[%s355 + $0x58] sm:$0xff]
        %v6111 = vld [vmem:[%s355 + $0x60] sm:$0xff]
        %v6112 = vld [vmem:[%s355 + $0x68] sm:$0xff]
        %v6113 = vld [vmem:[%s355 + $0x70] sm:$0xff]
        %v6114 = vld [vmem:[%s355 + $0x78] sm:$0xff]
        %v6115 = vld [vmem:[%s355 + $0xa0] sm:$0xff]
        %v6116 = vld [vmem:[%s355 + $0xa8] sm:$0xff]
        %v6117 = vld [vmem:[%s355 + $0xb0] sm:$0xff]
        %v6118 = vld [vmem:[%s355 + $0xb8] sm:$0xff]
        %v6119 = vld [vmem:[%s355 + $0xc0] sm:$0xff]
        %v6120 = vld [vmem:[%s355 + $0xc8] sm:$0xff]
        %v6121 = vld [vmem:[%s355 + $0xd0] sm:$0xff]
        %v6122 = vld [vmem:[%s355 + $0xd8] sm:$0xff]
        %v6123 = vld [vmem:[%s355 + $0xe0] sm:$0xff]
        %v6124 = vld [vmem:[%s355 + $0xe8] sm:$0xff]
        %v6125 = vld [vmem:[%s355 + $0xf0] sm:$0xff]
        %v6126 = vld [vmem:[%s355 + $0xf8] sm:$0xff]
        %v6127 = vld [vmem:[%s355 + $0x100] sm:$0xff]
        %v6128 = vld [vmem:[%s355 + $0x108] sm:$0xff]
        %v6129 = vld [vmem:[%s355 + $0x110] sm:$0xff]
        %v6130 = vld [vmem:[%s355 + $0x118] sm:$0xff]
        %v6131 = vrot.slane %v6099, 7
        %v6132 = vrot.slane %v6100, 7
        %v6133 = vrot.slane %v6101, 7
        %v6134 = vrot.slane %v6102, 7
        %v6135 = vrot.slane %v6103, 7
        %v6136 = vrot.slane %v6104, 7
        %v6137 = vrot.slane %v6105, 7
        %v6138 = vrot.slane %v6106, 7
        %v6139 = vrot.slane %v6107, 7
        %v6140 = vrot.slane %v6108, 7
        %v6141 = vrot.slane %v6109, 7
        %v6142 = vrot.slane %v6110, 7
        %v6143 = vrot.slane %v6111, 7
        %v6144 = vrot.slane %v6112, 7
        %v6145 = vrot.slane %v6113, 7
        %v6146 = vrot.slane %v6114, 7
        %v6147 = vrot.slane %v6115, 7
        %v6148 = vrot.slane %v6116, 7
        %v6149 = vrot.slane %v6117, 7
        %v6150 = vrot.slane %v6118, 7
        %v6151 = vrot.slane %v6119, 7
        %v6152 = vrot.slane %v6120, 7
        %v6153 = vrot.slane %v6121, 7
        %v6154 = vrot.slane %v6122, 7
        %v6155 = vrot.slane %v6123, 7
        %v6156 = vrot.slane %v6124, 7
        %v6157 = vrot.slane %v6125, 7
        %v6158 = vrot.slane %v6126, 7
        %v6159 = vrot.slane %v6127, 7
        %v6160 = vrot.slane %v6128, 7
        %v6161 = vrot.slane %v6129, 7
        %v6162 = vrot.slane %v6130, 7
        %v6163 = vsel %vm453, %v6131, 0.0
        %v6164 = vsel %vm453, %v6132, 0.0
        %v6165 = vsel %vm453, %v6133, 0.0
        %v6166 = vsel %vm453, %v6134, 0.0
        %v6167 = vsel %vm453, %v6135, 0.0
        %v6168 = vsel %vm453, %v6136, 0.0
        %v6169 = vsel %vm453, %v6137, 0.0
        %v6170 = vsel %vm453, %v6138, 0.0
        %v6171 = vsel %vm453, %v6139, 0.0
        %v6172 = vsel %vm453, %v6140, 0.0
        %v6173 = vsel %vm453, %v6141, 0.0
        %v6174 = vsel %vm453, %v6142, 0.0
        %v6175 = vsel %vm453, %v6143, 0.0
        %v6176 = vsel %vm453, %v6144, 0.0
        %v6177 = vsel %vm453, %v6145, 0.0
        %v6178 = vsel %vm453, %v6146, 0.0
        %v6179 = vsel %vm453, %v6147, 0.0
        %v6180 = vsel %vm453, %v6148, 0.0
        %v6181 = vsel %vm453, %v6149, 0.0
        %v6182 = vsel %vm453, %v6150, 0.0
        %v6183 = vsel %vm453, %v6151, 0.0
        %v6184 = vsel %vm453, %v6152, 0.0
        %v6185 = vsel %vm453, %v6153, 0.0
        %v6186 = vsel %vm453, %v6154, 0.0
        %v6187 = vsel %vm453, %v6155, 0.0
        %v6188 = vsel %vm453, %v6156, 0.0
        %v6189 = vsel %vm453, %v6157, 0.0
        %v6190 = vsel %vm453, %v6158, 0.0
        %v6191 = vsel %vm453, %v6159, 0.0
        %v6192 = vsel %vm453, %v6160, 0.0
        %v6193 = vsel %vm453, %v6161, 0.0
        %v6194 = vsel %vm453, %v6162, 0.0
        %v6195 = vpack.c.bf16 %v6164, %v6163
        %v6196 = vpack.c.bf16 %v6166, %v6165
        %v6197 = vpack.c.bf16 %v6168, %v6167
        %v6198 = vpack.c.bf16 %v6170, %v6169
        %v6199 = vpack.c.bf16 %v6172, %v6171
        %v6200 = vpack.c.bf16 %v6174, %v6173
        %v6201 = vpack.c.bf16 %v6176, %v6175
        %v6202 = vpack.c.bf16 %v6178, %v6177
        %v6203 = vpack.c.bf16 %v6180, %v6179
        %v6204 = vpack.c.bf16 %v6182, %v6181
        %v6205 = vpack.c.bf16 %v6184, %v6183
        %v6206 = vpack.c.bf16 %v6186, %v6185
        %v6207 = vpack.c.bf16 %v6188, %v6187
        %v6208 = vpack.c.bf16 %v6190, %v6189
        %v6209 = vpack.c.bf16 %v6192, %v6191
        %v6210 = vpack.c.bf16 %v6194, %v6193
        %6211 = vst [vmem:[#allocation3 + $0x18] sm:$0xff] %v6195
        %6212 = vst [vmem:[#allocation3 + $0x60] sm:$0xff] %v6196
        %6213 = vst [vmem:[#allocation3 + $0xa8] sm:$0xff] %v6197
        %6214 = vst [vmem:[#allocation3 + $0xf0] sm:$0xff] %v6198
        %6215 = vst [vmem:[#allocation3 + $0x138] sm:$0xff] %v6199
        %6216 = vst [vmem:[#allocation3 + $0x180] sm:$0xff] %v6200
        %6217 = vst [vmem:[#allocation3 + $0x1c8] sm:$0xff] %v6201
        %6218 = vst [vmem:[#allocation3 + $0x210] sm:$0xff] %v6202
        %6219 = vst [vmem:[#allocation3 + $0x258] sm:$0xff] %v6203
        %6220 = vst [vmem:[#allocation3 + $0x2a0] sm:$0xff] %v6204
        %6221 = vst [vmem:[#allocation3 + $0x2e8] sm:$0xff] %v6205
        %6222 = vst [vmem:[#allocation3 + $0x330] sm:$0xff] %v6206
        %6223 = vst [vmem:[#allocation3 + $0x378] sm:$0xff] %v6207
        %6224 = vst [vmem:[#allocation3 + $0x3c0] sm:$0xff] %v6208
        %6225 = vst [vmem:[#allocation3 + $0x408] sm:$0xff] %v6209
        %6226 = vst [vmem:[#allocation3 + $0x450] sm:$0xff] %v6210
        %v6227 = vld [vmem:[%s355] sm:$0xff]
        %v6228 = vld [vmem:[%s355 + $0x8] sm:$0xff]
        %v6229 = vld [vmem:[%s355 + $0x10] sm:$0xff]
        %v6230 = vld [vmem:[%s355 + $0x18] sm:$0xff]
        %v6231 = vld [vmem:[%s355 + $0x20] sm:$0xff]
        %v6232 = vld [vmem:[%s355 + $0x28] sm:$0xff]
        %v6233 = vld [vmem:[%s355 + $0x30] sm:$0xff]
        %v6234 = vld [vmem:[%s355 + $0x38] sm:$0xff]
        %v6235 = vld [vmem:[%s355 + $0x40] sm:$0xff]
        %v6236 = vld [vmem:[%s355 + $0x48] sm:$0xff]
        %v6237 = vld [vmem:[%s355 + $0x50] sm:$0xff]
        %v6238 = vld [vmem:[%s355 + $0x58] sm:$0xff]
        %v6239 = vld [vmem:[%s355 + $0x60] sm:$0xff]
        %v6240 = vld [vmem:[%s355 + $0x68] sm:$0xff]
        %v6241 = vld [vmem:[%s355 + $0x70] sm:$0xff]
        %v6242 = vld [vmem:[%s355 + $0x78] sm:$0xff]
        %v6243 = vld [vmem:[%s355 + $0xa0] sm:$0xff]
        %v6244 = vld [vmem:[%s355 + $0xa8] sm:$0xff]
        %v6245 = vld [vmem:[%s355 + $0xb0] sm:$0xff]
        %v6246 = vld [vmem:[%s355 + $0xb8] sm:$0xff]
        %v6247 = vld [vmem:[%s355 + $0xc0] sm:$0xff]
        %v6248 = vld [vmem:[%s355 + $0xc8] sm:$0xff]
        %v6249 = vld [vmem:[%s355 + $0xd0] sm:$0xff]
        %v6250 = vld [vmem:[%s355 + $0xd8] sm:$0xff]
        %v6251 = vld [vmem:[%s355 + $0xe0] sm:$0xff]
        %v6252 = vld [vmem:[%s355 + $0xe8] sm:$0xff]
        %v6253 = vld [vmem:[%s355 + $0xf0] sm:$0xff]
        %v6254 = vld [vmem:[%s355 + $0xf8] sm:$0xff]
        %v6255 = vld [vmem:[%s355 + $0x100] sm:$0xff]
        %v6256 = vld [vmem:[%s355 + $0x108] sm:$0xff]
        %v6257 = vld [vmem:[%s355 + $0x110] sm:$0xff]
        %v6258 = vld [vmem:[%s355 + $0x118] sm:$0xff]
        %v6259 = vpack.c.bf16 %v6228, %v6227
        %v6260 = vpack.c.bf16 %v6230, %v6229
        %v6261 = vpack.c.bf16 %v6232, %v6231
        %v6262 = vpack.c.bf16 %v6234, %v6233
        %v6263 = vpack.c.bf16 %v6236, %v6235
        %v6264 = vpack.c.bf16 %v6238, %v6237
        %v6265 = vpack.c.bf16 %v6240, %v6239
        %v6266 = vpack.c.bf16 %v6242, %v6241
        %v6267 = vpack.c.bf16 %v6244, %v6243
        %v6268 = vpack.c.bf16 %v6246, %v6245
        %v6269 = vpack.c.bf16 %v6248, %v6247
        %v6270 = vpack.c.bf16 %v6250, %v6249
        %v6271 = vpack.c.bf16 %v6252, %v6251
        %v6272 = vpack.c.bf16 %v6254, %v6253
        %v6273 = vpack.c.bf16 %v6256, %v6255
        %v6274 = vpack.c.bf16 %v6258, %v6257
        %6275 = vst [vmem:[#allocation3 + $0x20] sm:$0xff] %v6259
        %6276 = vst [vmem:[#allocation3 + $0x68] sm:$0xff] %v6260
        %6277 = vst [vmem:[#allocation3 + $0xb0] sm:$0xff] %v6261
        %6278 = vst [vmem:[#allocation3 + $0xf8] sm:$0xff] %v6262
        %6279 = vst [vmem:[#allocation3 + $0x140] sm:$0xff] %v6263
        %6280 = vst [vmem:[#allocation3 + $0x188] sm:$0xff] %v6264
        %6281 = vst [vmem:[#allocation3 + $0x1d0] sm:$0xff] %v6265
        %6282 = vst [vmem:[#allocation3 + $0x218] sm:$0xff] %v6266
        %6283 = vst [vmem:[#allocation3 + $0x260] sm:$0xff] %v6267
        %6284 = vst [vmem:[#allocation3 + $0x2a8] sm:$0xff] %v6268
        %6285 = vst [vmem:[#allocation3 + $0x2f0] sm:$0xff] %v6269
        %6286 = vst [vmem:[#allocation3 + $0x338] sm:$0xff] %v6270
        %6287 = vst [vmem:[#allocation3 + $0x380] sm:$0xff] %v6271
        %6288 = vst [vmem:[#allocation3 + $0x3c8] sm:$0xff] %v6272
        %6289 = vst [vmem:[#allocation3 + $0x410] sm:$0xff] %v6273
        %6290 = vst [vmem:[#allocation3 + $0x458] sm:$0xff] %v6274
        %v6291 = vld [vmem:[%s355] sm:$0xff]
        %v6292 = vld [vmem:[%s355 + $0x8] sm:$0xff]
        %v6293 = vld [vmem:[%s355 + $0x10] sm:$0xff]
        %v6294 = vld [vmem:[%s355 + $0x18] sm:$0xff]
        %v6295 = vld [vmem:[%s355 + $0x20] sm:$0xff]
        %v6296 = vld [vmem:[%s355 + $0x28] sm:$0xff]
        %v6297 = vld [vmem:[%s355 + $0x30] sm:$0xff]
        %v6298 = vld [vmem:[%s355 + $0x38] sm:$0xff]
        %v6299 = vld [vmem:[%s355 + $0x40] sm:$0xff]
        %v6300 = vld [vmem:[%s355 + $0x48] sm:$0xff]
        %v6301 = vld [vmem:[%s355 + $0x50] sm:$0xff]
        %v6302 = vld [vmem:[%s355 + $0x58] sm:$0xff]
        %v6303 = vld [vmem:[%s355 + $0x60] sm:$0xff]
        %v6304 = vld [vmem:[%s355 + $0x68] sm:$0xff]
        %v6305 = vld [vmem:[%s355 + $0x70] sm:$0xff]
        %v6306 = vld [vmem:[%s355 + $0x78] sm:$0xff]
        %v6307 = vld [vmem:[%s355 + $0xa0] sm:$0xff]
        %v6308 = vld [vmem:[%s355 + $0xa8] sm:$0xff]
        %v6309 = vld [vmem:[%s355 + $0xb0] sm:$0xff]
        %v6310 = vld [vmem:[%s355 + $0xb8] sm:$0xff]
        %v6311 = vld [vmem:[%s355 + $0xc0] sm:$0xff]
        %v6312 = vld [vmem:[%s355 + $0xc8] sm:$0xff]
        %v6313 = vld [vmem:[%s355 + $0xd0] sm:$0xff]
        %v6314 = vld [vmem:[%s355 + $0xd8] sm:$0xff]
        %v6315 = vld [vmem:[%s355 + $0xe0] sm:$0xff]
        %v6316 = vld [vmem:[%s355 + $0xe8] sm:$0xff]
        %v6317 = vld [vmem:[%s355 + $0xf0] sm:$0xff]
        %v6318 = vld [vmem:[%s355 + $0xf8] sm:$0xff]
        %v6319 = vld [vmem:[%s355 + $0x100] sm:$0xff]
        %v6320 = vld [vmem:[%s355 + $0x108] sm:$0xff]
        %v6321 = vld [vmem:[%s355 + $0x110] sm:$0xff]
        %v6322 = vld [vmem:[%s355 + $0x118] sm:$0xff]
        %v6323 = vrot.slane %v6291, 1
        %v6324 = vrot.slane %v6292, 1
        %v6325 = vrot.slane %v6293, 1
        %v6326 = vrot.slane %v6294, 1
        %v6327 = vrot.slane %v6295, 1
        %v6328 = vrot.slane %v6296, 1
        %v6329 = vrot.slane %v6297, 1
        %v6330 = vrot.slane %v6298, 1
        %v6331 = vrot.slane %v6299, 1
        %v6332 = vrot.slane %v6300, 1
        %v6333 = vrot.slane %v6301, 1
        %v6334 = vrot.slane %v6302, 1
        %v6335 = vrot.slane %v6303, 1
        %v6336 = vrot.slane %v6304, 1
        %v6337 = vrot.slane %v6305, 1
        %v6338 = vrot.slane %v6306, 1
        %v6339 = vrot.slane %v6307, 1
        %v6340 = vrot.slane %v6308, 1
        %v6341 = vrot.slane %v6309, 1
        %v6342 = vrot.slane %v6310, 1
        %v6343 = vrot.slane %v6311, 1
        %v6344 = vrot.slane %v6312, 1
        %v6345 = vrot.slane %v6313, 1
        %v6346 = vrot.slane %v6314, 1
        %v6347 = vrot.slane %v6315, 1
        %v6348 = vrot.slane %v6316, 1
        %v6349 = vrot.slane %v6317, 1
        %v6350 = vrot.slane %v6318, 1
        %v6351 = vrot.slane %v6319, 1
        %v6352 = vrot.slane %v6320, 1
        %v6353 = vrot.slane %v6321, 1
        %v6354 = vrot.slane %v6322, 1
        %v6355 = vsel %vm647, %v6323, 0.0
        %v6356 = vsel %vm647, %v6324, 0.0
        %v6357 = vsel %vm647, %v6325, 0.0
        %v6358 = vsel %vm647, %v6326, 0.0
        %v6359 = vsel %vm647, %v6327, 0.0
        %v6360 = vsel %vm647, %v6328, 0.0
        %v6361 = vsel %vm647, %v6329, 0.0
        %v6362 = vsel %vm647, %v6330, 0.0
        %v6363 = vsel %vm647, %v6331, 0.0
        %v6364 = vsel %vm647, %v6332, 0.0
        %v6365 = vsel %vm647, %v6333, 0.0
        %v6366 = vsel %vm647, %v6334, 0.0
        %v6367 = vsel %vm647, %v6335, 0.0
        %v6368 = vsel %vm647, %v6336, 0.0
        %v6369 = vsel %vm647, %v6337, 0.0
        %v6370 = vsel %vm647, %v6338, 0.0
        %v6371 = vsel %vm647, %v6339, 0.0
        %v6372 = vsel %vm647, %v6340, 0.0
        %v6373 = vsel %vm647, %v6341, 0.0
        %v6374 = vsel %vm647, %v6342, 0.0
        %v6375 = vsel %vm647, %v6343, 0.0
        %v6376 = vsel %vm647, %v6344, 0.0
        %v6377 = vsel %vm647, %v6345, 0.0
        %v6378 = vsel %vm647, %v6346, 0.0
        %v6379 = vsel %vm647, %v6347, 0.0
        %v6380 = vsel %vm647, %v6348, 0.0
        %v6381 = vsel %vm647, %v6349, 0.0
        %v6382 = vsel %vm647, %v6350, 0.0
        %v6383 = vsel %vm647, %v6351, 0.0
        %v6384 = vsel %vm647, %v6352, 0.0
        %v6385 = vsel %vm647, %v6353, 0.0
        %v6386 = vsel %vm647, %v6354, 0.0
        %v6387 = vpack.c.bf16 %v6356, %v6355
        %v6388 = vpack.c.bf16 %v6358, %v6357
        %v6389 = vpack.c.bf16 %v6360, %v6359
        %v6390 = vpack.c.bf16 %v6362, %v6361
        %v6391 = vpack.c.bf16 %v6364, %v6363
        %v6392 = vpack.c.bf16 %v6366, %v6365
        %v6393 = vpack.c.bf16 %v6368, %v6367
        %v6394 = vpack.c.bf16 %v6370, %v6369
        %v6395 = vpack.c.bf16 %v6372, %v6371
        %v6396 = vpack.c.bf16 %v6374, %v6373
        %v6397 = vpack.c.bf16 %v6376, %v6375
        %v6398 = vpack.c.bf16 %v6378, %v6377
        %v6399 = vpack.c.bf16 %v6380, %v6379
        %v6400 = vpack.c.bf16 %v6382, %v6381
        %v6401 = vpack.c.bf16 %v6384, %v6383
        %v6402 = vpack.c.bf16 %v6386, %v6385
        %6403 = vst [vmem:[#allocation3 + $0x28] sm:$0xff] %v6387
        %6404 = vst [vmem:[#allocation3 + $0x70] sm:$0xff] %v6388
        %6405 = vst [vmem:[#allocation3 + $0xb8] sm:$0xff] %v6389
        %6406 = vst [vmem:[#allocation3 + $0x100] sm:$0xff] %v6390
        %6407 = vst [vmem:[#allocation3 + $0x148] sm:$0xff] %v6391
        %6408 = vst [vmem:[#allocation3 + $0x190] sm:$0xff] %v6392
        %6409 = vst [vmem:[#allocation3 + $0x1d8] sm:$0xff] %v6393
        %6410 = vst [vmem:[#allocation3 + $0x220] sm:$0xff] %v6394
        %6411 = vst [vmem:[#allocation3 + $0x268] sm:$0xff] %v6395
        %6412 = vst [vmem:[#allocation3 + $0x2b0] sm:$0xff] %v6396
        %6413 = vst [vmem:[#allocation3 + $0x2f8] sm:$0xff] %v6397
        %6414 = vst [vmem:[#allocation3 + $0x340] sm:$0xff] %v6398
        %6415 = vst [vmem:[#allocation3 + $0x388] sm:$0xff] %v6399
        %6416 = vst [vmem:[#allocation3 + $0x3d0] sm:$0xff] %v6400
        %6417 = vst [vmem:[#allocation3 + $0x418] sm:$0xff] %v6401
        %6418 = vst [vmem:[#allocation3 + $0x460] sm:$0xff] %v6402
        %v6419 = vld [vmem:[%s1032] sm:$0xff]
        %v6420 = vld [vmem:[%s1032 + $0x8] sm:$0xff]
        %v6421 = vld [vmem:[%s1032 + $0x10] sm:$0xff]
        %v6422 = vld [vmem:[%s1032 + $0x18] sm:$0xff]
        %v6423 = vld [vmem:[%s1032 + $0x20] sm:$0xff]
        %v6424 = vld [vmem:[%s1032 + $0x28] sm:$0xff]
        %v6425 = vld [vmem:[%s1032 + $0x30] sm:$0xff]
        %v6426 = vld [vmem:[%s1032 + $0x38] sm:$0xff]
        %v6427 = vld [vmem:[%s1032 + $0x40] sm:$0xff]
        %v6428 = vld [vmem:[%s1032 + $0x48] sm:$0xff]
        %v6429 = vld [vmem:[%s1032 + $0x50] sm:$0xff]
        %v6430 = vld [vmem:[%s1032 + $0x58] sm:$0xff]
        %v6431 = vld [vmem:[%s1032 + $0x60] sm:$0xff]
        %v6432 = vld [vmem:[%s1032 + $0x68] sm:$0xff]
        %v6433 = vld [vmem:[%s1032 + $0x70] sm:$0xff]
        %v6434 = vld [vmem:[%s1032 + $0x78] sm:$0xff]
        %v6435 = vld [vmem:[%s1032 + $0xa0] sm:$0xff]
        %v6436 = vld [vmem:[%s1032 + $0xa8] sm:$0xff]
        %v6437 = vld [vmem:[%s1032 + $0xb0] sm:$0xff]
        %v6438 = vld [vmem:[%s1032 + $0xb8] sm:$0xff]
        %v6439 = vld [vmem:[%s1032 + $0xc0] sm:$0xff]
        %v6440 = vld [vmem:[%s1032 + $0xc8] sm:$0xff]
        %v6441 = vld [vmem:[%s1032 + $0xd0] sm:$0xff]
        %v6442 = vld [vmem:[%s1032 + $0xd8] sm:$0xff]
        %v6443 = vld [vmem:[%s1032 + $0xe0] sm:$0xff]
        %v6444 = vld [vmem:[%s1032 + $0xe8] sm:$0xff]
        %v6445 = vld [vmem:[%s1032 + $0xf0] sm:$0xff]
        %v6446 = vld [vmem:[%s1032 + $0xf8] sm:$0xff]
        %v6447 = vld [vmem:[%s1032 + $0x100] sm:$0xff]
        %v6448 = vld [vmem:[%s1032 + $0x108] sm:$0xff]
        %v6449 = vld [vmem:[%s1032 + $0x110] sm:$0xff]
        %v6450 = vld [vmem:[%s1032 + $0x118] sm:$0xff]
        %v6451 = vrot.slane %v6419, 7
        %v6452 = vrot.slane %v6420, 7
        %v6453 = vrot.slane %v6421, 7
        %v6454 = vrot.slane %v6422, 7
        %v6455 = vrot.slane %v6423, 7
        %v6456 = vrot.slane %v6424, 7
        %v6457 = vrot.slane %v6425, 7
        %v6458 = vrot.slane %v6426, 7
        %v6459 = vrot.slane %v6427, 7
        %v6460 = vrot.slane %v6428, 7
        %v6461 = vrot.slane %v6429, 7
        %v6462 = vrot.slane %v6430, 7
        %v6463 = vrot.slane %v6431, 7
        %v6464 = vrot.slane %v6432, 7
        %v6465 = vrot.slane %v6433, 7
        %v6466 = vrot.slane %v6434, 7
        %v6467 = vrot.slane %v6435, 7
        %v6468 = vrot.slane %v6436, 7
        %v6469 = vrot.slane %v6437, 7
        %v6470 = vrot.slane %v6438, 7
        %v6471 = vrot.slane %v6439, 7
        %v6472 = vrot.slane %v6440, 7
        %v6473 = vrot.slane %v6441, 7
        %v6474 = vrot.slane %v6442, 7
        %v6475 = vrot.slane %v6443, 7
        %v6476 = vrot.slane %v6444, 7
        %v6477 = vrot.slane %v6445, 7
        %v6478 = vrot.slane %v6446, 7
        %v6479 = vrot.slane %v6447, 7
        %v6480 = vrot.slane %v6448, 7
        %v6481 = vrot.slane %v6449, 7
        %v6482 = vrot.slane %v6450, 7
        %v6483 = vsel %vm453, %v6451, 0.0
        %v6484 = vsel %vm453, %v6452, 0.0
        %v6485 = vsel %vm453, %v6453, 0.0
        %v6486 = vsel %vm453, %v6454, 0.0
        %v6487 = vsel %vm453, %v6455, 0.0
        %v6488 = vsel %vm453, %v6456, 0.0
        %v6489 = vsel %vm453, %v6457, 0.0
        %v6490 = vsel %vm453, %v6458, 0.0
        %v6491 = vsel %vm453, %v6459, 0.0
        %v6492 = vsel %vm453, %v6460, 0.0
        %v6493 = vsel %vm453, %v6461, 0.0
        %v6494 = vsel %vm453, %v6462, 0.0
        %v6495 = vsel %vm453, %v6463, 0.0
        %v6496 = vsel %vm453, %v6464, 0.0
        %v6497 = vsel %vm453, %v6465, 0.0
        %v6498 = vsel %vm453, %v6466, 0.0
        %v6499 = vsel %vm453, %v6467, 0.0
        %v6500 = vsel %vm453, %v6468, 0.0
        %v6501 = vsel %vm453, %v6469, 0.0
        %v6502 = vsel %vm453, %v6470, 0.0
        %v6503 = vsel %vm453, %v6471, 0.0
        %v6504 = vsel %vm453, %v6472, 0.0
        %v6505 = vsel %vm453, %v6473, 0.0
        %v6506 = vsel %vm453, %v6474, 0.0
        %v6507 = vsel %vm453, %v6475, 0.0
        %v6508 = vsel %vm453, %v6476, 0.0
        %v6509 = vsel %vm453, %v6477, 0.0
        %v6510 = vsel %vm453, %v6478, 0.0
        %v6511 = vsel %vm453, %v6479, 0.0
        %v6512 = vsel %vm453, %v6480, 0.0
        %v6513 = vsel %vm453, %v6481, 0.0
        %v6514 = vsel %vm453, %v6482, 0.0
        %v6515 = vpack.c.bf16 %v6484, %v6483
        %v6516 = vpack.c.bf16 %v6486, %v6485
        %v6517 = vpack.c.bf16 %v6488, %v6487
        %v6518 = vpack.c.bf16 %v6490, %v6489
        %v6519 = vpack.c.bf16 %v6492, %v6491
        %v6520 = vpack.c.bf16 %v6494, %v6493
        %v6521 = vpack.c.bf16 %v6496, %v6495
        %v6522 = vpack.c.bf16 %v6498, %v6497
        %v6523 = vpack.c.bf16 %v6500, %v6499
        %v6524 = vpack.c.bf16 %v6502, %v6501
        %v6525 = vpack.c.bf16 %v6504, %v6503
        %v6526 = vpack.c.bf16 %v6506, %v6505
        %v6527 = vpack.c.bf16 %v6508, %v6507
        %v6528 = vpack.c.bf16 %v6510, %v6509
        %v6529 = vpack.c.bf16 %v6512, %v6511
        %v6530 = vpack.c.bf16 %v6514, %v6513
        %6531 = vst [vmem:[#allocation3 + $0x30] sm:$0xff] %v6515
        %6532 = vst [vmem:[#allocation3 + $0x78] sm:$0xff] %v6516
        %6533 = vst [vmem:[#allocation3 + $0xc0] sm:$0xff] %v6517
        %6534 = vst [vmem:[#allocation3 + $0x108] sm:$0xff] %v6518
        %6535 = vst [vmem:[#allocation3 + $0x150] sm:$0xff] %v6519
        %6536 = vst [vmem:[#allocation3 + $0x198] sm:$0xff] %v6520
        %6537 = vst [vmem:[#allocation3 + $0x1e0] sm:$0xff] %v6521
        %6538 = vst [vmem:[#allocation3 + $0x228] sm:$0xff] %v6522
        %6539 = vst [vmem:[#allocation3 + $0x270] sm:$0xff] %v6523
        %6540 = vst [vmem:[#allocation3 + $0x2b8] sm:$0xff] %v6524
        %6541 = vst [vmem:[#allocation3 + $0x300] sm:$0xff] %v6525
        %6542 = vst [vmem:[#allocation3 + $0x348] sm:$0xff] %v6526
        %6543 = vst [vmem:[#allocation3 + $0x390] sm:$0xff] %v6527
        %6544 = vst [vmem:[#allocation3 + $0x3d8] sm:$0xff] %v6528
        %6545 = vst [vmem:[#allocation3 + $0x420] sm:$0xff] %v6529
        %6546 = vst [vmem:[#allocation3 + $0x468] sm:$0xff] %v6530
        %v6547 = vld [vmem:[%s1032] sm:$0xff]
        %v6548 = vld [vmem:[%s1032 + $0x8] sm:$0xff]
        %v6549 = vld [vmem:[%s1032 + $0x10] sm:$0xff]
        %v6550 = vld [vmem:[%s1032 + $0x18] sm:$0xff]
        %v6551 = vld [vmem:[%s1032 + $0x20] sm:$0xff]
        %v6552 = vld [vmem:[%s1032 + $0x28] sm:$0xff]
        %v6553 = vld [vmem:[%s1032 + $0x30] sm:$0xff]
        %v6554 = vld [vmem:[%s1032 + $0x38] sm:$0xff]
        %v6555 = vld [vmem:[%s1032 + $0x40] sm:$0xff]
        %v6556 = vld [vmem:[%s1032 + $0x48] sm:$0xff]
        %v6557 = vld [vmem:[%s1032 + $0x50] sm:$0xff]
        %v6558 = vld [vmem:[%s1032 + $0x58] sm:$0xff]
        %v6559 = vld [vmem:[%s1032 + $0x60] sm:$0xff]
        %v6560 = vld [vmem:[%s1032 + $0x68] sm:$0xff]
        %v6561 = vld [vmem:[%s1032 + $0x70] sm:$0xff]
        %v6562 = vld [vmem:[%s1032 + $0x78] sm:$0xff]
        %v6563 = vld [vmem:[%s1032 + $0xa0] sm:$0xff]
        %v6564 = vld [vmem:[%s1032 + $0xa8] sm:$0xff]
        %v6565 = vld [vmem:[%s1032 + $0xb0] sm:$0xff]
        %v6566 = vld [vmem:[%s1032 + $0xb8] sm:$0xff]
        %v6567 = vld [vmem:[%s1032 + $0xc0] sm:$0xff]
        %v6568 = vld [vmem:[%s1032 + $0xc8] sm:$0xff]
        %v6569 = vld [vmem:[%s1032 + $0xd0] sm:$0xff]
        %v6570 = vld [vmem:[%s1032 + $0xd8] sm:$0xff]
        %v6571 = vld [vmem:[%s1032 + $0xe0] sm:$0xff]
        %v6572 = vld [vmem:[%s1032 + $0xe8] sm:$0xff]
        %v6573 = vld [vmem:[%s1032 + $0xf0] sm:$0xff]
        %v6574 = vld [vmem:[%s1032 + $0xf8] sm:$0xff]
        %v6575 = vld [vmem:[%s1032 + $0x100] sm:$0xff]
        %v6576 = vld [vmem:[%s1032 + $0x108] sm:$0xff]
        %v6577 = vld [vmem:[%s1032 + $0x110] sm:$0xff]
        %v6578 = vld [vmem:[%s1032 + $0x118] sm:$0xff]
        %v6579 = vpack.c.bf16 %v6548, %v6547
        %v6580 = vpack.c.bf16 %v6550, %v6549
        %v6581 = vpack.c.bf16 %v6552, %v6551
        %v6582 = vpack.c.bf16 %v6554, %v6553
        %v6583 = vpack.c.bf16 %v6556, %v6555
        %v6584 = vpack.c.bf16 %v6558, %v6557
        %v6585 = vpack.c.bf16 %v6560, %v6559
        %v6586 = vpack.c.bf16 %v6562, %v6561
        %v6587 = vpack.c.bf16 %v6564, %v6563
        %v6588 = vpack.c.bf16 %v6566, %v6565
        %v6589 = vpack.c.bf16 %v6568, %v6567
        %v6590 = vpack.c.bf16 %v6570, %v6569
        %v6591 = vpack.c.bf16 %v6572, %v6571
        %v6592 = vpack.c.bf16 %v6574, %v6573
        %v6593 = vpack.c.bf16 %v6576, %v6575
        %v6594 = vpack.c.bf16 %v6578, %v6577
        %6595 = vst [vmem:[#allocation3 + $0x38] sm:$0xff] %v6579
        %6596 = vst [vmem:[#allocation3 + $0x80] sm:$0xff] %v6580
        %6597 = vst [vmem:[#allocation3 + $0xc8] sm:$0xff] %v6581
        %6598 = vst [vmem:[#allocation3 + $0x110] sm:$0xff] %v6582
        %6599 = vst [vmem:[#allocation3 + $0x158] sm:$0xff] %v6583
        %6600 = vst [vmem:[#allocation3 + $0x1a0] sm:$0xff] %v6584
        %6601 = vst [vmem:[#allocation3 + $0x1e8] sm:$0xff] %v6585
        %6602 = vst [vmem:[#allocation3 + $0x230] sm:$0xff] %v6586
        %6603 = vst [vmem:[#allocation3 + $0x278] sm:$0xff] %v6587
        %6604 = vst [vmem:[#allocation3 + $0x2c0] sm:$0xff] %v6588
        %6605 = vst [vmem:[#allocation3 + $0x308] sm:$0xff] %v6589
        %6606 = vst [vmem:[#allocation3 + $0x350] sm:$0xff] %v6590
        %6607 = vst [vmem:[#allocation3 + $0x398] sm:$0xff] %v6591
        %6608 = vst [vmem:[#allocation3 + $0x3e0] sm:$0xff] %v6592
        %6609 = vst [vmem:[#allocation3 + $0x428] sm:$0xff] %v6593
        %6610 = vst [vmem:[#allocation3 + $0x470] sm:$0xff] %v6594
        %v6611 = vld [vmem:[%s1032] sm:$0xff]
        %v6612 = vld [vmem:[%s1032 + $0x8] sm:$0xff]
        %v6613 = vld [vmem:[%s1032 + $0x10] sm:$0xff]
        %v6614 = vld [vmem:[%s1032 + $0x18] sm:$0xff]
        %v6615 = vld [vmem:[%s1032 + $0x20] sm:$0xff]
        %v6616 = vld [vmem:[%s1032 + $0x28] sm:$0xff]
        %v6617 = vld [vmem:[%s1032 + $0x30] sm:$0xff]
        %v6618 = vld [vmem:[%s1032 + $0x38] sm:$0xff]
        %v6619 = vld [vmem:[%s1032 + $0x40] sm:$0xff]
        %v6620 = vld [vmem:[%s1032 + $0x48] sm:$0xff]
        %v6621 = vld [vmem:[%s1032 + $0x50] sm:$0xff]
        %v6622 = vld [vmem:[%s1032 + $0x58] sm:$0xff]
        %v6623 = vld [vmem:[%s1032 + $0x60] sm:$0xff]
        %v6624 = vld [vmem:[%s1032 + $0x68] sm:$0xff]
        %v6625 = vld [vmem:[%s1032 + $0x70] sm:$0xff]
        %v6626 = vld [vmem:[%s1032 + $0x78] sm:$0xff]
        %v6627 = vld [vmem:[%s1032 + $0xa0] sm:$0xff]
        %v6628 = vld [vmem:[%s1032 + $0xa8] sm:$0xff]
        %v6629 = vld [vmem:[%s1032 + $0xb0] sm:$0xff]
        %v6630 = vld [vmem:[%s1032 + $0xb8] sm:$0xff]
        %v6631 = vld [vmem:[%s1032 + $0xc0] sm:$0xff]
        %v6632 = vld [vmem:[%s1032 + $0xc8] sm:$0xff]
        %v6633 = vld [vmem:[%s1032 + $0xd0] sm:$0xff]
        %v6634 = vld [vmem:[%s1032 + $0xd8] sm:$0xff]
        %v6635 = vld [vmem:[%s1032 + $0xe0] sm:$0xff]
        %v6636 = vld [vmem:[%s1032 + $0xe8] sm:$0xff]
        %v6637 = vld [vmem:[%s1032 + $0xf0] sm:$0xff]
        %v6638 = vld [vmem:[%s1032 + $0xf8] sm:$0xff]
        %v6639 = vld [vmem:[%s1032 + $0x100] sm:$0xff]
        %v6640 = vld [vmem:[%s1032 + $0x108] sm:$0xff]
        %v6641 = vld [vmem:[%s1032 + $0x110] sm:$0xff]
        %v6642 = vld [vmem:[%s1032 + $0x118] sm:$0xff]
        %v6643 = vrot.slane %v6611, 1
        %v6644 = vrot.slane %v6612, 1
        %v6645 = vrot.slane %v6613, 1
        %v6646 = vrot.slane %v6614, 1
        %v6647 = vrot.slane %v6615, 1
        %v6648 = vrot.slane %v6616, 1
        %v6649 = vrot.slane %v6617, 1
        %v6650 = vrot.slane %v6618, 1
        %v6651 = vrot.slane %v6619, 1
        %v6652 = vrot.slane %v6620, 1
        %v6653 = vrot.slane %v6621, 1
        %v6654 = vrot.slane %v6622, 1
        %v6655 = vrot.slane %v6623, 1
        %v6656 = vrot.slane %v6624, 1
        %v6657 = vrot.slane %v6625, 1
        %v6658 = vrot.slane %v6626, 1
        %v6659 = vrot.slane %v6627, 1
        %v6660 = vrot.slane %v6628, 1
        %v6661 = vrot.slane %v6629, 1
        %v6662 = vrot.slane %v6630, 1
        %v6663 = vrot.slane %v6631, 1
        %v6664 = vrot.slane %v6632, 1
        %v6665 = vrot.slane %v6633, 1
        %v6666 = vrot.slane %v6634, 1
        %v6667 = vrot.slane %v6635, 1
        %v6668 = vrot.slane %v6636, 1
        %v6669 = vrot.slane %v6637, 1
        %v6670 = vrot.slane %v6638, 1
        %v6671 = vrot.slane %v6639, 1
        %v6672 = vrot.slane %v6640, 1
        %v6673 = vrot.slane %v6641, 1
        %v6674 = vrot.slane %v6642, 1
        %v6675 = vsel %vm647, %v6643, 0.0
        %v6676 = vsel %vm647, %v6644, 0.0
        %v6677 = vsel %vm647, %v6645, 0.0
        %v6678 = vsel %vm647, %v6646, 0.0
        %v6679 = vsel %vm647, %v6647, 0.0
        %v6680 = vsel %vm647, %v6648, 0.0
        %v6681 = vsel %vm647, %v6649, 0.0
        %v6682 = vsel %vm647, %v6650, 0.0
        %v6683 = vsel %vm647, %v6651, 0.0
        %v6684 = vsel %vm647, %v6652, 0.0
        %v6685 = vsel %vm647, %v6653, 0.0
        %v6686 = vsel %vm647, %v6654, 0.0
        %v6687 = vsel %vm647, %v6655, 0.0
        %v6688 = vsel %vm647, %v6656, 0.0
        %v6689 = vsel %vm647, %v6657, 0.0
        %v6690 = vsel %vm647, %v6658, 0.0
        %v6691 = vsel %vm647, %v6659, 0.0
        %v6692 = vsel %vm647, %v6660, 0.0
        %v6693 = vsel %vm647, %v6661, 0.0
        %v6694 = vsel %vm647, %v6662, 0.0
        %v6695 = vsel %vm647, %v6663, 0.0
        %v6696 = vsel %vm647, %v6664, 0.0
        %v6697 = vsel %vm647, %v6665, 0.0
        %v6698 = vsel %vm647, %v6666, 0.0
        %v6699 = vsel %vm647, %v6667, 0.0
        %v6700 = vsel %vm647, %v6668, 0.0
        %v6701 = vsel %vm647, %v6669, 0.0
        %v6702 = vsel %vm647, %v6670, 0.0
        %v6703 = vsel %vm647, %v6671, 0.0
        %v6704 = vsel %vm647, %v6672, 0.0
        %v6705 = vsel %vm647, %v6673, 0.0
        %v6706 = vsel %vm647, %v6674, 0.0
        %v6707 = vpack.c.bf16 %v6676, %v6675
        %v6708 = vpack.c.bf16 %v6678, %v6677
        %v6709 = vpack.c.bf16 %v6680, %v6679
        %v6710 = vpack.c.bf16 %v6682, %v6681
        %v6711 = vpack.c.bf16 %v6684, %v6683
        %v6712 = vpack.c.bf16 %v6686, %v6685
        %v6713 = vpack.c.bf16 %v6688, %v6687
        %v6714 = vpack.c.bf16 %v6690, %v6689
        %v6715 = vpack.c.bf16 %v6692, %v6691
        %v6716 = vpack.c.bf16 %v6694, %v6693
        %v6717 = vpack.c.bf16 %v6696, %v6695
        %v6718 = vpack.c.bf16 %v6698, %v6697
        %v6719 = vpack.c.bf16 %v6700, %v6699
        %v6720 = vpack.c.bf16 %v6702, %v6701
        %v6721 = vpack.c.bf16 %v6704, %v6703
        %v6722 = vpack.c.bf16 %v6706, %v6705
        %6723 = vst [vmem:[#allocation3 + $0x40] sm:$0xff] %v6707
        %6724 = vst [vmem:[#allocation3 + $0x88] sm:$0xff] %v6708
        %6725 = vst [vmem:[#allocation3 + $0xd0] sm:$0xff] %v6709
        %6726 = vst [vmem:[#allocation3 + $0x118] sm:$0xff] %v6710
        %6727 = vst [vmem:[#allocation3 + $0x160] sm:$0xff] %v6711
        %6728 = vst [vmem:[#allocation3 + $0x1a8] sm:$0xff] %v6712
        %6729 = vst [vmem:[#allocation3 + $0x1f0] sm:$0xff] %v6713
        %6730 = vst [vmem:[#allocation3 + $0x238] sm:$0xff] %v6714
        %6731 = vst [vmem:[#allocation3 + $0x280] sm:$0xff] %v6715
        %6732 = vst [vmem:[#allocation3 + $0x2c8] sm:$0xff] %v6716
        %6733 = vst [vmem:[#allocation3 + $0x310] sm:$0xff] %v6717
        %6734 = vst [vmem:[#allocation3 + $0x358] sm:$0xff] %v6718
        %6735 = vst [vmem:[#allocation3 + $0x3a0] sm:$0xff] %v6719
        %6736 = vst [vmem:[#allocation3 + $0x3e8] sm:$0xff] %v6720
        %6737 = vst [vmem:[#allocation3 + $0x430] sm:$0xff] %v6721
        %6738 = vst [vmem:[#allocation3 + $0x478] sm:$0xff] %v6722
        %v6739 = vld [vmem:[#allocation3] sm:$0xff]
        %v6740 = vld [vmem:[#allocation3 + $0x8] sm:$0xff]
        %v6741 = vld [vmem:[#allocation3 + $0x10] sm:$0xff]
        %v6742 = vld [vmem:[#allocation3 + $0x18] sm:$0xff]
        %v6743 = vld [vmem:[#allocation3 + $0x20] sm:$0xff]
        %v6744 = vld [vmem:[#allocation3 + $0x28] sm:$0xff]
        %v6745 = vld [vmem:[#allocation3 + $0x30] sm:$0xff]
        %v6746 = vld [vmem:[#allocation3 + $0x38] sm:$0xff]
        %v6747 = vld [vmem:[#allocation3 + $0x40] sm:$0xff]
        %v6748 = vld [vmem:[#allocation3 + $0x48] sm:$0xff]
        %v6749 = vld [vmem:[#allocation3 + $0x50] sm:$0xff]
        %v6750 = vld [vmem:[#allocation3 + $0x58] sm:$0xff]
        %v6751 = vld [vmem:[#allocation3 + $0x60] sm:$0xff]
        %v6752 = vld [vmem:[#allocation3 + $0x68] sm:$0xff]
        %v6753 = vld [vmem:[#allocation3 + $0x70] sm:$0xff]
        %v6754 = vld [vmem:[#allocation3 + $0x78] sm:$0xff]
        %v6755 = vld [vmem:[#allocation3 + $0x80] sm:$0xff]
        %v6756 = vld [vmem:[#allocation3 + $0x88] sm:$0xff]
        %v6757 = vld [vmem:[#allocation3 + $0x90] sm:$0xff]
        %v6758 = vld [vmem:[#allocation3 + $0x98] sm:$0xff]
        %v6759 = vld [vmem:[#allocation3 + $0xa0] sm:$0xff]
        %v6760 = vld [vmem:[#allocation3 + $0xa8] sm:$0xff]
        %v6761 = vld [vmem:[#allocation3 + $0xb0] sm:$0xff]
        %v6762 = vld [vmem:[#allocation3 + $0xb8] sm:$0xff]
        %v6763 = vld [vmem:[#allocation3 + $0xc0] sm:$0xff]
        %v6764 = vld [vmem:[#allocation3 + $0xc8] sm:$0xff]
        %v6765 = vld [vmem:[#allocation3 + $0xd0] sm:$0xff]
        %v6766 = vld [vmem:[#allocation3 + $0xd8] sm:$0xff]
        %v6767 = vld [vmem:[#allocation3 + $0xe0] sm:$0xff]
        %v6768 = vld [vmem:[#allocation3 + $0xe8] sm:$0xff]
        %v6769 = vld [vmem:[#allocation3 + $0xf0] sm:$0xff]
        %v6770 = vld [vmem:[#allocation3 + $0xf8] sm:$0xff]
        %v6771 = vld [vmem:[#allocation3 + $0x100] sm:$0xff]
        %v6772 = vld [vmem:[#allocation3 + $0x108] sm:$0xff]
        %v6773 = vld [vmem:[#allocation3 + $0x110] sm:$0xff]
        %v6774 = vld [vmem:[#allocation3 + $0x118] sm:$0xff]
        %v6775 = vld [vmem:[#allocation3 + $0x120] sm:$0xff]
        %v6776 = vld [vmem:[#allocation3 + $0x128] sm:$0xff]
        %v6777 = vld [vmem:[#allocation3 + $0x130] sm:$0xff]
        %v6778 = vld [vmem:[#allocation3 + $0x138] sm:$0xff]
        %v6779 = vld [vmem:[#allocation3 + $0x140] sm:$0xff]
        %v6780 = vld [vmem:[#allocation3 + $0x148] sm:$0xff]
        %v6781 = vld [vmem:[#allocation3 + $0x150] sm:$0xff]
        %v6782 = vld [vmem:[#allocation3 + $0x158] sm:$0xff]
        %v6783 = vld [vmem:[#allocation3 + $0x160] sm:$0xff]
        %v6784 = vld [vmem:[#allocation3 + $0x168] sm:$0xff]
        %v6785 = vld [vmem:[#allocation3 + $0x170] sm:$0xff]
        %v6786 = vld [vmem:[#allocation3 + $0x178] sm:$0xff]
        %v6787 = vld [vmem:[#allocation3 + $0x180] sm:$0xff]
        %v6788 = vld [vmem:[#allocation3 + $0x188] sm:$0xff]
        %v6789 = vld [vmem:[#allocation3 + $0x190] sm:$0xff]
        %v6790 = vld [vmem:[#allocation3 + $0x198] sm:$0xff]
        %v6791 = vld [vmem:[#allocation3 + $0x1a0] sm:$0xff]
        %v6792 = vld [vmem:[#allocation3 + $0x1a8] sm:$0xff]
        %v6793 = vld [vmem:[#allocation3 + $0x1b0] sm:$0xff]
        %v6794 = vld [vmem:[#allocation3 + $0x1b8] sm:$0xff]
        %v6795 = vld [vmem:[#allocation3 + $0x1c0] sm:$0xff]
        %v6796 = vld [vmem:[#allocation3 + $0x1c8] sm:$0xff]
        %v6797 = vld [vmem:[#allocation3 + $0x1d0] sm:$0xff]
        %v6798 = vld [vmem:[#allocation3 + $0x1d8] sm:$0xff]
        %v6799 = vld [vmem:[#allocation3 + $0x1e0] sm:$0xff]
        %v6800 = vld [vmem:[#allocation3 + $0x1e8] sm:$0xff]
        %v6801 = vld [vmem:[#allocation3 + $0x1f0] sm:$0xff]
        %v6802 = vld [vmem:[#allocation3 + $0x1f8] sm:$0xff]
        %v6803 = vld [vmem:[#allocation3 + $0x200] sm:$0xff]
        %v6804 = vld [vmem:[#allocation3 + $0x208] sm:$0xff]
        %v6805 = vld [vmem:[#allocation3 + $0x210] sm:$0xff]
        %v6806 = vld [vmem:[#allocation3 + $0x218] sm:$0xff]
        %v6807 = vld [vmem:[#allocation3 + $0x220] sm:$0xff]
        %v6808 = vld [vmem:[#allocation3 + $0x228] sm:$0xff]
        %v6809 = vld [vmem:[#allocation3 + $0x230] sm:$0xff]
        %v6810 = vld [vmem:[#allocation3 + $0x238] sm:$0xff]
        %v6811 = vld [vmem:[#allocation3 + $0x240] sm:$0xff]
        %v6812 = vld [vmem:[#allocation3 + $0x248] sm:$0xff]
        %v6813 = vld [vmem:[#allocation3 + $0x250] sm:$0xff]
        %v6814 = vld [vmem:[#allocation3 + $0x258] sm:$0xff]
        %v6815 = vld [vmem:[#allocation3 + $0x260] sm:$0xff]
        %v6816 = vld [vmem:[#allocation3 + $0x268] sm:$0xff]
        %v6817 = vld [vmem:[#allocation3 + $0x270] sm:$0xff]
        %v6818 = vld [vmem:[#allocation3 + $0x278] sm:$0xff]
        %v6819 = vld [vmem:[#allocation3 + $0x280] sm:$0xff]
        %v6820 = vld [vmem:[#allocation3 + $0x288] sm:$0xff]
        %v6821 = vld [vmem:[#allocation3 + $0x290] sm:$0xff]
        %v6822 = vld [vmem:[#allocation3 + $0x298] sm:$0xff]
        %v6823 = vld [vmem:[#allocation3 + $0x2a0] sm:$0xff]
        %v6824 = vld [vmem:[#allocation3 + $0x2a8] sm:$0xff]
        %v6825 = vld [vmem:[#allocation3 + $0x2b0] sm:$0xff]
        %v6826 = vld [vmem:[#allocation3 + $0x2b8] sm:$0xff]
        %v6827 = vld [vmem:[#allocation3 + $0x2c0] sm:$0xff]
        %v6828 = vld [vmem:[#allocation3 + $0x2c8] sm:$0xff]
        %v6829 = vld [vmem:[#allocation3 + $0x2d0] sm:$0xff]
        %v6830 = vld [vmem:[#allocation3 + $0x2d8] sm:$0xff]
        %v6831 = vld [vmem:[#allocation3 + $0x2e0] sm:$0xff]
        %v6832 = vld [vmem:[#allocation3 + $0x2e8] sm:$0xff]
        %v6833 = vld [vmem:[#allocation3 + $0x2f0] sm:$0xff]
        %v6834 = vld [vmem:[#allocation3 + $0x2f8] sm:$0xff]
        %v6835 = vld [vmem:[#allocation3 + $0x300] sm:$0xff]
        %v6836 = vld [vmem:[#allocation3 + $0x308] sm:$0xff]
        %v6837 = vld [vmem:[#allocation3 + $0x310] sm:$0xff]
        %v6838 = vld [vmem:[#allocation3 + $0x318] sm:$0xff]
        %v6839 = vld [vmem:[#allocation3 + $0x320] sm:$0xff]
        %v6840 = vld [vmem:[#allocation3 + $0x328] sm:$0xff]
        %v6841 = vld [vmem:[#allocation3 + $0x330] sm:$0xff]
        %v6842 = vld [vmem:[#allocation3 + $0x338] sm:$0xff]
        %v6843 = vld [vmem:[#allocation3 + $0x340] sm:$0xff]
        %v6844 = vld [vmem:[#allocation3 + $0x348] sm:$0xff]
        %v6845 = vld [vmem:[#allocation3 + $0x350] sm:$0xff]
        %v6846 = vld [vmem:[#allocation3 + $0x358] sm:$0xff]
        %v6847 = vld [vmem:[#allocation3 + $0x360] sm:$0xff]
        %v6848 = vld [vmem:[#allocation3 + $0x368] sm:$0xff]
        %v6849 = vld [vmem:[#allocation3 + $0x370] sm:$0xff]
        %v6850 = vld [vmem:[#allocation3 + $0x378] sm:$0xff]
        %v6851 = vld [vmem:[#allocation3 + $0x380] sm:$0xff]
        %v6852 = vld [vmem:[#allocation3 + $0x388] sm:$0xff]
        %v6853 = vld [vmem:[#allocation3 + $0x390] sm:$0xff]
        %v6854 = vld [vmem:[#allocation3 + $0x398] sm:$0xff]
        %v6855 = vld [vmem:[#allocation3 + $0x3a0] sm:$0xff]
        %v6856 = vld [vmem:[#allocation3 + $0x3a8] sm:$0xff]
        %v6857 = vld [vmem:[#allocation3 + $0x3b0] sm:$0xff]
        %v6858 = vld [vmem:[#allocation3 + $0x3b8] sm:$0xff]
        %v6859 = vld [vmem:[#allocation3 + $0x3c0] sm:$0xff]
        %v6860 = vld [vmem:[#allocation3 + $0x3c8] sm:$0xff]
        %v6861 = vld [vmem:[#allocation3 + $0x3d0] sm:$0xff]
        %v6862 = vld [vmem:[#allocation3 + $0x3d8] sm:$0xff]
        %v6863 = vld [vmem:[#allocation3 + $0x3e0] sm:$0xff]
        %v6864 = vld [vmem:[#allocation3 + $0x3e8] sm:$0xff]
        %v6865 = vld [vmem:[#allocation3 + $0x3f0] sm:$0xff]
        %v6866 = vld [vmem:[#allocation3 + $0x3f8] sm:$0xff]
        %v6867 = vld [vmem:[#allocation3 + $0x400] sm:$0xff]
        %v6868 = vld [vmem:[#allocation3 + $0x408] sm:$0xff]
        %v6869 = vld [vmem:[#allocation3 + $0x410] sm:$0xff]
        %v6870 = vld [vmem:[#allocation3 + $0x418] sm:$0xff]
        %v6871 = vld [vmem:[#allocation3 + $0x420] sm:$0xff]
        %v6872 = vld [vmem:[#allocation3 + $0x428] sm:$0xff]
        %v6873 = vld [vmem:[#allocation3 + $0x430] sm:$0xff]
        %v6874 = vld [vmem:[#allocation3 + $0x438] sm:$0xff]
        %v6875 = vld [vmem:[#allocation3 + $0x440] sm:$0xff]
        %v6876 = vld [vmem:[#allocation3 + $0x448] sm:$0xff]
        %v6877 = vld [vmem:[#allocation3 + $0x450] sm:$0xff]
        %v6878 = vld [vmem:[#allocation3 + $0x458] sm:$0xff]
        %v6879 = vld [vmem:[#allocation3 + $0x460] sm:$0xff]
        %v6880 = vld [vmem:[#allocation3 + $0x468] sm:$0xff]
        %v6881 = vld [vmem:[#allocation3 + $0x470] sm:$0xff]
        %v6882 = vld [vmem:[#allocation3 + $0x478] sm:$0xff]
        %v6883 = vld [vmem:[#allocation10] sm:$0xff]
        %v6884 = vld [vmem:[#allocation10 + $0x8] sm:$0xff]
        %v6885 = vld [vmem:[#allocation10 + $0x10] sm:$0xff]
        %v6886 = vld [vmem:[#allocation10 + $0x18] sm:$0xff]
        %v6887 = vld [vmem:[#allocation10 + $0x20] sm:$0xff]
        %v6888 = vld [vmem:[#allocation10 + $0x28] sm:$0xff]
        %v6889 = vld [vmem:[#allocation10 + $0x30] sm:$0xff]
        %v6890 = vld [vmem:[#allocation10 + $0x38] sm:$0xff]
        %v6891 = vld [vmem:[#allocation10 + $0x40] sm:$0xff]
        %v6892 = vld [vmem:[#allocation10 + $0x48] sm:$0xff]
        %v6893 = vld [vmem:[#allocation10 + $0x50] sm:$0xff]
        %v6894 = vld [vmem:[#allocation10 + $0x58] sm:$0xff]
        %v6895 = vld [vmem:[#allocation10 + $0x60] sm:$0xff]
        %v6896 = vld [vmem:[#allocation10 + $0x68] sm:$0xff]
        %v6897 = vld [vmem:[#allocation10 + $0x70] sm:$0xff]
        %v6898 = vld [vmem:[#allocation10 + $0x78] sm:$0xff]
        %v6899 = vld [vmem:[#allocation10 + $0x80] sm:$0xff]
        %v6900 = vld [vmem:[#allocation10 + $0x88] sm:$0xff]
        %v6901 = vld [vmem:[#allocation10 + $0x90] sm:$0xff]
        %v6902 = vld [vmem:[#allocation10 + $0x98] sm:$0xff]
        %v6903 = vld [vmem:[#allocation10 + $0xa0] sm:$0xff]
        %v6904 = vld [vmem:[#allocation10 + $0xa8] sm:$0xff]
        %v6905 = vld [vmem:[#allocation10 + $0xb0] sm:$0xff]
        %v6906 = vld [vmem:[#allocation10 + $0xb8] sm:$0xff]
        %v6907 = vld [vmem:[#allocation10 + $0xc0] sm:$0xff]
        %v6908 = vld [vmem:[#allocation10 + $0xc8] sm:$0xff]
        %v6909 = vld [vmem:[#allocation10 + $0xd0] sm:$0xff]
        %v6910 = vld [vmem:[#allocation10 + $0xd8] sm:$0xff]
        %v6911 = vld [vmem:[#allocation10 + $0xe0] sm:$0xff]
        %v6912 = vld [vmem:[#allocation10 + $0xe8] sm:$0xff]
        %v6913 = vld [vmem:[#allocation10 + $0xf0] sm:$0xff]
        %v6914 = vld [vmem:[#allocation10 + $0xf8] sm:$0xff]
        %v6915 = vld [vmem:[#allocation10 + $0x100] sm:$0xff]
        %v6916 = vld [vmem:[#allocation10 + $0x108] sm:$0xff]
        %v6917 = vld [vmem:[#allocation10 + $0x110] sm:$0xff]
        %v6918 = vld [vmem:[#allocation10 + $0x118] sm:$0xff]
        %v6919 = vld [vmem:[#allocation10 + $0x120] sm:$0xff]
        %v6920 = vld [vmem:[#allocation10 + $0x128] sm:$0xff]
        %v6921 = vld [vmem:[#allocation10 + $0x130] sm:$0xff]
        %v6922 = vld [vmem:[#allocation10 + $0x138] sm:$0xff]
        %v6923 = vld [vmem:[#allocation10 + $0x140] sm:$0xff]
        %v6924 = vld [vmem:[#allocation10 + $0x148] sm:$0xff]
        %v6925 = vld [vmem:[#allocation10 + $0x150] sm:$0xff]
        %v6926 = vld [vmem:[#allocation10 + $0x158] sm:$0xff]
        %v6927 = vld [vmem:[#allocation10 + $0x160] sm:$0xff]
        %v6928 = vld [vmem:[#allocation10 + $0x168] sm:$0xff]
        %v6929 = vld [vmem:[#allocation10 + $0x170] sm:$0xff]
        %v6930 = vld [vmem:[#allocation10 + $0x178] sm:$0xff]
        %v6931 = vld [vmem:[#allocation10 + $0x180] sm:$0xff]
        %v6932 = vld [vmem:[#allocation10 + $0x188] sm:$0xff]
        %v6933 = vld [vmem:[#allocation10 + $0x190] sm:$0xff]
        %v6934 = vld [vmem:[#allocation10 + $0x198] sm:$0xff]
        %v6935 = vld [vmem:[#allocation10 + $0x1a0] sm:$0xff]
        %v6936 = vld [vmem:[#allocation10 + $0x1a8] sm:$0xff]
        %v6937 = vld [vmem:[#allocation10 + $0x1b0] sm:$0xff]
        %v6938 = vld [vmem:[#allocation10 + $0x1b8] sm:$0xff]
        %v6939 = vld [vmem:[#allocation10 + $0x1c0] sm:$0xff]
        %v6940 = vld [vmem:[#allocation10 + $0x1c8] sm:$0xff]
        %v6941 = vld [vmem:[#allocation10 + $0x1d0] sm:$0xff]
        %v6942 = vld [vmem:[#allocation10 + $0x1d8] sm:$0xff]
        %v6943 = vld [vmem:[#allocation10 + $0x1e0] sm:$0xff]
        %v6944 = vld [vmem:[#allocation10 + $0x1e8] sm:$0xff]
        %v6945 = vld [vmem:[#allocation10 + $0x1f0] sm:$0xff]
        %v6946 = vld [vmem:[#allocation10 + $0x1f8] sm:$0xff]
        %v6947 = vld [vmem:[#allocation10 + $0x200] sm:$0xff]
        %v6948 = vld [vmem:[#allocation10 + $0x208] sm:$0xff]
        %v6949 = vld [vmem:[#allocation10 + $0x210] sm:$0xff]
        %v6950 = vld [vmem:[#allocation10 + $0x218] sm:$0xff]
        %v6951 = vld [vmem:[#allocation10 + $0x220] sm:$0xff]
        %v6952 = vld [vmem:[#allocation10 + $0x228] sm:$0xff]
        %v6953 = vld [vmem:[#allocation10 + $0x230] sm:$0xff]
        %v6954 = vld [vmem:[#allocation10 + $0x238] sm:$0xff]
        %v6955 = vld [vmem:[#allocation10 + $0x240] sm:$0xff]
        %v6956 = vld [vmem:[#allocation10 + $0x248] sm:$0xff]
        %v6957 = vld [vmem:[#allocation10 + $0x250] sm:$0xff]
        %v6958 = vld [vmem:[#allocation10 + $0x258] sm:$0xff]
        %v6959 = vld [vmem:[#allocation10 + $0x260] sm:$0xff]
        %v6960 = vld [vmem:[#allocation10 + $0x268] sm:$0xff]
        %v6961 = vld [vmem:[#allocation10 + $0x270] sm:$0xff]
        %v6962 = vld [vmem:[#allocation10 + $0x278] sm:$0xff]
        %v6963 = vld [vmem:[#allocation10 + $0x280] sm:$0xff]
        %v6964 = vld [vmem:[#allocation10 + $0x288] sm:$0xff]
        %v6965 = vld [vmem:[#allocation10 + $0x290] sm:$0xff]
        %v6966 = vld [vmem:[#allocation10 + $0x298] sm:$0xff]
        %v6967 = vld [vmem:[#allocation10 + $0x2a0] sm:$0xff]
        %v6968 = vld [vmem:[#allocation10 + $0x2a8] sm:$0xff]
        %v6969 = vld [vmem:[#allocation10 + $0x2b0] sm:$0xff]
        %v6970 = vld [vmem:[#allocation10 + $0x2b8] sm:$0xff]
        %v6971 = vld [vmem:[#allocation10 + $0x2c0] sm:$0xff]
        %v6972 = vld [vmem:[#allocation10 + $0x2c8] sm:$0xff]
        %v6973 = vld [vmem:[#allocation10 + $0x2d0] sm:$0xff]
        %v6974 = vld [vmem:[#allocation10 + $0x2d8] sm:$0xff]
        %v6975 = vld [vmem:[#allocation10 + $0x2e0] sm:$0xff]
        %v6976 = vld [vmem:[#allocation10 + $0x2e8] sm:$0xff]
        %v6977 = vld [vmem:[#allocation10 + $0x2f0] sm:$0xff]
        %v6978 = vld [vmem:[#allocation10 + $0x2f8] sm:$0xff]
        %v6979 = vld [vmem:[#allocation10 + $0x300] sm:$0xff]
        %v6980 = vld [vmem:[#allocation10 + $0x308] sm:$0xff]
        %v6981 = vld [vmem:[#allocation10 + $0x310] sm:$0xff]
        %v6982 = vld [vmem:[#allocation10 + $0x318] sm:$0xff]
        %v6983 = vld [vmem:[#allocation10 + $0x320] sm:$0xff]
        %v6984 = vld [vmem:[#allocation10 + $0x328] sm:$0xff]
        %v6985 = vld [vmem:[#allocation10 + $0x330] sm:$0xff]
        %v6986 = vld [vmem:[#allocation10 + $0x338] sm:$0xff]
        %v6987 = vld [vmem:[#allocation10 + $0x340] sm:$0xff]
        %v6988 = vld [vmem:[#allocation10 + $0x348] sm:$0xff]
        %v6989 = vld [vmem:[#allocation10 + $0x350] sm:$0xff]
        %v6990 = vld [vmem:[#allocation10 + $0x358] sm:$0xff]
        %v6991 = vld [vmem:[#allocation10 + $0x360] sm:$0xff]
        %v6992 = vld [vmem:[#allocation10 + $0x368] sm:$0xff]
        %v6993 = vld [vmem:[#allocation10 + $0x370] sm:$0xff]
        %v6994 = vld [vmem:[#allocation10 + $0x378] sm:$0xff]
        %v6995 = vld [vmem:[#allocation10 + $0x380] sm:$0xff]
        %v6996 = vld [vmem:[#allocation10 + $0x388] sm:$0xff]
        %v6997 = vld [vmem:[#allocation10 + $0x390] sm:$0xff]
        %v6998 = vld [vmem:[#allocation10 + $0x398] sm:$0xff]
        %v6999 = vld [vmem:[#allocation10 + $0x3a0] sm:$0xff]
        %v7000 = vld [vmem:[#allocation10 + $0x3a8] sm:$0xff]
        %v7001 = vld [vmem:[#allocation10 + $0x3b0] sm:$0xff]
        %v7002 = vld [vmem:[#allocation10 + $0x3b8] sm:$0xff]
        %v7003 = vld [vmem:[#allocation10 + $0x3c0] sm:$0xff]
        %v7004 = vld [vmem:[#allocation10 + $0x3c8] sm:$0xff]
        %v7005 = vld [vmem:[#allocation10 + $0x3d0] sm:$0xff]
        %v7006 = vld [vmem:[#allocation10 + $0x3d8] sm:$0xff]
        %v7007 = vld [vmem:[#allocation10 + $0x3e0] sm:$0xff]
        %v7008 = vld [vmem:[#allocation10 + $0x3e8] sm:$0xff]
        %v7009 = vld [vmem:[#allocation10 + $0x3f0] sm:$0xff]
        %v7010 = vld [vmem:[#allocation10 + $0x3f8] sm:$0xff]
        %v7011 = vld [vmem:[#allocation10 + $0x400] sm:$0xff]
        %v7012 = vld [vmem:[#allocation10 + $0x408] sm:$0xff]
        %v7013 = vld [vmem:[#allocation10 + $0x410] sm:$0xff]
        %v7014 = vld [vmem:[#allocation10 + $0x418] sm:$0xff]
        %v7015 = vld [vmem:[#allocation10 + $0x420] sm:$0xff]
        %v7016 = vld [vmem:[#allocation10 + $0x428] sm:$0xff]
        %v7017 = vld [vmem:[#allocation10 + $0x430] sm:$0xff]
        %v7018 = vld [vmem:[#allocation10 + $0x438] sm:$0xff]
        %v7019 = vld [vmem:[#allocation10 + $0x440] sm:$0xff]
        %v7020 = vld [vmem:[#allocation10 + $0x448] sm:$0xff]
        %v7021 = vld [vmem:[#allocation10 + $0x450] sm:$0xff]
        %v7022 = vld [vmem:[#allocation10 + $0x458] sm:$0xff]
        %v7023 = vld [vmem:[#allocation10 + $0x460] sm:$0xff]
        %v7024 = vld [vmem:[#allocation10 + $0x468] sm:$0xff]
        %v7025 = vld [vmem:[#allocation10 + $0x470] sm:$0xff]
        %v7026 = vld [vmem:[#allocation10 + $0x478] sm:$0xff]
        %v7027 = vld [vmem:[#allocation10 + $0x480] sm:$0xff]
        %v7028 = vld [vmem:[#allocation10 + $0x488] sm:$0xff]
        %v7029 = vld [vmem:[#allocation10 + $0x490] sm:$0xff]
        %v7030 = vld [vmem:[#allocation10 + $0x498] sm:$0xff]
        %v7031 = vld [vmem:[#allocation10 + $0x4a0] sm:$0xff]
        %v7032 = vld [vmem:[#allocation10 + $0x4a8] sm:$0xff]
        %v7033 = vld [vmem:[#allocation10 + $0x4b0] sm:$0xff]
        %v7034 = vld [vmem:[#allocation10 + $0x4b8] sm:$0xff]
        %v7035 = vld [vmem:[#allocation10 + $0x4c0] sm:$0xff]
        %v7036 = vld [vmem:[#allocation10 + $0x4c8] sm:$0xff]
        %v7037 = vld [vmem:[#allocation10 + $0x4d0] sm:$0xff]
        %v7038 = vld [vmem:[#allocation10 + $0x4d8] sm:$0xff]
        %v7039 = vld [vmem:[#allocation10 + $0x4e0] sm:$0xff]
        %v7040 = vld [vmem:[#allocation10 + $0x4e8] sm:$0xff]
        %v7041 = vld [vmem:[#allocation10 + $0x4f0] sm:$0xff]
        %v7042 = vld [vmem:[#allocation10 + $0x4f8] sm:$0xff]
        %v7043 = vld [vmem:[#allocation10 + $0x500] sm:$0xff]
        %v7044 = vld [vmem:[#allocation10 + $0x508] sm:$0xff]
        %v7045 = vld [vmem:[#allocation10 + $0x510] sm:$0xff]
        %v7046 = vld [vmem:[#allocation10 + $0x518] sm:$0xff]
        %v7047 = vld [vmem:[#allocation10 + $0x520] sm:$0xff]
        %v7048 = vld [vmem:[#allocation10 + $0x528] sm:$0xff]
        %v7049 = vld [vmem:[#allocation10 + $0x530] sm:$0xff]
        %v7050 = vld [vmem:[#allocation10 + $0x538] sm:$0xff]
        %v7051 = vld [vmem:[#allocation10 + $0x540] sm:$0xff]
        %v7052 = vld [vmem:[#allocation10 + $0x548] sm:$0xff]
        %v7053 = vld [vmem:[#allocation10 + $0x550] sm:$0xff]
        %v7054 = vld [vmem:[#allocation10 + $0x558] sm:$0xff]
        %v7055 = vld [vmem:[#allocation10 + $0x560] sm:$0xff]
        %v7056 = vld [vmem:[#allocation10 + $0x568] sm:$0xff]
        %v7057 = vld [vmem:[#allocation10 + $0x570] sm:$0xff]
        %v7058 = vld [vmem:[#allocation10 + $0x578] sm:$0xff]
        %v7059 = vld [vmem:[#allocation10 + $0x580] sm:$0xff]
        %v7060 = vld [vmem:[#allocation10 + $0x588] sm:$0xff]
        %v7061 = vld [vmem:[#allocation10 + $0x590] sm:$0xff]
        %v7062 = vld [vmem:[#allocation10 + $0x598] sm:$0xff]
        %v7063 = vld [vmem:[#allocation10 + $0x5a0] sm:$0xff]
        %v7064 = vld [vmem:[#allocation10 + $0x5a8] sm:$0xff]
        %v7065 = vld [vmem:[#allocation10 + $0x5b0] sm:$0xff]
        %v7066 = vld [vmem:[#allocation10 + $0x5b8] sm:$0xff]
        %v7067 = vld [vmem:[#allocation10 + $0x5c0] sm:$0xff]
        %v7068 = vld [vmem:[#allocation10 + $0x5c8] sm:$0xff]
        %v7069 = vld [vmem:[#allocation10 + $0x5d0] sm:$0xff]
        %v7070 = vld [vmem:[#allocation10 + $0x5d8] sm:$0xff]
        %v7071 = vld [vmem:[#allocation10 + $0x5e0] sm:$0xff]
        %v7072 = vld [vmem:[#allocation10 + $0x5e8] sm:$0xff]
        %v7073 = vld [vmem:[#allocation10 + $0x5f0] sm:$0xff]
        %v7074 = vld [vmem:[#allocation10 + $0x5f8] sm:$0xff]
        %v7075 = vld [vmem:[#allocation10 + $0x600] sm:$0xff]
        %v7076 = vld [vmem:[#allocation10 + $0x608] sm:$0xff]
        %v7077 = vld [vmem:[#allocation10 + $0x610] sm:$0xff]
        %v7078 = vld [vmem:[#allocation10 + $0x618] sm:$0xff]
        %v7079 = vld [vmem:[#allocation10 + $0x620] sm:$0xff]
        %v7080 = vld [vmem:[#allocation10 + $0x628] sm:$0xff]
        %v7081 = vld [vmem:[#allocation10 + $0x630] sm:$0xff]
        %v7082 = vld [vmem:[#allocation10 + $0x638] sm:$0xff]
        %v7083 = vld [vmem:[#allocation10 + $0x640] sm:$0xff]
        %v7084 = vld [vmem:[#allocation10 + $0x648] sm:$0xff]
        %v7085 = vld [vmem:[#allocation10 + $0x650] sm:$0xff]
        %v7086 = vld [vmem:[#allocation10 + $0x658] sm:$0xff]
        %v7087 = vld [vmem:[#allocation10 + $0x660] sm:$0xff]
        %v7088 = vld [vmem:[#allocation10 + $0x668] sm:$0xff]
        %v7089 = vld [vmem:[#allocation10 + $0x670] sm:$0xff]
        %v7090 = vld [vmem:[#allocation10 + $0x678] sm:$0xff]
        %v7091 = vld [vmem:[#allocation10 + $0x680] sm:$0xff]
        %v7092 = vld [vmem:[#allocation10 + $0x688] sm:$0xff]
        %v7093 = vld [vmem:[#allocation10 + $0x690] sm:$0xff]
        %v7094 = vld [vmem:[#allocation10 + $0x698] sm:$0xff]
        %v7095 = vld [vmem:[#allocation10 + $0x6a0] sm:$0xff]
        %v7096 = vld [vmem:[#allocation10 + $0x6a8] sm:$0xff]
        %v7097 = vld [vmem:[#allocation10 + $0x6b0] sm:$0xff]
        %v7098 = vld [vmem:[#allocation10 + $0x6b8] sm:$0xff]
        %v7099 = vld [vmem:[#allocation10 + $0x6c0] sm:$0xff]
        %v7100 = vld [vmem:[#allocation10 + $0x6c8] sm:$0xff]
        %v7101 = vld [vmem:[#allocation10 + $0x6d0] sm:$0xff]
        %v7102 = vld [vmem:[#allocation10 + $0x6d8] sm:$0xff]
        %v7103 = vld [vmem:[#allocation10 + $0x6e0] sm:$0xff]
        %v7104 = vld [vmem:[#allocation10 + $0x6e8] sm:$0xff]
        %v7105 = vld [vmem:[#allocation10 + $0x6f0] sm:$0xff]
        %v7106 = vld [vmem:[#allocation10 + $0x6f8] sm:$0xff]
        %v7107 = vld [vmem:[#allocation10 + $0x700] sm:$0xff]
        %v7108 = vld [vmem:[#allocation10 + $0x708] sm:$0xff]
        %v7109 = vld [vmem:[#allocation10 + $0x710] sm:$0xff]
        %v7110 = vld [vmem:[#allocation10 + $0x718] sm:$0xff]
        %v7111 = vld [vmem:[#allocation10 + $0x720] sm:$0xff]
        %v7112 = vld [vmem:[#allocation10 + $0x728] sm:$0xff]
        %v7113 = vld [vmem:[#allocation10 + $0x730] sm:$0xff]
        %v7114 = vld [vmem:[#allocation10 + $0x738] sm:$0xff]
        %v7115 = vld [vmem:[#allocation10 + $0x740] sm:$0xff]
        %v7116 = vld [vmem:[#allocation10 + $0x748] sm:$0xff]
        %v7117 = vld [vmem:[#allocation10 + $0x750] sm:$0xff]
        %v7118 = vld [vmem:[#allocation10 + $0x758] sm:$0xff]
        %v7119 = vld [vmem:[#allocation10 + $0x760] sm:$0xff]
        %v7120 = vld [vmem:[#allocation10 + $0x768] sm:$0xff]
        %v7121 = vld [vmem:[#allocation10 + $0x770] sm:$0xff]
        %v7122 = vld [vmem:[#allocation10 + $0x778] sm:$0xff]
        %v7123 = vld [vmem:[#allocation10 + $0x780] sm:$0xff]
        %v7124 = vld [vmem:[#allocation10 + $0x788] sm:$0xff]
        %v7125 = vld [vmem:[#allocation10 + $0x790] sm:$0xff]
        %v7126 = vld [vmem:[#allocation10 + $0x798] sm:$0xff]
        %v7127 = vld [vmem:[#allocation10 + $0x7a0] sm:$0xff]
        %v7128 = vld [vmem:[#allocation10 + $0x7a8] sm:$0xff]
        %v7129 = vld [vmem:[#allocation10 + $0x7b0] sm:$0xff]
        %v7130 = vld [vmem:[#allocation10 + $0x7b8] sm:$0xff]
        %v7131 = vld [vmem:[#allocation10 + $0x7c0] sm:$0xff]
        %v7132 = vld [vmem:[#allocation10 + $0x7c8] sm:$0xff]
        %v7133 = vld [vmem:[#allocation10 + $0x7d0] sm:$0xff]
        %v7134 = vld [vmem:[#allocation10 + $0x7d8] sm:$0xff]
        %v7135 = vld [vmem:[#allocation10 + $0x7e0] sm:$0xff]
        %v7136 = vld [vmem:[#allocation10 + $0x7e8] sm:$0xff]
        %v7137 = vld [vmem:[#allocation10 + $0x7f0] sm:$0xff]
        %v7138 = vld [vmem:[#allocation10 + $0x7f8] sm:$0xff]
        %v7139 = vld [vmem:[#allocation10 + $0x800] sm:$0xff]
        %v7140 = vld [vmem:[#allocation10 + $0x808] sm:$0xff]
        %v7141 = vld [vmem:[#allocation10 + $0x810] sm:$0xff]
        %v7142 = vld [vmem:[#allocation10 + $0x818] sm:$0xff]
        %v7143 = vld [vmem:[#allocation10 + $0x820] sm:$0xff]
        %v7144 = vld [vmem:[#allocation10 + $0x828] sm:$0xff]
        %v7145 = vld [vmem:[#allocation10 + $0x830] sm:$0xff]
        %v7146 = vld [vmem:[#allocation10 + $0x838] sm:$0xff]
        %v7147 = vld [vmem:[#allocation10 + $0x840] sm:$0xff]
        %v7148 = vld [vmem:[#allocation10 + $0x848] sm:$0xff]
        %v7149 = vld [vmem:[#allocation10 + $0x850] sm:$0xff]
        %v7150 = vld [vmem:[#allocation10 + $0x858] sm:$0xff]
        %v7151 = vld [vmem:[#allocation10 + $0x860] sm:$0xff]
        %v7152 = vld [vmem:[#allocation10 + $0x868] sm:$0xff]
        %v7153 = vld [vmem:[#allocation10 + $0x870] sm:$0xff]
        %v7154 = vld [vmem:[#allocation10 + $0x878] sm:$0xff]
        %v7155 = vld [vmem:[#allocation10 + $0x880] sm:$0xff]
        %v7156 = vld [vmem:[#allocation10 + $0x888] sm:$0xff]
        %v7157 = vld [vmem:[#allocation10 + $0x890] sm:$0xff]
        %v7158 = vld [vmem:[#allocation10 + $0x898] sm:$0xff]
        %v7159 = vld [vmem:[#allocation10 + $0x8a0] sm:$0xff]
        %v7160 = vld [vmem:[#allocation10 + $0x8a8] sm:$0xff]
        %v7161 = vld [vmem:[#allocation10 + $0x8b0] sm:$0xff]
        %v7162 = vld [vmem:[#allocation10 + $0x8b8] sm:$0xff]
        %v7163 = vld [vmem:[#allocation10 + $0x8c0] sm:$0xff]
        %v7164 = vld [vmem:[#allocation10 + $0x8c8] sm:$0xff]
        %v7165 = vld [vmem:[#allocation10 + $0x8d0] sm:$0xff]
        %v7166 = vld [vmem:[#allocation10 + $0x8d8] sm:$0xff]
        %v7167 = vld [vmem:[#allocation10 + $0x8e0] sm:$0xff]
        %v7168 = vld [vmem:[#allocation10 + $0x8e8] sm:$0xff]
        %v7169 = vld [vmem:[#allocation10 + $0x8f0] sm:$0xff]
        %v7170 = vld [vmem:[#allocation10 + $0x8f8] sm:$0xff]
        %v7171 = vld [vmem:[#allocation12] sm:$0x3]
        %v7173 = vperm.slane %v7171, 0
        %v7174 = vperm.slane %v7171, 1
        %v7321 = vunpack.c.l.b16 %v6739
        %v7322 = vunpack.c.h.b16 %v6739
        %v7323 = vunpack.c.l.b16 %v6740
        %v7324 = vunpack.c.h.b16 %v6740
        %v7325 = vunpack.c.l.b16 %v6741
        %v7326 = vunpack.c.h.b16 %v6741
        %v7327 = vunpack.c.l.b16 %v6742
        %v7328 = vunpack.c.h.b16 %v6742
        %v7329 = vunpack.c.l.b16 %v6743
        %v7330 = vunpack.c.h.b16 %v6743
        %v7331 = vunpack.c.l.b16 %v6744
        %v7332 = vunpack.c.h.b16 %v6744
        %v7333 = vunpack.c.l.b16 %v6745
        %v7334 = vunpack.c.h.b16 %v6745
        %v7335 = vunpack.c.l.b16 %v6746
        %v7336 = vunpack.c.h.b16 %v6746
        %v7337 = vunpack.c.l.b16 %v6747
        %v7338 = vunpack.c.h.b16 %v6747
        %v7339 = vunpack.c.l.b16 %v6748
        %v7340 = vunpack.c.h.b16 %v6748
        %v7341 = vunpack.c.l.b16 %v6749
        %v7342 = vunpack.c.h.b16 %v6749
        %v7343 = vunpack.c.l.b16 %v6750
        %v7344 = vunpack.c.h.b16 %v6750
        %v7345 = vunpack.c.l.b16 %v6751
        %v7346 = vunpack.c.h.b16 %v6751
        %v7347 = vunpack.c.l.b16 %v6752
        %v7348 = vunpack.c.h.b16 %v6752
        %v7349 = vunpack.c.l.b16 %v6753
        %v7350 = vunpack.c.h.b16 %v6753
        %v7351 = vunpack.c.l.b16 %v6754
        %v7352 = vunpack.c.h.b16 %v6754
        %v7353 = vunpack.c.l.b16 %v6755
        %v7354 = vunpack.c.h.b16 %v6755
        %v7355 = vunpack.c.l.b16 %v6756
        %v7356 = vunpack.c.h.b16 %v6756
        %v7357 = vunpack.c.l.b16 %v6757
        %v7358 = vunpack.c.h.b16 %v6757
        %v7359 = vunpack.c.l.b16 %v6758
        %v7360 = vunpack.c.h.b16 %v6758
        %v7361 = vunpack.c.l.b16 %v6759
        %v7362 = vunpack.c.h.b16 %v6759
        %v7363 = vunpack.c.l.b16 %v6760
        %v7364 = vunpack.c.h.b16 %v6760
        %v7365 = vunpack.c.l.b16 %v6761
        %v7366 = vunpack.c.h.b16 %v6761
        %v7367 = vunpack.c.l.b16 %v6762
        %v7368 = vunpack.c.h.b16 %v6762
        %v7369 = vunpack.c.l.b16 %v6763
        %v7370 = vunpack.c.h.b16 %v6763
        %v7371 = vunpack.c.l.b16 %v6764
        %v7372 = vunpack.c.h.b16 %v6764
        %v7373 = vunpack.c.l.b16 %v6765
        %v7374 = vunpack.c.h.b16 %v6765
        %v7375 = vunpack.c.l.b16 %v6766
        %v7376 = vunpack.c.h.b16 %v6766
        %v7377 = vunpack.c.l.b16 %v6767
        %v7378 = vunpack.c.h.b16 %v6767
        %v7379 = vunpack.c.l.b16 %v6768
        %v7380 = vunpack.c.h.b16 %v6768
        %v7381 = vunpack.c.l.b16 %v6769
        %v7382 = vunpack.c.h.b16 %v6769
        %v7383 = vunpack.c.l.b16 %v6770
        %v7384 = vunpack.c.h.b16 %v6770
        %v7385 = vunpack.c.l.b16 %v6771
        %v7386 = vunpack.c.h.b16 %v6771
        %v7387 = vunpack.c.l.b16 %v6772
        %v7388 = vunpack.c.h.b16 %v6772
        %v7389 = vunpack.c.l.b16 %v6773
        %v7390 = vunpack.c.h.b16 %v6773
        %v7391 = vunpack.c.l.b16 %v6774
        %v7392 = vunpack.c.h.b16 %v6774
        %v7393 = vunpack.c.l.b16 %v6775
        %v7394 = vunpack.c.h.b16 %v6775
        %v7395 = vunpack.c.l.b16 %v6776
        %v7396 = vunpack.c.h.b16 %v6776
        %v7397 = vunpack.c.l.b16 %v6777
        %v7398 = vunpack.c.h.b16 %v6777
        %v7399 = vunpack.c.l.b16 %v6778
        %v7400 = vunpack.c.h.b16 %v6778
        %v7401 = vunpack.c.l.b16 %v6779
        %v7402 = vunpack.c.h.b16 %v6779
        %v7403 = vunpack.c.l.b16 %v6780
        %v7404 = vunpack.c.h.b16 %v6780
        %v7405 = vunpack.c.l.b16 %v6781
        %v7406 = vunpack.c.h.b16 %v6781
        %v7407 = vunpack.c.l.b16 %v6782
        %v7408 = vunpack.c.h.b16 %v6782
        %v7409 = vunpack.c.l.b16 %v6783
        %v7410 = vunpack.c.h.b16 %v6783
        %v7411 = vunpack.c.l.b16 %v6784
        %v7412 = vunpack.c.h.b16 %v6784
        %v7413 = vunpack.c.l.b16 %v6785
        %v7414 = vunpack.c.h.b16 %v6785
        %v7415 = vunpack.c.l.b16 %v6786
        %v7416 = vunpack.c.h.b16 %v6786
        %v7417 = vunpack.c.l.b16 %v6787
        %v7418 = vunpack.c.h.b16 %v6787
        %v7419 = vunpack.c.l.b16 %v6788
        %v7420 = vunpack.c.h.b16 %v6788
        %v7421 = vunpack.c.l.b16 %v6789
        %v7422 = vunpack.c.h.b16 %v6789
        %v7423 = vunpack.c.l.b16 %v6790
        %v7424 = vunpack.c.h.b16 %v6790
        %v7425 = vunpack.c.l.b16 %v6791
        %v7426 = vunpack.c.h.b16 %v6791
        %v7427 = vunpack.c.l.b16 %v6792
        %v7428 = vunpack.c.h.b16 %v6792
        %v7429 = vunpack.c.l.b16 %v6793
        %v7430 = vunpack.c.h.b16 %v6793
        %v7431 = vunpack.c.l.b16 %v6794
        %v7432 = vunpack.c.h.b16 %v6794
        %v7433 = vunpack.c.l.b16 %v6795
        %v7434 = vunpack.c.h.b16 %v6795
        %v7435 = vunpack.c.l.b16 %v6796
        %v7436 = vunpack.c.h.b16 %v6796
        %v7437 = vunpack.c.l.b16 %v6797
        %v7438 = vunpack.c.h.b16 %v6797
        %v7439 = vunpack.c.l.b16 %v6798
        %v7440 = vunpack.c.h.b16 %v6798
        %v7441 = vunpack.c.l.b16 %v6799
        %v7442 = vunpack.c.h.b16 %v6799
        %v7443 = vunpack.c.l.b16 %v6800
        %v7444 = vunpack.c.h.b16 %v6800
        %v7445 = vunpack.c.l.b16 %v6801
        %v7446 = vunpack.c.h.b16 %v6801
        %v7447 = vunpack.c.l.b16 %v6802
        %v7448 = vunpack.c.h.b16 %v6802
        %v7449 = vunpack.c.l.b16 %v6803
        %v7450 = vunpack.c.h.b16 %v6803
        %v7451 = vunpack.c.l.b16 %v6804
        %v7452 = vunpack.c.h.b16 %v6804
        %v7453 = vunpack.c.l.b16 %v6805
        %v7454 = vunpack.c.h.b16 %v6805
        %v7455 = vunpack.c.l.b16 %v6806
        %v7456 = vunpack.c.h.b16 %v6806
        %v7457 = vunpack.c.l.b16 %v6807
        %v7458 = vunpack.c.h.b16 %v6807
        %v7459 = vunpack.c.l.b16 %v6808
        %v7460 = vunpack.c.h.b16 %v6808
        %v7461 = vunpack.c.l.b16 %v6809
        %v7462 = vunpack.c.h.b16 %v6809
        %v7463 = vunpack.c.l.b16 %v6810
        %v7464 = vunpack.c.h.b16 %v6810
        %v7465 = vunpack.c.l.b16 %v6811
        %v7466 = vunpack.c.h.b16 %v6811
        %v7467 = vunpack.c.l.b16 %v6812
        %v7468 = vunpack.c.h.b16 %v6812
        %v7469 = vunpack.c.l.b16 %v6813
        %v7470 = vunpack.c.h.b16 %v6813
        %v7471 = vunpack.c.l.b16 %v6814
        %v7472 = vunpack.c.h.b16 %v6814
        %v7473 = vunpack.c.l.b16 %v6815
        %v7474 = vunpack.c.h.b16 %v6815
        %v7475 = vunpack.c.l.b16 %v6816
        %v7476 = vunpack.c.h.b16 %v6816
        %v7477 = vunpack.c.l.b16 %v6817
        %v7478 = vunpack.c.h.b16 %v6817
        %v7479 = vunpack.c.l.b16 %v6818
        %v7480 = vunpack.c.h.b16 %v6818
        %v7481 = vunpack.c.l.b16 %v6819
        %v7482 = vunpack.c.h.b16 %v6819
        %v7483 = vunpack.c.l.b16 %v6820
        %v7484 = vunpack.c.h.b16 %v6820
        %v7485 = vunpack.c.l.b16 %v6821
        %v7486 = vunpack.c.h.b16 %v6821
        %v7487 = vunpack.c.l.b16 %v6822
        %v7488 = vunpack.c.h.b16 %v6822
        %v7489 = vunpack.c.l.b16 %v6823
        %v7490 = vunpack.c.h.b16 %v6823
        %v7491 = vunpack.c.l.b16 %v6824
        %v7492 = vunpack.c.h.b16 %v6824
        %v7493 = vunpack.c.l.b16 %v6825
        %v7494 = vunpack.c.h.b16 %v6825
        %v7495 = vunpack.c.l.b16 %v6826
        %v7496 = vunpack.c.h.b16 %v6826
        %v7497 = vunpack.c.l.b16 %v6827
        %v7498 = vunpack.c.h.b16 %v6827
        %v7499 = vunpack.c.l.b16 %v6828
        %v7500 = vunpack.c.h.b16 %v6828
        %v7501 = vunpack.c.l.b16 %v6829
        %v7502 = vunpack.c.h.b16 %v6829
        %v7503 = vunpack.c.l.b16 %v6830
        %v7504 = vunpack.c.h.b16 %v6830
        %v7505 = vunpack.c.l.b16 %v6831
        %v7506 = vunpack.c.h.b16 %v6831
        %v7507 = vunpack.c.l.b16 %v6832
        %v7508 = vunpack.c.h.b16 %v6832
        %v7509 = vunpack.c.l.b16 %v6833
        %v7510 = vunpack.c.h.b16 %v6833
        %v7511 = vunpack.c.l.b16 %v6834
        %v7512 = vunpack.c.h.b16 %v6834
        %v7513 = vunpack.c.l.b16 %v6835
        %v7514 = vunpack.c.h.b16 %v6835
        %v7515 = vunpack.c.l.b16 %v6836
        %v7516 = vunpack.c.h.b16 %v6836
        %v7517 = vunpack.c.l.b16 %v6837
        %v7518 = vunpack.c.h.b16 %v6837
        %v7519 = vunpack.c.l.b16 %v6838
        %v7520 = vunpack.c.h.b16 %v6838
        %v7521 = vunpack.c.l.b16 %v6839
        %v7522 = vunpack.c.h.b16 %v6839
        %v7523 = vunpack.c.l.b16 %v6840
        %v7524 = vunpack.c.h.b16 %v6840
        %v7525 = vunpack.c.l.b16 %v6841
        %v7526 = vunpack.c.h.b16 %v6841
        %v7527 = vunpack.c.l.b16 %v6842
        %v7528 = vunpack.c.h.b16 %v6842
        %v7529 = vunpack.c.l.b16 %v6843
        %v7530 = vunpack.c.h.b16 %v6843
        %v7531 = vunpack.c.l.b16 %v6844
        %v7532 = vunpack.c.h.b16 %v6844
        %v7533 = vunpack.c.l.b16 %v6845
        %v7534 = vunpack.c.h.b16 %v6845
        %v7535 = vunpack.c.l.b16 %v6846
        %v7536 = vunpack.c.h.b16 %v6846
        %v7537 = vunpack.c.l.b16 %v6847
        %v7538 = vunpack.c.h.b16 %v6847
        %v7539 = vunpack.c.l.b16 %v6848
        %v7540 = vunpack.c.h.b16 %v6848
        %v7541 = vunpack.c.l.b16 %v6849
        %v7542 = vunpack.c.h.b16 %v6849
        %v7543 = vunpack.c.l.b16 %v6850
        %v7544 = vunpack.c.h.b16 %v6850
        %v7545 = vunpack.c.l.b16 %v6851
        %v7546 = vunpack.c.h.b16 %v6851
        %v7547 = vunpack.c.l.b16 %v6852
        %v7548 = vunpack.c.h.b16 %v6852
        %v7549 = vunpack.c.l.b16 %v6853
        %v7550 = vunpack.c.h.b16 %v6853
        %v7551 = vunpack.c.l.b16 %v6854
        %v7552 = vunpack.c.h.b16 %v6854
        %v7553 = vunpack.c.l.b16 %v6855
        %v7554 = vunpack.c.h.b16 %v6855
        %v7555 = vunpack.c.l.b16 %v6856
        %v7556 = vunpack.c.h.b16 %v6856
        %v7557 = vunpack.c.l.b16 %v6857
        %v7558 = vunpack.c.h.b16 %v6857
        %v7559 = vunpack.c.l.b16 %v6858
        %v7560 = vunpack.c.h.b16 %v6858
        %v7561 = vunpack.c.l.b16 %v6859
        %v7562 = vunpack.c.h.b16 %v6859
        %v7563 = vunpack.c.l.b16 %v6860
        %v7564 = vunpack.c.h.b16 %v6860
        %v7565 = vunpack.c.l.b16 %v6861
        %v7566 = vunpack.c.h.b16 %v6861
        %v7567 = vunpack.c.l.b16 %v6862
        %v7568 = vunpack.c.h.b16 %v6862
        %v7569 = vunpack.c.l.b16 %v6863
        %v7570 = vunpack.c.h.b16 %v6863
        %v7571 = vunpack.c.l.b16 %v6864
        %v7572 = vunpack.c.h.b16 %v6864
        %v7573 = vunpack.c.l.b16 %v6865
        %v7574 = vunpack.c.h.b16 %v6865
        %v7575 = vunpack.c.l.b16 %v6866
        %v7576 = vunpack.c.h.b16 %v6866
        %v7577 = vunpack.c.l.b16 %v6867
        %v7578 = vunpack.c.h.b16 %v6867
        %v7579 = vunpack.c.l.b16 %v6868
        %v7580 = vunpack.c.h.b16 %v6868
        %v7581 = vunpack.c.l.b16 %v6869
        %v7582 = vunpack.c.h.b16 %v6869
        %v7583 = vunpack.c.l.b16 %v6870
        %v7584 = vunpack.c.h.b16 %v6870
        %v7585 = vunpack.c.l.b16 %v6871
        %v7586 = vunpack.c.h.b16 %v6871
        %v7587 = vunpack.c.l.b16 %v6872
        %v7588 = vunpack.c.h.b16 %v6872
        %v7589 = vunpack.c.l.b16 %v6873
        %v7590 = vunpack.c.h.b16 %v6873
        %v7591 = vunpack.c.l.b16 %v6874
        %v7592 = vunpack.c.h.b16 %v6874
        %v7593 = vunpack.c.l.b16 %v6875
        %v7594 = vunpack.c.h.b16 %v6875
        %v7595 = vunpack.c.l.b16 %v6876
        %v7596 = vunpack.c.h.b16 %v6876
        %v7597 = vunpack.c.l.b16 %v6877
        %v7598 = vunpack.c.h.b16 %v6877
        %v7599 = vunpack.c.l.b16 %v6878
        %v7600 = vunpack.c.h.b16 %v6878
        %v7601 = vunpack.c.l.b16 %v6879
        %v7602 = vunpack.c.h.b16 %v6879
        %v7603 = vunpack.c.l.b16 %v6880
        %v7604 = vunpack.c.h.b16 %v6880
        %v7605 = vunpack.c.l.b16 %v6881
        %v7606 = vunpack.c.h.b16 %v6881
        %v7607 = vunpack.c.l.b16 %v6882
        %v7608 = vunpack.c.h.b16 %v6882
        %v7609 = vpack.c.b16 %v7339, %v7321
        %v7610 = vpack.c.b16 %v7340, %v7322
        %v7611 = vpack.c.b16 %v7341, %v7323
        %v7612 = vpack.c.b16 %v7342, %v7324
        %v7613 = vpack.c.b16 %v7343, %v7325
        %v7614 = vpack.c.b16 %v7344, %v7326
        %v7615 = vpack.c.b16 %v7345, %v7327
        %v7616 = vpack.c.b16 %v7346, %v7328
        %v7617 = vpack.c.b16 %v7347, %v7329
        %v7618 = vpack.c.b16 %v7348, %v7330
        %v7619 = vpack.c.b16 %v7349, %v7331
        %v7620 = vpack.c.b16 %v7350, %v7332
        %v7621 = vpack.c.b16 %v7351, %v7333
        %v7622 = vpack.c.b16 %v7352, %v7334
        %v7623 = vpack.c.b16 %v7353, %v7335
        %v7624 = vpack.c.b16 %v7354, %v7336
        %v7625 = vpack.c.b16 %v7355, %v7337
        %v7626 = vpack.c.b16 %v7356, %v7338
        %v7627 = vpack.c.b16 %v7375, %v7357
        %v7628 = vpack.c.b16 %v7376, %v7358
        %v7629 = vpack.c.b16 %v7377, %v7359
        %v7630 = vpack.c.b16 %v7378, %v7360
        %v7631 = vpack.c.b16 %v7379, %v7361
        %v7632 = vpack.c.b16 %v7380, %v7362
        %v7633 = vpack.c.b16 %v7381, %v7363
        %v7634 = vpack.c.b16 %v7382, %v7364
        %v7635 = vpack.c.b16 %v7383, %v7365
        %v7636 = vpack.c.b16 %v7384, %v7366
        %v7637 = vpack.c.b16 %v7385, %v7367
        %v7638 = vpack.c.b16 %v7386, %v7368
        %v7639 = vpack.c.b16 %v7387, %v7369
        %v7640 = vpack.c.b16 %v7388, %v7370
        %v7641 = vpack.c.b16 %v7389, %v7371
        %v7642 = vpack.c.b16 %v7390, %v7372
        %v7643 = vpack.c.b16 %v7391, %v7373
        %v7644 = vpack.c.b16 %v7392, %v7374
        %v7645 = vpack.c.b16 %v7411, %v7393
        %v7646 = vpack.c.b16 %v7412, %v7394
        %v7647 = vpack.c.b16 %v7413, %v7395
        %v7648 = vpack.c.b16 %v7414, %v7396
        %v7649 = vpack.c.b16 %v7415, %v7397
        %v7650 = vpack.c.b16 %v7416, %v7398
        %v7651 = vpack.c.b16 %v7417, %v7399
        %v7652 = vpack.c.b16 %v7418, %v7400
        %v7653 = vpack.c.b16 %v7419, %v7401
        %v7654 = vpack.c.b16 %v7420, %v7402
        %v7655 = vpack.c.b16 %v7421, %v7403
        %v7656 = vpack.c.b16 %v7422, %v7404
        %v7657 = vpack.c.b16 %v7423, %v7405
        %v7658 = vpack.c.b16 %v7424, %v7406
        %v7659 = vpack.c.b16 %v7425, %v7407
        %v7660 = vpack.c.b16 %v7426, %v7408
        %v7661 = vpack.c.b16 %v7427, %v7409
        %v7662 = vpack.c.b16 %v7428, %v7410
        %v7663 = vpack.c.b16 %v7447, %v7429
        %v7664 = vpack.c.b16 %v7448, %v7430
        %v7665 = vpack.c.b16 %v7449, %v7431
        %v7666 = vpack.c.b16 %v7450, %v7432
        %v7667 = vpack.c.b16 %v7451, %v7433
        %v7668 = vpack.c.b16 %v7452, %v7434
        %v7669 = vpack.c.b16 %v7453, %v7435
        %v7670 = vpack.c.b16 %v7454, %v7436
        %v7671 = vpack.c.b16 %v7455, %v7437
        %v7672 = vpack.c.b16 %v7456, %v7438
        %v7673 = vpack.c.b16 %v7457, %v7439
        %v7674 = vpack.c.b16 %v7458, %v7440
        %v7675 = vpack.c.b16 %v7459, %v7441
        %v7676 = vpack.c.b16 %v7460, %v7442
        %v7677 = vpack.c.b16 %v7461, %v7443
        %v7678 = vpack.c.b16 %v7462, %v7444
        %v7679 = vpack.c.b16 %v7463, %v7445
        %v7680 = vpack.c.b16 %v7464, %v7446
        %v7681 = vpack.c.b16 %v7483, %v7465
        %v7682 = vpack.c.b16 %v7484, %v7466
        %v7683 = vpack.c.b16 %v7485, %v7467
        %v7684 = vpack.c.b16 %v7486, %v7468
        %v7685 = vpack.c.b16 %v7487, %v7469
        %v7686 = vpack.c.b16 %v7488, %v7470
        %v7687 = vpack.c.b16 %v7489, %v7471
        %v7688 = vpack.c.b16 %v7490, %v7472
        %v7689 = vpack.c.b16 %v7491, %v7473
        %v7690 = vpack.c.b16 %v7492, %v7474
        %v7691 = vpack.c.b16 %v7493, %v7475
        %v7692 = vpack.c.b16 %v7494, %v7476
        %v7693 = vpack.c.b16 %v7495, %v7477
        %v7694 = vpack.c.b16 %v7496, %v7478
        %v7695 = vpack.c.b16 %v7497, %v7479
        %v7696 = vpack.c.b16 %v7498, %v7480
        %v7697 = vpack.c.b16 %v7499, %v7481
        %v7698 = vpack.c.b16 %v7500, %v7482
        %v7699 = vpack.c.b16 %v7519, %v7501
        %v7700 = vpack.c.b16 %v7520, %v7502
        %v7701 = vpack.c.b16 %v7521, %v7503
        %v7702 = vpack.c.b16 %v7522, %v7504
        %v7703 = vpack.c.b16 %v7523, %v7505
        %v7704 = vpack.c.b16 %v7524, %v7506
        %v7705 = vpack.c.b16 %v7525, %v7507
        %v7706 = vpack.c.b16 %v7526, %v7508
        %v7707 = vpack.c.b16 %v7527, %v7509
        %v7708 = vpack.c.b16 %v7528, %v7510
        %v7709 = vpack.c.b16 %v7529, %v7511
        %v7710 = vpack.c.b16 %v7530, %v7512
        %v7711 = vpack.c.b16 %v7531, %v7513
        %v7712 = vpack.c.b16 %v7532, %v7514
        %v7713 = vpack.c.b16 %v7533, %v7515
        %v7714 = vpack.c.b16 %v7534, %v7516
        %v7715 = vpack.c.b16 %v7535, %v7517
        %v7716 = vpack.c.b16 %v7536, %v7518
        %v7717 = vpack.c.b16 %v7555, %v7537
        %v7718 = vpack.c.b16 %v7556, %v7538
        %v7719 = vpack.c.b16 %v7557, %v7539
        %v7720 = vpack.c.b16 %v7558, %v7540
        %v7721 = vpack.c.b16 %v7559, %v7541
        %v7722 = vpack.c.b16 %v7560, %v7542
        %v7723 = vpack.c.b16 %v7561, %v7543
        %v7724 = vpack.c.b16 %v7562, %v7544
        %v7725 = vpack.c.b16 %v7563, %v7545
        %v7726 = vpack.c.b16 %v7564, %v7546
        %v7727 = vpack.c.b16 %v7565, %v7547
        %v7728 = vpack.c.b16 %v7566, %v7548
        %v7729 = vpack.c.b16 %v7567, %v7549
        %v7730 = vpack.c.b16 %v7568, %v7550
        %v7731 = vpack.c.b16 %v7569, %v7551
        %v7732 = vpack.c.b16 %v7570, %v7552
        %v7733 = vpack.c.b16 %v7571, %v7553
        %v7734 = vpack.c.b16 %v7572, %v7554
        %v7735 = vpack.c.b16 %v7591, %v7573
        %v7736 = vpack.c.b16 %v7592, %v7574
        %v7737 = vpack.c.b16 %v7593, %v7575
        %v7738 = vpack.c.b16 %v7594, %v7576
        %v7739 = vpack.c.b16 %v7595, %v7577
        %v7740 = vpack.c.b16 %v7596, %v7578
        %v7741 = vpack.c.b16 %v7597, %v7579
        %v7742 = vpack.c.b16 %v7598, %v7580
        %v7743 = vpack.c.b16 %v7599, %v7581
        %v7744 = vpack.c.b16 %v7600, %v7582
        %v7745 = vpack.c.b16 %v7601, %v7583
        %v7746 = vpack.c.b16 %v7602, %v7584
        %v7747 = vpack.c.b16 %v7603, %v7585
        %v7748 = vpack.c.b16 %v7604, %v7586
        %v7749 = vpack.c.b16 %v7605, %v7587
        %v7750 = vpack.c.b16 %v7606, %v7588
        %v7751 = vpack.c.b16 %v7607, %v7589
        %v7752 = vpack.c.b16 %v7608, %v7590
        %v8185 = vunpack.c.l.b16 %v6883
        %v8186 = vunpack.c.h.b16 %v6883
        %v8187 = vunpack.c.l.b16 %v6884
        %v8188 = vunpack.c.h.b16 %v6884
        %v8189 = vunpack.c.l.b16 %v6885
        %v8190 = vunpack.c.h.b16 %v6885
        %v8191 = vunpack.c.l.b16 %v6886
        %v8192 = vunpack.c.h.b16 %v6886
        %v8193 = vunpack.c.l.b16 %v6887
        %v8194 = vunpack.c.h.b16 %v6887
        %v8195 = vunpack.c.l.b16 %v6888
        %v8196 = vunpack.c.h.b16 %v6888
        %v8197 = vunpack.c.l.b16 %v6889
        %v8198 = vunpack.c.h.b16 %v6889
        %v8199 = vunpack.c.l.b16 %v6890
        %v8200 = vunpack.c.h.b16 %v6890
        %v8201 = vunpack.c.l.b16 %v6891
        %v8202 = vunpack.c.h.b16 %v6891
        %v8203 = vunpack.c.l.b16 %v6892
        %v8204 = vunpack.c.h.b16 %v6892
        %v8205 = vunpack.c.l.b16 %v6893
        %v8206 = vunpack.c.h.b16 %v6893
        %v8207 = vunpack.c.l.b16 %v6894
        %v8208 = vunpack.c.h.b16 %v6894
        %v8209 = vunpack.c.l.b16 %v6895
        %v8210 = vunpack.c.h.b16 %v6895
        %v8211 = vunpack.c.l.b16 %v6896
        %v8212 = vunpack.c.h.b16 %v6896
        %v8213 = vunpack.c.l.b16 %v6897
        %v8214 = vunpack.c.h.b16 %v6897
        %v8215 = vunpack.c.l.b16 %v6898
        %v8216 = vunpack.c.h.b16 %v6898
        %v8217 = vunpack.c.l.b16 %v6899
        %v8218 = vunpack.c.h.b16 %v6899
        %v8219 = vunpack.c.l.b16 %v6900
        %v8220 = vunpack.c.h.b16 %v6900
        %v8221 = vunpack.c.l.b16 %v6901
        %v8222 = vunpack.c.h.b16 %v6901
        %v8223 = vunpack.c.l.b16 %v6902
        %v8224 = vunpack.c.h.b16 %v6902
        %v8225 = vunpack.c.l.b16 %v6903
        %v8226 = vunpack.c.h.b16 %v6903
        %v8227 = vunpack.c.l.b16 %v6904
        %v8228 = vunpack.c.h.b16 %v6904
        %v8229 = vunpack.c.l.b16 %v6905
        %v8230 = vunpack.c.h.b16 %v6905
        %v8231 = vunpack.c.l.b16 %v6906
        %v8232 = vunpack.c.h.b16 %v6906
        %v8233 = vunpack.c.l.b16 %v6907
        %v8234 = vunpack.c.h.b16 %v6907
        %v8235 = vunpack.c.l.b16 %v6908
        %v8236 = vunpack.c.h.b16 %v6908
        %v8237 = vunpack.c.l.b16 %v6909
        %v8238 = vunpack.c.h.b16 %v6909
        %v8239 = vunpack.c.l.b16 %v6910
        %v8240 = vunpack.c.h.b16 %v6910
        %v8241 = vunpack.c.l.b16 %v6911
        %v8242 = vunpack.c.h.b16 %v6911
        %v8243 = vunpack.c.l.b16 %v6912
        %v8244 = vunpack.c.h.b16 %v6912
        %v8245 = vunpack.c.l.b16 %v6913
        %v8246 = vunpack.c.h.b16 %v6913
        %v8247 = vunpack.c.l.b16 %v6914
        %v8248 = vunpack.c.h.b16 %v6914
        %v8249 = vunpack.c.l.b16 %v6915
        %v8250 = vunpack.c.h.b16 %v6915
        %v8251 = vunpack.c.l.b16 %v6916
        %v8252 = vunpack.c.h.b16 %v6916
        %v8253 = vunpack.c.l.b16 %v6917
        %v8254 = vunpack.c.h.b16 %v6917
        %v8255 = vunpack.c.l.b16 %v6918
        %v8256 = vunpack.c.h.b16 %v6918
        %v8257 = vunpack.c.l.b16 %v6919
        %v8258 = vunpack.c.h.b16 %v6919
        %v8259 = vunpack.c.l.b16 %v6920
        %v8260 = vunpack.c.h.b16 %v6920
        %v8261 = vunpack.c.l.b16 %v6921
        %v8262 = vunpack.c.h.b16 %v6921
        %v8263 = vunpack.c.l.b16 %v6922
        %v8264 = vunpack.c.h.b16 %v6922
        %v8265 = vunpack.c.l.b16 %v6923
        %v8266 = vunpack.c.h.b16 %v6923
        %v8267 = vunpack.c.l.b16 %v6924
        %v8268 = vunpack.c.h.b16 %v6924
        %v8269 = vunpack.c.l.b16 %v6925
        %v8270 = vunpack.c.h.b16 %v6925
        %v8271 = vunpack.c.l.b16 %v6926
        %v8272 = vunpack.c.h.b16 %v6926
        %v8273 = vunpack.c.l.b16 %v6927
        %v8274 = vunpack.c.h.b16 %v6927
        %v8275 = vunpack.c.l.b16 %v6928
        %v8276 = vunpack.c.h.b16 %v6928
        %v8277 = vunpack.c.l.b16 %v6929
        %v8278 = vunpack.c.h.b16 %v6929
        %v8279 = vunpack.c.l.b16 %v6930
        %v8280 = vunpack.c.h.b16 %v6930
        %v8281 = vunpack.c.l.b16 %v6931
        %v8282 = vunpack.c.h.b16 %v6931
        %v8283 = vunpack.c.l.b16 %v6932
        %v8284 = vunpack.c.h.b16 %v6932
        %v8285 = vunpack.c.l.b16 %v6933
        %v8286 = vunpack.c.h.b16 %v6933
        %v8287 = vunpack.c.l.b16 %v6934
        %v8288 = vunpack.c.h.b16 %v6934
        %v8289 = vunpack.c.l.b16 %v6935
        %v8290 = vunpack.c.h.b16 %v6935
        %v8291 = vunpack.c.l.b16 %v6936
        %v8292 = vunpack.c.h.b16 %v6936
        %v8293 = vunpack.c.l.b16 %v6937
        %v8294 = vunpack.c.h.b16 %v6937
        %v8295 = vunpack.c.l.b16 %v6938
        %v8296 = vunpack.c.h.b16 %v6938
        %v8297 = vunpack.c.l.b16 %v6939
        %v8298 = vunpack.c.h.b16 %v6939
        %v8299 = vunpack.c.l.b16 %v6940
        %v8300 = vunpack.c.h.b16 %v6940
        %v8301 = vunpack.c.l.b16 %v6941
        %v8302 = vunpack.c.h.b16 %v6941
        %v8303 = vunpack.c.l.b16 %v6942
        %v8304 = vunpack.c.h.b16 %v6942
        %v8305 = vunpack.c.l.b16 %v6943
        %v8306 = vunpack.c.h.b16 %v6943
        %v8307 = vunpack.c.l.b16 %v6944
        %v8308 = vunpack.c.h.b16 %v6944
        %v8309 = vunpack.c.l.b16 %v6945
        %v8310 = vunpack.c.h.b16 %v6945
        %v8311 = vunpack.c.l.b16 %v6946
        %v8312 = vunpack.c.h.b16 %v6946
        %v8313 = vunpack.c.l.b16 %v6947
        %v8314 = vunpack.c.h.b16 %v6947
        %v8315 = vunpack.c.l.b16 %v6948
        %v8316 = vunpack.c.h.b16 %v6948
        %v8317 = vunpack.c.l.b16 %v6949
        %v8318 = vunpack.c.h.b16 %v6949
        %v8319 = vunpack.c.l.b16 %v6950
        %v8320 = vunpack.c.h.b16 %v6950
        %v8321 = vunpack.c.l.b16 %v6951
        %v8322 = vunpack.c.h.b16 %v6951
        %v8323 = vunpack.c.l.b16 %v6952
        %v8324 = vunpack.c.h.b16 %v6952
        %v8325 = vunpack.c.l.b16 %v6953
        %v8326 = vunpack.c.h.b16 %v6953
        %v8327 = vunpack.c.l.b16 %v6954
        %v8328 = vunpack.c.h.b16 %v6954
        %v8329 = vunpack.c.l.b16 %v6955
        %v8330 = vunpack.c.h.b16 %v6955
        %v8331 = vunpack.c.l.b16 %v6956
        %v8332 = vunpack.c.h.b16 %v6956
        %v8333 = vunpack.c.l.b16 %v6957
        %v8334 = vunpack.c.h.b16 %v6957
        %v8335 = vunpack.c.l.b16 %v6958
        %v8336 = vunpack.c.h.b16 %v6958
        %v8337 = vunpack.c.l.b16 %v6959
        %v8338 = vunpack.c.h.b16 %v6959
        %v8339 = vunpack.c.l.b16 %v6960
        %v8340 = vunpack.c.h.b16 %v6960
        %v8341 = vunpack.c.l.b16 %v6961
        %v8342 = vunpack.c.h.b16 %v6961
        %v8343 = vunpack.c.l.b16 %v6962
        %v8344 = vunpack.c.h.b16 %v6962
        %v8345 = vunpack.c.l.b16 %v6963
        %v8346 = vunpack.c.h.b16 %v6963
        %v8347 = vunpack.c.l.b16 %v6964
        %v8348 = vunpack.c.h.b16 %v6964
        %v8349 = vunpack.c.l.b16 %v6965
        %v8350 = vunpack.c.h.b16 %v6965
        %v8351 = vunpack.c.l.b16 %v6966
        %v8352 = vunpack.c.h.b16 %v6966
        %v8353 = vunpack.c.l.b16 %v6967
        %v8354 = vunpack.c.h.b16 %v6967
        %v8355 = vunpack.c.l.b16 %v6968
        %v8356 = vunpack.c.h.b16 %v6968
        %v8357 = vunpack.c.l.b16 %v6969
        %v8358 = vunpack.c.h.b16 %v6969
        %v8359 = vunpack.c.l.b16 %v6970
        %v8360 = vunpack.c.h.b16 %v6970
        %v8361 = vunpack.c.l.b16 %v6971
        %v8362 = vunpack.c.h.b16 %v6971
        %v8363 = vunpack.c.l.b16 %v6972
        %v8364 = vunpack.c.h.b16 %v6972
        %v8365 = vunpack.c.l.b16 %v6973
        %v8366 = vunpack.c.h.b16 %v6973
        %v8367 = vunpack.c.l.b16 %v6974
        %v8368 = vunpack.c.h.b16 %v6974
        %v8369 = vunpack.c.l.b16 %v6975
        %v8370 = vunpack.c.h.b16 %v6975
        %v8371 = vunpack.c.l.b16 %v6976
        %v8372 = vunpack.c.h.b16 %v6976
        %v8373 = vunpack.c.l.b16 %v6977
        %v8374 = vunpack.c.h.b16 %v6977
        %v8375 = vunpack.c.l.b16 %v6978
        %v8376 = vunpack.c.h.b16 %v6978
        %v8377 = vunpack.c.l.b16 %v6979
        %v8378 = vunpack.c.h.b16 %v6979
        %v8379 = vunpack.c.l.b16 %v6980
        %v8380 = vunpack.c.h.b16 %v6980
        %v8381 = vunpack.c.l.b16 %v6981
        %v8382 = vunpack.c.h.b16 %v6981
        %v8383 = vunpack.c.l.b16 %v6982
        %v8384 = vunpack.c.h.b16 %v6982
        %v8385 = vunpack.c.l.b16 %v6983
        %v8386 = vunpack.c.h.b16 %v6983
        %v8387 = vunpack.c.l.b16 %v6984
        %v8388 = vunpack.c.h.b16 %v6984
        %v8389 = vunpack.c.l.b16 %v6985
        %v8390 = vunpack.c.h.b16 %v6985
        %v8391 = vunpack.c.l.b16 %v6986
        %v8392 = vunpack.c.h.b16 %v6986
        %v8393 = vunpack.c.l.b16 %v6987
        %v8394 = vunpack.c.h.b16 %v6987
        %v8395 = vunpack.c.l.b16 %v6988
        %v8396 = vunpack.c.h.b16 %v6988
        %v8397 = vunpack.c.l.b16 %v6989
        %v8398 = vunpack.c.h.b16 %v6989
        %v8399 = vunpack.c.l.b16 %v6990
        %v8400 = vunpack.c.h.b16 %v6990
        %v8401 = vunpack.c.l.b16 %v6991
        %v8402 = vunpack.c.h.b16 %v6991
        %v8403 = vunpack.c.l.b16 %v6992
        %v8404 = vunpack.c.h.b16 %v6992
        %v8405 = vunpack.c.l.b16 %v6993
        %v8406 = vunpack.c.h.b16 %v6993
        %v8407 = vunpack.c.l.b16 %v6994
        %v8408 = vunpack.c.h.b16 %v6994
        %v8409 = vunpack.c.l.b16 %v6995
        %v8410 = vunpack.c.h.b16 %v6995
        %v8411 = vunpack.c.l.b16 %v6996
        %v8412 = vunpack.c.h.b16 %v6996
        %v8413 = vunpack.c.l.b16 %v6997
        %v8414 = vunpack.c.h.b16 %v6997
        %v8415 = vunpack.c.l.b16 %v6998
        %v8416 = vunpack.c.h.b16 %v6998
        %v8417 = vunpack.c.l.b16 %v6999
        %v8418 = vunpack.c.h.b16 %v6999
        %v8419 = vunpack.c.l.b16 %v7000
        %v8420 = vunpack.c.h.b16 %v7000
        %v8421 = vunpack.c.l.b16 %v7001
        %v8422 = vunpack.c.h.b16 %v7001
        %v8423 = vunpack.c.l.b16 %v7002
        %v8424 = vunpack.c.h.b16 %v7002
        %v8425 = vunpack.c.l.b16 %v7003
        %v8426 = vunpack.c.h.b16 %v7003
        %v8427 = vunpack.c.l.b16 %v7004
        %v8428 = vunpack.c.h.b16 %v7004
        %v8429 = vunpack.c.l.b16 %v7005
        %v8430 = vunpack.c.h.b16 %v7005
        %v8431 = vunpack.c.l.b16 %v7006
        %v8432 = vunpack.c.h.b16 %v7006
        %v8433 = vunpack.c.l.b16 %v7007
        %v8434 = vunpack.c.h.b16 %v7007
        %v8435 = vunpack.c.l.b16 %v7008
        %v8436 = vunpack.c.h.b16 %v7008
        %v8437 = vunpack.c.l.b16 %v7009
        %v8438 = vunpack.c.h.b16 %v7009
        %v8439 = vunpack.c.l.b16 %v7010
        %v8440 = vunpack.c.h.b16 %v7010
        %v8441 = vunpack.c.l.b16 %v7011
        %v8442 = vunpack.c.h.b16 %v7011
        %v8443 = vunpack.c.l.b16 %v7012
        %v8444 = vunpack.c.h.b16 %v7012
        %v8445 = vunpack.c.l.b16 %v7013
        %v8446 = vunpack.c.h.b16 %v7013
        %v8447 = vunpack.c.l.b16 %v7014
        %v8448 = vunpack.c.h.b16 %v7014
        %v8449 = vunpack.c.l.b16 %v7015
        %v8450 = vunpack.c.h.b16 %v7015
        %v8451 = vunpack.c.l.b16 %v7016
        %v8452 = vunpack.c.h.b16 %v7016
        %v8453 = vunpack.c.l.b16 %v7017
        %v8454 = vunpack.c.h.b16 %v7017
        %v8455 = vunpack.c.l.b16 %v7018
        %v8456 = vunpack.c.h.b16 %v7018
        %v8457 = vunpack.c.l.b16 %v7019
        %v8458 = vunpack.c.h.b16 %v7019
        %v8459 = vunpack.c.l.b16 %v7020
        %v8460 = vunpack.c.h.b16 %v7020
        %v8461 = vunpack.c.l.b16 %v7021
        %v8462 = vunpack.c.h.b16 %v7021
        %v8463 = vunpack.c.l.b16 %v7022
        %v8464 = vunpack.c.h.b16 %v7022
        %v8465 = vunpack.c.l.b16 %v7023
        %v8466 = vunpack.c.h.b16 %v7023
        %v8467 = vunpack.c.l.b16 %v7024
        %v8468 = vunpack.c.h.b16 %v7024
        %v8469 = vunpack.c.l.b16 %v7025
        %v8470 = vunpack.c.h.b16 %v7025
        %v8471 = vunpack.c.l.b16 %v7026
        %v8472 = vunpack.c.h.b16 %v7026
        %v8473 = vunpack.c.l.b16 %v7027
        %v8474 = vunpack.c.h.b16 %v7027
        %v8475 = vunpack.c.l.b16 %v7028
        %v8476 = vunpack.c.h.b16 %v7028
        %v8477 = vunpack.c.l.b16 %v7029
        %v8478 = vunpack.c.h.b16 %v7029
        %v8479 = vunpack.c.l.b16 %v7030
        %v8480 = vunpack.c.h.b16 %v7030
        %v8481 = vunpack.c.l.b16 %v7031
        %v8482 = vunpack.c.h.b16 %v7031
        %v8483 = vunpack.c.l.b16 %v7032
        %v8484 = vunpack.c.h.b16 %v7032
        %v8485 = vunpack.c.l.b16 %v7033
        %v8486 = vunpack.c.h.b16 %v7033
        %v8487 = vunpack.c.l.b16 %v7034
        %v8488 = vunpack.c.h.b16 %v7034
        %v8489 = vunpack.c.l.b16 %v7035
        %v8490 = vunpack.c.h.b16 %v7035
        %v8491 = vunpack.c.l.b16 %v7036
        %v8492 = vunpack.c.h.b16 %v7036
        %v8493 = vunpack.c.l.b16 %v7037
        %v8494 = vunpack.c.h.b16 %v7037
        %v8495 = vunpack.c.l.b16 %v7038
        %v8496 = vunpack.c.h.b16 %v7038
        %v8497 = vunpack.c.l.b16 %v7039
        %v8498 = vunpack.c.h.b16 %v7039
        %v8499 = vunpack.c.l.b16 %v7040
        %v8500 = vunpack.c.h.b16 %v7040
        %v8501 = vunpack.c.l.b16 %v7041
        %v8502 = vunpack.c.h.b16 %v7041
        %v8503 = vunpack.c.l.b16 %v7042
        %v8504 = vunpack.c.h.b16 %v7042
        %v8505 = vunpack.c.l.b16 %v7043
        %v8506 = vunpack.c.h.b16 %v7043
        %v8507 = vunpack.c.l.b16 %v7044
        %v8508 = vunpack.c.h.b16 %v7044
        %v8509 = vunpack.c.l.b16 %v7045
        %v8510 = vunpack.c.h.b16 %v7045
        %v8511 = vunpack.c.l.b16 %v7046
        %v8512 = vunpack.c.h.b16 %v7046
        %v8513 = vunpack.c.l.b16 %v7047
        %v8514 = vunpack.c.h.b16 %v7047
        %v8515 = vunpack.c.l.b16 %v7048
        %v8516 = vunpack.c.h.b16 %v7048
        %v8517 = vunpack.c.l.b16 %v7049
        %v8518 = vunpack.c.h.b16 %v7049
        %v8519 = vunpack.c.l.b16 %v7050
        %v8520 = vunpack.c.h.b16 %v7050
        %v8521 = vunpack.c.l.b16 %v7051
        %v8522 = vunpack.c.h.b16 %v7051
        %v8523 = vunpack.c.l.b16 %v7052
        %v8524 = vunpack.c.h.b16 %v7052
        %v8525 = vunpack.c.l.b16 %v7053
        %v8526 = vunpack.c.h.b16 %v7053
        %v8527 = vunpack.c.l.b16 %v7054
        %v8528 = vunpack.c.h.b16 %v7054
        %v8529 = vunpack.c.l.b16 %v7055
        %v8530 = vunpack.c.h.b16 %v7055
        %v8531 = vunpack.c.l.b16 %v7056
        %v8532 = vunpack.c.h.b16 %v7056
        %v8533 = vunpack.c.l.b16 %v7057
        %v8534 = vunpack.c.h.b16 %v7057
        %v8535 = vunpack.c.l.b16 %v7058
        %v8536 = vunpack.c.h.b16 %v7058
        %v8537 = vunpack.c.l.b16 %v7059
        %v8538 = vunpack.c.h.b16 %v7059
        %v8539 = vunpack.c.l.b16 %v7060
        %v8540 = vunpack.c.h.b16 %v7060
        %v8541 = vunpack.c.l.b16 %v7061
        %v8542 = vunpack.c.h.b16 %v7061
        %v8543 = vunpack.c.l.b16 %v7062
        %v8544 = vunpack.c.h.b16 %v7062
        %v8545 = vunpack.c.l.b16 %v7063
        %v8546 = vunpack.c.h.b16 %v7063
        %v8547 = vunpack.c.l.b16 %v7064
        %v8548 = vunpack.c.h.b16 %v7064
        %v8549 = vunpack.c.l.b16 %v7065
        %v8550 = vunpack.c.h.b16 %v7065
        %v8551 = vunpack.c.l.b16 %v7066
        %v8552 = vunpack.c.h.b16 %v7066
        %v8553 = vunpack.c.l.b16 %v7067
        %v8554 = vunpack.c.h.b16 %v7067
        %v8555 = vunpack.c.l.b16 %v7068
        %v8556 = vunpack.c.h.b16 %v7068
        %v8557 = vunpack.c.l.b16 %v7069
        %v8558 = vunpack.c.h.b16 %v7069
        %v8559 = vunpack.c.l.b16 %v7070
        %v8560 = vunpack.c.h.b16 %v7070
        %v8561 = vunpack.c.l.b16 %v7071
        %v8562 = vunpack.c.h.b16 %v7071
        %v8563 = vunpack.c.l.b16 %v7072
        %v8564 = vunpack.c.h.b16 %v7072
        %v8565 = vunpack.c.l.b16 %v7073
        %v8566 = vunpack.c.h.b16 %v7073
        %v8567 = vunpack.c.l.b16 %v7074
        %v8568 = vunpack.c.h.b16 %v7074
        %v8569 = vunpack.c.l.b16 %v7075
        %v8570 = vunpack.c.h.b16 %v7075
        %v8571 = vunpack.c.l.b16 %v7076
        %v8572 = vunpack.c.h.b16 %v7076
        %v8573 = vunpack.c.l.b16 %v7077
        %v8574 = vunpack.c.h.b16 %v7077
        %v8575 = vunpack.c.l.b16 %v7078
        %v8576 = vunpack.c.h.b16 %v7078
        %v8577 = vunpack.c.l.b16 %v7079
        %v8578 = vunpack.c.h.b16 %v7079
        %v8579 = vunpack.c.l.b16 %v7080
        %v8580 = vunpack.c.h.b16 %v7080
        %v8581 = vunpack.c.l.b16 %v7081
        %v8582 = vunpack.c.h.b16 %v7081
        %v8583 = vunpack.c.l.b16 %v7082
        %v8584 = vunpack.c.h.b16 %v7082
        %v8585 = vunpack.c.l.b16 %v7083
        %v8586 = vunpack.c.h.b16 %v7083
        %v8587 = vunpack.c.l.b16 %v7084
        %v8588 = vunpack.c.h.b16 %v7084
        %v8589 = vunpack.c.l.b16 %v7085
        %v8590 = vunpack.c.h.b16 %v7085
        %v8591 = vunpack.c.l.b16 %v7086
        %v8592 = vunpack.c.h.b16 %v7086
        %v8593 = vunpack.c.l.b16 %v7087
        %v8594 = vunpack.c.h.b16 %v7087
        %v8595 = vunpack.c.l.b16 %v7088
        %v8596 = vunpack.c.h.b16 %v7088
        %v8597 = vunpack.c.l.b16 %v7089
        %v8598 = vunpack.c.h.b16 %v7089
        %v8599 = vunpack.c.l.b16 %v7090
        %v8600 = vunpack.c.h.b16 %v7090
        %v8601 = vunpack.c.l.b16 %v7091
        %v8602 = vunpack.c.h.b16 %v7091
        %v8603 = vunpack.c.l.b16 %v7092
        %v8604 = vunpack.c.h.b16 %v7092
        %v8605 = vunpack.c.l.b16 %v7093
        %v8606 = vunpack.c.h.b16 %v7093
        %v8607 = vunpack.c.l.b16 %v7094
        %v8608 = vunpack.c.h.b16 %v7094
        %v8609 = vunpack.c.l.b16 %v7095
        %v8610 = vunpack.c.h.b16 %v7095
        %v8611 = vunpack.c.l.b16 %v7096
        %v8612 = vunpack.c.h.b16 %v7096
        %v8613 = vunpack.c.l.b16 %v7097
        %v8614 = vunpack.c.h.b16 %v7097
        %v8615 = vunpack.c.l.b16 %v7098
        %v8616 = vunpack.c.h.b16 %v7098
        %v8617 = vunpack.c.l.b16 %v7099
        %v8618 = vunpack.c.h.b16 %v7099
        %v8619 = vunpack.c.l.b16 %v7100
        %v8620 = vunpack.c.h.b16 %v7100
        %v8621 = vunpack.c.l.b16 %v7101
        %v8622 = vunpack.c.h.b16 %v7101
        %v8623 = vunpack.c.l.b16 %v7102
        %v8624 = vunpack.c.h.b16 %v7102
        %v8625 = vunpack.c.l.b16 %v7103
        %v8626 = vunpack.c.h.b16 %v7103
        %v8627 = vunpack.c.l.b16 %v7104
        %v8628 = vunpack.c.h.b16 %v7104
        %v8629 = vunpack.c.l.b16 %v7105
        %v8630 = vunpack.c.h.b16 %v7105
        %v8631 = vunpack.c.l.b16 %v7106
        %v8632 = vunpack.c.h.b16 %v7106
        %v8633 = vunpack.c.l.b16 %v7107
        %v8634 = vunpack.c.h.b16 %v7107
        %v8635 = vunpack.c.l.b16 %v7108
        %v8636 = vunpack.c.h.b16 %v7108
        %v8637 = vunpack.c.l.b16 %v7109
        %v8638 = vunpack.c.h.b16 %v7109
        %v8639 = vunpack.c.l.b16 %v7110
        %v8640 = vunpack.c.h.b16 %v7110
        %v8641 = vunpack.c.l.b16 %v7111
        %v8642 = vunpack.c.h.b16 %v7111
        %v8643 = vunpack.c.l.b16 %v7112
        %v8644 = vunpack.c.h.b16 %v7112
        %v8645 = vunpack.c.l.b16 %v7113
        %v8646 = vunpack.c.h.b16 %v7113
        %v8647 = vunpack.c.l.b16 %v7114
        %v8648 = vunpack.c.h.b16 %v7114
        %v8649 = vunpack.c.l.b16 %v7115
        %v8650 = vunpack.c.h.b16 %v7115
        %v8651 = vunpack.c.l.b16 %v7116
        %v8652 = vunpack.c.h.b16 %v7116
        %v8653 = vunpack.c.l.b16 %v7117
        %v8654 = vunpack.c.h.b16 %v7117
        %v8655 = vunpack.c.l.b16 %v7118
        %v8656 = vunpack.c.h.b16 %v7118
        %v8657 = vunpack.c.l.b16 %v7119
        %v8658 = vunpack.c.h.b16 %v7119
        %v8659 = vunpack.c.l.b16 %v7120
        %v8660 = vunpack.c.h.b16 %v7120
        %v8661 = vunpack.c.l.b16 %v7121
        %v8662 = vunpack.c.h.b16 %v7121
        %v8663 = vunpack.c.l.b16 %v7122
        %v8664 = vunpack.c.h.b16 %v7122
        %v8665 = vunpack.c.l.b16 %v7123
        %v8666 = vunpack.c.h.b16 %v7123
        %v8667 = vunpack.c.l.b16 %v7124
        %v8668 = vunpack.c.h.b16 %v7124
        %v8669 = vunpack.c.l.b16 %v7125
        %v8670 = vunpack.c.h.b16 %v7125
        %v8671 = vunpack.c.l.b16 %v7126
        %v8672 = vunpack.c.h.b16 %v7126
        %v8673 = vunpack.c.l.b16 %v7127
        %v8674 = vunpack.c.h.b16 %v7127
        %v8675 = vunpack.c.l.b16 %v7128
        %v8676 = vunpack.c.h.b16 %v7128
        %v8677 = vunpack.c.l.b16 %v7129
        %v8678 = vunpack.c.h.b16 %v7129
        %v8679 = vunpack.c.l.b16 %v7130
        %v8680 = vunpack.c.h.b16 %v7130
        %v8681 = vunpack.c.l.b16 %v7131
        %v8682 = vunpack.c.h.b16 %v7131
        %v8683 = vunpack.c.l.b16 %v7132
        %v8684 = vunpack.c.h.b16 %v7132
        %v8685 = vunpack.c.l.b16 %v7133
        %v8686 = vunpack.c.h.b16 %v7133
        %v8687 = vunpack.c.l.b16 %v7134
        %v8688 = vunpack.c.h.b16 %v7134
        %v8689 = vunpack.c.l.b16 %v7135
        %v8690 = vunpack.c.h.b16 %v7135
        %v8691 = vunpack.c.l.b16 %v7136
        %v8692 = vunpack.c.h.b16 %v7136
        %v8693 = vunpack.c.l.b16 %v7137
        %v8694 = vunpack.c.h.b16 %v7137
        %v8695 = vunpack.c.l.b16 %v7138
        %v8696 = vunpack.c.h.b16 %v7138
        %v8697 = vunpack.c.l.b16 %v7139
        %v8698 = vunpack.c.h.b16 %v7139
        %v8699 = vunpack.c.l.b16 %v7140
        %v8700 = vunpack.c.h.b16 %v7140
        %v8701 = vunpack.c.l.b16 %v7141
        %v8702 = vunpack.c.h.b16 %v7141
        %v8703 = vunpack.c.l.b16 %v7142
        %v8704 = vunpack.c.h.b16 %v7142
        %v8705 = vunpack.c.l.b16 %v7143
        %v8706 = vunpack.c.h.b16 %v7143
        %v8707 = vunpack.c.l.b16 %v7144
        %v8708 = vunpack.c.h.b16 %v7144
        %v8709 = vunpack.c.l.b16 %v7145
        %v8710 = vunpack.c.h.b16 %v7145
        %v8711 = vunpack.c.l.b16 %v7146
        %v8712 = vunpack.c.h.b16 %v7146
        %v8713 = vunpack.c.l.b16 %v7147
        %v8714 = vunpack.c.h.b16 %v7147
        %v8715 = vunpack.c.l.b16 %v7148
        %v8716 = vunpack.c.h.b16 %v7148
        %v8717 = vunpack.c.l.b16 %v7149
        %v8718 = vunpack.c.h.b16 %v7149
        %v8719 = vunpack.c.l.b16 %v7150
        %v8720 = vunpack.c.h.b16 %v7150
        %v8721 = vunpack.c.l.b16 %v7151
        %v8722 = vunpack.c.h.b16 %v7151
        %v8723 = vunpack.c.l.b16 %v7152
        %v8724 = vunpack.c.h.b16 %v7152
        %v8725 = vunpack.c.l.b16 %v7153
        %v8726 = vunpack.c.h.b16 %v7153
        %v8727 = vunpack.c.l.b16 %v7154
        %v8728 = vunpack.c.h.b16 %v7154
        %v8729 = vunpack.c.l.b16 %v7155
        %v8730 = vunpack.c.h.b16 %v7155
        %v8731 = vunpack.c.l.b16 %v7156
        %v8732 = vunpack.c.h.b16 %v7156
        %v8733 = vunpack.c.l.b16 %v7157
        %v8734 = vunpack.c.h.b16 %v7157
        %v8735 = vunpack.c.l.b16 %v7158
        %v8736 = vunpack.c.h.b16 %v7158
        %v8737 = vunpack.c.l.b16 %v7159
        %v8738 = vunpack.c.h.b16 %v7159
        %v8739 = vunpack.c.l.b16 %v7160
        %v8740 = vunpack.c.h.b16 %v7160
        %v8741 = vunpack.c.l.b16 %v7161
        %v8742 = vunpack.c.h.b16 %v7161
        %v8743 = vunpack.c.l.b16 %v7162
        %v8744 = vunpack.c.h.b16 %v7162
        %v8745 = vunpack.c.l.b16 %v7163
        %v8746 = vunpack.c.h.b16 %v7163
        %v8747 = vunpack.c.l.b16 %v7164
        %v8748 = vunpack.c.h.b16 %v7164
        %v8749 = vunpack.c.l.b16 %v7165
        %v8750 = vunpack.c.h.b16 %v7165
        %v8751 = vunpack.c.l.b16 %v7166
        %v8752 = vunpack.c.h.b16 %v7166
        %v8753 = vunpack.c.l.b16 %v7167
        %v8754 = vunpack.c.h.b16 %v7167
        %v8755 = vunpack.c.l.b16 %v7168
        %v8756 = vunpack.c.h.b16 %v7168
        %v8757 = vunpack.c.l.b16 %v7169
        %v8758 = vunpack.c.h.b16 %v7169
        %v8759 = vunpack.c.l.b16 %v7170
        %v8760 = vunpack.c.h.b16 %v7170
        %v8761 = vpack.c.b16 %v8187, %v8185
        %v8762 = vpack.c.b16 %v8188, %v8186
        %v8763 = vpack.c.b16 %v8191, %v8189
        %v8764 = vpack.c.b16 %v8192, %v8190
        %v8765 = vpack.c.b16 %v8195, %v8193
        %v8766 = vpack.c.b16 %v8196, %v8194
        %v8767 = vpack.c.b16 %v8199, %v8197
        %v8768 = vpack.c.b16 %v8200, %v8198
        %v8769 = vpack.c.b16 %v8203, %v8201
        %v8770 = vpack.c.b16 %v8204, %v8202
        %v8771 = vpack.c.b16 %v8207, %v8205
        %v8772 = vpack.c.b16 %v8208, %v8206
        %v8773 = vpack.c.b16 %v8211, %v8209
        %v8774 = vpack.c.b16 %v8212, %v8210
        %v8775 = vpack.c.b16 %v8215, %v8213
        %v8776 = vpack.c.b16 %v8216, %v8214
        %v8777 = vpack.c.b16 %v8219, %v8217
        %v8778 = vpack.c.b16 %v8220, %v8218
        %v8779 = vpack.c.b16 %v8223, %v8221
        %v8780 = vpack.c.b16 %v8224, %v8222
        %v8781 = vpack.c.b16 %v8227, %v8225
        %v8782 = vpack.c.b16 %v8228, %v8226
        %v8783 = vpack.c.b16 %v8231, %v8229
        %v8784 = vpack.c.b16 %v8232, %v8230
        %v8785 = vpack.c.b16 %v8235, %v8233
        %v8786 = vpack.c.b16 %v8236, %v8234
        %v8787 = vpack.c.b16 %v8239, %v8237
        %v8788 = vpack.c.b16 %v8240, %v8238
        %v8789 = vpack.c.b16 %v8243, %v8241
        %v8790 = vpack.c.b16 %v8244, %v8242
        %v8791 = vpack.c.b16 %v8247, %v8245
        %v8792 = vpack.c.b16 %v8248, %v8246
        %v8793 = vpack.c.b16 %v8251, %v8249
        %v8794 = vpack.c.b16 %v8252, %v8250
        %v8795 = vpack.c.b16 %v8255, %v8253
        %v8796 = vpack.c.b16 %v8256, %v8254
        %v8797 = vpack.c.b16 %v8259, %v8257
        %v8798 = vpack.c.b16 %v8260, %v8258
        %v8799 = vpack.c.b16 %v8263, %v8261
        %v8800 = vpack.c.b16 %v8264, %v8262
        %v8801 = vpack.c.b16 %v8267, %v8265
        %v8802 = vpack.c.b16 %v8268, %v8266
        %v8803 = vpack.c.b16 %v8271, %v8269
        %v8804 = vpack.c.b16 %v8272, %v8270
        %v8805 = vpack.c.b16 %v8275, %v8273
        %v8806 = vpack.c.b16 %v8276, %v8274
        %v8807 = vpack.c.b16 %v8279, %v8277
        %v8808 = vpack.c.b16 %v8280, %v8278
        %v8809 = vpack.c.b16 %v8283, %v8281
        %v8810 = vpack.c.b16 %v8284, %v8282
        %v8811 = vpack.c.b16 %v8287, %v8285
        %v8812 = vpack.c.b16 %v8288, %v8286
        %v8813 = vpack.c.b16 %v8291, %v8289
        %v8814 = vpack.c.b16 %v8292, %v8290
        %v8815 = vpack.c.b16 %v8295, %v8293
        %v8816 = vpack.c.b16 %v8296, %v8294
        %v8817 = vpack.c.b16 %v8299, %v8297
        %v8818 = vpack.c.b16 %v8300, %v8298
        %v8819 = vpack.c.b16 %v8303, %v8301
        %v8820 = vpack.c.b16 %v8304, %v8302
        %v8821 = vpack.c.b16 %v8307, %v8305
        %v8822 = vpack.c.b16 %v8308, %v8306
        %v8823 = vpack.c.b16 %v8311, %v8309
        %v8824 = vpack.c.b16 %v8312, %v8310
        %v8825 = vpack.c.b16 %v8315, %v8313
        %v8826 = vpack.c.b16 %v8316, %v8314
        %v8827 = vpack.c.b16 %v8319, %v8317
        %v8828 = vpack.c.b16 %v8320, %v8318
        %v8829 = vpack.c.b16 %v8323, %v8321
        %v8830 = vpack.c.b16 %v8324, %v8322
        %v8831 = vpack.c.b16 %v8327, %v8325
        %v8832 = vpack.c.b16 %v8328, %v8326
        %v8833 = vpack.c.b16 %v8331, %v8329
        %v8834 = vpack.c.b16 %v8332, %v8330
        %v8835 = vpack.c.b16 %v8335, %v8333
        %v8836 = vpack.c.b16 %v8336, %v8334
        %v8837 = vpack.c.b16 %v8339, %v8337
        %v8838 = vpack.c.b16 %v8340, %v8338
        %v8839 = vpack.c.b16 %v8343, %v8341
        %v8840 = vpack.c.b16 %v8344, %v8342
        %v8841 = vpack.c.b16 %v8347, %v8345
        %v8842 = vpack.c.b16 %v8348, %v8346
        %v8843 = vpack.c.b16 %v8351, %v8349
        %v8844 = vpack.c.b16 %v8352, %v8350
        %v8845 = vpack.c.b16 %v8355, %v8353
        %v8846 = vpack.c.b16 %v8356, %v8354
        %v8847 = vpack.c.b16 %v8359, %v8357
        %v8848 = vpack.c.b16 %v8360, %v8358
        %v8849 = vpack.c.b16 %v8363, %v8361
        %v8850 = vpack.c.b16 %v8364, %v8362
        %v8851 = vpack.c.b16 %v8367, %v8365
        %v8852 = vpack.c.b16 %v8368, %v8366
        %v8853 = vpack.c.b16 %v8371, %v8369
        %v8854 = vpack.c.b16 %v8372, %v8370
        %v8855 = vpack.c.b16 %v8375, %v8373
        %v8856 = vpack.c.b16 %v8376, %v8374
        %v8857 = vpack.c.b16 %v8379, %v8377
        %v8858 = vpack.c.b16 %v8380, %v8378
        %v8859 = vpack.c.b16 %v8383, %v8381
        %v8860 = vpack.c.b16 %v8384, %v8382
        %v8861 = vpack.c.b16 %v8387, %v8385
        %v8862 = vpack.c.b16 %v8388, %v8386
        %v8863 = vpack.c.b16 %v8391, %v8389
        %v8864 = vpack.c.b16 %v8392, %v8390
        %v8865 = vpack.c.b16 %v8395, %v8393
        %v8866 = vpack.c.b16 %v8396, %v8394
        %v8867 = vpack.c.b16 %v8399, %v8397
        %v8868 = vpack.c.b16 %v8400, %v8398
        %v8869 = vpack.c.b16 %v8403, %v8401
        %v8870 = vpack.c.b16 %v8404, %v8402
        %v8871 = vpack.c.b16 %v8407, %v8405
        %v8872 = vpack.c.b16 %v8408, %v8406
        %v8873 = vpack.c.b16 %v8411, %v8409
        %v8874 = vpack.c.b16 %v8412, %v8410
        %v8875 = vpack.c.b16 %v8415, %v8413
        %v8876 = vpack.c.b16 %v8416, %v8414
        %v8877 = vpack.c.b16 %v8419, %v8417
        %v8878 = vpack.c.b16 %v8420, %v8418
        %v8879 = vpack.c.b16 %v8423, %v8421
        %v8880 = vpack.c.b16 %v8424, %v8422
        %v8881 = vpack.c.b16 %v8427, %v8425
        %v8882 = vpack.c.b16 %v8428, %v8426
        %v8883 = vpack.c.b16 %v8431, %v8429
        %v8884 = vpack.c.b16 %v8432, %v8430
        %v8885 = vpack.c.b16 %v8435, %v8433
        %v8886 = vpack.c.b16 %v8436, %v8434
        %v8887 = vpack.c.b16 %v8439, %v8437
        %v8888 = vpack.c.b16 %v8440, %v8438
        %v8889 = vpack.c.b16 %v8443, %v8441
        %v8890 = vpack.c.b16 %v8444, %v8442
        %v8891 = vpack.c.b16 %v8447, %v8445
        %v8892 = vpack.c.b16 %v8448, %v8446
        %v8893 = vpack.c.b16 %v8451, %v8449
        %v8894 = vpack.c.b16 %v8452, %v8450
        %v8895 = vpack.c.b16 %v8455, %v8453
        %v8896 = vpack.c.b16 %v8456, %v8454
        %v8897 = vpack.c.b16 %v8459, %v8457
        %v8898 = vpack.c.b16 %v8460, %v8458
        %v8899 = vpack.c.b16 %v8463, %v8461
        %v8900 = vpack.c.b16 %v8464, %v8462
        %v8901 = vpack.c.b16 %v8467, %v8465
        %v8902 = vpack.c.b16 %v8468, %v8466
        %v8903 = vpack.c.b16 %v8471, %v8469
        %v8904 = vpack.c.b16 %v8472, %v8470
        %v8905 = vpack.c.b16 %v8475, %v8473
        %v8906 = vpack.c.b16 %v8476, %v8474
        %v8907 = vpack.c.b16 %v8479, %v8477
        %v8908 = vpack.c.b16 %v8480, %v8478
        %v8909 = vpack.c.b16 %v8483, %v8481
        %v8910 = vpack.c.b16 %v8484, %v8482
        %v8911 = vpack.c.b16 %v8487, %v8485
        %v8912 = vpack.c.b16 %v8488, %v8486
        %v8913 = vpack.c.b16 %v8491, %v8489
        %v8914 = vpack.c.b16 %v8492, %v8490
        %v8915 = vpack.c.b16 %v8495, %v8493
        %v8916 = vpack.c.b16 %v8496, %v8494
        %v8917 = vpack.c.b16 %v8499, %v8497
        %v8918 = vpack.c.b16 %v8500, %v8498
        %v8919 = vpack.c.b16 %v8503, %v8501
        %v8920 = vpack.c.b16 %v8504, %v8502
        %v8921 = vpack.c.b16 %v8507, %v8505
        %v8922 = vpack.c.b16 %v8508, %v8506
        %v8923 = vpack.c.b16 %v8511, %v8509
        %v8924 = vpack.c.b16 %v8512, %v8510
        %v8925 = vpack.c.b16 %v8515, %v8513
        %v8926 = vpack.c.b16 %v8516, %v8514
        %v8927 = vpack.c.b16 %v8519, %v8517
        %v8928 = vpack.c.b16 %v8520, %v8518
        %v8929 = vpack.c.b16 %v8523, %v8521
        %v8930 = vpack.c.b16 %v8524, %v8522
        %v8931 = vpack.c.b16 %v8527, %v8525
        %v8932 = vpack.c.b16 %v8528, %v8526
        %v8933 = vpack.c.b16 %v8531, %v8529
        %v8934 = vpack.c.b16 %v8532, %v8530
        %v8935 = vpack.c.b16 %v8535, %v8533
        %v8936 = vpack.c.b16 %v8536, %v8534
        %v8937 = vpack.c.b16 %v8539, %v8537
        %v8938 = vpack.c.b16 %v8540, %v8538
        %v8939 = vpack.c.b16 %v8543, %v8541
        %v8940 = vpack.c.b16 %v8544, %v8542
        %v8941 = vpack.c.b16 %v8547, %v8545
        %v8942 = vpack.c.b16 %v8548, %v8546
        %v8943 = vpack.c.b16 %v8551, %v8549
        %v8944 = vpack.c.b16 %v8552, %v8550
        %v8945 = vpack.c.b16 %v8555, %v8553
        %v8946 = vpack.c.b16 %v8556, %v8554
        %v8947 = vpack.c.b16 %v8559, %v8557
        %v8948 = vpack.c.b16 %v8560, %v8558
        %v8949 = vpack.c.b16 %v8563, %v8561
        %v8950 = vpack.c.b16 %v8564, %v8562
        %v8951 = vpack.c.b16 %v8567, %v8565
        %v8952 = vpack.c.b16 %v8568, %v8566
        %v8953 = vpack.c.b16 %v8571, %v8569
        %v8954 = vpack.c.b16 %v8572, %v8570
        %v8955 = vpack.c.b16 %v8575, %v8573
        %v8956 = vpack.c.b16 %v8576, %v8574
        %v8957 = vpack.c.b16 %v8579, %v8577
        %v8958 = vpack.c.b16 %v8580, %v8578
        %v8959 = vpack.c.b16 %v8583, %v8581
        %v8960 = vpack.c.b16 %v8584, %v8582
        %v8961 = vpack.c.b16 %v8587, %v8585
        %v8962 = vpack.c.b16 %v8588, %v8586
        %v8963 = vpack.c.b16 %v8591, %v8589
        %v8964 = vpack.c.b16 %v8592, %v8590
        %v8965 = vpack.c.b16 %v8595, %v8593
        %v8966 = vpack.c.b16 %v8596, %v8594
        %v8967 = vpack.c.b16 %v8599, %v8597
        %v8968 = vpack.c.b16 %v8600, %v8598
        %v8969 = vpack.c.b16 %v8603, %v8601
        %v8970 = vpack.c.b16 %v8604, %v8602
        %v8971 = vpack.c.b16 %v8607, %v8605
        %v8972 = vpack.c.b16 %v8608, %v8606
        %v8973 = vpack.c.b16 %v8611, %v8609
        %v8974 = vpack.c.b16 %v8612, %v8610
        %v8975 = vpack.c.b16 %v8615, %v8613
        %v8976 = vpack.c.b16 %v8616, %v8614
        %v8977 = vpack.c.b16 %v8619, %v8617
        %v8978 = vpack.c.b16 %v8620, %v8618
        %v8979 = vpack.c.b16 %v8623, %v8621
        %v8980 = vpack.c.b16 %v8624, %v8622
        %v8981 = vpack.c.b16 %v8627, %v8625
        %v8982 = vpack.c.b16 %v8628, %v8626
        %v8983 = vpack.c.b16 %v8631, %v8629
        %v8984 = vpack.c.b16 %v8632, %v8630
        %v8985 = vpack.c.b16 %v8635, %v8633
        %v8986 = vpack.c.b16 %v8636, %v8634
        %v8987 = vpack.c.b16 %v8639, %v8637
        %v8988 = vpack.c.b16 %v8640, %v8638
        %v8989 = vpack.c.b16 %v8643, %v8641
        %v8990 = vpack.c.b16 %v8644, %v8642
        %v8991 = vpack.c.b16 %v8647, %v8645
        %v8992 = vpack.c.b16 %v8648, %v8646
        %v8993 = vpack.c.b16 %v8651, %v8649
        %v8994 = vpack.c.b16 %v8652, %v8650
        %v8995 = vpack.c.b16 %v8655, %v8653
        %v8996 = vpack.c.b16 %v8656, %v8654
        %v8997 = vpack.c.b16 %v8659, %v8657
        %v8998 = vpack.c.b16 %v8660, %v8658
        %v8999 = vpack.c.b16 %v8663, %v8661
        %v9000 = vpack.c.b16 %v8664, %v8662
        %v9001 = vpack.c.b16 %v8667, %v8665
        %v9002 = vpack.c.b16 %v8668, %v8666
        %v9003 = vpack.c.b16 %v8671, %v8669
        %v9004 = vpack.c.b16 %v8672, %v8670
        %v9005 = vpack.c.b16 %v8675, %v8673
        %v9006 = vpack.c.b16 %v8676, %v8674
        %v9007 = vpack.c.b16 %v8679, %v8677
        %v9008 = vpack.c.b16 %v8680, %v8678
        %v9009 = vpack.c.b16 %v8683, %v8681
        %v9010 = vpack.c.b16 %v8684, %v8682
        %v9011 = vpack.c.b16 %v8687, %v8685
        %v9012 = vpack.c.b16 %v8688, %v8686
        %v9013 = vpack.c.b16 %v8691, %v8689
        %v9014 = vpack.c.b16 %v8692, %v8690
        %v9015 = vpack.c.b16 %v8695, %v8693
        %v9016 = vpack.c.b16 %v8696, %v8694
        %v9017 = vpack.c.b16 %v8699, %v8697
        %v9018 = vpack.c.b16 %v8700, %v8698
        %v9019 = vpack.c.b16 %v8703, %v8701
        %v9020 = vpack.c.b16 %v8704, %v8702
        %v9021 = vpack.c.b16 %v8707, %v8705
        %v9022 = vpack.c.b16 %v8708, %v8706
        %v9023 = vpack.c.b16 %v8711, %v8709
        %v9024 = vpack.c.b16 %v8712, %v8710
        %v9025 = vpack.c.b16 %v8715, %v8713
        %v9026 = vpack.c.b16 %v8716, %v8714
        %v9027 = vpack.c.b16 %v8719, %v8717
        %v9028 = vpack.c.b16 %v8720, %v8718
        %v9029 = vpack.c.b16 %v8723, %v8721
        %v9030 = vpack.c.b16 %v8724, %v8722
        %v9031 = vpack.c.b16 %v8727, %v8725
        %v9032 = vpack.c.b16 %v8728, %v8726
        %v9033 = vpack.c.b16 %v8731, %v8729
        %v9034 = vpack.c.b16 %v8732, %v8730
        %v9035 = vpack.c.b16 %v8735, %v8733
        %v9036 = vpack.c.b16 %v8736, %v8734
        %v9037 = vpack.c.b16 %v8739, %v8737
        %v9038 = vpack.c.b16 %v8740, %v8738
        %v9039 = vpack.c.b16 %v8743, %v8741
        %v9040 = vpack.c.b16 %v8744, %v8742
        %v9041 = vpack.c.b16 %v8747, %v8745
        %v9042 = vpack.c.b16 %v8748, %v8746
        %v9043 = vpack.c.b16 %v8751, %v8749
        %v9044 = vpack.c.b16 %v8752, %v8750
        %v9045 = vpack.c.b16 %v8755, %v8753
        %v9046 = vpack.c.b16 %v8756, %v8754
        %v9047 = vpack.c.b16 %v8759, %v8757
        %v9048 = vpack.c.b16 %v8760, %v8758
        %9337 = vmatpush.bf16.msra.mxu0 %v8775
        %9338 = vmatpush.bf16.msra.mxu0 %v8773
        %9339 = vmatpush.bf16.msra.mxu0 %v8771
        %9340 = vmatpush.bf16.msra.mxu0 %v8769
        %9341 = vmatpush.bf16.msra.mxu0 %v8767
        %9342 = vmatpush.bf16.msra.mxu0 %v8765
        %9343 = vmatpush.bf16.msra.mxu0 %v8763
        %9344 = vmatpush.bf16.msra.mxu0 %v8761
        %9345 = vmatmul.bf16.gmra.mxu0 %v7609
        %v9346 = vpop.f32.mrf.mxu0
        %v9347 = vadd.f32 %v7173, %v9346
        %v9348 = vpop.f32.mrf.mxu0
        %v9349 = vadd.f32 %v7173, %v9348
        %9350 = vmatmul.bf16.gmra.mxu0 %v7627
        %v9351 = vpop.f32.mrf.mxu0
        %v9352 = vadd.f32 %v7173, %v9351
        %v9353 = vpop.f32.mrf.mxu0
        %v9354 = vadd.f32 %v7173, %v9353
        %9355 = vmatmul.bf16.gmra.mxu0 %v7645
        %v9356 = vpop.f32.mrf.mxu0
        %v9357 = vadd.f32 %v7173, %v9356
        %v9358 = vpop.f32.mrf.mxu0
        %v9359 = vadd.f32 %v7173, %v9358
        %9360 = vmatmul.bf16.gmra.mxu0 %v7663
        %v9361 = vpop.f32.mrf.mxu0
        %v9362 = vadd.f32 %v7173, %v9361
        %v9363 = vpop.f32.mrf.mxu0
        %v9364 = vadd.f32 %v7173, %v9363
        %9365 = vmatmul.bf16.gmra.mxu0 %v7681
        %v9366 = vpop.f32.mrf.mxu0
        %v9367 = vadd.f32 %v7173, %v9366
        %v9368 = vpop.f32.mrf.mxu0
        %v9369 = vadd.f32 %v7173, %v9368
        %9370 = vmatmul.bf16.gmra.mxu0 %v7699
        %v9371 = vpop.f32.mrf.mxu0
        %v9372 = vadd.f32 %v7173, %v9371
        %v9373 = vpop.f32.mrf.mxu0
        %v9374 = vadd.f32 %v7173, %v9373
        %9375 = vmatmul.bf16.gmra.mxu0 %v7717
        %v9376 = vpop.f32.mrf.mxu0
        %v9377 = vadd.f32 %v7173, %v9376
        %v9378 = vpop.f32.mrf.mxu0
        %v9379 = vadd.f32 %v7173, %v9378
        %9380 = vmatmul.bf16.gmra.mxu0 %v7735
        %v9381 = vpop.f32.mrf.mxu0
        %v9382 = vadd.f32 %v7173, %v9381
        %v9383 = vpop.f32.mrf.mxu0
        %v9384 = vadd.f32 %v7173, %v9383
        %9385 = vdwg.mxu0
        %9386 = vmatpush.bf16.msra.mxu0 %v8791
        %9387 = vmatpush.bf16.msra.mxu0 %v8789
        %9388 = vmatpush.bf16.msra.mxu0 %v8787
        %9389 = vmatpush.bf16.msra.mxu0 %v8785
        %9390 = vmatpush.bf16.msra.mxu0 %v8783
        %9391 = vmatpush.bf16.msra.mxu0 %v8781
        %9392 = vmatpush.bf16.msra.mxu0 %v8779
        %9393 = vmatpush.bf16.msra.mxu0 %v8777
        %9394 = vmatmul.bf16.gmra.mxu0 %v7610
        %v9395 = vpop.f32.mrf.mxu0
        %v9396 = vadd.f32 %v9347, %v9395
        %v9397 = vpop.f32.mrf.mxu0
        %v9398 = vadd.f32 %v9349, %v9397
        %9399 = vmatmul.bf16.gmra.mxu0 %v7628
        %v9400 = vpop.f32.mrf.mxu0
        %v9401 = vadd.f32 %v9352, %v9400
        %v9402 = vpop.f32.mrf.mxu0
        %v9403 = vadd.f32 %v9354, %v9402
        %9404 = vmatmul.bf16.gmra.mxu0 %v7646
        %v9405 = vpop.f32.mrf.mxu0
        %v9406 = vadd.f32 %v9357, %v9405
        %v9407 = vpop.f32.mrf.mxu0
        %v9408 = vadd.f32 %v9359, %v9407
        %9409 = vmatmul.bf16.gmra.mxu0 %v7664
        %v9410 = vpop.f32.mrf.mxu0
        %v9411 = vadd.f32 %v9362, %v9410
        %v9412 = vpop.f32.mrf.mxu0
        %v9413 = vadd.f32 %v9364, %v9412
        %9414 = vmatmul.bf16.gmra.mxu0 %v7682
        %v9415 = vpop.f32.mrf.mxu0
        %v9416 = vadd.f32 %v9367, %v9415
        %v9417 = vpop.f32.mrf.mxu0
        %v9418 = vadd.f32 %v9369, %v9417
        %9419 = vmatmul.bf16.gmra.mxu0 %v7700
        %v9420 = vpop.f32.mrf.mxu0
        %v9421 = vadd.f32 %v9372, %v9420
        %v9422 = vpop.f32.mrf.mxu0
        %v9423 = vadd.f32 %v9374, %v9422
        %9424 = vmatmul.bf16.gmra.mxu0 %v7718
        %v9425 = vpop.f32.mrf.mxu0
        %v9426 = vadd.f32 %v9377, %v9425
        %v9427 = vpop.f32.mrf.mxu0
        %v9428 = vadd.f32 %v9379, %v9427
        %9429 = vmatmul.bf16.gmra.mxu0 %v7736
        %v9430 = vpop.f32.mrf.mxu0
        %v9431 = vadd.f32 %v9382, %v9430
        %v9432 = vpop.f32.mrf.mxu0
        %v9433 = vadd.f32 %v9384, %v9432
        %9434 = vdwg.mxu0
        %9435 = vmatpush.bf16.msra.mxu0 %v8807
        %9436 = vmatpush.bf16.msra.mxu0 %v8805
        %9437 = vmatpush.bf16.msra.mxu0 %v8803
        %9438 = vmatpush.bf16.msra.mxu0 %v8801
        %9439 = vmatpush.bf16.msra.mxu0 %v8799
        %9440 = vmatpush.bf16.msra.mxu0 %v8797
        %9441 = vmatpush.bf16.msra.mxu0 %v8795
        %9442 = vmatpush.bf16.msra.mxu0 %v8793
        %9443 = vmatmul.bf16.gmra.mxu0 %v7611
        %v9444 = vpop.f32.mrf.mxu0
        %v9445 = vadd.f32 %v9396, %v9444
        %v9446 = vpop.f32.mrf.mxu0
        %v9447 = vadd.f32 %v9398, %v9446
        %9448 = vmatmul.bf16.gmra.mxu0 %v7629
        %v9449 = vpop.f32.mrf.mxu0
        %v9450 = vadd.f32 %v9401, %v9449
        %v9451 = vpop.f32.mrf.mxu0
        %v9452 = vadd.f32 %v9403, %v9451
        %9453 = vmatmul.bf16.gmra.mxu0 %v7647
        %v9454 = vpop.f32.mrf.mxu0
        %v9455 = vadd.f32 %v9406, %v9454
        %v9456 = vpop.f32.mrf.mxu0
        %v9457 = vadd.f32 %v9408, %v9456
        %9458 = vmatmul.bf16.gmra.mxu0 %v7665
        %v9459 = vpop.f32.mrf.mxu0
        %v9460 = vadd.f32 %v9411, %v9459
        %v9461 = vpop.f32.mrf.mxu0
        %v9462 = vadd.f32 %v9413, %v9461
        %9463 = vmatmul.bf16.gmra.mxu0 %v7683
        %v9464 = vpop.f32.mrf.mxu0
        %v9465 = vadd.f32 %v9416, %v9464
        %v9466 = vpop.f32.mrf.mxu0
        %v9467 = vadd.f32 %v9418, %v9466
        %9468 = vmatmul.bf16.gmra.mxu0 %v7701
        %v9469 = vpop.f32.mrf.mxu0
        %v9470 = vadd.f32 %v9421, %v9469
        %v9471 = vpop.f32.mrf.mxu0
        %v9472 = vadd.f32 %v9423, %v9471
        %9473 = vmatmul.bf16.gmra.mxu0 %v7719
        %v9474 = vpop.f32.mrf.mxu0
        %v9475 = vadd.f32 %v9426, %v9474
        %v9476 = vpop.f32.mrf.mxu0
        %v9477 = vadd.f32 %v9428, %v9476
        %9478 = vmatmul.bf16.gmra.mxu0 %v7737
        %v9479 = vpop.f32.mrf.mxu0
        %v9480 = vadd.f32 %v9431, %v9479
        %v9481 = vpop.f32.mrf.mxu0
        %v9482 = vadd.f32 %v9433, %v9481
        %9483 = vdwg.mxu0
        %9484 = vmatpush.bf16.msra.mxu0 %v8823
        %9485 = vmatpush.bf16.msra.mxu0 %v8821
        %9486 = vmatpush.bf16.msra.mxu0 %v8819
        %9487 = vmatpush.bf16.msra.mxu0 %v8817
        %9488 = vmatpush.bf16.msra.mxu0 %v8815
        %9489 = vmatpush.bf16.msra.mxu0 %v8813
        %9490 = vmatpush.bf16.msra.mxu0 %v8811
        %9491 = vmatpush.bf16.msra.mxu0 %v8809
        %9492 = vmatmul.bf16.gmra.mxu0 %v7612
        %v9493 = vpop.f32.mrf.mxu0
        %v9494 = vadd.f32 %v9445, %v9493
        %v9495 = vpop.f32.mrf.mxu0
        %v9496 = vadd.f32 %v9447, %v9495
        %9497 = vmatmul.bf16.gmra.mxu0 %v7630
        %v9498 = vpop.f32.mrf.mxu0
        %v9499 = vadd.f32 %v9450, %v9498
        %v9500 = vpop.f32.mrf.mxu0
        %v9501 = vadd.f32 %v9452, %v9500
        %9502 = vmatmul.bf16.gmra.mxu0 %v7648
        %v9503 = vpop.f32.mrf.mxu0
        %v9504 = vadd.f32 %v9455, %v9503
        %v9505 = vpop.f32.mrf.mxu0
        %v9506 = vadd.f32 %v9457, %v9505
        %9507 = vmatmul.bf16.gmra.mxu0 %v7666
        %v9508 = vpop.f32.mrf.mxu0
        %v9509 = vadd.f32 %v9460, %v9508
        %v9510 = vpop.f32.mrf.mxu0
        %v9511 = vadd.f32 %v9462, %v9510
        %9512 = vmatmul.bf16.gmra.mxu0 %v7684
        %v9513 = vpop.f32.mrf.mxu0
        %v9514 = vadd.f32 %v9465, %v9513
        %v9515 = vpop.f32.mrf.mxu0
        %v9516 = vadd.f32 %v9467, %v9515
        %9517 = vmatmul.bf16.gmra.mxu0 %v7702
        %v9518 = vpop.f32.mrf.mxu0
        %v9519 = vadd.f32 %v9470, %v9518
        %v9520 = vpop.f32.mrf.mxu0
        %v9521 = vadd.f32 %v9472, %v9520
        %9522 = vmatmul.bf16.gmra.mxu0 %v7720
        %v9523 = vpop.f32.mrf.mxu0
        %v9524 = vadd.f32 %v9475, %v9523
        %v9525 = vpop.f32.mrf.mxu0
        %v9526 = vadd.f32 %v9477, %v9525
        %9527 = vmatmul.bf16.gmra.mxu0 %v7738
        %v9528 = vpop.f32.mrf.mxu0
        %v9529 = vadd.f32 %v9480, %v9528
        %v9530 = vpop.f32.mrf.mxu0
        %v9531 = vadd.f32 %v9482, %v9530
        %9532 = vdwg.mxu0
        %9533 = vmatpush.bf16.msra.mxu0 %v8839
        %9534 = vmatpush.bf16.msra.mxu0 %v8837
        %9535 = vmatpush.bf16.msra.mxu0 %v8835
        %9536 = vmatpush.bf16.msra.mxu0 %v8833
        %9537 = vmatpush.bf16.msra.mxu0 %v8831
        %9538 = vmatpush.bf16.msra.mxu0 %v8829
        %9539 = vmatpush.bf16.msra.mxu0 %v8827
        %9540 = vmatpush.bf16.msra.mxu0 %v8825
        %9541 = vmatmul.bf16.gmra.mxu0 %v7613
        %v9542 = vpop.f32.mrf.mxu0
        %v9543 = vadd.f32 %v9494, %v9542
        %v9544 = vpop.f32.mrf.mxu0
        %v9545 = vadd.f32 %v9496, %v9544
        %9546 = vmatmul.bf16.gmra.mxu0 %v7631
        %v9547 = vpop.f32.mrf.mxu0
        %v9548 = vadd.f32 %v9499, %v9547
        %v9549 = vpop.f32.mrf.mxu0
        %v9550 = vadd.f32 %v9501, %v9549
        %9551 = vmatmul.bf16.gmra.mxu0 %v7649
        %v9552 = vpop.f32.mrf.mxu0
        %v9553 = vadd.f32 %v9504, %v9552
        %v9554 = vpop.f32.mrf.mxu0
        %v9555 = vadd.f32 %v9506, %v9554
        %9556 = vmatmul.bf16.gmra.mxu0 %v7667
        %v9557 = vpop.f32.mrf.mxu0
        %v9558 = vadd.f32 %v9509, %v9557
        %v9559 = vpop.f32.mrf.mxu0
        %v9560 = vadd.f32 %v9511, %v9559
        %9561 = vmatmul.bf16.gmra.mxu0 %v7685
        %v9562 = vpop.f32.mrf.mxu0
        %v9563 = vadd.f32 %v9514, %v9562
        %v9564 = vpop.f32.mrf.mxu0
        %v9565 = vadd.f32 %v9516, %v9564
        %9566 = vmatmul.bf16.gmra.mxu0 %v7703
        %v9567 = vpop.f32.mrf.mxu0
        %v9568 = vadd.f32 %v9519, %v9567
        %v9569 = vpop.f32.mrf.mxu0
        %v9570 = vadd.f32 %v9521, %v9569
        %9571 = vmatmul.bf16.gmra.mxu0 %v7721
        %v9572 = vpop.f32.mrf.mxu0
        %v9573 = vadd.f32 %v9524, %v9572
        %v9574 = vpop.f32.mrf.mxu0
        %v9575 = vadd.f32 %v9526, %v9574
        %9576 = vmatmul.bf16.gmra.mxu0 %v7739
        %v9577 = vpop.f32.mrf.mxu0
        %v9578 = vadd.f32 %v9529, %v9577
        %v9579 = vpop.f32.mrf.mxu0
        %v9580 = vadd.f32 %v9531, %v9579
        %9581 = vdwg.mxu0
        %9582 = vmatpush.bf16.msra.mxu0 %v8855
        %9583 = vmatpush.bf16.msra.mxu0 %v8853
        %9584 = vmatpush.bf16.msra.mxu0 %v8851
        %9585 = vmatpush.bf16.msra.mxu0 %v8849
        %9586 = vmatpush.bf16.msra.mxu0 %v8847
        %9587 = vmatpush.bf16.msra.mxu0 %v8845
        %9588 = vmatpush.bf16.msra.mxu0 %v8843
        %9589 = vmatpush.bf16.msra.mxu0 %v8841
        %9590 = vmatmul.bf16.gmra.mxu0 %v7614
        %v9591 = vpop.f32.mrf.mxu0
        %v9592 = vadd.f32 %v9543, %v9591
        %v9593 = vpop.f32.mrf.mxu0
        %v9594 = vadd.f32 %v9545, %v9593
        %9595 = vmatmul.bf16.gmra.mxu0 %v7632
        %v9596 = vpop.f32.mrf.mxu0
        %v9597 = vadd.f32 %v9548, %v9596
        %v9598 = vpop.f32.mrf.mxu0
        %v9599 = vadd.f32 %v9550, %v9598
        %9600 = vmatmul.bf16.gmra.mxu0 %v7650
        %v9601 = vpop.f32.mrf.mxu0
        %v9602 = vadd.f32 %v9553, %v9601
        %v9603 = vpop.f32.mrf.mxu0
        %v9604 = vadd.f32 %v9555, %v9603
        %9605 = vmatmul.bf16.gmra.mxu0 %v7668
        %v9606 = vpop.f32.mrf.mxu0
        %v9607 = vadd.f32 %v9558, %v9606
        %v9608 = vpop.f32.mrf.mxu0
        %v9609 = vadd.f32 %v9560, %v9608
        %9610 = vmatmul.bf16.gmra.mxu0 %v7686
        %v9611 = vpop.f32.mrf.mxu0
        %v9612 = vadd.f32 %v9563, %v9611
        %v9613 = vpop.f32.mrf.mxu0
        %v9614 = vadd.f32 %v9565, %v9613
        %9615 = vmatmul.bf16.gmra.mxu0 %v7704
        %v9616 = vpop.f32.mrf.mxu0
        %v9617 = vadd.f32 %v9568, %v9616
        %v9618 = vpop.f32.mrf.mxu0
        %v9619 = vadd.f32 %v9570, %v9618
        %9620 = vmatmul.bf16.gmra.mxu0 %v7722
        %v9621 = vpop.f32.mrf.mxu0
        %v9622 = vadd.f32 %v9573, %v9621
        %v9623 = vpop.f32.mrf.mxu0
        %v9624 = vadd.f32 %v9575, %v9623
        %9625 = vmatmul.bf16.gmra.mxu0 %v7740
        %v9626 = vpop.f32.mrf.mxu0
        %v9627 = vadd.f32 %v9578, %v9626
        %v9628 = vpop.f32.mrf.mxu0
        %v9629 = vadd.f32 %v9580, %v9628
        %9630 = vdwg.mxu0
        %9631 = vmatpush.bf16.msra.mxu0 %v8871
        %9632 = vmatpush.bf16.msra.mxu0 %v8869
        %9633 = vmatpush.bf16.msra.mxu0 %v8867
        %9634 = vmatpush.bf16.msra.mxu0 %v8865
        %9635 = vmatpush.bf16.msra.mxu0 %v8863
        %9636 = vmatpush.bf16.msra.mxu0 %v8861
        %9637 = vmatpush.bf16.msra.mxu0 %v8859
        %9638 = vmatpush.bf16.msra.mxu0 %v8857
        %9639 = vmatmul.bf16.gmra.mxu0 %v7615
        %v9640 = vpop.f32.mrf.mxu0
        %v9641 = vadd.f32 %v9592, %v9640
        %v9642 = vpop.f32.mrf.mxu0
        %v9643 = vadd.f32 %v9594, %v9642
        %9644 = vmatmul.bf16.gmra.mxu0 %v7633
        %v9645 = vpop.f32.mrf.mxu0
        %v9646 = vadd.f32 %v9597, %v9645
        %v9647 = vpop.f32.mrf.mxu0
        %v9648 = vadd.f32 %v9599, %v9647
        %9649 = vmatmul.bf16.gmra.mxu0 %v7651
        %v9650 = vpop.f32.mrf.mxu0
        %v9651 = vadd.f32 %v9602, %v9650
        %v9652 = vpop.f32.mrf.mxu0
        %v9653 = vadd.f32 %v9604, %v9652
        %9654 = vmatmul.bf16.gmra.mxu0 %v7669
        %v9655 = vpop.f32.mrf.mxu0
        %v9656 = vadd.f32 %v9607, %v9655
        %v9657 = vpop.f32.mrf.mxu0
        %v9658 = vadd.f32 %v9609, %v9657
        %9659 = vmatmul.bf16.gmra.mxu0 %v7687
        %v9660 = vpop.f32.mrf.mxu0
        %v9661 = vadd.f32 %v9612, %v9660
        %v9662 = vpop.f32.mrf.mxu0
        %v9663 = vadd.f32 %v9614, %v9662
        %9664 = vmatmul.bf16.gmra.mxu0 %v7705
        %v9665 = vpop.f32.mrf.mxu0
        %v9666 = vadd.f32 %v9617, %v9665
        %v9667 = vpop.f32.mrf.mxu0
        %v9668 = vadd.f32 %v9619, %v9667
        %9669 = vmatmul.bf16.gmra.mxu0 %v7723
        %v9670 = vpop.f32.mrf.mxu0
        %v9671 = vadd.f32 %v9622, %v9670
        %v9672 = vpop.f32.mrf.mxu0
        %v9673 = vadd.f32 %v9624, %v9672
        %9674 = vmatmul.bf16.gmra.mxu0 %v7741
        %v9675 = vpop.f32.mrf.mxu0
        %v9676 = vadd.f32 %v9627, %v9675
        %v9677 = vpop.f32.mrf.mxu0
        %v9678 = vadd.f32 %v9629, %v9677
        %9679 = vdwg.mxu0
        %9680 = vmatpush.bf16.msra.mxu0 %v8887
        %9681 = vmatpush.bf16.msra.mxu0 %v8885
        %9682 = vmatpush.bf16.msra.mxu0 %v8883
        %9683 = vmatpush.bf16.msra.mxu0 %v8881
        %9684 = vmatpush.bf16.msra.mxu0 %v8879
        %9685 = vmatpush.bf16.msra.mxu0 %v8877
        %9686 = vmatpush.bf16.msra.mxu0 %v8875
        %9687 = vmatpush.bf16.msra.mxu0 %v8873
        %9688 = vmatmul.bf16.gmra.mxu0 %v7616
        %v9689 = vpop.f32.mrf.mxu0
        %v9690 = vadd.f32 %v9641, %v9689
        %v9691 = vpop.f32.mrf.mxu0
        %v9692 = vadd.f32 %v9643, %v9691
        %9693 = vmatmul.bf16.gmra.mxu0 %v7634
        %v9694 = vpop.f32.mrf.mxu0
        %v9695 = vadd.f32 %v9646, %v9694
        %v9696 = vpop.f32.mrf.mxu0
        %v9697 = vadd.f32 %v9648, %v9696
        %9698 = vmatmul.bf16.gmra.mxu0 %v7652
        %v9699 = vpop.f32.mrf.mxu0
        %v9700 = vadd.f32 %v9651, %v9699
        %v9701 = vpop.f32.mrf.mxu0
        %v9702 = vadd.f32 %v9653, %v9701
        %9703 = vmatmul.bf16.gmra.mxu0 %v7670
        %v9704 = vpop.f32.mrf.mxu0
        %v9705 = vadd.f32 %v9656, %v9704
        %v9706 = vpop.f32.mrf.mxu0
        %v9707 = vadd.f32 %v9658, %v9706
        %9708 = vmatmul.bf16.gmra.mxu0 %v7688
        %v9709 = vpop.f32.mrf.mxu0
        %v9710 = vadd.f32 %v9661, %v9709
        %v9711 = vpop.f32.mrf.mxu0
        %v9712 = vadd.f32 %v9663, %v9711
        %9713 = vmatmul.bf16.gmra.mxu0 %v7706
        %v9714 = vpop.f32.mrf.mxu0
        %v9715 = vadd.f32 %v9666, %v9714
        %v9716 = vpop.f32.mrf.mxu0
        %v9717 = vadd.f32 %v9668, %v9716
        %9718 = vmatmul.bf16.gmra.mxu0 %v7724
        %v9719 = vpop.f32.mrf.mxu0
        %v9720 = vadd.f32 %v9671, %v9719
        %v9721 = vpop.f32.mrf.mxu0
        %v9722 = vadd.f32 %v9673, %v9721
        %9723 = vmatmul.bf16.gmra.mxu0 %v7742
        %v9724 = vpop.f32.mrf.mxu0
        %v9725 = vadd.f32 %v9676, %v9724
        %v9726 = vpop.f32.mrf.mxu0
        %v9727 = vadd.f32 %v9678, %v9726
        %9728 = vdwg.mxu0
        %9729 = vmatpush.bf16.msra.mxu0 %v8903
        %9730 = vmatpush.bf16.msra.mxu0 %v8901
        %9731 = vmatpush.bf16.msra.mxu0 %v8899
        %9732 = vmatpush.bf16.msra.mxu0 %v8897
        %9733 = vmatpush.bf16.msra.mxu0 %v8895
        %9734 = vmatpush.bf16.msra.mxu0 %v8893
        %9735 = vmatpush.bf16.msra.mxu0 %v8891
        %9736 = vmatpush.bf16.msra.mxu0 %v8889
        %9737 = vmatmul.bf16.gmra.mxu0 %v7617
        %v9738 = vpop.f32.mrf.mxu0
        %v9739 = vadd.f32 %v9690, %v9738
        %v9740 = vpop.f32.mrf.mxu0
        %v9741 = vadd.f32 %v9692, %v9740
        %9742 = vmatmul.bf16.gmra.mxu0 %v7635
        %v9743 = vpop.f32.mrf.mxu0
        %v9744 = vadd.f32 %v9695, %v9743
        %v9745 = vpop.f32.mrf.mxu0
        %v9746 = vadd.f32 %v9697, %v9745
        %9747 = vmatmul.bf16.gmra.mxu0 %v7653
        %v9748 = vpop.f32.mrf.mxu0
        %v9749 = vadd.f32 %v9700, %v9748
        %v9750 = vpop.f32.mrf.mxu0
        %v9751 = vadd.f32 %v9702, %v9750
        %9752 = vmatmul.bf16.gmra.mxu0 %v7671
        %v9753 = vpop.f32.mrf.mxu0
        %v9754 = vadd.f32 %v9705, %v9753
        %v9755 = vpop.f32.mrf.mxu0
        %v9756 = vadd.f32 %v9707, %v9755
        %9757 = vmatmul.bf16.gmra.mxu0 %v7689
        %v9758 = vpop.f32.mrf.mxu0
        %v9759 = vadd.f32 %v9710, %v9758
        %v9760 = vpop.f32.mrf.mxu0
        %v9761 = vadd.f32 %v9712, %v9760
        %9762 = vmatmul.bf16.gmra.mxu0 %v7707
        %v9763 = vpop.f32.mrf.mxu0
        %v9764 = vadd.f32 %v9715, %v9763
        %v9765 = vpop.f32.mrf.mxu0
        %v9766 = vadd.f32 %v9717, %v9765
        %9767 = vmatmul.bf16.gmra.mxu0 %v7725
        %v9768 = vpop.f32.mrf.mxu0
        %v9769 = vadd.f32 %v9720, %v9768
        %v9770 = vpop.f32.mrf.mxu0
        %v9771 = vadd.f32 %v9722, %v9770
        %9772 = vmatmul.bf16.gmra.mxu0 %v7743
        %v9773 = vpop.f32.mrf.mxu0
        %v9774 = vadd.f32 %v9725, %v9773
        %v9775 = vpop.f32.mrf.mxu0
        %v9776 = vadd.f32 %v9727, %v9775
        %9777 = vdwg.mxu0
        %9778 = vmatpush.bf16.msra.mxu0 %v8919
        %9779 = vmatpush.bf16.msra.mxu0 %v8917
        %9780 = vmatpush.bf16.msra.mxu0 %v8915
        %9781 = vmatpush.bf16.msra.mxu0 %v8913
        %9782 = vmatpush.bf16.msra.mxu0 %v8911
        %9783 = vmatpush.bf16.msra.mxu0 %v8909
        %9784 = vmatpush.bf16.msra.mxu0 %v8907
        %9785 = vmatpush.bf16.msra.mxu0 %v8905
        %9786 = vmatmul.bf16.gmra.mxu0 %v7618
        %v9787 = vpop.f32.mrf.mxu0
        %v9788 = vadd.f32 %v9739, %v9787
        %v9789 = vpop.f32.mrf.mxu0
        %v9790 = vadd.f32 %v9741, %v9789
        %9791 = vmatmul.bf16.gmra.mxu0 %v7636
        %v9792 = vpop.f32.mrf.mxu0
        %v9793 = vadd.f32 %v9744, %v9792
        %v9794 = vpop.f32.mrf.mxu0
        %v9795 = vadd.f32 %v9746, %v9794
        %9796 = vmatmul.bf16.gmra.mxu0 %v7654
        %v9797 = vpop.f32.mrf.mxu0
        %v9798 = vadd.f32 %v9749, %v9797
        %v9799 = vpop.f32.mrf.mxu0
        %v9800 = vadd.f32 %v9751, %v9799
        %9801 = vmatmul.bf16.gmra.mxu0 %v7672
        %v9802 = vpop.f32.mrf.mxu0
        %v9803 = vadd.f32 %v9754, %v9802
        %v9804 = vpop.f32.mrf.mxu0
        %v9805 = vadd.f32 %v9756, %v9804
        %9806 = vmatmul.bf16.gmra.mxu0 %v7690
        %v9807 = vpop.f32.mrf.mxu0
        %v9808 = vadd.f32 %v9759, %v9807
        %v9809 = vpop.f32.mrf.mxu0
        %v9810 = vadd.f32 %v9761, %v9809
        %9811 = vmatmul.bf16.gmra.mxu0 %v7708
        %v9812 = vpop.f32.mrf.mxu0
        %v9813 = vadd.f32 %v9764, %v9812
        %v9814 = vpop.f32.mrf.mxu0
        %v9815 = vadd.f32 %v9766, %v9814
        %9816 = vmatmul.bf16.gmra.mxu0 %v7726
        %v9817 = vpop.f32.mrf.mxu0
        %v9818 = vadd.f32 %v9769, %v9817
        %v9819 = vpop.f32.mrf.mxu0
        %v9820 = vadd.f32 %v9771, %v9819
        %9821 = vmatmul.bf16.gmra.mxu0 %v7744
        %v9822 = vpop.f32.mrf.mxu0
        %v9823 = vadd.f32 %v9774, %v9822
        %v9824 = vpop.f32.mrf.mxu0
        %v9825 = vadd.f32 %v9776, %v9824
        %9826 = vdwg.mxu0
        %9827 = vmatpush.bf16.msra.mxu0 %v8935
        %9828 = vmatpush.bf16.msra.mxu0 %v8933
        %9829 = vmatpush.bf16.msra.mxu0 %v8931
        %9830 = vmatpush.bf16.msra.mxu0 %v8929
        %9831 = vmatpush.bf16.msra.mxu0 %v8927
        %9832 = vmatpush.bf16.msra.mxu0 %v8925
        %9833 = vmatpush.bf16.msra.mxu0 %v8923
        %9834 = vmatpush.bf16.msra.mxu0 %v8921
        %9835 = vmatmul.bf16.gmra.mxu0 %v7619
        %v9836 = vpop.f32.mrf.mxu0
        %v9837 = vadd.f32 %v9788, %v9836
        %v9838 = vpop.f32.mrf.mxu0
        %v9839 = vadd.f32 %v9790, %v9838
        %9840 = vmatmul.bf16.gmra.mxu0 %v7637
        %v9841 = vpop.f32.mrf.mxu0
        %v9842 = vadd.f32 %v9793, %v9841
        %v9843 = vpop.f32.mrf.mxu0
        %v9844 = vadd.f32 %v9795, %v9843
        %9845 = vmatmul.bf16.gmra.mxu0 %v7655
        %v9846 = vpop.f32.mrf.mxu0
        %v9847 = vadd.f32 %v9798, %v9846
        %v9848 = vpop.f32.mrf.mxu0
        %v9849 = vadd.f32 %v9800, %v9848
        %9850 = vmatmul.bf16.gmra.mxu0 %v7673
        %v9851 = vpop.f32.mrf.mxu0
        %v9852 = vadd.f32 %v9803, %v9851
        %v9853 = vpop.f32.mrf.mxu0
        %v9854 = vadd.f32 %v9805, %v9853
        %9855 = vmatmul.bf16.gmra.mxu0 %v7691
        %v9856 = vpop.f32.mrf.mxu0
        %v9857 = vadd.f32 %v9808, %v9856
        %v9858 = vpop.f32.mrf.mxu0
        %v9859 = vadd.f32 %v9810, %v9858
        %9860 = vmatmul.bf16.gmra.mxu0 %v7709
        %v9861 = vpop.f32.mrf.mxu0
        %v9862 = vadd.f32 %v9813, %v9861
        %v9863 = vpop.f32.mrf.mxu0
        %v9864 = vadd.f32 %v9815, %v9863
        %9865 = vmatmul.bf16.gmra.mxu0 %v7727
        %v9866 = vpop.f32.mrf.mxu0
        %v9867 = vadd.f32 %v9818, %v9866
        %v9868 = vpop.f32.mrf.mxu0
        %v9869 = vadd.f32 %v9820, %v9868
        %9870 = vmatmul.bf16.gmra.mxu0 %v7745
        %v9871 = vpop.f32.mrf.mxu0
        %v9872 = vadd.f32 %v9823, %v9871
        %v9873 = vpop.f32.mrf.mxu0
        %v9874 = vadd.f32 %v9825, %v9873
        %9875 = vdwg.mxu0
        %9876 = vmatpush.bf16.msra.mxu0 %v8951
        %9877 = vmatpush.bf16.msra.mxu0 %v8949
        %9878 = vmatpush.bf16.msra.mxu0 %v8947
        %9879 = vmatpush.bf16.msra.mxu0 %v8945
        %9880 = vmatpush.bf16.msra.mxu0 %v8943
        %9881 = vmatpush.bf16.msra.mxu0 %v8941
        %9882 = vmatpush.bf16.msra.mxu0 %v8939
        %9883 = vmatpush.bf16.msra.mxu0 %v8937
        %9884 = vmatmul.bf16.gmra.mxu0 %v7620
        %v9885 = vpop.f32.mrf.mxu0
        %v9886 = vadd.f32 %v9837, %v9885
        %v9887 = vpop.f32.mrf.mxu0
        %v9888 = vadd.f32 %v9839, %v9887
        %9889 = vmatmul.bf16.gmra.mxu0 %v7638
        %v9890 = vpop.f32.mrf.mxu0
        %v9891 = vadd.f32 %v9842, %v9890
        %v9892 = vpop.f32.mrf.mxu0
        %v9893 = vadd.f32 %v9844, %v9892
        %9894 = vmatmul.bf16.gmra.mxu0 %v7656
        %v9895 = vpop.f32.mrf.mxu0
        %v9896 = vadd.f32 %v9847, %v9895
        %v9897 = vpop.f32.mrf.mxu0
        %v9898 = vadd.f32 %v9849, %v9897
        %9899 = vmatmul.bf16.gmra.mxu0 %v7674
        %v9900 = vpop.f32.mrf.mxu0
        %v9901 = vadd.f32 %v9852, %v9900
        %v9902 = vpop.f32.mrf.mxu0
        %v9903 = vadd.f32 %v9854, %v9902
        %9904 = vmatmul.bf16.gmra.mxu0 %v7692
        %v9905 = vpop.f32.mrf.mxu0
        %v9906 = vadd.f32 %v9857, %v9905
        %v9907 = vpop.f32.mrf.mxu0
        %v9908 = vadd.f32 %v9859, %v9907
        %9909 = vmatmul.bf16.gmra.mxu0 %v7710
        %v9910 = vpop.f32.mrf.mxu0
        %v9911 = vadd.f32 %v9862, %v9910
        %v9912 = vpop.f32.mrf.mxu0
        %v9913 = vadd.f32 %v9864, %v9912
        %9914 = vmatmul.bf16.gmra.mxu0 %v7728
        %v9915 = vpop.f32.mrf.mxu0
        %v9916 = vadd.f32 %v9867, %v9915
        %v9917 = vpop.f32.mrf.mxu0
        %v9918 = vadd.f32 %v9869, %v9917
        %9919 = vmatmul.bf16.gmra.mxu0 %v7746
        %v9920 = vpop.f32.mrf.mxu0
        %v9921 = vadd.f32 %v9872, %v9920
        %v9922 = vpop.f32.mrf.mxu0
        %v9923 = vadd.f32 %v9874, %v9922
        %9924 = vdwg.mxu0
        %9925 = vmatpush.bf16.msra.mxu0 %v8967
        %9926 = vmatpush.bf16.msra.mxu0 %v8965
        %9927 = vmatpush.bf16.msra.mxu0 %v8963
        %9928 = vmatpush.bf16.msra.mxu0 %v8961
        %9929 = vmatpush.bf16.msra.mxu0 %v8959
        %9930 = vmatpush.bf16.msra.mxu0 %v8957
        %9931 = vmatpush.bf16.msra.mxu0 %v8955
        %9932 = vmatpush.bf16.msra.mxu0 %v8953
        %9933 = vmatmul.bf16.gmra.mxu0 %v7621
        %v9934 = vpop.f32.mrf.mxu0
        %v9935 = vadd.f32 %v9886, %v9934
        %v9936 = vpop.f32.mrf.mxu0
        %v9937 = vadd.f32 %v9888, %v9936
        %9938 = vmatmul.bf16.gmra.mxu0 %v7639
        %v9939 = vpop.f32.mrf.mxu0
        %v9940 = vadd.f32 %v9891, %v9939
        %v9941 = vpop.f32.mrf.mxu0
        %v9942 = vadd.f32 %v9893, %v9941
        %9943 = vmatmul.bf16.gmra.mxu0 %v7657
        %v9944 = vpop.f32.mrf.mxu0
        %v9945 = vadd.f32 %v9896, %v9944
        %v9946 = vpop.f32.mrf.mxu0
        %v9947 = vadd.f32 %v9898, %v9946
        %9948 = vmatmul.bf16.gmra.mxu0 %v7675
        %v9949 = vpop.f32.mrf.mxu0
        %v9950 = vadd.f32 %v9901, %v9949
        %v9951 = vpop.f32.mrf.mxu0
        %v9952 = vadd.f32 %v9903, %v9951
        %9953 = vmatmul.bf16.gmra.mxu0 %v7693
        %v9954 = vpop.f32.mrf.mxu0
        %v9955 = vadd.f32 %v9906, %v9954
        %v9956 = vpop.f32.mrf.mxu0
        %v9957 = vadd.f32 %v9908, %v9956
        %9958 = vmatmul.bf16.gmra.mxu0 %v7711
        %v9959 = vpop.f32.mrf.mxu0
        %v9960 = vadd.f32 %v9911, %v9959
        %v9961 = vpop.f32.mrf.mxu0
        %v9962 = vadd.f32 %v9913, %v9961
        %9963 = vmatmul.bf16.gmra.mxu0 %v7729
        %v9964 = vpop.f32.mrf.mxu0
        %v9965 = vadd.f32 %v9916, %v9964
        %v9966 = vpop.f32.mrf.mxu0
        %v9967 = vadd.f32 %v9918, %v9966
        %9968 = vmatmul.bf16.gmra.mxu0 %v7747
        %v9969 = vpop.f32.mrf.mxu0
        %v9970 = vadd.f32 %v9921, %v9969
        %v9971 = vpop.f32.mrf.mxu0
        %v9972 = vadd.f32 %v9923, %v9971
        %9973 = vdwg.mxu0
        %9974 = vmatpush.bf16.msra.mxu0 %v8983
        %9975 = vmatpush.bf16.msra.mxu0 %v8981
        %9976 = vmatpush.bf16.msra.mxu0 %v8979
        %9977 = vmatpush.bf16.msra.mxu0 %v8977
        %9978 = vmatpush.bf16.msra.mxu0 %v8975
        %9979 = vmatpush.bf16.msra.mxu0 %v8973
        %9980 = vmatpush.bf16.msra.mxu0 %v8971
        %9981 = vmatpush.bf16.msra.mxu0 %v8969
        %9982 = vmatmul.bf16.gmra.mxu0 %v7622
        %v9983 = vpop.f32.mrf.mxu0
        %v9984 = vadd.f32 %v9935, %v9983
        %v9985 = vpop.f32.mrf.mxu0
        %v9986 = vadd.f32 %v9937, %v9985
        %9987 = vmatmul.bf16.gmra.mxu0 %v7640
        %v9988 = vpop.f32.mrf.mxu0
        %v9989 = vadd.f32 %v9940, %v9988
        %v9990 = vpop.f32.mrf.mxu0
        %v9991 = vadd.f32 %v9942, %v9990
        %9992 = vmatmul.bf16.gmra.mxu0 %v7658
        %v9993 = vpop.f32.mrf.mxu0
        %v9994 = vadd.f32 %v9945, %v9993
        %v9995 = vpop.f32.mrf.mxu0
        %v9996 = vadd.f32 %v9947, %v9995
        %9997 = vmatmul.bf16.gmra.mxu0 %v7676
        %v9998 = vpop.f32.mrf.mxu0
        %v9999 = vadd.f32 %v9950, %v9998
        %v10000 = vpop.f32.mrf.mxu0
        %v10001 = vadd.f32 %v9952, %v10000
        %10002 = vmatmul.bf16.gmra.mxu0 %v7694
        %v10003 = vpop.f32.mrf.mxu0
        %v10004 = vadd.f32 %v9955, %v10003
        %v10005 = vpop.f32.mrf.mxu0
        %v10006 = vadd.f32 %v9957, %v10005
        %10007 = vmatmul.bf16.gmra.mxu0 %v7712
        %v10008 = vpop.f32.mrf.mxu0
        %v10009 = vadd.f32 %v9960, %v10008
        %v10010 = vpop.f32.mrf.mxu0
        %v10011 = vadd.f32 %v9962, %v10010
        %10012 = vmatmul.bf16.gmra.mxu0 %v7730
        %v10013 = vpop.f32.mrf.mxu0
        %v10014 = vadd.f32 %v9965, %v10013
        %v10015 = vpop.f32.mrf.mxu0
        %v10016 = vadd.f32 %v9967, %v10015
        %10017 = vmatmul.bf16.gmra.mxu0 %v7748
        %v10018 = vpop.f32.mrf.mxu0
        %v10019 = vadd.f32 %v9970, %v10018
        %v10020 = vpop.f32.mrf.mxu0
        %v10021 = vadd.f32 %v9972, %v10020
        %10022 = vdwg.mxu0
        %10023 = vmatpush.bf16.msra.mxu0 %v8999
        %10024 = vmatpush.bf16.msra.mxu0 %v8997
        %10025 = vmatpush.bf16.msra.mxu0 %v8995
        %10026 = vmatpush.bf16.msra.mxu0 %v8993
        %10027 = vmatpush.bf16.msra.mxu0 %v8991
        %10028 = vmatpush.bf16.msra.mxu0 %v8989
        %10029 = vmatpush.bf16.msra.mxu0 %v8987
        %10030 = vmatpush.bf16.msra.mxu0 %v8985
        %10031 = vmatmul.bf16.gmra.mxu0 %v7623
        %v10032 = vpop.f32.mrf.mxu0
        %v10033 = vadd.f32 %v9984, %v10032
        %v10034 = vpop.f32.mrf.mxu0
        %v10035 = vadd.f32 %v9986, %v10034
        %10036 = vmatmul.bf16.gmra.mxu0 %v7641
        %v10037 = vpop.f32.mrf.mxu0
        %v10038 = vadd.f32 %v9989, %v10037
        %v10039 = vpop.f32.mrf.mxu0
        %v10040 = vadd.f32 %v9991, %v10039
        %10041 = vmatmul.bf16.gmra.mxu0 %v7659
        %v10042 = vpop.f32.mrf.mxu0
        %v10043 = vadd.f32 %v9994, %v10042
        %v10044 = vpop.f32.mrf.mxu0
        %v10045 = vadd.f32 %v9996, %v10044
        %10046 = vmatmul.bf16.gmra.mxu0 %v7677
        %v10047 = vpop.f32.mrf.mxu0
        %v10048 = vadd.f32 %v9999, %v10047
        %v10049 = vpop.f32.mrf.mxu0
        %v10050 = vadd.f32 %v10001, %v10049
        %10051 = vmatmul.bf16.gmra.mxu0 %v7695
        %v10052 = vpop.f32.mrf.mxu0
        %v10053 = vadd.f32 %v10004, %v10052
        %v10054 = vpop.f32.mrf.mxu0
        %v10055 = vadd.f32 %v10006, %v10054
        %10056 = vmatmul.bf16.gmra.mxu0 %v7713
        %v10057 = vpop.f32.mrf.mxu0
        %v10058 = vadd.f32 %v10009, %v10057
        %v10059 = vpop.f32.mrf.mxu0
        %v10060 = vadd.f32 %v10011, %v10059
        %10061 = vmatmul.bf16.gmra.mxu0 %v7731
        %v10062 = vpop.f32.mrf.mxu0
        %v10063 = vadd.f32 %v10014, %v10062
        %v10064 = vpop.f32.mrf.mxu0
        %v10065 = vadd.f32 %v10016, %v10064
        %10066 = vmatmul.bf16.gmra.mxu0 %v7749
        %v10067 = vpop.f32.mrf.mxu0
        %v10068 = vadd.f32 %v10019, %v10067
        %v10069 = vpop.f32.mrf.mxu0
        %v10070 = vadd.f32 %v10021, %v10069
        %10071 = vdwg.mxu0
        %10072 = vmatpush.bf16.msra.mxu0 %v9015
        %10073 = vmatpush.bf16.msra.mxu0 %v9013
        %10074 = vmatpush.bf16.msra.mxu0 %v9011
        %10075 = vmatpush.bf16.msra.mxu0 %v9009
        %10076 = vmatpush.bf16.msra.mxu0 %v9007
        %10077 = vmatpush.bf16.msra.mxu0 %v9005
        %10078 = vmatpush.bf16.msra.mxu0 %v9003
        %10079 = vmatpush.bf16.msra.mxu0 %v9001
        %10080 = vmatmul.bf16.gmra.mxu0 %v7624
        %v10081 = vpop.f32.mrf.mxu0
        %v10082 = vadd.f32 %v10033, %v10081
        %v10083 = vpop.f32.mrf.mxu0
        %v10084 = vadd.f32 %v10035, %v10083
        %10085 = vmatmul.bf16.gmra.mxu0 %v7642
        %v10086 = vpop.f32.mrf.mxu0
        %v10087 = vadd.f32 %v10038, %v10086
        %v10088 = vpop.f32.mrf.mxu0
        %v10089 = vadd.f32 %v10040, %v10088
        %10090 = vmatmul.bf16.gmra.mxu0 %v7660
        %v10091 = vpop.f32.mrf.mxu0
        %v10092 = vadd.f32 %v10043, %v10091
        %v10093 = vpop.f32.mrf.mxu0
        %v10094 = vadd.f32 %v10045, %v10093
        %10095 = vmatmul.bf16.gmra.mxu0 %v7678
        %v10096 = vpop.f32.mrf.mxu0
        %v10097 = vadd.f32 %v10048, %v10096
        %v10098 = vpop.f32.mrf.mxu0
        %v10099 = vadd.f32 %v10050, %v10098
        %10100 = vmatmul.bf16.gmra.mxu0 %v7696
        %v10101 = vpop.f32.mrf.mxu0
        %v10102 = vadd.f32 %v10053, %v10101
        %v10103 = vpop.f32.mrf.mxu0
        %v10104 = vadd.f32 %v10055, %v10103
        %10105 = vmatmul.bf16.gmra.mxu0 %v7714
        %v10106 = vpop.f32.mrf.mxu0
        %v10107 = vadd.f32 %v10058, %v10106
        %v10108 = vpop.f32.mrf.mxu0
        %v10109 = vadd.f32 %v10060, %v10108
        %10110 = vmatmul.bf16.gmra.mxu0 %v7732
        %v10111 = vpop.f32.mrf.mxu0
        %v10112 = vadd.f32 %v10063, %v10111
        %v10113 = vpop.f32.mrf.mxu0
        %v10114 = vadd.f32 %v10065, %v10113
        %10115 = vmatmul.bf16.gmra.mxu0 %v7750
        %v10116 = vpop.f32.mrf.mxu0
        %v10117 = vadd.f32 %v10068, %v10116
        %v10118 = vpop.f32.mrf.mxu0
        %v10119 = vadd.f32 %v10070, %v10118
        %10120 = vdwg.mxu0
        %10121 = vmatpush.bf16.msra.mxu0 %v9031
        %10122 = vmatpush.bf16.msra.mxu0 %v9029
        %10123 = vmatpush.bf16.msra.mxu0 %v9027
        %10124 = vmatpush.bf16.msra.mxu0 %v9025
        %10125 = vmatpush.bf16.msra.mxu0 %v9023
        %10126 = vmatpush.bf16.msra.mxu0 %v9021
        %10127 = vmatpush.bf16.msra.mxu0 %v9019
        %10128 = vmatpush.bf16.msra.mxu0 %v9017
        %10129 = vmatmul.bf16.gmra.mxu0 %v7625
        %v10130 = vpop.f32.mrf.mxu0
        %v10131 = vadd.f32 %v10082, %v10130
        %v10132 = vpop.f32.mrf.mxu0
        %v10133 = vadd.f32 %v10084, %v10132
        %10134 = vmatmul.bf16.gmra.mxu0 %v7643
        %v10135 = vpop.f32.mrf.mxu0
        %v10136 = vadd.f32 %v10087, %v10135
        %v10137 = vpop.f32.mrf.mxu0
        %v10138 = vadd.f32 %v10089, %v10137
        %10139 = vmatmul.bf16.gmra.mxu0 %v7661
        %v10140 = vpop.f32.mrf.mxu0
        %v10141 = vadd.f32 %v10092, %v10140
        %v10142 = vpop.f32.mrf.mxu0
        %v10143 = vadd.f32 %v10094, %v10142
        %10144 = vmatmul.bf16.gmra.mxu0 %v7679
        %v10145 = vpop.f32.mrf.mxu0
        %v10146 = vadd.f32 %v10097, %v10145
        %v10147 = vpop.f32.mrf.mxu0
        %v10148 = vadd.f32 %v10099, %v10147
        %10149 = vmatmul.bf16.gmra.mxu0 %v7697
        %v10150 = vpop.f32.mrf.mxu0
        %v10151 = vadd.f32 %v10102, %v10150
        %v10152 = vpop.f32.mrf.mxu0
        %v10153 = vadd.f32 %v10104, %v10152
        %10154 = vmatmul.bf16.gmra.mxu0 %v7715
        %v10155 = vpop.f32.mrf.mxu0
        %v10156 = vadd.f32 %v10107, %v10155
        %v10157 = vpop.f32.mrf.mxu0
        %v10158 = vadd.f32 %v10109, %v10157
        %10159 = vmatmul.bf16.gmra.mxu0 %v7733
        %v10160 = vpop.f32.mrf.mxu0
        %v10161 = vadd.f32 %v10112, %v10160
        %v10162 = vpop.f32.mrf.mxu0
        %v10163 = vadd.f32 %v10114, %v10162
        %10164 = vmatmul.bf16.gmra.mxu0 %v7751
        %v10165 = vpop.f32.mrf.mxu0
        %v10166 = vadd.f32 %v10117, %v10165
        %v10167 = vpop.f32.mrf.mxu0
        %v10168 = vadd.f32 %v10119, %v10167
        %10169 = vdwg.mxu0
        %10170 = vmatpush.bf16.msra.mxu0 %v9047
        %10171 = vmatpush.bf16.msra.mxu0 %v9045
        %10172 = vmatpush.bf16.msra.mxu0 %v9043
        %10173 = vmatpush.bf16.msra.mxu0 %v9041
        %10174 = vmatpush.bf16.msra.mxu0 %v9039
        %10175 = vmatpush.bf16.msra.mxu0 %v9037
        %10176 = vmatpush.bf16.msra.mxu0 %v9035
        %10177 = vmatpush.bf16.msra.mxu0 %v9033
        %10178 = vmatmul.bf16.gmra.mxu0 %v7626
        %v10179 = vpop.f32.mrf.mxu0
        %v10180 = vadd.f32 %v10131, %v10179
        %v10181 = vpop.f32.mrf.mxu0
        %v10182 = vadd.f32 %v10133, %v10181
        %10183 = vmatmul.bf16.gmra.mxu0 %v7644
        %v10184 = vpop.f32.mrf.mxu0
        %v10185 = vadd.f32 %v10136, %v10184
        %v10186 = vpop.f32.mrf.mxu0
        %v10187 = vadd.f32 %v10138, %v10186
        %10188 = vmatmul.bf16.gmra.mxu0 %v7662
        %v10189 = vpop.f32.mrf.mxu0
        %v10190 = vadd.f32 %v10141, %v10189
        %v10191 = vpop.f32.mrf.mxu0
        %v10192 = vadd.f32 %v10143, %v10191
        %10193 = vmatmul.bf16.gmra.mxu0 %v7680
        %v10194 = vpop.f32.mrf.mxu0
        %v10195 = vadd.f32 %v10146, %v10194
        %v10196 = vpop.f32.mrf.mxu0
        %v10197 = vadd.f32 %v10148, %v10196
        %10198 = vmatmul.bf16.gmra.mxu0 %v7698
        %v10199 = vpop.f32.mrf.mxu0
        %v10200 = vadd.f32 %v10151, %v10199
        %v10201 = vpop.f32.mrf.mxu0
        %v10202 = vadd.f32 %v10153, %v10201
        %10203 = vmatmul.bf16.gmra.mxu0 %v7716
        %v10204 = vpop.f32.mrf.mxu0
        %v10205 = vadd.f32 %v10156, %v10204
        %v10206 = vpop.f32.mrf.mxu0
        %v10207 = vadd.f32 %v10158, %v10206
        %10208 = vmatmul.bf16.gmra.mxu0 %v7734
        %v10209 = vpop.f32.mrf.mxu0
        %v10210 = vadd.f32 %v10161, %v10209
        %v10211 = vpop.f32.mrf.mxu0
        %v10212 = vadd.f32 %v10163, %v10211
        %10213 = vmatmul.bf16.gmra.mxu0 %v7752
        %v10214 = vpop.f32.mrf.mxu0
        %v10215 = vadd.f32 %v10166, %v10214
        %v10216 = vpop.f32.mrf.mxu0
        %v10217 = vadd.f32 %v10168, %v10216
        %10218 = vdwg.mxu0
        %10219 = vmatpush.bf16.msra.mxu0 %v8776
        %10220 = vmatpush.bf16.msra.mxu0 %v8774
        %10221 = vmatpush.bf16.msra.mxu0 %v8772
        %10222 = vmatpush.bf16.msra.mxu0 %v8770
        %10223 = vmatpush.bf16.msra.mxu0 %v8768
        %10224 = vmatpush.bf16.msra.mxu0 %v8766
        %10225 = vmatpush.bf16.msra.mxu0 %v8764
        %10226 = vmatpush.bf16.msra.mxu0 %v8762
        %10227 = vmatmul.bf16.gmra.mxu0 %v7609
        %v10228 = vpop.f32.mrf.mxu0
        %v10229 = vadd.f32 %v7174, %v10228
        %v10230 = vpop.f32.mrf.mxu0
        %v10231 = vadd.f32 %v7174, %v10230
        %10232 = vmatmul.bf16.gmra.mxu0 %v7627
        %v10233 = vpop.f32.mrf.mxu0
        %v10234 = vadd.f32 %v7174, %v10233
        %v10235 = vpop.f32.mrf.mxu0
        %v10236 = vadd.f32 %v7174, %v10235
        %10237 = vmatmul.bf16.gmra.mxu0 %v7645
        %v10238 = vpop.f32.mrf.mxu0
        %v10239 = vadd.f32 %v7174, %v10238
        %v10240 = vpop.f32.mrf.mxu0
        %v10241 = vadd.f32 %v7174, %v10240
        %10242 = vmatmul.bf16.gmra.mxu0 %v7663
        %v10243 = vpop.f32.mrf.mxu0
        %v10244 = vadd.f32 %v7174, %v10243
        %v10245 = vpop.f32.mrf.mxu0
        %v10246 = vadd.f32 %v7174, %v10245
        %10247 = vmatmul.bf16.gmra.mxu0 %v7681
        %v10248 = vpop.f32.mrf.mxu0
        %v10249 = vadd.f32 %v7174, %v10248
        %v10250 = vpop.f32.mrf.mxu0
        %v10251 = vadd.f32 %v7174, %v10250
        %10252 = vmatmul.bf16.gmra.mxu0 %v7699
        %v10253 = vpop.f32.mrf.mxu0
        %v10254 = vadd.f32 %v7174, %v10253
        %v10255 = vpop.f32.mrf.mxu0
        %v10256 = vadd.f32 %v7174, %v10255
        %10257 = vmatmul.bf16.gmra.mxu0 %v7717
        %v10258 = vpop.f32.mrf.mxu0
        %v10259 = vadd.f32 %v7174, %v10258
        %v10260 = vpop.f32.mrf.mxu0
        %v10261 = vadd.f32 %v7174, %v10260
        %10262 = vmatmul.bf16.gmra.mxu0 %v7735
        %v10263 = vpop.f32.mrf.mxu0
        %v10264 = vadd.f32 %v7174, %v10263
        %v10265 = vpop.f32.mrf.mxu0
        %v10266 = vadd.f32 %v7174, %v10265
        %10267 = vdwg.mxu0
        %10268 = vmatpush.bf16.msra.mxu0 %v8792
        %10269 = vmatpush.bf16.msra.mxu0 %v8790
        %10270 = vmatpush.bf16.msra.mxu0 %v8788
        %10271 = vmatpush.bf16.msra.mxu0 %v8786
        %10272 = vmatpush.bf16.msra.mxu0 %v8784
        %10273 = vmatpush.bf16.msra.mxu0 %v8782
        %10274 = vmatpush.bf16.msra.mxu0 %v8780
        %10275 = vmatpush.bf16.msra.mxu0 %v8778
        %10276 = vmatmul.bf16.gmra.mxu0 %v7610
        %v10277 = vpop.f32.mrf.mxu0
        %v10278 = vadd.f32 %v10229, %v10277
        %v10279 = vpop.f32.mrf.mxu0
        %v10280 = vadd.f32 %v10231, %v10279
        %10281 = vmatmul.bf16.gmra.mxu0 %v7628
        %v10282 = vpop.f32.mrf.mxu0
        %v10283 = vadd.f32 %v10234, %v10282
        %v10284 = vpop.f32.mrf.mxu0
        %v10285 = vadd.f32 %v10236, %v10284
        %10286 = vmatmul.bf16.gmra.mxu0 %v7646
        %v10287 = vpop.f32.mrf.mxu0
        %v10288 = vadd.f32 %v10239, %v10287
        %v10289 = vpop.f32.mrf.mxu0
        %v10290 = vadd.f32 %v10241, %v10289
        %10291 = vmatmul.bf16.gmra.mxu0 %v7664
        %v10292 = vpop.f32.mrf.mxu0
        %v10293 = vadd.f32 %v10244, %v10292
        %v10294 = vpop.f32.mrf.mxu0
        %v10295 = vadd.f32 %v10246, %v10294
        %10296 = vmatmul.bf16.gmra.mxu0 %v7682
        %v10297 = vpop.f32.mrf.mxu0
        %v10298 = vadd.f32 %v10249, %v10297
        %v10299 = vpop.f32.mrf.mxu0
        %v10300 = vadd.f32 %v10251, %v10299
        %10301 = vmatmul.bf16.gmra.mxu0 %v7700
        %v10302 = vpop.f32.mrf.mxu0
        %v10303 = vadd.f32 %v10254, %v10302
        %v10304 = vpop.f32.mrf.mxu0
        %v10305 = vadd.f32 %v10256, %v10304
        %10306 = vmatmul.bf16.gmra.mxu0 %v7718
        %v10307 = vpop.f32.mrf.mxu0
        %v10308 = vadd.f32 %v10259, %v10307
        %v10309 = vpop.f32.mrf.mxu0
        %v10310 = vadd.f32 %v10261, %v10309
        %10311 = vmatmul.bf16.gmra.mxu0 %v7736
        %v10312 = vpop.f32.mrf.mxu0
        %v10313 = vadd.f32 %v10264, %v10312
        %v10314 = vpop.f32.mrf.mxu0
        %v10315 = vadd.f32 %v10266, %v10314
        %10316 = vdwg.mxu0
        %10317 = vmatpush.bf16.msra.mxu0 %v8808
        %10318 = vmatpush.bf16.msra.mxu0 %v8806
        %10319 = vmatpush.bf16.msra.mxu0 %v8804
        %10320 = vmatpush.bf16.msra.mxu0 %v8802
        %10321 = vmatpush.bf16.msra.mxu0 %v8800
        %10322 = vmatpush.bf16.msra.mxu0 %v8798
        %10323 = vmatpush.bf16.msra.mxu0 %v8796
        %10324 = vmatpush.bf16.msra.mxu0 %v8794
        %10325 = vmatmul.bf16.gmra.mxu0 %v7611
        %v10326 = vpop.f32.mrf.mxu0
        %v10327 = vadd.f32 %v10278, %v10326
        %v10328 = vpop.f32.mrf.mxu0
        %v10329 = vadd.f32 %v10280, %v10328
        %10330 = vmatmul.bf16.gmra.mxu0 %v7629
        %v10331 = vpop.f32.mrf.mxu0
        %v10332 = vadd.f32 %v10283, %v10331
        %v10333 = vpop.f32.mrf.mxu0
        %v10334 = vadd.f32 %v10285, %v10333
        %10335 = vmatmul.bf16.gmra.mxu0 %v7647
        %v10336 = vpop.f32.mrf.mxu0
        %v10337 = vadd.f32 %v10288, %v10336
        %v10338 = vpop.f32.mrf.mxu0
        %v10339 = vadd.f32 %v10290, %v10338
        %10340 = vmatmul.bf16.gmra.mxu0 %v7665
        %v10341 = vpop.f32.mrf.mxu0
        %v10342 = vadd.f32 %v10293, %v10341
        %v10343 = vpop.f32.mrf.mxu0
        %v10344 = vadd.f32 %v10295, %v10343
        %10345 = vmatmul.bf16.gmra.mxu0 %v7683
        %v10346 = vpop.f32.mrf.mxu0
        %v10347 = vadd.f32 %v10298, %v10346
        %v10348 = vpop.f32.mrf.mxu0
        %v10349 = vadd.f32 %v10300, %v10348
        %10350 = vmatmul.bf16.gmra.mxu0 %v7701
        %v10351 = vpop.f32.mrf.mxu0
        %v10352 = vadd.f32 %v10303, %v10351
        %v10353 = vpop.f32.mrf.mxu0
        %v10354 = vadd.f32 %v10305, %v10353
        %10355 = vmatmul.bf16.gmra.mxu0 %v7719
        %v10356 = vpop.f32.mrf.mxu0
        %v10357 = vadd.f32 %v10308, %v10356
        %v10358 = vpop.f32.mrf.mxu0
        %v10359 = vadd.f32 %v10310, %v10358
        %10360 = vmatmul.bf16.gmra.mxu0 %v7737
        %v10361 = vpop.f32.mrf.mxu0
        %v10362 = vadd.f32 %v10313, %v10361
        %v10363 = vpop.f32.mrf.mxu0
        %v10364 = vadd.f32 %v10315, %v10363
        %10365 = vdwg.mxu0
        %10366 = vmatpush.bf16.msra.mxu0 %v8824
        %10367 = vmatpush.bf16.msra.mxu0 %v8822
        %10368 = vmatpush.bf16.msra.mxu0 %v8820
        %10369 = vmatpush.bf16.msra.mxu0 %v8818
        %10370 = vmatpush.bf16.msra.mxu0 %v8816
        %10371 = vmatpush.bf16.msra.mxu0 %v8814
        %10372 = vmatpush.bf16.msra.mxu0 %v8812
        %10373 = vmatpush.bf16.msra.mxu0 %v8810
        %10374 = vmatmul.bf16.gmra.mxu0 %v7612
        %v10375 = vpop.f32.mrf.mxu0
        %v10376 = vadd.f32 %v10327, %v10375
        %v10377 = vpop.f32.mrf.mxu0
        %v10378 = vadd.f32 %v10329, %v10377
        %10379 = vmatmul.bf16.gmra.mxu0 %v7630
        %v10380 = vpop.f32.mrf.mxu0
        %v10381 = vadd.f32 %v10332, %v10380
        %v10382 = vpop.f32.mrf.mxu0
        %v10383 = vadd.f32 %v10334, %v10382
        %10384 = vmatmul.bf16.gmra.mxu0 %v7648
        %v10385 = vpop.f32.mrf.mxu0
        %v10386 = vadd.f32 %v10337, %v10385
        %v10387 = vpop.f32.mrf.mxu0
        %v10388 = vadd.f32 %v10339, %v10387
        %10389 = vmatmul.bf16.gmra.mxu0 %v7666
        %v10390 = vpop.f32.mrf.mxu0
        %v10391 = vadd.f32 %v10342, %v10390
        %v10392 = vpop.f32.mrf.mxu0
        %v10393 = vadd.f32 %v10344, %v10392
        %10394 = vmatmul.bf16.gmra.mxu0 %v7684
        %v10395 = vpop.f32.mrf.mxu0
        %v10396 = vadd.f32 %v10347, %v10395
        %v10397 = vpop.f32.mrf.mxu0
        %v10398 = vadd.f32 %v10349, %v10397
        %10399 = vmatmul.bf16.gmra.mxu0 %v7702
        %v10400 = vpop.f32.mrf.mxu0
        %v10401 = vadd.f32 %v10352, %v10400
        %v10402 = vpop.f32.mrf.mxu0
        %v10403 = vadd.f32 %v10354, %v10402
        %10404 = vmatmul.bf16.gmra.mxu0 %v7720
        %v10405 = vpop.f32.mrf.mxu0
        %v10406 = vadd.f32 %v10357, %v10405
        %v10407 = vpop.f32.mrf.mxu0
        %v10408 = vadd.f32 %v10359, %v10407
        %10409 = vmatmul.bf16.gmra.mxu0 %v7738
        %v10410 = vpop.f32.mrf.mxu0
        %v10411 = vadd.f32 %v10362, %v10410
        %v10412 = vpop.f32.mrf.mxu0
        %v10413 = vadd.f32 %v10364, %v10412
        %10414 = vdwg.mxu0
        %10415 = vmatpush.bf16.msra.mxu0 %v8840
        %10416 = vmatpush.bf16.msra.mxu0 %v8838
        %10417 = vmatpush.bf16.msra.mxu0 %v8836
        %10418 = vmatpush.bf16.msra.mxu0 %v8834
        %10419 = vmatpush.bf16.msra.mxu0 %v8832
        %10420 = vmatpush.bf16.msra.mxu0 %v8830
        %10421 = vmatpush.bf16.msra.mxu0 %v8828
        %10422 = vmatpush.bf16.msra.mxu0 %v8826
        %10423 = vmatmul.bf16.gmra.mxu0 %v7613
        %v10424 = vpop.f32.mrf.mxu0
        %v10425 = vadd.f32 %v10376, %v10424
        %v10426 = vpop.f32.mrf.mxu0
        %v10427 = vadd.f32 %v10378, %v10426
        %10428 = vmatmul.bf16.gmra.mxu0 %v7631
        %v10429 = vpop.f32.mrf.mxu0
        %v10430 = vadd.f32 %v10381, %v10429
        %v10431 = vpop.f32.mrf.mxu0
        %v10432 = vadd.f32 %v10383, %v10431
        %10433 = vmatmul.bf16.gmra.mxu0 %v7649
        %v10434 = vpop.f32.mrf.mxu0
        %v10435 = vadd.f32 %v10386, %v10434
        %v10436 = vpop.f32.mrf.mxu0
        %v10437 = vadd.f32 %v10388, %v10436
        %10438 = vmatmul.bf16.gmra.mxu0 %v7667
        %v10439 = vpop.f32.mrf.mxu0
        %v10440 = vadd.f32 %v10391, %v10439
        %v10441 = vpop.f32.mrf.mxu0
        %v10442 = vadd.f32 %v10393, %v10441
        %10443 = vmatmul.bf16.gmra.mxu0 %v7685
        %v10444 = vpop.f32.mrf.mxu0
        %v10445 = vadd.f32 %v10396, %v10444
        %v10446 = vpop.f32.mrf.mxu0
        %v10447 = vadd.f32 %v10398, %v10446
        %10448 = vmatmul.bf16.gmra.mxu0 %v7703
        %v10449 = vpop.f32.mrf.mxu0
        %v10450 = vadd.f32 %v10401, %v10449
        %v10451 = vpop.f32.mrf.mxu0
        %v10452 = vadd.f32 %v10403, %v10451
        %10453 = vmatmul.bf16.gmra.mxu0 %v7721
        %v10454 = vpop.f32.mrf.mxu0
        %v10455 = vadd.f32 %v10406, %v10454
        %v10456 = vpop.f32.mrf.mxu0
        %v10457 = vadd.f32 %v10408, %v10456
        %10458 = vmatmul.bf16.gmra.mxu0 %v7739
        %v10459 = vpop.f32.mrf.mxu0
        %v10460 = vadd.f32 %v10411, %v10459
        %v10461 = vpop.f32.mrf.mxu0
        %v10462 = vadd.f32 %v10413, %v10461
        %10463 = vdwg.mxu0
        %10464 = vmatpush.bf16.msra.mxu0 %v8856
        %10465 = vmatpush.bf16.msra.mxu0 %v8854
        %10466 = vmatpush.bf16.msra.mxu0 %v8852
        %10467 = vmatpush.bf16.msra.mxu0 %v8850
        %10468 = vmatpush.bf16.msra.mxu0 %v8848
        %10469 = vmatpush.bf16.msra.mxu0 %v8846
        %10470 = vmatpush.bf16.msra.mxu0 %v8844
        %10471 = vmatpush.bf16.msra.mxu0 %v8842
        %10472 = vmatmul.bf16.gmra.mxu0 %v7614
        %v10473 = vpop.f32.mrf.mxu0
        %v10474 = vadd.f32 %v10425, %v10473
        %v10475 = vpop.f32.mrf.mxu0
        %v10476 = vadd.f32 %v10427, %v10475
        %10477 = vmatmul.bf16.gmra.mxu0 %v7632
        %v10478 = vpop.f32.mrf.mxu0
        %v10479 = vadd.f32 %v10430, %v10478
        %v10480 = vpop.f32.mrf.mxu0
        %v10481 = vadd.f32 %v10432, %v10480
        %10482 = vmatmul.bf16.gmra.mxu0 %v7650
        %v10483 = vpop.f32.mrf.mxu0
        %v10484 = vadd.f32 %v10435, %v10483
        %v10485 = vpop.f32.mrf.mxu0
        %v10486 = vadd.f32 %v10437, %v10485
        %10487 = vmatmul.bf16.gmra.mxu0 %v7668
        %v10488 = vpop.f32.mrf.mxu0
        %v10489 = vadd.f32 %v10440, %v10488
        %v10490 = vpop.f32.mrf.mxu0
        %v10491 = vadd.f32 %v10442, %v10490
        %10492 = vmatmul.bf16.gmra.mxu0 %v7686
        %v10493 = vpop.f32.mrf.mxu0
        %v10494 = vadd.f32 %v10445, %v10493
        %v10495 = vpop.f32.mrf.mxu0
        %v10496 = vadd.f32 %v10447, %v10495
        %10497 = vmatmul.bf16.gmra.mxu0 %v7704
        %v10498 = vpop.f32.mrf.mxu0
        %v10499 = vadd.f32 %v10450, %v10498
        %v10500 = vpop.f32.mrf.mxu0
        %v10501 = vadd.f32 %v10452, %v10500
        %10502 = vmatmul.bf16.gmra.mxu0 %v7722
        %v10503 = vpop.f32.mrf.mxu0
        %v10504 = vadd.f32 %v10455, %v10503
        %v10505 = vpop.f32.mrf.mxu0
        %v10506 = vadd.f32 %v10457, %v10505
        %10507 = vmatmul.bf16.gmra.mxu0 %v7740
        %v10508 = vpop.f32.mrf.mxu0
        %v10509 = vadd.f32 %v10460, %v10508
        %v10510 = vpop.f32.mrf.mxu0
        %v10511 = vadd.f32 %v10462, %v10510
        %10512 = vdwg.mxu0
        %10513 = vmatpush.bf16.msra.mxu0 %v8872
        %10514 = vmatpush.bf16.msra.mxu0 %v8870
        %10515 = vmatpush.bf16.msra.mxu0 %v8868
        %10516 = vmatpush.bf16.msra.mxu0 %v8866
        %10517 = vmatpush.bf16.msra.mxu0 %v8864
        %10518 = vmatpush.bf16.msra.mxu0 %v8862
        %10519 = vmatpush.bf16.msra.mxu0 %v8860
        %10520 = vmatpush.bf16.msra.mxu0 %v8858
        %10521 = vmatmul.bf16.gmra.mxu0 %v7615
        %v10522 = vpop.f32.mrf.mxu0
        %v10523 = vadd.f32 %v10474, %v10522
        %v10524 = vpop.f32.mrf.mxu0
        %v10525 = vadd.f32 %v10476, %v10524
        %10526 = vmatmul.bf16.gmra.mxu0 %v7633
        %v10527 = vpop.f32.mrf.mxu0
        %v10528 = vadd.f32 %v10479, %v10527
        %v10529 = vpop.f32.mrf.mxu0
        %v10530 = vadd.f32 %v10481, %v10529
        %10531 = vmatmul.bf16.gmra.mxu0 %v7651
        %v10532 = vpop.f32.mrf.mxu0
        %v10533 = vadd.f32 %v10484, %v10532
        %v10534 = vpop.f32.mrf.mxu0
        %v10535 = vadd.f32 %v10486, %v10534
        %10536 = vmatmul.bf16.gmra.mxu0 %v7669
        %v10537 = vpop.f32.mrf.mxu0
        %v10538 = vadd.f32 %v10489, %v10537
        %v10539 = vpop.f32.mrf.mxu0
        %v10540 = vadd.f32 %v10491, %v10539
        %10541 = vmatmul.bf16.gmra.mxu0 %v7687
        %v10542 = vpop.f32.mrf.mxu0
        %v10543 = vadd.f32 %v10494, %v10542
        %v10544 = vpop.f32.mrf.mxu0
        %v10545 = vadd.f32 %v10496, %v10544
        %10546 = vmatmul.bf16.gmra.mxu0 %v7705
        %v10547 = vpop.f32.mrf.mxu0
        %v10548 = vadd.f32 %v10499, %v10547
        %v10549 = vpop.f32.mrf.mxu0
        %v10550 = vadd.f32 %v10501, %v10549
        %10551 = vmatmul.bf16.gmra.mxu0 %v7723
        %v10552 = vpop.f32.mrf.mxu0
        %v10553 = vadd.f32 %v10504, %v10552
        %v10554 = vpop.f32.mrf.mxu0
        %v10555 = vadd.f32 %v10506, %v10554
        %10556 = vmatmul.bf16.gmra.mxu0 %v7741
        %v10557 = vpop.f32.mrf.mxu0
        %v10558 = vadd.f32 %v10509, %v10557
        %v10559 = vpop.f32.mrf.mxu0
        %v10560 = vadd.f32 %v10511, %v10559
        %10561 = vdwg.mxu0
        %10562 = vmatpush.bf16.msra.mxu0 %v8888
        %10563 = vmatpush.bf16.msra.mxu0 %v8886
        %10564 = vmatpush.bf16.msra.mxu0 %v8884
        %10565 = vmatpush.bf16.msra.mxu0 %v8882
        %10566 = vmatpush.bf16.msra.mxu0 %v8880
        %10567 = vmatpush.bf16.msra.mxu0 %v8878
        %10568 = vmatpush.bf16.msra.mxu0 %v8876
        %10569 = vmatpush.bf16.msra.mxu0 %v8874
        %10570 = vmatmul.bf16.gmra.mxu0 %v7616
        %v10571 = vpop.f32.mrf.mxu0
        %v10572 = vadd.f32 %v10523, %v10571
        %v10573 = vpop.f32.mrf.mxu0
        %v10574 = vadd.f32 %v10525, %v10573
        %10575 = vmatmul.bf16.gmra.mxu0 %v7634
        %v10576 = vpop.f32.mrf.mxu0
        %v10577 = vadd.f32 %v10528, %v10576
        %v10578 = vpop.f32.mrf.mxu0
        %v10579 = vadd.f32 %v10530, %v10578
        %10580 = vmatmul.bf16.gmra.mxu0 %v7652
        %v10581 = vpop.f32.mrf.mxu0
        %v10582 = vadd.f32 %v10533, %v10581
        %v10583 = vpop.f32.mrf.mxu0
        %v10584 = vadd.f32 %v10535, %v10583
        %10585 = vmatmul.bf16.gmra.mxu0 %v7670
        %v10586 = vpop.f32.mrf.mxu0
        %v10587 = vadd.f32 %v10538, %v10586
        %v10588 = vpop.f32.mrf.mxu0
        %v10589 = vadd.f32 %v10540, %v10588
        %10590 = vmatmul.bf16.gmra.mxu0 %v7688
        %v10591 = vpop.f32.mrf.mxu0
        %v10592 = vadd.f32 %v10543, %v10591
        %v10593 = vpop.f32.mrf.mxu0
        %v10594 = vadd.f32 %v10545, %v10593
        %10595 = vmatmul.bf16.gmra.mxu0 %v7706
        %v10596 = vpop.f32.mrf.mxu0
        %v10597 = vadd.f32 %v10548, %v10596
        %v10598 = vpop.f32.mrf.mxu0
        %v10599 = vadd.f32 %v10550, %v10598
        %10600 = vmatmul.bf16.gmra.mxu0 %v7724
        %v10601 = vpop.f32.mrf.mxu0
        %v10602 = vadd.f32 %v10553, %v10601
        %v10603 = vpop.f32.mrf.mxu0
        %v10604 = vadd.f32 %v10555, %v10603
        %10605 = vmatmul.bf16.gmra.mxu0 %v7742
        %v10606 = vpop.f32.mrf.mxu0
        %v10607 = vadd.f32 %v10558, %v10606
        %v10608 = vpop.f32.mrf.mxu0
        %v10609 = vadd.f32 %v10560, %v10608
        %10610 = vdwg.mxu0
        %10611 = vmatpush.bf16.msra.mxu0 %v8904
        %10612 = vmatpush.bf16.msra.mxu0 %v8902
        %10613 = vmatpush.bf16.msra.mxu0 %v8900
        %10614 = vmatpush.bf16.msra.mxu0 %v8898
        %10615 = vmatpush.bf16.msra.mxu0 %v8896
        %10616 = vmatpush.bf16.msra.mxu0 %v8894
        %10617 = vmatpush.bf16.msra.mxu0 %v8892
        %10618 = vmatpush.bf16.msra.mxu0 %v8890
        %10619 = vmatmul.bf16.gmra.mxu0 %v7617
        %v10620 = vpop.f32.mrf.mxu0
        %v10621 = vadd.f32 %v10572, %v10620
        %v10622 = vpop.f32.mrf.mxu0
        %v10623 = vadd.f32 %v10574, %v10622
        %10624 = vmatmul.bf16.gmra.mxu0 %v7635
        %v10625 = vpop.f32.mrf.mxu0
        %v10626 = vadd.f32 %v10577, %v10625
        %v10627 = vpop.f32.mrf.mxu0
        %v10628 = vadd.f32 %v10579, %v10627
        %10629 = vmatmul.bf16.gmra.mxu0 %v7653
        %v10630 = vpop.f32.mrf.mxu0
        %v10631 = vadd.f32 %v10582, %v10630
        %v10632 = vpop.f32.mrf.mxu0
        %v10633 = vadd.f32 %v10584, %v10632
        %10634 = vmatmul.bf16.gmra.mxu0 %v7671
        %v10635 = vpop.f32.mrf.mxu0
        %v10636 = vadd.f32 %v10587, %v10635
        %v10637 = vpop.f32.mrf.mxu0
        %v10638 = vadd.f32 %v10589, %v10637
        %10639 = vmatmul.bf16.gmra.mxu0 %v7689
        %v10640 = vpop.f32.mrf.mxu0
        %v10641 = vadd.f32 %v10592, %v10640
        %v10642 = vpop.f32.mrf.mxu0
        %v10643 = vadd.f32 %v10594, %v10642
        %10644 = vmatmul.bf16.gmra.mxu0 %v7707
        %v10645 = vpop.f32.mrf.mxu0
        %v10646 = vadd.f32 %v10597, %v10645
        %v10647 = vpop.f32.mrf.mxu0
        %v10648 = vadd.f32 %v10599, %v10647
        %10649 = vmatmul.bf16.gmra.mxu0 %v7725
        %v10650 = vpop.f32.mrf.mxu0
        %v10651 = vadd.f32 %v10602, %v10650
        %v10652 = vpop.f32.mrf.mxu0
        %v10653 = vadd.f32 %v10604, %v10652
        %10654 = vmatmul.bf16.gmra.mxu0 %v7743
        %v10655 = vpop.f32.mrf.mxu0
        %v10656 = vadd.f32 %v10607, %v10655
        %v10657 = vpop.f32.mrf.mxu0
        %v10658 = vadd.f32 %v10609, %v10657
        %10659 = vdwg.mxu0
        %10660 = vmatpush.bf16.msra.mxu0 %v8920
        %10661 = vmatpush.bf16.msra.mxu0 %v8918
        %10662 = vmatpush.bf16.msra.mxu0 %v8916
        %10663 = vmatpush.bf16.msra.mxu0 %v8914
        %10664 = vmatpush.bf16.msra.mxu0 %v8912
        %10665 = vmatpush.bf16.msra.mxu0 %v8910
        %10666 = vmatpush.bf16.msra.mxu0 %v8908
        %10667 = vmatpush.bf16.msra.mxu0 %v8906
        %10668 = vmatmul.bf16.gmra.mxu0 %v7618
        %v10669 = vpop.f32.mrf.mxu0
        %v10670 = vadd.f32 %v10621, %v10669
        %v10671 = vpop.f32.mrf.mxu0
        %v10672 = vadd.f32 %v10623, %v10671
        %10673 = vmatmul.bf16.gmra.mxu0 %v7636
        %v10674 = vpop.f32.mrf.mxu0
        %v10675 = vadd.f32 %v10626, %v10674
        %v10676 = vpop.f32.mrf.mxu0
        %v10677 = vadd.f32 %v10628, %v10676
        %10678 = vmatmul.bf16.gmra.mxu0 %v7654
        %v10679 = vpop.f32.mrf.mxu0
        %v10680 = vadd.f32 %v10631, %v10679
        %v10681 = vpop.f32.mrf.mxu0
        %v10682 = vadd.f32 %v10633, %v10681
        %10683 = vmatmul.bf16.gmra.mxu0 %v7672
        %v10684 = vpop.f32.mrf.mxu0
        %v10685 = vadd.f32 %v10636, %v10684
        %v10686 = vpop.f32.mrf.mxu0
        %v10687 = vadd.f32 %v10638, %v10686
        %10688 = vmatmul.bf16.gmra.mxu0 %v7690
        %v10689 = vpop.f32.mrf.mxu0
        %v10690 = vadd.f32 %v10641, %v10689
        %v10691 = vpop.f32.mrf.mxu0
        %v10692 = vadd.f32 %v10643, %v10691
        %10693 = vmatmul.bf16.gmra.mxu0 %v7708
        %v10694 = vpop.f32.mrf.mxu0
        %v10695 = vadd.f32 %v10646, %v10694
        %v10696 = vpop.f32.mrf.mxu0
        %v10697 = vadd.f32 %v10648, %v10696
        %10698 = vmatmul.bf16.gmra.mxu0 %v7726
        %v10699 = vpop.f32.mrf.mxu0
        %v10700 = vadd.f32 %v10651, %v10699
        %v10701 = vpop.f32.mrf.mxu0
        %v10702 = vadd.f32 %v10653, %v10701
        %10703 = vmatmul.bf16.gmra.mxu0 %v7744
        %v10704 = vpop.f32.mrf.mxu0
        %v10705 = vadd.f32 %v10656, %v10704
        %v10706 = vpop.f32.mrf.mxu0
        %v10707 = vadd.f32 %v10658, %v10706
        %10708 = vdwg.mxu0
        %10709 = vmatpush.bf16.msra.mxu0 %v8936
        %10710 = vmatpush.bf16.msra.mxu0 %v8934
        %10711 = vmatpush.bf16.msra.mxu0 %v8932
        %10712 = vmatpush.bf16.msra.mxu0 %v8930
        %10713 = vmatpush.bf16.msra.mxu0 %v8928
        %10714 = vmatpush.bf16.msra.mxu0 %v8926
        %10715 = vmatpush.bf16.msra.mxu0 %v8924
        %10716 = vmatpush.bf16.msra.mxu0 %v8922
        %10717 = vmatmul.bf16.gmra.mxu0 %v7619
        %v10718 = vpop.f32.mrf.mxu0
        %v10719 = vadd.f32 %v10670, %v10718
        %v10720 = vpop.f32.mrf.mxu0
        %v10721 = vadd.f32 %v10672, %v10720
        %10722 = vmatmul.bf16.gmra.mxu0 %v7637
        %v10723 = vpop.f32.mrf.mxu0
        %v10724 = vadd.f32 %v10675, %v10723
        %v10725 = vpop.f32.mrf.mxu0
        %v10726 = vadd.f32 %v10677, %v10725
        %10727 = vmatmul.bf16.gmra.mxu0 %v7655
        %v10728 = vpop.f32.mrf.mxu0
        %v10729 = vadd.f32 %v10680, %v10728
        %v10730 = vpop.f32.mrf.mxu0
        %v10731 = vadd.f32 %v10682, %v10730
        %10732 = vmatmul.bf16.gmra.mxu0 %v7673
        %v10733 = vpop.f32.mrf.mxu0
        %v10734 = vadd.f32 %v10685, %v10733
        %v10735 = vpop.f32.mrf.mxu0
        %v10736 = vadd.f32 %v10687, %v10735
        %10737 = vmatmul.bf16.gmra.mxu0 %v7691
        %v10738 = vpop.f32.mrf.mxu0
        %v10739 = vadd.f32 %v10690, %v10738
        %v10740 = vpop.f32.mrf.mxu0
        %v10741 = vadd.f32 %v10692, %v10740
        %10742 = vmatmul.bf16.gmra.mxu0 %v7709
        %v10743 = vpop.f32.mrf.mxu0
        %v10744 = vadd.f32 %v10695, %v10743
        %v10745 = vpop.f32.mrf.mxu0
        %v10746 = vadd.f32 %v10697, %v10745
        %10747 = vmatmul.bf16.gmra.mxu0 %v7727
        %v10748 = vpop.f32.mrf.mxu0
        %v10749 = vadd.f32 %v10700, %v10748
        %v10750 = vpop.f32.mrf.mxu0
        %v10751 = vadd.f32 %v10702, %v10750
        %10752 = vmatmul.bf16.gmra.mxu0 %v7745
        %v10753 = vpop.f32.mrf.mxu0
        %v10754 = vadd.f32 %v10705, %v10753
        %v10755 = vpop.f32.mrf.mxu0
        %v10756 = vadd.f32 %v10707, %v10755
        %10757 = vdwg.mxu0
        %10758 = vmatpush.bf16.msra.mxu0 %v8952
        %10759 = vmatpush.bf16.msra.mxu0 %v8950
        %10760 = vmatpush.bf16.msra.mxu0 %v8948
        %10761 = vmatpush.bf16.msra.mxu0 %v8946
        %10762 = vmatpush.bf16.msra.mxu0 %v8944
        %10763 = vmatpush.bf16.msra.mxu0 %v8942
        %10764 = vmatpush.bf16.msra.mxu0 %v8940
        %10765 = vmatpush.bf16.msra.mxu0 %v8938
        %10766 = vmatmul.bf16.gmra.mxu0 %v7620
        %v10767 = vpop.f32.mrf.mxu0
        %v10768 = vadd.f32 %v10719, %v10767
        %v10769 = vpop.f32.mrf.mxu0
        %v10770 = vadd.f32 %v10721, %v10769
        %10771 = vmatmul.bf16.gmra.mxu0 %v7638
        %v10772 = vpop.f32.mrf.mxu0
        %v10773 = vadd.f32 %v10724, %v10772
        %v10774 = vpop.f32.mrf.mxu0
        %v10775 = vadd.f32 %v10726, %v10774
        %10776 = vmatmul.bf16.gmra.mxu0 %v7656
        %v10777 = vpop.f32.mrf.mxu0
        %v10778 = vadd.f32 %v10729, %v10777
        %v10779 = vpop.f32.mrf.mxu0
        %v10780 = vadd.f32 %v10731, %v10779
        %10781 = vmatmul.bf16.gmra.mxu0 %v7674
        %v10782 = vpop.f32.mrf.mxu0
        %v10783 = vadd.f32 %v10734, %v10782
        %v10784 = vpop.f32.mrf.mxu0
        %v10785 = vadd.f32 %v10736, %v10784
        %10786 = vmatmul.bf16.gmra.mxu0 %v7692
        %v10787 = vpop.f32.mrf.mxu0
        %v10788 = vadd.f32 %v10739, %v10787
        %v10789 = vpop.f32.mrf.mxu0
        %v10790 = vadd.f32 %v10741, %v10789
        %10791 = vmatmul.bf16.gmra.mxu0 %v7710
        %v10792 = vpop.f32.mrf.mxu0
        %v10793 = vadd.f32 %v10744, %v10792
        %v10794 = vpop.f32.mrf.mxu0
        %v10795 = vadd.f32 %v10746, %v10794
        %10796 = vmatmul.bf16.gmra.mxu0 %v7728
        %v10797 = vpop.f32.mrf.mxu0
        %v10798 = vadd.f32 %v10749, %v10797
        %v10799 = vpop.f32.mrf.mxu0
        %v10800 = vadd.f32 %v10751, %v10799
        %10801 = vmatmul.bf16.gmra.mxu0 %v7746
        %v10802 = vpop.f32.mrf.mxu0
        %v10803 = vadd.f32 %v10754, %v10802
        %v10804 = vpop.f32.mrf.mxu0
        %v10805 = vadd.f32 %v10756, %v10804
        %10806 = vdwg.mxu0
        %10807 = vmatpush.bf16.msra.mxu0 %v8968
        %10808 = vmatpush.bf16.msra.mxu0 %v8966
        %10809 = vmatpush.bf16.msra.mxu0 %v8964
        %10810 = vmatpush.bf16.msra.mxu0 %v8962
        %10811 = vmatpush.bf16.msra.mxu0 %v8960
        %10812 = vmatpush.bf16.msra.mxu0 %v8958
        %10813 = vmatpush.bf16.msra.mxu0 %v8956
        %10814 = vmatpush.bf16.msra.mxu0 %v8954
        %10815 = vmatmul.bf16.gmra.mxu0 %v7621
        %v10816 = vpop.f32.mrf.mxu0
        %v10817 = vadd.f32 %v10768, %v10816
        %v10818 = vpop.f32.mrf.mxu0
        %v10819 = vadd.f32 %v10770, %v10818
        %10820 = vmatmul.bf16.gmra.mxu0 %v7639
        %v10821 = vpop.f32.mrf.mxu0
        %v10822 = vadd.f32 %v10773, %v10821
        %v10823 = vpop.f32.mrf.mxu0
        %v10824 = vadd.f32 %v10775, %v10823
        %10825 = vmatmul.bf16.gmra.mxu0 %v7657
        %v10826 = vpop.f32.mrf.mxu0
        %v10827 = vadd.f32 %v10778, %v10826
        %v10828 = vpop.f32.mrf.mxu0
        %v10829 = vadd.f32 %v10780, %v10828
        %10830 = vmatmul.bf16.gmra.mxu0 %v7675
        %v10831 = vpop.f32.mrf.mxu0
        %v10832 = vadd.f32 %v10783, %v10831
        %v10833 = vpop.f32.mrf.mxu0
        %v10834 = vadd.f32 %v10785, %v10833
        %10835 = vmatmul.bf16.gmra.mxu0 %v7693
        %v10836 = vpop.f32.mrf.mxu0
        %v10837 = vadd.f32 %v10788, %v10836
        %v10838 = vpop.f32.mrf.mxu0
        %v10839 = vadd.f32 %v10790, %v10838
        %10840 = vmatmul.bf16.gmra.mxu0 %v7711
        %v10841 = vpop.f32.mrf.mxu0
        %v10842 = vadd.f32 %v10793, %v10841
        %v10843 = vpop.f32.mrf.mxu0
        %v10844 = vadd.f32 %v10795, %v10843
        %10845 = vmatmul.bf16.gmra.mxu0 %v7729
        %v10846 = vpop.f32.mrf.mxu0
        %v10847 = vadd.f32 %v10798, %v10846
        %v10848 = vpop.f32.mrf.mxu0
        %v10849 = vadd.f32 %v10800, %v10848
        %10850 = vmatmul.bf16.gmra.mxu0 %v7747
        %v10851 = vpop.f32.mrf.mxu0
        %v10852 = vadd.f32 %v10803, %v10851
        %v10853 = vpop.f32.mrf.mxu0
        %v10854 = vadd.f32 %v10805, %v10853
        %10855 = vdwg.mxu0
        %10856 = vmatpush.bf16.msra.mxu0 %v8984
        %10857 = vmatpush.bf16.msra.mxu0 %v8982
        %10858 = vmatpush.bf16.msra.mxu0 %v8980
        %10859 = vmatpush.bf16.msra.mxu0 %v8978
        %10860 = vmatpush.bf16.msra.mxu0 %v8976
        %10861 = vmatpush.bf16.msra.mxu0 %v8974
        %10862 = vmatpush.bf16.msra.mxu0 %v8972
        %10863 = vmatpush.bf16.msra.mxu0 %v8970
        %10864 = vmatmul.bf16.gmra.mxu0 %v7622
        %v10865 = vpop.f32.mrf.mxu0
        %v10866 = vadd.f32 %v10817, %v10865
        %v10867 = vpop.f32.mrf.mxu0
        %v10868 = vadd.f32 %v10819, %v10867
        %10869 = vmatmul.bf16.gmra.mxu0 %v7640
        %v10870 = vpop.f32.mrf.mxu0
        %v10871 = vadd.f32 %v10822, %v10870
        %v10872 = vpop.f32.mrf.mxu0
        %v10873 = vadd.f32 %v10824, %v10872
        %10874 = vmatmul.bf16.gmra.mxu0 %v7658
        %v10875 = vpop.f32.mrf.mxu0
        %v10876 = vadd.f32 %v10827, %v10875
        %v10877 = vpop.f32.mrf.mxu0
        %v10878 = vadd.f32 %v10829, %v10877
        %10879 = vmatmul.bf16.gmra.mxu0 %v7676
        %v10880 = vpop.f32.mrf.mxu0
        %v10881 = vadd.f32 %v10832, %v10880
        %v10882 = vpop.f32.mrf.mxu0
        %v10883 = vadd.f32 %v10834, %v10882
        %10884 = vmatmul.bf16.gmra.mxu0 %v7694
        %v10885 = vpop.f32.mrf.mxu0
        %v10886 = vadd.f32 %v10837, %v10885
        %v10887 = vpop.f32.mrf.mxu0
        %v10888 = vadd.f32 %v10839, %v10887
        %10889 = vmatmul.bf16.gmra.mxu0 %v7712
        %v10890 = vpop.f32.mrf.mxu0
        %v10891 = vadd.f32 %v10842, %v10890
        %v10892 = vpop.f32.mrf.mxu0
        %v10893 = vadd.f32 %v10844, %v10892
        %10894 = vmatmul.bf16.gmra.mxu0 %v7730
        %v10895 = vpop.f32.mrf.mxu0
        %v10896 = vadd.f32 %v10847, %v10895
        %v10897 = vpop.f32.mrf.mxu0
        %v10898 = vadd.f32 %v10849, %v10897
        %10899 = vmatmul.bf16.gmra.mxu0 %v7748
        %v10900 = vpop.f32.mrf.mxu0
        %v10901 = vadd.f32 %v10852, %v10900
        %v10902 = vpop.f32.mrf.mxu0
        %v10903 = vadd.f32 %v10854, %v10902
        %10904 = vdwg.mxu0
        %10905 = vmatpush.bf16.msra.mxu0 %v9000
        %10906 = vmatpush.bf16.msra.mxu0 %v8998
        %10907 = vmatpush.bf16.msra.mxu0 %v8996
        %10908 = vmatpush.bf16.msra.mxu0 %v8994
        %10909 = vmatpush.bf16.msra.mxu0 %v8992
        %10910 = vmatpush.bf16.msra.mxu0 %v8990
        %10911 = vmatpush.bf16.msra.mxu0 %v8988
        %10912 = vmatpush.bf16.msra.mxu0 %v8986
        %10913 = vmatmul.bf16.gmra.mxu0 %v7623
        %v10914 = vpop.f32.mrf.mxu0
        %v10915 = vadd.f32 %v10866, %v10914
        %v10916 = vpop.f32.mrf.mxu0
        %v10917 = vadd.f32 %v10868, %v10916
        %10918 = vmatmul.bf16.gmra.mxu0 %v7641
        %v10919 = vpop.f32.mrf.mxu0
        %v10920 = vadd.f32 %v10871, %v10919
        %v10921 = vpop.f32.mrf.mxu0
        %v10922 = vadd.f32 %v10873, %v10921
        %10923 = vmatmul.bf16.gmra.mxu0 %v7659
        %v10924 = vpop.f32.mrf.mxu0
        %v10925 = vadd.f32 %v10876, %v10924
        %v10926 = vpop.f32.mrf.mxu0
        %v10927 = vadd.f32 %v10878, %v10926
        %10928 = vmatmul.bf16.gmra.mxu0 %v7677
        %v10929 = vpop.f32.mrf.mxu0
        %v10930 = vadd.f32 %v10881, %v10929
        %v10931 = vpop.f32.mrf.mxu0
        %v10932 = vadd.f32 %v10883, %v10931
        %10933 = vmatmul.bf16.gmra.mxu0 %v7695
        %v10934 = vpop.f32.mrf.mxu0
        %v10935 = vadd.f32 %v10886, %v10934
        %v10936 = vpop.f32.mrf.mxu0
        %v10937 = vadd.f32 %v10888, %v10936
        %10938 = vmatmul.bf16.gmra.mxu0 %v7713
        %v10939 = vpop.f32.mrf.mxu0
        %v10940 = vadd.f32 %v10891, %v10939
        %v10941 = vpop.f32.mrf.mxu0
        %v10942 = vadd.f32 %v10893, %v10941
        %10943 = vmatmul.bf16.gmra.mxu0 %v7731
        %v10944 = vpop.f32.mrf.mxu0
        %v10945 = vadd.f32 %v10896, %v10944
        %v10946 = vpop.f32.mrf.mxu0
        %v10947 = vadd.f32 %v10898, %v10946
        %10948 = vmatmul.bf16.gmra.mxu0 %v7749
        %v10949 = vpop.f32.mrf.mxu0
        %v10950 = vadd.f32 %v10901, %v10949
        %v10951 = vpop.f32.mrf.mxu0
        %v10952 = vadd.f32 %v10903, %v10951
        %10953 = vdwg.mxu0
        %10954 = vmatpush.bf16.msra.mxu0 %v9016
        %10955 = vmatpush.bf16.msra.mxu0 %v9014
        %10956 = vmatpush.bf16.msra.mxu0 %v9012
        %10957 = vmatpush.bf16.msra.mxu0 %v9010
        %10958 = vmatpush.bf16.msra.mxu0 %v9008
        %10959 = vmatpush.bf16.msra.mxu0 %v9006
        %10960 = vmatpush.bf16.msra.mxu0 %v9004
        %10961 = vmatpush.bf16.msra.mxu0 %v9002
        %10962 = vmatmul.bf16.gmra.mxu0 %v7624
        %v10963 = vpop.f32.mrf.mxu0
        %v10964 = vadd.f32 %v10915, %v10963
        %v10965 = vpop.f32.mrf.mxu0
        %v10966 = vadd.f32 %v10917, %v10965
        %10967 = vmatmul.bf16.gmra.mxu0 %v7642
        %v10968 = vpop.f32.mrf.mxu0
        %v10969 = vadd.f32 %v10920, %v10968
        %v10970 = vpop.f32.mrf.mxu0
        %v10971 = vadd.f32 %v10922, %v10970
        %10972 = vmatmul.bf16.gmra.mxu0 %v7660
        %v10973 = vpop.f32.mrf.mxu0
        %v10974 = vadd.f32 %v10925, %v10973
        %v10975 = vpop.f32.mrf.mxu0
        %v10976 = vadd.f32 %v10927, %v10975
        %10977 = vmatmul.bf16.gmra.mxu0 %v7678
        %v10978 = vpop.f32.mrf.mxu0
        %v10979 = vadd.f32 %v10930, %v10978
        %v10980 = vpop.f32.mrf.mxu0
        %v10981 = vadd.f32 %v10932, %v10980
        %10982 = vmatmul.bf16.gmra.mxu0 %v7696
        %v10983 = vpop.f32.mrf.mxu0
        %v10984 = vadd.f32 %v10935, %v10983
        %v10985 = vpop.f32.mrf.mxu0
        %v10986 = vadd.f32 %v10937, %v10985
        %10987 = vmatmul.bf16.gmra.mxu0 %v7714
        %v10988 = vpop.f32.mrf.mxu0
        %v10989 = vadd.f32 %v10940, %v10988
        %v10990 = vpop.f32.mrf.mxu0
        %v10991 = vadd.f32 %v10942, %v10990
        %10992 = vmatmul.bf16.gmra.mxu0 %v7732
        %v10993 = vpop.f32.mrf.mxu0
        %v10994 = vadd.f32 %v10945, %v10993
        %v10995 = vpop.f32.mrf.mxu0
        %v10996 = vadd.f32 %v10947, %v10995
        %10997 = vmatmul.bf16.gmra.mxu0 %v7750
        %v10998 = vpop.f32.mrf.mxu0
        %v10999 = vadd.f32 %v10950, %v10998
        %v11000 = vpop.f32.mrf.mxu0
        %v11001 = vadd.f32 %v10952, %v11000
        %11002 = vdwg.mxu0
        %11003 = vmatpush.bf16.msra.mxu0 %v9032
        %11004 = vmatpush.bf16.msra.mxu0 %v9030
        %11005 = vmatpush.bf16.msra.mxu0 %v9028
        %11006 = vmatpush.bf16.msra.mxu0 %v9026
        %11007 = vmatpush.bf16.msra.mxu0 %v9024
        %11008 = vmatpush.bf16.msra.mxu0 %v9022
        %11009 = vmatpush.bf16.msra.mxu0 %v9020
        %11010 = vmatpush.bf16.msra.mxu0 %v9018
        %11011 = vmatmul.bf16.gmra.mxu0 %v7625
        %v11012 = vpop.f32.mrf.mxu0
        %v11013 = vadd.f32 %v10964, %v11012
        %v11014 = vpop.f32.mrf.mxu0
        %v11015 = vadd.f32 %v10966, %v11014
        %11016 = vmatmul.bf16.gmra.mxu0 %v7643
        %v11017 = vpop.f32.mrf.mxu0
        %v11018 = vadd.f32 %v10969, %v11017
        %v11019 = vpop.f32.mrf.mxu0
        %v11020 = vadd.f32 %v10971, %v11019
        %11021 = vmatmul.bf16.gmra.mxu0 %v7661
        %v11022 = vpop.f32.mrf.mxu0
        %v11023 = vadd.f32 %v10974, %v11022
        %v11024 = vpop.f32.mrf.mxu0
        %v11025 = vadd.f32 %v10976, %v11024
        %11026 = vmatmul.bf16.gmra.mxu0 %v7679
        %v11027 = vpop.f32.mrf.mxu0
        %v11028 = vadd.f32 %v10979, %v11027
        %v11029 = vpop.f32.mrf.mxu0
        %v11030 = vadd.f32 %v10981, %v11029
        %11031 = vmatmul.bf16.gmra.mxu0 %v7697
        %v11032 = vpop.f32.mrf.mxu0
        %v11033 = vadd.f32 %v10984, %v11032
        %v11034 = vpop.f32.mrf.mxu0
        %v11035 = vadd.f32 %v10986, %v11034
        %11036 = vmatmul.bf16.gmra.mxu0 %v7715
        %v11037 = vpop.f32.mrf.mxu0
        %v11038 = vadd.f32 %v10989, %v11037
        %v11039 = vpop.f32.mrf.mxu0
        %v11040 = vadd.f32 %v10991, %v11039
        %11041 = vmatmul.bf16.gmra.mxu0 %v7733
        %v11042 = vpop.f32.mrf.mxu0
        %v11043 = vadd.f32 %v10994, %v11042
        %v11044 = vpop.f32.mrf.mxu0
        %v11045 = vadd.f32 %v10996, %v11044
        %11046 = vmatmul.bf16.gmra.mxu0 %v7751
        %v11047 = vpop.f32.mrf.mxu0
        %v11048 = vadd.f32 %v10999, %v11047
        %v11049 = vpop.f32.mrf.mxu0
        %v11050 = vadd.f32 %v11001, %v11049
        %11051 = vdwg.mxu0
        %11052 = vmatpush.bf16.msra.mxu0 %v9048
        %11053 = vmatpush.bf16.msra.mxu0 %v9046
        %11054 = vmatpush.bf16.msra.mxu0 %v9044
        %11055 = vmatpush.bf16.msra.mxu0 %v9042
        %11056 = vmatpush.bf16.msra.mxu0 %v9040
        %11057 = vmatpush.bf16.msra.mxu0 %v9038
        %11058 = vmatpush.bf16.msra.mxu0 %v9036
        %11059 = vmatpush.bf16.msra.mxu0 %v9034
        %11060 = vmatmul.bf16.gmra.mxu0 %v7626
        %v11061 = vpop.f32.mrf.mxu0
        %v11062 = vadd.f32 %v11013, %v11061
        %v11063 = vpop.f32.mrf.mxu0
        %v11064 = vadd.f32 %v11015, %v11063
        %11065 = vmatmul.bf16.gmra.mxu0 %v7644
        %v11066 = vpop.f32.mrf.mxu0
        %v11067 = vadd.f32 %v11018, %v11066
        %v11068 = vpop.f32.mrf.mxu0
        %v11069 = vadd.f32 %v11020, %v11068
        %11070 = vmatmul.bf16.gmra.mxu0 %v7662
        %v11071 = vpop.f32.mrf.mxu0
        %v11072 = vadd.f32 %v11023, %v11071
        %v11073 = vpop.f32.mrf.mxu0
        %v11074 = vadd.f32 %v11025, %v11073
        %11075 = vmatmul.bf16.gmra.mxu0 %v7680
        %v11076 = vpop.f32.mrf.mxu0
        %v11077 = vadd.f32 %v11028, %v11076
        %v11078 = vpop.f32.mrf.mxu0
        %v11079 = vadd.f32 %v11030, %v11078
        %11080 = vmatmul.bf16.gmra.mxu0 %v7698
        %v11081 = vpop.f32.mrf.mxu0
        %v11082 = vadd.f32 %v11033, %v11081
        %v11083 = vpop.f32.mrf.mxu0
        %v11084 = vadd.f32 %v11035, %v11083
        %11085 = vmatmul.bf16.gmra.mxu0 %v7716
        %v11086 = vpop.f32.mrf.mxu0
        %v11087 = vadd.f32 %v11038, %v11086
        %v11088 = vpop.f32.mrf.mxu0
        %v11089 = vadd.f32 %v11040, %v11088
        %11090 = vmatmul.bf16.gmra.mxu0 %v7734
        %v11091 = vpop.f32.mrf.mxu0
        %v11092 = vadd.f32 %v11043, %v11091
        %v11093 = vpop.f32.mrf.mxu0
        %v11094 = vadd.f32 %v11045, %v11093
        %11095 = vmatmul.bf16.gmra.mxu0 %v7752
        %v11096 = vpop.f32.mrf.mxu0
        %v11097 = vadd.f32 %v11048, %v11096
        %v11098 = vpop.f32.mrf.mxu0
        %v11099 = vadd.f32 %v11050, %v11098
        %11100 = vdwg.mxu0
        %v11101 = vld [vmem:[%s260] sm:$0xff]
        %v11102 = vld [vmem:[%s260 + $0x8] sm:$0xff]
        %v11103 = vld [vmem:[%s260 + $0x10] sm:$0xff]
        %v11104 = vld [vmem:[%s260 + $0x18] sm:$0xff]
        %v11105 = vld [vmem:[%s260 + $0x20] sm:$0xff]
        %v11106 = vld [vmem:[%s260 + $0x28] sm:$0xff]
        %v11107 = vld [vmem:[%s260 + $0x30] sm:$0xff]
        %v11108 = vld [vmem:[%s260 + $0x38] sm:$0xff]
        %v11109 = vld [vmem:[%s260 + $0x40] sm:$0xff]
        %v11110 = vld [vmem:[%s260 + $0x48] sm:$0xff]
        %v11111 = vld [vmem:[%s260 + $0x50] sm:$0xff]
        %v11112 = vld [vmem:[%s260 + $0x58] sm:$0xff]
        %v11113 = vld [vmem:[%s260 + $0x60] sm:$0xff]
        %v11114 = vld [vmem:[%s260 + $0x68] sm:$0xff]
        %v11115 = vld [vmem:[%s260 + $0x70] sm:$0xff]
        %v11116 = vld [vmem:[%s260 + $0x78] sm:$0xff]
        %v11117 = vld [vmem:[%s260 + $0x80] sm:$0xff]
        %v11118 = vld [vmem:[%s260 + $0x88] sm:$0xff]
        %v11119 = vld [vmem:[%s260 + $0x90] sm:$0xff]
        %v11120 = vld [vmem:[%s260 + $0x98] sm:$0xff]
        %v11121 = vld [vmem:[%s260 + $0xa0] sm:$0xff]
        %v11122 = vld [vmem:[%s260 + $0xa8] sm:$0xff]
        %v11123 = vld [vmem:[%s260 + $0xb0] sm:$0xff]
        %v11124 = vld [vmem:[%s260 + $0xb8] sm:$0xff]
        %v11125 = vld [vmem:[%s260 + $0xc0] sm:$0xff]
        %v11126 = vld [vmem:[%s260 + $0xc8] sm:$0xff]
        %v11127 = vld [vmem:[%s260 + $0xd0] sm:$0xff]
        %v11128 = vld [vmem:[%s260 + $0xd8] sm:$0xff]
        %v11129 = vld [vmem:[%s260 + $0xe0] sm:$0xff]
        %v11130 = vld [vmem:[%s260 + $0xe8] sm:$0xff]
        %v11131 = vld [vmem:[%s260 + $0xf0] sm:$0xff]
        %v11132 = vld [vmem:[%s260 + $0xf8] sm:$0xff]
        %v11133 = vadd.f32 %v10180, %v11101
        %v11134 = vadd.f32 %v11062, %v11102
        %v11135 = vadd.f32 %v10182, %v11103
        %v11136 = vadd.f32 %v11064, %v11104
        %v11137 = vadd.f32 %v10185, %v11105
        %v11138 = vadd.f32 %v11067, %v11106
        %v11139 = vadd.f32 %v10187, %v11107
        %v11140 = vadd.f32 %v11069, %v11108
        %v11141 = vadd.f32 %v10190, %v11109
        %v11142 = vadd.f32 %v11072, %v11110
        %v11143 = vadd.f32 %v10192, %v11111
        %v11144 = vadd.f32 %v11074, %v11112
        %v11145 = vadd.f32 %v10195, %v11113
        %v11146 = vadd.f32 %v11077, %v11114
        %v11147 = vadd.f32 %v10197, %v11115
        %v11148 = vadd.f32 %v11079, %v11116
        %v11149 = vadd.f32 %v10200, %v11117
        %v11150 = vadd.f32 %v11082, %v11118
        %v11151 = vadd.f32 %v10202, %v11119
        %v11152 = vadd.f32 %v11084, %v11120
        %v11153 = vadd.f32 %v10205, %v11121
        %v11154 = vadd.f32 %v11087, %v11122
        %v11155 = vadd.f32 %v10207, %v11123
        %v11156 = vadd.f32 %v11089, %v11124
        %v11157 = vadd.f32 %v10210, %v11125
        %v11158 = vadd.f32 %v11092, %v11126
        %v11159 = vadd.f32 %v10212, %v11127
        %v11160 = vadd.f32 %v11094, %v11128
        %v11161 = vadd.f32 %v10215, %v11129
        %v11162 = vadd.f32 %v11097, %v11130
        %v11163 = vadd.f32 %v10217, %v11131
        %v11164 = vadd.f32 %v11099, %v11132
        %v11165 = vmax.f32 %v11133, 0.0
        %v11166 = vmax.f32 %v11134, 0.0
        %v11167 = vmax.f32 %v11135, 0.0
        %v11168 = vmax.f32 %v11136, 0.0
        %v11169 = vmax.f32 %v11137, 0.0
        %v11170 = vmax.f32 %v11138, 0.0
        %v11171 = vmax.f32 %v11139, 0.0
        %v11172 = vmax.f32 %v11140, 0.0
        %v11173 = vmax.f32 %v11141, 0.0
        %v11174 = vmax.f32 %v11142, 0.0
        %v11175 = vmax.f32 %v11143, 0.0
        %v11176 = vmax.f32 %v11144, 0.0
        %v11177 = vmax.f32 %v11145, 0.0
        %v11178 = vmax.f32 %v11146, 0.0
        %v11179 = vmax.f32 %v11147, 0.0
        %v11180 = vmax.f32 %v11148, 0.0
        %v11181 = vmax.f32 %v11149, 0.0
        %v11182 = vmax.f32 %v11150, 0.0
        %v11183 = vmax.f32 %v11151, 0.0
        %v11184 = vmax.f32 %v11152, 0.0
        %v11185 = vmax.f32 %v11153, 0.0
        %v11186 = vmax.f32 %v11154, 0.0
        %v11187 = vmax.f32 %v11155, 0.0
        %v11188 = vmax.f32 %v11156, 0.0
        %v11189 = vmax.f32 %v11157, 0.0
        %v11190 = vmax.f32 %v11158, 0.0
        %v11191 = vmax.f32 %v11159, 0.0
        %v11192 = vmax.f32 %v11160, 0.0
        %v11193 = vmax.f32 %v11161, 0.0
        %v11194 = vmax.f32 %v11162, 0.0
        %v11195 = vmax.f32 %v11163, 0.0
        %v11196 = vmax.f32 %v11164, 0.0
        %11197 = vst [vmem:[%s307] sm:$0xff] %v11165
        %11198 = vst [vmem:[%s307 + $0x8] sm:$0xff] %v11166
        %11199 = vst [vmem:[%s307 + $0x10] sm:$0xff] %v11167
        %11200 = vst [vmem:[%s307 + $0x18] sm:$0xff] %v11168
        %11201 = vst [vmem:[%s307 + $0x20] sm:$0xff] %v11169
        %11202 = vst [vmem:[%s307 + $0x28] sm:$0xff] %v11170
        %11203 = vst [vmem:[%s307 + $0x30] sm:$0xff] %v11171
        %11204 = vst [vmem:[%s307 + $0x38] sm:$0xff] %v11172
        %11205 = vst [vmem:[%s307 + $0x40] sm:$0xff] %v11173
        %11206 = vst [vmem:[%s307 + $0x48] sm:$0xff] %v11174
        %11207 = vst [vmem:[%s307 + $0x50] sm:$0xff] %v11175
        %11208 = vst [vmem:[%s307 + $0x58] sm:$0xff] %v11176
        %11209 = vst [vmem:[%s307 + $0x60] sm:$0xff] %v11177
        %11210 = vst [vmem:[%s307 + $0x68] sm:$0xff] %v11178
        %11211 = vst [vmem:[%s307 + $0x70] sm:$0xff] %v11179
        %11212 = vst [vmem:[%s307 + $0x78] sm:$0xff] %v11180
        %11213 = vst [vmem:[%s307 + $0x80] sm:$0xff] %v11181
        %11214 = vst [vmem:[%s307 + $0x88] sm:$0xff] %v11182
        %11215 = vst [vmem:[%s307 + $0x90] sm:$0xff] %v11183
        %11216 = vst [vmem:[%s307 + $0x98] sm:$0xff] %v11184
        %11217 = vst [vmem:[%s307 + $0xa0] sm:$0xff] %v11185
        %11218 = vst [vmem:[%s307 + $0xa8] sm:$0xff] %v11186
        %11219 = vst [vmem:[%s307 + $0xb0] sm:$0xff] %v11187
        %11220 = vst [vmem:[%s307 + $0xb8] sm:$0xff] %v11188
        %11221 = vst [vmem:[%s307 + $0xc0] sm:$0xff] %v11189
        %11222 = vst [vmem:[%s307 + $0xc8] sm:$0xff] %v11190
        %11223 = vst [vmem:[%s307 + $0xd0] sm:$0xff] %v11191
        %11224 = vst [vmem:[%s307 + $0xd8] sm:$0xff] %v11192
        %11225 = vst [vmem:[%s307 + $0xe0] sm:$0xff] %v11193
        %11226 = vst [vmem:[%s307 + $0xe8] sm:$0xff] %v11194
        %11227 = vst [vmem:[%s307 + $0xf0] sm:$0xff] %v11195
        %11228 = vst [vmem:[%s307 + $0xf8] sm:$0xff] %v11196
        %s11229 = sand.u32 %s142, 1
        %s11230 = scalar_lea.sflag [#allocation6], %s11229
        %s11231 = sand.u32 %s142, 1
        %s11232 = smul.addr %s11231, 256
        %s11233 = scalar_lea.vmem [#allocation13], %s11232
        // Predicated region
        $region61: #{tpu_custom_call.1} parent=39 // pred_check
          %p11234 = pneg %p152
        $region62: #{tpu_custom_call.1} parent=39 // pred_check_branch
          %11236 = sbr.rel (%p11234) target = $region64
        $region63: #{tpu_custom_call.1} parent=39 // pred_region
          %s11237 = smul.u32 2, %s24
          %11239 = vsyncadd %s11230, 0
          %s11240 = smul.addr %s11237, 16
          %s11241 = smul.addr %s11240, 8
          %s11242 = scalar_lea.hbm %s5, %s11241
          %s11243 = sshll.u32 %s11233, 4
          %s11244 = int_to_ptr.vmem [resolvable:$true] %s11243
          %s11245 = sshll.u32 %s11242, 4
          %s11246 = int_to_ptr.hbm [resolvable:$true] %s11245
          %11251 = dma.vmem_to_hbm [thread:$0]  %s11244, 4096, %s11246, %s11230, 256, 256, 16
        $region64: #{tpu_custom_call.1} parent=39 // pred_fallthru
          _
      $region40: #{tpu_custom_call.1} parent=5 // pred_fallthru
        _
      %p11252 = scmp.le.s32.totalorder 2, %s19
      // Predicated region
      $region65: #{tpu_custom_call.1} parent=5 // pred_check
        %p11253 = pneg %p11252
      $region66: #{tpu_custom_call.1} parent=5 // pred_check_branch
        %11255 = sbr.rel (%p11253) target = $region68
      $region67: #{tpu_custom_call.1} parent=5 // pred_region
        %s11256 = ssub.s32 %s19, 2
        // Predicated region
        $region69: #{tpu_custom_call.1} parent=67 // pred_check
          %p11257 = pneg %p158
        $region70: #{tpu_custom_call.1} parent=67 // pred_check_branch
          %11259 = sbr.rel (%p11257) target = $region72
        $region71: #{tpu_custom_call.1} parent=67 // pred_region
          %s11260 = sand.u32 %s143, 1
          %s11261 = scalar_lea.sflag [#allocation6], %s11260
          %s11262 = sand.u32 %s143, 1
          %s11263 = smul.addr %s11262, 256
          %s11264 = scalar_lea.vmem [#allocation13], %s11263
          %11266 = dma.done %s11261, 4096
        $region72: #{tpu_custom_call.1} parent=67 // pred_fallthru
          _
      $region68: #{tpu_custom_call.1} parent=5 // pred_fallthru
        _
    $region6: #{tpu_custom_call.1} parent=1 // loop_footer
      %s23 = sadd.s32 1, %s19
    $region7: #{tpu_custom_call.1} parent=1 // loop_footer_branch
      %18 = sbr.rel target = $region3
    $region8: #{tpu_custom_call.1} parent=1 // loop_exit
      _
    %11267 = vsyncpa [#allocation5], 1
    %s11268 = scalar_lea.sflag [#allocation5], 1
    %11269 = vsyncpa %s11268, 1
    %11270 = vsyncpa [#allocation8], 1
    %11271 = vsyncpa [#allocation11], 1
    %11272 = vsyncpa [#allocation6], 1
    %s11273 = scalar_lea.sflag [#allocation6], 1
    %11274 = vsyncpa %s11273, 1

</llo_original>
